<compile_context>
chip_gen: v6e
topology: v6e:2x2x1
jax: 0.10.0
libtpu: 0.0.40
codegen_flags: <defaults>
</compile_context>

<pallas_src>
import jax
import jax.numpy as jnp
from jax.experimental import pallas as pl
from jax.experimental.pallas import tpu as pltpu

# ----------------------------- config -----------------------------
EMB_DIM = 32          # source / target word embedding dim
WALS_SIZE = 16        # MLP_target_or_both output size
HID = 32              # encoder / decoder hidden size
FEAT_DIM = 5          # per-WALS-feature embedding dim
NUM_FEAT_VALUES = 4   # vocabulary of each WALS feature
VOCAB = 20
SRC_LEN = 8
TGT_LEN = 9           # tgt[:-1] -> 8 decoding steps
BATCH = 2

SimulationLanguages = ["en", "pt"]
FeatureTypes = [("Phonology", ["f1", "f2"]), ("Morphology", ["f3"])]
ALL_FEATURES = [f for _, feats in FeatureTypes for f in feats]
F_TOTAL = len(ALL_FEATURES) * FEAT_DIM
WALS_MODEL = "WalstoSource_Target"


# ---------- Pallas kernel: fused GRU encoder + GRU decoder + attention ----------
def _seq2seq_kernel(enc_in_ref, tgt_emb_ref, bias_ref,
                    ewi_ref, ewh_ref, eb_ref,
                    dwi_ref, dwh_ref, db_ref,
                    woc_ref, woh_ref, bo_ref,
                    out_ref, attn_ref, hfin_ref):
    S, B, _ = enc_in_ref.shape
    T = tgt_emb_ref.shape[0]
    H = hfin_ref.shape[-1]

    # Load weights once (bf16 MXU operands; per-gate lane-aligned slabs).
    ewi = [ewi_ref[g] for g in range(3)]          # each (Din_enc, H) bf16
    ewh = [ewh_ref[g] for g in range(3)]          # each (H, H)      bf16
    eb = [eb_ref[g] for g in range(4)]            # [b_r, b_z, bi_n, bh_n] (1,H) f32
    dwi = [dwi_ref[g] for g in range(3)]
    dwh = [dwh_ref[g] for g in range(3)]
    db = [db_ref[g] for g in range(4)]
    wo_c = woc_ref[...]                           # (H, H) bf16
    wo_h = woh_ref[...]                           # (H, H) bf16
    bo = bo_ref[...]                              # (1, H) f32
    bias = bias_ref[...]                          # (B, S) f32 additive length mask

    def gru_step(x_bf, h, wi, wh, b):
        # bf16 operands into the MXU, f32 accumulation; gate math in f32.
        h_bf = h.astype(jnp.bfloat16)
        gi = [jnp.dot(x_bf, wi[g], preferred_element_type=jnp.float32)
              for g in range(3)]
        gh = [jnp.dot(h_bf, wh[g], preferred_element_type=jnp.float32)
              for g in range(3)]
        r = jax.nn.sigmoid(gi[0] + gh[0] + b[0])
        z = jax.nn.sigmoid(gi[1] + gh[1] + b[1])
        n = jnp.tanh(gi[2] + b[2] + r * (gh[2] + b[3]))
        return (1.0 - z) * n + z * h

    # ---------------- encoder: unrolled time loop, ctx stays on-chip ----------------
    h = jnp.zeros((B, H), jnp.float32)
    ctx = []                                      # S values of shape (B, H), f32
    for t in range(S):
        h = gru_step(enc_in_ref[t], h, ewi, ewh, eb)
        ctx.append(h)

    # ---------------- decoder + Luong dot attention: unrolled time loop ----------------
    # Decoder is initialized with the encoder final hidden state (init_decoder_state).
    for t in range(T):
        h = gru_step(tgt_emb_ref[t], h, dwi, dwh, db)

        # scores[b, s] = <h[b], ctx_s[b]>  (VPU multiply + lane reduce; MXU left
        # free for the GRU dots), masked by source lengths via additive bias.
        cols = [jnp.sum(h * ctx[s], axis=-1, keepdims=True) for s in range(S)]
        scores = jnp.concatenate(cols, axis=-1) + bias            # (B, S)
        m = jnp.max(scores, axis=-1, keepdims=True)
        e = jnp.exp(scores - m)
        a = e * pl.reciprocal(jnp.sum(e, axis=-1, keepdims=True), approx=True)

        # context vector: cvec[b] = sum_s a[b, s] * ctx_s[b]
        cvec = a[:, 0:1] * ctx[0]
        for s in range(1, S):
            cvec = cvec + a[:, s:s + 1] * ctx[s]

        # split output projection (no lane-axis concatenate):
        # o = tanh([cvec, h] @ Wo + bo) == tanh(cvec @ Wo_c + h @ Wo_h + bo)
        o = jnp.tanh(
            jnp.dot(cvec.astype(jnp.bfloat16), wo_c,
                    preferred_element_type=jnp.float32)
            + jnp.dot(h.astype(jnp.bfloat16), wo_h,
                      preferred_element_type=jnp.float32)
            + bo)
        out_ref[t] = o
        attn_ref[t] = a

    hfin_ref[...] = h                             # written once, at the end


def seq2seq_fused(enc_in, tgt_emb, att_bias,
                  enc_wi, enc_wh, enc_b, dec_wi, dec_wh, dec_b,
                  wo_c, wo_h, bo):
    S, B, _ = enc_in.shape
    T = tgt_emb.shape[0]
    H = enc_wh.shape[-1]

    def full(a):
        nd = a.ndim
        return pl.BlockSpec(a.shape, lambda i, _nd=nd: (0,) * _nd)

    args = (enc_in, tgt_emb, att_bias, enc_wi, enc_wh, enc_b,
            dec_wi, dec_wh, dec_b, wo_c, wo_h, bo)

    out, attn, hfin = pl.pallas_call(
        _seq2seq_kernel,
        out_shape=(jax.ShapeDtypeStruct((T, B, H), jnp.float32),
                   jax.ShapeDtypeStruct((T, B, S), jnp.float32),
                   jax.ShapeDtypeStruct((B, H), jnp.float32)),
        grid=(1,),
        in_specs=[full(a) for a in args],
        out_specs=[pl.BlockSpec((T, B, H), lambda i: (0, 0, 0)),
                   pl.BlockSpec((T, B, S), lambda i: (0, 0, 0)),
                   pl.BlockSpec((B, H), lambda i: (0, 0))],
        compiler_params=pltpu.CompilerParams(dimension_semantics=("arbitrary",)),
    )(*args)
    return out, attn, hfin


# ----------------------- parameter construction -----------------------
def init_params(key):
    ks = jax.random.split(key, 12)
    p = {}
    # WALS feature embedding tables (one per feature).
    p["EmbeddingFeatures"] = {
        f: 0.1 * jax.random.normal(jax.random.fold_in(ks[0], i),
                                   (NUM_FEAT_VALUES, FEAT_DIM), jnp.float32)
        for i, f in enumerate(ALL_FEATURES)}
    # Feature values (per language, per feature).
    p["FeatureValues"] = {
        "en": {"f1": 0, "f2": 1, "f3": 2},
        "pt": {"f1": 3, "f2": 0, "f3": 1},
    }
    # MLP_target_or_both: Linear(F_TOTAL -> WALS_SIZE) + Tanh (plain XLA).
    p["mlp_w"] = 0.1 * jax.random.normal(ks[1], (F_TOTAL, WALS_SIZE), jnp.float32)
    p["mlp_b"] = 0.1 * jax.random.normal(ks[2], (1, WALS_SIZE), jnp.float32)
    # word embeddings
    p["src_emb"] = 0.1 * jax.random.normal(ks[3], (VOCAB, EMB_DIM), jnp.float32)
    p["tgt_emb"] = 0.1 * jax.random.normal(ks[4], (VOCAB, EMB_DIM), jnp.float32)
    # encoder GRU (input dim = EMB_DIM + WALS_SIZE), per-gate slabs [r, z, n].
    enc_in = EMB_DIM + WALS_SIZE
    p["enc_wi"] = 0.1 * jax.random.normal(ks[5], (3, enc_in, HID), jnp.float32)
    p["enc_wh"] = 0.1 * jax.random.normal(ks[6], (3, HID, HID), jnp.float32)
    p["enc_b"] = jnp.zeros((4, 1, HID), jnp.float32)   # [b_r, b_z, bi_n, bh_n]
    # decoder GRU
    p["dec_wi"] = 0.1 * jax.random.normal(ks[7], (3, EMB_DIM, HID), jnp.float32)
    p["dec_wh"] = 0.1 * jax.random.normal(ks[8], (3, HID, HID), jnp.float32)
    p["dec_b"] = jnp.zeros((4, 1, HID), jnp.float32)
    # attention output projection Linear(2H -> H) + Tanh, split into two H x H.
    p["att_wo_c"] = 0.1 * jax.random.normal(ks[9], (HID, HID), jnp.float32)
    p["att_wo_h"] = 0.1 * jax.random.normal(ks[10], (HID, HID), jnp.float32)
    p["att_bo"] = jnp.zeros((1, HID), jnp.float32)
    return p


# -------------------------- forward pass ------------------------------
def get_local_features_jax(params):
    # WalstoSource_Target: concat all feature embeddings of the target
    # language (SimulationLanguages[1]) along dim=1, then MLP_target_or_both.
    lang = SimulationLanguages[1]
    rows = []
    for _ftype, feats in FeatureTypes:
        per_type = []
        for f in feats:
            idx = params["FeatureValues"][lang][f]
            emb = params["EmbeddingFeatures"][f][idx]            # (FEAT_DIM,)
            per_type.append(emb.reshape(1, FEAT_DIM))
        rows.append(jnp.concatenate(per_type, axis=1))
    feat = jnp.concatenate(rows, axis=1)                         # (1, F_TOTAL)
    # MLP is ~500 FLOPs: keep it in XLA (a kernel launch would dominate).
    return jnp.tanh(feat @ params["mlp_w"] + params["mlp_b"])    # (1, WALS_SIZE)


def combine_wals_source_words_forward(params, src, tgt, lengths, flipping=False):
    wals = get_local_features_jax(params)                        # (1, WALS_SIZE)
    # flip_simulation_languages(SimulationLanguages, flipping): no-op here
    dim0, dim1 = wals.shape
    wals_features = wals.reshape(1, dim0, dim1)                  # (1, 1, WALS_SIZE)

    tgt_in = tgt[:-1]                                            # tgt = tgt[:-1]

    # Encoder input: concat WALS features to every source word embedding (Model C).
    src_emb = params["src_emb"][src]                             # (S, B, EMB)
    S, B, _ = src_emb.shape
    wals_b = jnp.broadcast_to(wals_features, (S, B, WALS_SIZE))
    enc_in = jnp.concatenate([src_emb, wals_b], axis=-1)         # (S, B, EMB+WALS)
    tgt_emb = params["tgt_emb"][tgt_in]                          # (T, B, EMB)

    # Source-length mask as an additive bias, computed once (constant over time).
    att_bias = jnp.where(jnp.arange(S)[None, :] < lengths[:, None],
                         jnp.float32(0.0), jnp.float32(-1e30))   # (B, S)

    # bf16 MXU operands, f32 accumulation inside the kernel.
    to_bf16 = lambda a: a.astype(jnp.bfloat16)
    out, attn, dec_state = seq2seq_fused(
        to_bf16(enc_in), to_bf16(tgt_emb), att_bias,
        to_bf16(params["enc_wi"]), to_bf16(params["enc_wh"]), params["enc_b"],
        to_bf16(params["dec_wi"]), to_bf16(params["dec_wh"]), params["dec_b"],
        to_bf16(params["att_wo_c"]), to_bf16(params["att_wo_h"]), params["att_bo"])
    return out, {"std": attn}, dec_state


# ------------------------------- main ---------------------------------
if __name__ == "__main__":
    key = jax.random.PRNGKey(0)
    params = init_params(key)

    k_src, k_tgt = jax.random.split(jax.random.PRNGKey(0), 2)
    src = jax.random.randint(k_src, (SRC_LEN, BATCH), 0, VOCAB, jnp.int32)
    tgt = jax.random.randint(k_tgt, (TGT_LEN, BATCH), 0, VOCAB, jnp.int32)
    lengths = jnp.array([SRC_LEN, SRC_LEN - 2], jnp.int32)

    fwd = jax.jit(combine_wals_source_words_forward)
    out, attns, dec_state = fwd(params, src, tgt, lengths)
    jax.block_until_ready((out, attns["std"], dec_state))

    assert out.shape == (TGT_LEN - 1, BATCH, HID)
    assert attns["std"].shape == (TGT_LEN - 1, BATCH, SRC_LEN)
    assert dec_state.shape == (BATCH, HID)
    print("KERNEL_OK")
</pallas_src>

<mosaic_0001>
module attributes {stable_mosaic.version = 11 : i64} {
  func.func @_seq2seq_kernel(%arg0: i32, %arg1: memref<8x2x48xbf16, #tpu.memory_space<vmem>>, %arg2: memref<8x2x32xbf16, #tpu.memory_space<vmem>>, %arg3: memref<2x8xf32, #tpu.memory_space<vmem>>, %arg4: memref<3x48x32xbf16, #tpu.memory_space<vmem>>, %arg5: memref<3x32x32xbf16, #tpu.memory_space<vmem>>, %arg6: memref<4x1x32xf32, #tpu.memory_space<vmem>>, %arg7: memref<3x32x32xbf16, #tpu.memory_space<vmem>>, %arg8: memref<3x32x32xbf16, #tpu.memory_space<vmem>>, %arg9: memref<4x1x32xf32, #tpu.memory_space<vmem>>, %arg10: memref<32x32xbf16, #tpu.memory_space<vmem>>, %arg11: memref<32x32xbf16, #tpu.memory_space<vmem>>, %arg12: memref<1x32xf32, #tpu.memory_space<vmem>>, %arg13: memref<8x2x32xf32, #tpu.memory_space<vmem>>, %arg14: memref<8x2x8xf32, #tpu.memory_space<vmem>>, %arg15: memref<2x32xf32, #tpu.memory_space<vmem>>) attributes {dimension_semantics = [#tpu.dimension_semantics<arbitrary>], iteration_bounds = array<i64: 1>, scalar_prefetch = 0 : i64, scratch_operands = 0 : i64, tpu.core_type = #tpu.core_type<tc>, window_params = [{pipeline_mode = #tpu.pipeline_mode<synchronous>, transform_indices = @transform_0, window_bounds = array<i64: 8, 2, 48>}, {pipeline_mode = #tpu.pipeline_mode<synchronous>, transform_indices = @transform_1, window_bounds = array<i64: 8, 2, 32>}, {pipeline_mode = #tpu.pipeline_mode<synchronous>, transform_indices = @transform_2, window_bounds = array<i64: 2, 8>}, {pipeline_mode = #tpu.pipeline_mode<synchronous>, transform_indices = @transform_3, window_bounds = array<i64: 3, 48, 32>}, {pipeline_mode = #tpu.pipeline_mode<synchronous>, transform_indices = @transform_4, window_bounds = array<i64: 3, 32, 32>}, {pipeline_mode = #tpu.pipeline_mode<synchronous>, transform_indices = @transform_5, window_bounds = array<i64: 4, 1, 32>}, {pipeline_mode = #tpu.pipeline_mode<synchronous>, transform_indices = @transform_6, window_bounds = array<i64: 3, 32, 32>}, {pipeline_mode = #tpu.pipeline_mode<synchronous>, transform_indices = @transform_7, window_bounds = array<i64: 3, 32, 32>}, {pipeline_mode = #tpu.pipeline_mode<synchronous>, transform_indices = @transform_8, window_bounds = array<i64: 4, 1, 32>}, {pipeline_mode = #tpu.pipeline_mode<synchronous>, transform_indices = @transform_9, window_bounds = array<i64: 32, 32>}, {pipeline_mode = #tpu.pipeline_mode<synchronous>, transform_indices = @transform_10, window_bounds = array<i64: 32, 32>}, {pipeline_mode = #tpu.pipeline_mode<synchronous>, transform_indices = @transform_11, window_bounds = array<i64: 1, 32>}, {pipeline_mode = #tpu.pipeline_mode<synchronous>, transform_indices = @transform_12, window_bounds = array<i64: 8, 2, 32>}, {pipeline_mode = #tpu.pipeline_mode<synchronous>, transform_indices = @transform_13, window_bounds = array<i64: 8, 2, 8>}, {pipeline_mode = #tpu.pipeline_mode<synchronous>, transform_indices = @transform_14, window_bounds = array<i64: 2, 32>}]} {
    %c0 = arith.constant 0 : index
    %c0_0 = arith.constant 0 : index
    %c0_1 = arith.constant 0 : index
    %0 = vector.load %arg4[%c0, %c0_0, %c0_1] : memref<3x48x32xbf16, #tpu.memory_space<vmem>>, vector<1x48x32xbf16>
    %1 = vector.shape_cast %0 : vector<1x48x32xbf16> to vector<48x32xbf16>
    %c1 = arith.constant 1 : index
    %c0_2 = arith.constant 0 : index
    %c0_3 = arith.constant 0 : index
    %2 = vector.load %arg4[%c1, %c0_2, %c0_3] : memref<3x48x32xbf16, #tpu.memory_space<vmem>>, vector<1x48x32xbf16>
    %3 = vector.shape_cast %2 : vector<1x48x32xbf16> to vector<48x32xbf16>
    %c2 = arith.constant 2 : index
    %c0_4 = arith.constant 0 : index
    %c0_5 = arith.constant 0 : index
    %4 = vector.load %arg4[%c2, %c0_4, %c0_5] : memref<3x48x32xbf16, #tpu.memory_space<vmem>>, vector<1x48x32xbf16>
    %5 = vector.shape_cast %4 : vector<1x48x32xbf16> to vector<48x32xbf16>
    %c0_6 = arith.constant 0 : index
    %c0_7 = arith.constant 0 : index
    %c0_8 = arith.constant 0 : index
    %6 = vector.load %arg5[%c0_6, %c0_7, %c0_8] : memref<3x32x32xbf16, #tpu.memory_space<vmem>>, vector<1x32x32xbf16>
    %7 = vector.shape_cast %6 : vector<1x32x32xbf16> to vector<32x32xbf16>
    %c1_9 = arith.constant 1 : index
    %c0_10 = arith.constant 0 : index
    %c0_11 = arith.constant 0 : index
    %8 = vector.load %arg5[%c1_9, %c0_10, %c0_11] : memref<3x32x32xbf16, #tpu.memory_space<vmem>>, vector<1x32x32xbf16>
    %9 = vector.shape_cast %8 : vector<1x32x32xbf16> to vector<32x32xbf16>
    %c2_12 = arith.constant 2 : index
    %c0_13 = arith.constant 0 : index
    %c0_14 = arith.constant 0 : index
    %10 = vector.load %arg5[%c2_12, %c0_13, %c0_14] : memref<3x32x32xbf16, #tpu.memory_space<vmem>>, vector<1x32x32xbf16>
    %11 = vector.shape_cast %10 : vector<1x32x32xbf16> to vector<32x32xbf16>
    %c0_15 = arith.constant 0 : index
    %c0_16 = arith.constant 0 : index
    %c0_17 = arith.constant 0 : index
    %12 = vector.load %arg6[%c0_15, %c0_16, %c0_17] : memref<4x1x32xf32, #tpu.memory_space<vmem>>, vector<1x1x32xf32>
    %13 = vector.shape_cast %12 : vector<1x1x32xf32> to vector<1x32xf32>
    %c1_18 = arith.constant 1 : index
    %c0_19 = arith.constant 0 : index
    %c0_20 = arith.constant 0 : index
    %14 = vector.load %arg6[%c1_18, %c0_19, %c0_20] : memref<4x1x32xf32, #tpu.memory_space<vmem>>, vector<1x1x32xf32>
    %15 = vector.shape_cast %14 : vector<1x1x32xf32> to vector<1x32xf32>
    %c2_21 = arith.constant 2 : index
    %c0_22 = arith.constant 0 : index
    %c0_23 = arith.constant 0 : index
    %16 = vector.load %arg6[%c2_21, %c0_22, %c0_23] : memref<4x1x32xf32, #tpu.memory_space<vmem>>, vector<1x1x32xf32>
    %17 = vector.shape_cast %16 : vector<1x1x32xf32> to vector<1x32xf32>
    %c3 = arith.constant 3 : index
    %c0_24 = arith.constant 0 : index
    %c0_25 = arith.constant 0 : index
    %18 = vector.load %arg6[%c3, %c0_24, %c0_25] : memref<4x1x32xf32, #tpu.memory_space<vmem>>, vector<1x1x32xf32>
    %19 = vector.shape_cast %18 : vector<1x1x32xf32> to vector<1x32xf32>
    %c0_26 = arith.constant 0 : index
    %c0_27 = arith.constant 0 : index
    %c0_28 = arith.constant 0 : index
    %20 = vector.load %arg7[%c0_26, %c0_27, %c0_28] : memref<3x32x32xbf16, #tpu.memory_space<vmem>>, vector<1x32x32xbf16>
    %21 = vector.shape_cast %20 : vector<1x32x32xbf16> to vector<32x32xbf16>
    %c1_29 = arith.constant 1 : index
    %c0_30 = arith.constant 0 : index
    %c0_31 = arith.constant 0 : index
    %22 = vector.load %arg7[%c1_29, %c0_30, %c0_31] : memref<3x32x32xbf16, #tpu.memory_space<vmem>>, vector<1x32x32xbf16>
    %23 = vector.shape_cast %22 : vector<1x32x32xbf16> to vector<32x32xbf16>
    %c2_32 = arith.constant 2 : index
    %c0_33 = arith.constant 0 : index
    %c0_34 = arith.constant 0 : index
    %24 = vector.load %arg7[%c2_32, %c0_33, %c0_34] : memref<3x32x32xbf16, #tpu.memory_space<vmem>>, vector<1x32x32xbf16>
    %25 = vector.shape_cast %24 : vector<1x32x32xbf16> to vector<32x32xbf16>
    %c0_35 = arith.constant 0 : index
    %c0_36 = arith.constant 0 : index
    %c0_37 = arith.constant 0 : index
    %26 = vector.load %arg8[%c0_35, %c0_36, %c0_37] : memref<3x32x32xbf16, #tpu.memory_space<vmem>>, vector<1x32x32xbf16>
    %27 = vector.shape_cast %26 : vector<1x32x32xbf16> to vector<32x32xbf16>
    %c1_38 = arith.constant 1 : index
    %c0_39 = arith.constant 0 : index
    %c0_40 = arith.constant 0 : index
    %28 = vector.load %arg8[%c1_38, %c0_39, %c0_40] : memref<3x32x32xbf16, #tpu.memory_space<vmem>>, vector<1x32x32xbf16>
    %29 = vector.shape_cast %28 : vector<1x32x32xbf16> to vector<32x32xbf16>
    %c2_41 = arith.constant 2 : index
    %c0_42 = arith.constant 0 : index
    %c0_43 = arith.constant 0 : index
    %30 = vector.load %arg8[%c2_41, %c0_42, %c0_43] : memref<3x32x32xbf16, #tpu.memory_space<vmem>>, vector<1x32x32xbf16>
    %31 = vector.shape_cast %30 : vector<1x32x32xbf16> to vector<32x32xbf16>
    %c0_44 = arith.constant 0 : index
    %c0_45 = arith.constant 0 : index
    %c0_46 = arith.constant 0 : index
    %32 = vector.load %arg9[%c0_44, %c0_45, %c0_46] : memref<4x1x32xf32, #tpu.memory_space<vmem>>, vector<1x1x32xf32>
    %33 = vector.shape_cast %32 : vector<1x1x32xf32> to vector<1x32xf32>
    %c1_47 = arith.constant 1 : index
    %c0_48 = arith.constant 0 : index
    %c0_49 = arith.constant 0 : index
    %34 = vector.load %arg9[%c1_47, %c0_48, %c0_49] : memref<4x1x32xf32, #tpu.memory_space<vmem>>, vector<1x1x32xf32>
    %35 = vector.shape_cast %34 : vector<1x1x32xf32> to vector<1x32xf32>
    %c2_50 = arith.constant 2 : index
    %c0_51 = arith.constant 0 : index
    %c0_52 = arith.constant 0 : index
    %36 = vector.load %arg9[%c2_50, %c0_51, %c0_52] : memref<4x1x32xf32, #tpu.memory_space<vmem>>, vector<1x1x32xf32>
    %37 = vector.shape_cast %36 : vector<1x1x32xf32> to vector<1x32xf32>
    %c3_53 = arith.constant 3 : index
    %c0_54 = arith.constant 0 : index
    %c0_55 = arith.constant 0 : index
    %38 = vector.load %arg9[%c3_53, %c0_54, %c0_55] : memref<4x1x32xf32, #tpu.memory_space<vmem>>, vector<1x1x32xf32>
    %39 = vector.shape_cast %38 : vector<1x1x32xf32> to vector<1x32xf32>
    %c0_56 = arith.constant 0 : index
    %c0_57 = arith.constant 0 : index
    %40 = vector.load %arg10[%c0_56, %c0_57] : memref<32x32xbf16, #tpu.memory_space<vmem>>, vector<32x32xbf16>
    %c0_58 = arith.constant 0 : index
    %c0_59 = arith.constant 0 : index
    %41 = vector.load %arg11[%c0_58, %c0_59] : memref<32x32xbf16, #tpu.memory_space<vmem>>, vector<32x32xbf16>
    %c0_60 = arith.constant 0 : index
    %c0_61 = arith.constant 0 : index
    %42 = vector.load %arg12[%c0_60, %c0_61] : memref<1x32xf32, #tpu.memory_space<vmem>>, vector<1x32xf32>
    %c0_62 = arith.constant 0 : index
    %c0_63 = arith.constant 0 : index
    %43 = vector.load %arg3[%c0_62, %c0_63] : memref<2x8xf32, #tpu.memory_space<vmem>>, vector<2x8xf32>
    %cst = arith.constant 0.000000e+00 : f32
    %44 = vector.broadcast %cst : f32 to vector<2x32xf32>
    %c0_64 = arith.constant 0 : index
    %c0_65 = arith.constant 0 : index
    %c0_66 = arith.constant 0 : index
    %45 = vector.load %arg1[%c0_64, %c0_65, %c0_66] : memref<8x2x48xbf16, #tpu.memory_space<vmem>>, vector<1x2x48xbf16>
    %46 = vector.shape_cast %45 : vector<1x2x48xbf16> to vector<2x48xbf16>
    %47 = arith.truncf %44 : vector<2x32xf32> to vector<2x32xbf16>
    %cst_67 = arith.constant dense<0.000000e+00> : vector<2x32xf32>
    %48 = tpu.matmul %46, %1, %cst_67 {dimension_numbers = #tpu.dot_dimension_numbers<[1], [0], [0], [1], [0, 0, 1, 1], [], []>} : vector<2x48xbf16>, vector<48x32xbf16>, vector<2x32xf32> -> vector<2x32xf32>
    %cst_68 = arith.constant dense<0.000000e+00> : vector<2x32xf32>
    %49 = tpu.matmul %46, %3, %cst_68 {dimension_numbers = #tpu.dot_dimension_numbers<[1], [0], [0], [1], [0, 0, 1, 1], [], []>} : vector<2x48xbf16>, vector<48x32xbf16>, vector<2x32xf32> -> vector<2x32xf32>
    %cst_69 = arith.constant dense<0.000000e+00> : vector<2x32xf32>
    %50 = tpu.matmul %46, %5, %cst_69 {dimension_numbers = #tpu.dot_dimension_numbers<[1], [0], [0], [1], [0, 0, 1, 1], [], []>} : vector<2x48xbf16>, vector<48x32xbf16>, vector<2x32xf32> -> vector<2x32xf32>
    %cst_70 = arith.constant dense<0.000000e+00> : vector<2x32xf32>
    %51 = tpu.matmul %47, %7, %cst_70 {dimension_numbers = #tpu.dot_dimension_numbers<[1], [0], [0], [1], [0, 0, 1, 1], [], []>} : vector<2x32xbf16>, vector<32x32xbf16>, vector<2x32xf32> -> vector<2x32xf32>
    %cst_71 = arith.constant dense<0.000000e+00> : vector<2x32xf32>
    %52 = tpu.matmul %47, %9, %cst_71 {dimension_numbers = #tpu.dot_dimension_numbers<[1], [0], [0], [1], [0, 0, 1, 1], [], []>} : vector<2x32xbf16>, vector<32x32xbf16>, vector<2x32xf32> -> vector<2x32xf32>
    %cst_72 = arith.constant dense<0.000000e+00> : vector<2x32xf32>
    %53 = tpu.matmul %47, %11, %cst_72 {dimension_numbers = #tpu.dot_dimension_numbers<[1], [0], [0], [1], [0, 0, 1, 1], [], []>} : vector<2x32xbf16>, vector<32x32xbf16>, vector<2x32xf32> -> vector<2x32xf32>
    %54 = arith.addf %48, %51 : vector<2x32xf32>
    %55 = vector.broadcast %13 : vector<1x32xf32> to vector<2x32xf32>
    %56 = arith.addf %54, %55 : vector<2x32xf32>
    %57 = arith.negf %56 : vector<2x32xf32>
    %58 = math.exp %57 : vector<2x32xf32>
    %cst_73 = arith.constant 1.000000e+00 : f32
    %59 = vector.broadcast %cst_73 : f32 to vector<2x32xf32>
    %60 = arith.addf %59, %58 : vector<2x32xf32>
    %61 = arith.divf %59, %60 : vector<2x32xf32>
    %62 = arith.addf %49, %52 : vector<2x32xf32>
    %63 = vector.broadcast %15 : vector<1x32xf32> to vector<2x32xf32>
    %64 = arith.addf %62, %63 : vector<2x32xf32>
    %65 = arith.negf %64 : vector<2x32xf32>
    %66 = math.exp %65 : vector<2x32xf32>
    %cst_74 = arith.constant 1.000000e+00 : f32
    %67 = vector.broadcast %cst_74 : f32 to vector<2x32xf32>
    %68 = arith.addf %67, %66 : vector<2x32xf32>
    %69 = arith.divf %67, %68 : vector<2x32xf32>
    %70 = vector.broadcast %17 : vector<1x32xf32> to vector<2x32xf32>
    %71 = arith.addf %50, %70 : vector<2x32xf32>
    %72 = vector.broadcast %19 : vector<1x32xf32> to vector<2x32xf32>
    %73 = arith.addf %53, %72 : vector<2x32xf32>
    %74 = arith.mulf %61, %73 : vector<2x32xf32>
    %75 = arith.addf %71, %74 : vector<2x32xf32>
    %76 = math.tanh %75 : vector<2x32xf32>
    %cst_75 = arith.constant 1.000000e+00 : f32
    %77 = vector.broadcast %cst_75 : f32 to vector<2x32xf32>
    %78 = arith.subf %77, %69 : vector<2x32xf32>
    %79 = arith.mulf %78, %76 : vector<2x32xf32>
    %80 = arith.mulf %69, %44 : vector<2x32xf32>
    %81 = arith.addf %79, %80 : vector<2x32xf32>
    %c1_76 = arith.constant 1 : index
    %c0_77 = arith.constant 0 : index
    %c0_78 = arith.constant 0 : index
    %82 = vector.load %arg1[%c1_76, %c0_77, %c0_78] : memref<8x2x48xbf16, #tpu.memory_space<vmem>>, vector<1x2x48xbf16>
    %83 = vector.shape_cast %82 : vector<1x2x48xbf16> to vector<2x48xbf16>
    %84 = arith.truncf %81 : vector<2x32xf32> to vector<2x32xbf16>
    %cst_79 = arith.constant dense<0.000000e+00> : vector<2x32xf32>
    %85 = tpu.matmul %83, %1, %cst_79 {dimension_numbers = #tpu.dot_dimension_numbers<[1], [0], [0], [1], [0, 0, 1, 1], [], []>} : vector<2x48xbf16>, vector<48x32xbf16>, vector<2x32xf32> -> vector<2x32xf32>
    %cst_80 = arith.constant dense<0.000000e+00> : vector<2x32xf32>
    %86 = tpu.matmul %83, %3, %cst_80 {dimension_numbers = #tpu.dot_dimension_numbers<[1], [0], [0], [1], [0, 0, 1, 1], [], []>} : vector<2x48xbf16>, vector<48x32xbf16>, vector<2x32xf32> -> vector<2x32xf32>
    %cst_81 = arith.constant dense<0.000000e+00> : vector<2x32xf32>
    %87 = tpu.matmul %83, %5, %cst_81 {dimension_numbers = #tpu.dot_dimension_numbers<[1], [0], [0], [1], [0, 0, 1, 1], [], []>} : vector<2x48xbf16>, vector<48x32xbf16>, vector<2x32xf32> -> vector<2x32xf32>
    %cst_82 = arith.constant dense<0.000000e+00> : vector<2x32xf32>
    %88 = tpu.matmul %84, %7, %cst_82 {dimension_numbers = #tpu.dot_dimension_numbers<[1], [0], [0], [1], [0, 0, 1, 1], [], []>} : vector<2x32xbf16>, vector<32x32xbf16>, vector<2x32xf32> -> vector<2x32xf32>
    %cst_83 = arith.constant dense<0.000000e+00> : vector<2x32xf32>
    %89 = tpu.matmul %84, %9, %cst_83 {dimension_numbers = #tpu.dot_dimension_numbers<[1], [0], [0], [1], [0, 0, 1, 1], [], []>} : vector<2x32xbf16>, vector<32x32xbf16>, vector<2x32xf32> -> vector<2x32xf32>
    %cst_84 = arith.constant dense<0.000000e+00> : vector<2x32xf32>
    %90 = tpu.matmul %84, %11, %cst_84 {dimension_numbers = #tpu.dot_dimension_numbers<[1], [0], [0], [1], [0, 0, 1, 1], [], []>} : vector<2x32xbf16>, vector<32x32xbf16>, vector<2x32xf32> -> vector<2x32xf32>
    %91 = arith.addf %85, %88 : vector<2x32xf32>
    %92 = vector.broadcast %13 : vector<1x32xf32> to vector<2x32xf32>
    %93 = arith.addf %91, %92 : vector<2x32xf32>
    %94 = arith.negf %93 : vector<2x32xf32>
    %95 = math.exp %94 : vector<2x32xf32>
    %cst_85 = arith.constant 1.000000e+00 : f32
    %96 = vector.broadcast %cst_85 : f32 to vector<2x32xf32>
    %97 = arith.addf %96, %95 : vector<2x32xf32>
    %98 = arith.divf %96, %97 : vector<2x32xf32>
    %99 = arith.addf %86, %89 : vector<2x32xf32>
    %100 = vector.broadcast %15 : vector<1x32xf32> to vector<2x32xf32>
    %101 = arith.addf %99, %100 : vector<2x32xf32>
    %102 = arith.negf %101 : vector<2x32xf32>
    %103 = math.exp %102 : vector<2x32xf32>
    %cst_86 = arith.constant 1.000000e+00 : f32
    %104 = vector.broadcast %cst_86 : f32 to vector<2x32xf32>
    %105 = arith.addf %104, %103 : vector<2x32xf32>
    %106 = arith.divf %104, %105 : vector<2x32xf32>
    %107 = vector.broadcast %17 : vector<1x32xf32> to vector<2x32xf32>
    %108 = arith.addf %87, %107 : vector<2x32xf32>
    %109 = vector.broadcast %19 : vector<1x32xf32> to vector<2x32xf32>
    %110 = arith.addf %90, %109 : vector<2x32xf32>
    %111 = arith.mulf %98, %110 : vector<2x32xf32>
    %112 = arith.addf %108, %111 : vector<2x32xf32>
    %113 = math.tanh %112 : vector<2x32xf32>
    %cst_87 = arith.constant 1.000000e+00 : f32
    %114 = vector.broadcast %cst_87 : f32 to vector<2x32xf32>
    %115 = arith.subf %114, %106 : vector<2x32xf32>
    %116 = arith.mulf %115, %113 : vector<2x32xf32>
    %117 = arith.mulf %106, %81 : vector<2x32xf32>
    %118 = arith.addf %116, %117 : vector<2x32xf32>
    %c2_88 = arith.constant 2 : index
    %c0_89 = arith.constant 0 : index
    %c0_90 = arith.constant 0 : index
    %119 = vector.load %arg1[%c2_88, %c0_89, %c0_90] : memref<8x2x48xbf16, #tpu.memory_space<vmem>>, vector<1x2x48xbf16>
    %120 = vector.shape_cast %119 : vector<1x2x48xbf16> to vector<2x48xbf16>
    %121 = arith.truncf %118 : vector<2x32xf32> to vector<2x32xbf16>
    %cst_91 = arith.constant dense<0.000000e+00> : vector<2x32xf32>
    %122 = tpu.matmul %120, %1, %cst_91 {dimension_numbers = #tpu.dot_dimension_numbers<[1], [0], [0], [1], [0, 0, 1, 1], [], []>} : vector<2x48xbf16>, vector<48x32xbf16>, vector<2x32xf32> -> vector<2x32xf32>
    %cst_92 = arith.constant dense<0.000000e+00> : vector<2x32xf32>
    %123 = tpu.matmul %120, %3, %cst_92 {dimension_numbers = #tpu.dot_dimension_numbers<[1], [0], [0], [1], [0, 0, 1, 1], [], []>} : vector<2x48xbf16>, vector<48x32xbf16>, vector<2x32xf32> -> vector<2x32xf32>
    %cst_93 = arith.constant dense<0.000000e+00> : vector<2x32xf32>
    %124 = tpu.matmul %120, %5, %cst_93 {dimension_numbers = #tpu.dot_dimension_numbers<[1], [0], [0], [1], [0, 0, 1, 1], [], []>} : vector<2x48xbf16>, vector<48x32xbf16>, vector<2x32xf32> -> vector<2x32xf32>
    %cst_94 = arith.constant dense<0.000000e+00> : vector<2x32xf32>
    %125 = tpu.matmul %121, %7, %cst_94 {dimension_numbers = #tpu.dot_dimension_numbers<[1], [0], [0], [1], [0, 0, 1, 1], [], []>} : vector<2x32xbf16>, vector<32x32xbf16>, vector<2x32xf32> -> vector<2x32xf32>
    %cst_95 = arith.constant dense<0.000000e+00> : vector<2x32xf32>
    %126 = tpu.matmul %121, %9, %cst_95 {dimension_numbers = #tpu.dot_dimension_numbers<[1], [0], [0], [1], [0, 0, 1, 1], [], []>} : vector<2x32xbf16>, vector<32x32xbf16>, vector<2x32xf32> -> vector<2x32xf32>
    %cst_96 = arith.constant dense<0.000000e+00> : vector<2x32xf32>
    %127 = tpu.matmul %121, %11, %cst_96 {dimension_numbers = #tpu.dot_dimension_numbers<[1], [0], [0], [1], [0, 0, 1, 1], [], []>} : vector<2x32xbf16>, vector<32x32xbf16>, vector<2x32xf32> -> vector<2x32xf32>
    %128 = arith.addf %122, %125 : vector<2x32xf32>
    %129 = vector.broadcast %13 : vector<1x32xf32> to vector<2x32xf32>
    %130 = arith.addf %128, %129 : vector<2x32xf32>
    %131 = arith.negf %130 : vector<2x32xf32>
    %132 = math.exp %131 : vector<2x32xf32>
    %cst_97 = arith.constant 1.000000e+00 : f32
    %133 = vector.broadcast %cst_97 : f32 to vector<2x32xf32>
    %134 = arith.addf %133, %132 : vector<2x32xf32>
    %135 = arith.divf %133, %134 : vector<2x32xf32>
    %136 = arith.addf %123, %126 : vector<2x32xf32>
    %137 = vector.broadcast %15 : vector<1x32xf32> to vector<2x32xf32>
    %138 = arith.addf %136, %137 : vector<2x32xf32>
    %139 = arith.negf %138 : vector<2x32xf32>
    %140 = math.exp %139 : vector<2x32xf32>
    %cst_98 = arith.constant 1.000000e+00 : f32
    %141 = vector.broadcast %cst_98 : f32 to vector<2x32xf32>
    %142 = arith.addf %141, %140 : vector<2x32xf32>
    %143 = arith.divf %141, %142 : vector<2x32xf32>
    %144 = vector.broadcast %17 : vector<1x32xf32> to vector<2x32xf32>
    %145 = arith.addf %124, %144 : vector<2x32xf32>
    %146 = vector.broadcast %19 : vector<1x32xf32> to vector<2x32xf32>
    %147 = arith.addf %127, %146 : vector<2x32xf32>
    %148 = arith.mulf %135, %147 : vector<2x32xf32>
    %149 = arith.addf %145, %148 : vector<2x32xf32>
    %150 = math.tanh %149 : vector<2x32xf32>
    %cst_99 = arith.constant 1.000000e+00 : f32
    %151 = vector.broadcast %cst_99 : f32 to vector<2x32xf32>
    %152 = arith.subf %151, %143 : vector<2x32xf32>
    %153 = arith.mulf %152, %150 : vector<2x32xf32>
    %154 = arith.mulf %143, %118 : vector<2x32xf32>
    %155 = arith.addf %153, %154 : vector<2x32xf32>
    %c3_100 = arith.constant 3 : index
    %c0_101 = arith.constant 0 : index
    %c0_102 = arith.constant 0 : index
    %156 = vector.load %arg1[%c3_100, %c0_101, %c0_102] : memref<8x2x48xbf16, #tpu.memory_space<vmem>>, vector<1x2x48xbf16>
    %157 = vector.shape_cast %156 : vector<1x2x48xbf16> to vector<2x48xbf16>
    %158 = arith.truncf %155 : vector<2x32xf32> to vector<2x32xbf16>
    %cst_103 = arith.constant dense<0.000000e+00> : vector<2x32xf32>
    %159 = tpu.matmul %157, %1, %cst_103 {dimension_numbers = #tpu.dot_dimension_numbers<[1], [0], [0], [1], [0, 0, 1, 1], [], []>} : vector<2x48xbf16>, vector<48x32xbf16>, vector<2x32xf32> -> vector<2x32xf32>
    %cst_104 = arith.constant dense<0.000000e+00> : vector<2x32xf32>
    %160 = tpu.matmul %157, %3, %cst_104 {dimension_numbers = #tpu.dot_dimension_numbers<[1], [0], [0], [1], [0, 0, 1, 1], [], []>} : vector<2x48xbf16>, vector<48x32xbf16>, vector<2x32xf32> -> vector<2x32xf32>
    %cst_105 = arith.constant dense<0.000000e+00> : vector<2x32xf32>
    %161 = tpu.matmul %157, %5, %cst_105 {dimension_numbers = #tpu.dot_dimension_numbers<[1], [0], [0], [1], [0, 0, 1, 1], [], []>} : vector<2x48xbf16>, vector<48x32xbf16>, vector<2x32xf32> -> vector<2x32xf32>
    %cst_106 = arith.constant dense<0.000000e+00> : vector<2x32xf32>
    %162 = tpu.matmul %158, %7, %cst_106 {dimension_numbers = #tpu.dot_dimension_numbers<[1], [0], [0], [1], [0, 0, 1, 1], [], []>} : vector<2x32xbf16>, vector<32x32xbf16>, vector<2x32xf32> -> vector<2x32xf32>
    %cst_107 = arith.constant dense<0.000000e+00> : vector<2x32xf32>
    %163 = tpu.matmul %158, %9, %cst_107 {dimension_numbers = #tpu.dot_dimension_numbers<[1], [0], [0], [1], [0, 0, 1, 1], [], []>} : vector<2x32xbf16>, vector<32x32xbf16>, vector<2x32xf32> -> vector<2x32xf32>
    %cst_108 = arith.constant dense<0.000000e+00> : vector<2x32xf32>
    %164 = tpu.matmul %158, %11, %cst_108 {dimension_numbers = #tpu.dot_dimension_numbers<[1], [0], [0], [1], [0, 0, 1, 1], [], []>} : vector<2x32xbf16>, vector<32x32xbf16>, vector<2x32xf32> -> vector<2x32xf32>
    %165 = arith.addf %159, %162 : vector<2x32xf32>
    %166 = vector.broadcast %13 : vector<1x32xf32> to vector<2x32xf32>
    %167 = arith.addf %165, %166 : vector<2x32xf32>
    %168 = arith.negf %167 : vector<2x32xf32>
    %169 = math.exp %168 : vector<2x32xf32>
    %cst_109 = arith.constant 1.000000e+00 : f32
    %170 = vector.broadcast %cst_109 : f32 to vector<2x32xf32>
    %171 = arith.addf %170, %169 : vector<2x32xf32>
    %172 = arith.divf %170, %171 : vector<2x32xf32>
    %173 = arith.addf %160, %163 : vector<2x32xf32>
    %174 = vector.broadcast %15 : vector<1x32xf32> to vector<2x32xf32>
    %175 = arith.addf %173, %174 : vector<2x32xf32>
    %176 = arith.negf %175 : vector<2x32xf32>
    %177 = math.exp %176 : vector<2x32xf32>
    %cst_110 = arith.constant 1.000000e+00 : f32
    %178 = vector.broadcast %cst_110 : f32 to vector<2x32xf32>
    %179 = arith.addf %178, %177 : vector<2x32xf32>
    %180 = arith.divf %178, %179 : vector<2x32xf32>
    %181 = vector.broadcast %17 : vector<1x32xf32> to vector<2x32xf32>
    %182 = arith.addf %161, %181 : vector<2x32xf32>
    %183 = vector.broadcast %19 : vector<1x32xf32> to vector<2x32xf32>
    %184 = arith.addf %164, %183 : vector<2x32xf32>
    %185 = arith.mulf %172, %184 : vector<2x32xf32>
    %186 = arith.addf %182, %185 : vector<2x32xf32>
    %187 = math.tanh %186 : vector<2x32xf32>
    %cst_111 = arith.constant 1.000000e+00 : f32
    %188 = vector.broadcast %cst_111 : f32 to vector<2x32xf32>
    %189 = arith.subf %188, %180 : vector<2x32xf32>
    %190 = arith.mulf %189, %187 : vector<2x32xf32>
    %191 = arith.mulf %180, %155 : vector<2x32xf32>
    %192 = arith.addf %190, %191 : vector<2x32xf32>
    %c4 = arith.constant 4 : index
    %c0_112 = arith.constant 0 : index
    %c0_113 = arith.constant 0 : index
    %193 = vector.load %arg1[%c4, %c0_112, %c0_113] : memref<8x2x48xbf16, #tpu.memory_space<vmem>>, vector<1x2x48xbf16>
    %194 = vector.shape_cast %193 : vector<1x2x48xbf16> to vector<2x48xbf16>
    %195 = arith.truncf %192 : vector<2x32xf32> to vector<2x32xbf16>
    %cst_114 = arith.constant dense<0.000000e+00> : vector<2x32xf32>
    %196 = tpu.matmul %194, %1, %cst_114 {dimension_numbers = #tpu.dot_dimension_numbers<[1], [0], [0], [1], [0, 0, 1, 1], [], []>} : vector<2x48xbf16>, vector<48x32xbf16>, vector<2x32xf32> -> vector<2x32xf32>
    %cst_115 = arith.constant dense<0.000000e+00> : vector<2x32xf32>
    %197 = tpu.matmul %194, %3, %cst_115 {dimension_numbers = #tpu.dot_dimension_numbers<[1], [0], [0], [1], [0, 0, 1, 1], [], []>} : vector<2x48xbf16>, vector<48x32xbf16>, vector<2x32xf32> -> vector<2x32xf32>
    %cst_116 = arith.constant dense<0.000000e+00> : vector<2x32xf32>
    %198 = tpu.matmul %194, %5, %cst_116 {dimension_numbers = #tpu.dot_dimension_numbers<[1], [0], [0], [1], [0, 0, 1, 1], [], []>} : vector<2x48xbf16>, vector<48x32xbf16>, vector<2x32xf32> -> vector<2x32xf32>
    %cst_117 = arith.constant dense<0.000000e+00> : vector<2x32xf32>
    %199 = tpu.matmul %195, %7, %cst_117 {dimension_numbers = #tpu.dot_dimension_numbers<[1], [0], [0], [1], [0, 0, 1, 1], [], []>} : vector<2x32xbf16>, vector<32x32xbf16>, vector<2x32xf32> -> vector<2x32xf32>
    %cst_118 = arith.constant dense<0.000000e+00> : vector<2x32xf32>
    %200 = tpu.matmul %195, %9, %cst_118 {dimension_numbers = #tpu.dot_dimension_numbers<[1], [0], [0], [1], [0, 0, 1, 1], [], []>} : vector<2x32xbf16>, vector<32x32xbf16>, vector<2x32xf32> -> vector<2x32xf32>
    %cst_119 = arith.constant dense<0.000000e+00> : vector<2x32xf32>
    %201 = tpu.matmul %195, %11, %cst_119 {dimension_numbers = #tpu.dot_dimension_numbers<[1], [0], [0], [1], [0, 0, 1, 1], [], []>} : vector<2x32xbf16>, vector<32x32xbf16>, vector<2x32xf32> -> vector<2x32xf32>
    %202 = arith.addf %196, %199 : vector<2x32xf32>
    %203 = vector.broadcast %13 : vector<1x32xf32> to vector<2x32xf32>
    %204 = arith.addf %202, %203 : vector<2x32xf32>
    %205 = arith.negf %204 : vector<2x32xf32>
    %206 = math.exp %205 : vector<2x32xf32>
    %cst_120 = arith.constant 1.000000e+00 : f32
    %207 = vector.broadcast %cst_120 : f32 to vector<2x32xf32>
    %208 = arith.addf %207, %206 : vector<2x32xf32>
    %209 = arith.divf %207, %208 : vector<2x32xf32>
    %210 = arith.addf %197, %200 : vector<2x32xf32>
    %211 = vector.broadcast %15 : vector<1x32xf32> to vector<2x32xf32>
    %212 = arith.addf %210, %211 : vector<2x32xf32>
    %213 = arith.negf %212 : vector<2x32xf32>
    %214 = math.exp %213 : vector<2x32xf32>
    %cst_121 = arith.constant 1.000000e+00 : f32
    %215 = vector.broadcast %cst_121 : f32 to vector<2x32xf32>
    %216 = arith.addf %215, %214 : vector<2x32xf32>
    %217 = arith.divf %215, %216 : vector<2x32xf32>
    %218 = vector.broadcast %17 : vector<1x32xf32> to vector<2x32xf32>
    %219 = arith.addf %198, %218 : vector<2x32xf32>
    %220 = vector.broadcast %19 : vector<1x32xf32> to vector<2x32xf32>
    %221 = arith.addf %201, %220 : vector<2x32xf32>
    %222 = arith.mulf %209, %221 : vector<2x32xf32>
    %223 = arith.addf %219, %222 : vector<2x32xf32>
    %224 = math.tanh %223 : vector<2x32xf32>
    %cst_122 = arith.constant 1.000000e+00 : f32
    %225 = vector.broadcast %cst_122 : f32 to vector<2x32xf32>
    %226 = arith.subf %225, %217 : vector<2x32xf32>
    %227 = arith.mulf %226, %224 : vector<2x32xf32>
    %228 = arith.mulf %217, %192 : vector<2x32xf32>
    %229 = arith.addf %227, %228 : vector<2x32xf32>
    %c5 = arith.constant 5 : index
    %c0_123 = arith.constant 0 : index
    %c0_124 = arith.constant 0 : index
    %230 = vector.load %arg1[%c5, %c0_123, %c0_124] : memref<8x2x48xbf16, #tpu.memory_space<vmem>>, vector<1x2x48xbf16>
    %231 = vector.shape_cast %230 : vector<1x2x48xbf16> to vector<2x48xbf16>
    %232 = arith.truncf %229 : vector<2x32xf32> to vector<2x32xbf16>
    %cst_125 = arith.constant dense<0.000000e+00> : vector<2x32xf32>
    %233 = tpu.matmul %231, %1, %cst_125 {dimension_numbers = #tpu.dot_dimension_numbers<[1], [0], [0], [1], [0, 0, 1, 1], [], []>} : vector<2x48xbf16>, vector<48x32xbf16>, vector<2x32xf32> -> vector<2x32xf32>
    %cst_126 = arith.constant dense<0.000000e+00> : vector<2x32xf32>
    %234 = tpu.matmul %231, %3, %cst_126 {dimension_numbers = #tpu.dot_dimension_numbers<[1], [0], [0], [1], [0, 0, 1, 1], [], []>} : vector<2x48xbf16>, vector<48x32xbf16>, vector<2x32xf32> -> vector<2x32xf32>
    %cst_127 = arith.constant dense<0.000000e+00> : vector<2x32xf32>
    %235 = tpu.matmul %231, %5, %cst_127 {dimension_numbers = #tpu.dot_dimension_numbers<[1], [0], [0], [1], [0, 0, 1, 1], [], []>} : vector<2x48xbf16>, vector<48x32xbf16>, vector<2x32xf32> -> vector<2x32xf32>
    %cst_128 = arith.constant dense<0.000000e+00> : vector<2x32xf32>
    %236 = tpu.matmul %232, %7, %cst_128 {dimension_numbers = #tpu.dot_dimension_numbers<[1], [0], [0], [1], [0, 0, 1, 1], [], []>} : vector<2x32xbf16>, vector<32x32xbf16>, vector<2x32xf32> -> vector<2x32xf32>
    %cst_129 = arith.constant dense<0.000000e+00> : vector<2x32xf32>
    %237 = tpu.matmul %232, %9, %cst_129 {dimension_numbers = #tpu.dot_dimension_numbers<[1], [0], [0], [1], [0, 0, 1, 1], [], []>} : vector<2x32xbf16>, vector<32x32xbf16>, vector<2x32xf32> -> vector<2x32xf32>
    %cst_130 = arith.constant dense<0.000000e+00> : vector<2x32xf32>
    %238 = tpu.matmul %232, %11, %cst_130 {dimension_numbers = #tpu.dot_dimension_numbers<[1], [0], [0], [1], [0, 0, 1, 1], [], []>} : vector<2x32xbf16>, vector<32x32xbf16>, vector<2x32xf32> -> vector<2x32xf32>
    %239 = arith.addf %233, %236 : vector<2x32xf32>
    %240 = vector.broadcast %13 : vector<1x32xf32> to vector<2x32xf32>
    %241 = arith.addf %239, %240 : vector<2x32xf32>
    %242 = arith.negf %241 : vector<2x32xf32>
    %243 = math.exp %242 : vector<2x32xf32>
    %cst_131 = arith.constant 1.000000e+00 : f32
    %244 = vector.broadcast %cst_131 : f32 to vector<2x32xf32>
    %245 = arith.addf %244, %243 : vector<2x32xf32>
    %246 = arith.divf %244, %245 : vector<2x32xf32>
    %247 = arith.addf %234, %237 : vector<2x32xf32>
    %248 = vector.broadcast %15 : vector<1x32xf32> to vector<2x32xf32>
    %249 = arith.addf %247, %248 : vector<2x32xf32>
    %250 = arith.negf %249 : vector<2x32xf32>
    %251 = math.exp %250 : vector<2x32xf32>
    %cst_132 = arith.constant 1.000000e+00 : f32
    %252 = vector.broadcast %cst_132 : f32 to vector<2x32xf32>
    %253 = arith.addf %252, %251 : vector<2x32xf32>
    %254 = arith.divf %252, %253 : vector<2x32xf32>
    %255 = vector.broadcast %17 : vector<1x32xf32> to vector<2x32xf32>
    %256 = arith.addf %235, %255 : vector<2x32xf32>
    %257 = vector.broadcast %19 : vector<1x32xf32> to vector<2x32xf32>
    %258 = arith.addf %238, %257 : vector<2x32xf32>
    %259 = arith.mulf %246, %258 : vector<2x32xf32>
    %260 = arith.addf %256, %259 : vector<2x32xf32>
    %261 = math.tanh %260 : vector<2x32xf32>
    %cst_133 = arith.constant 1.000000e+00 : f32
    %262 = vector.broadcast %cst_133 : f32 to vector<2x32xf32>
    %263 = arith.subf %262, %254 : vector<2x32xf32>
    %264 = arith.mulf %263, %261 : vector<2x32xf32>
    %265 = arith.mulf %254, %229 : vector<2x32xf32>
    %266 = arith.addf %264, %265 : vector<2x32xf32>
    %c6 = arith.constant 6 : index
    %c0_134 = arith.constant 0 : index
    %c0_135 = arith.constant 0 : index
    %267 = vector.load %arg1[%c6, %c0_134, %c0_135] : memref<8x2x48xbf16, #tpu.memory_space<vmem>>, vector<1x2x48xbf16>
    %268 = vector.shape_cast %267 : vector<1x2x48xbf16> to vector<2x48xbf16>
    %269 = arith.truncf %266 : vector<2x32xf32> to vector<2x32xbf16>
    %cst_136 = arith.constant dense<0.000000e+00> : vector<2x32xf32>
    %270 = tpu.matmul %268, %1, %cst_136 {dimension_numbers = #tpu.dot_dimension_numbers<[1], [0], [0], [1], [0, 0, 1, 1], [], []>} : vector<2x48xbf16>, vector<48x32xbf16>, vector<2x32xf32> -> vector<2x32xf32>
    %cst_137 = arith.constant dense<0.000000e+00> : vector<2x32xf32>
    %271 = tpu.matmul %268, %3, %cst_137 {dimension_numbers = #tpu.dot_dimension_numbers<[1], [0], [0], [1], [0, 0, 1, 1], [], []>} : vector<2x48xbf16>, vector<48x32xbf16>, vector<2x32xf32> -> vector<2x32xf32>
    %cst_138 = arith.constant dense<0.000000e+00> : vector<2x32xf32>
    %272 = tpu.matmul %268, %5, %cst_138 {dimension_numbers = #tpu.dot_dimension_numbers<[1], [0], [0], [1], [0, 0, 1, 1], [], []>} : vector<2x48xbf16>, vector<48x32xbf16>, vector<2x32xf32> -> vector<2x32xf32>
    %cst_139 = arith.constant dense<0.000000e+00> : vector<2x32xf32>
    %273 = tpu.matmul %269, %7, %cst_139 {dimension_numbers = #tpu.dot_dimension_numbers<[1], [0], [0], [1], [0, 0, 1, 1], [], []>} : vector<2x32xbf16>, vector<32x32xbf16>, vector<2x32xf32> -> vector<2x32xf32>
    %cst_140 = arith.constant dense<0.000000e+00> : vector<2x32xf32>
    %274 = tpu.matmul %269, %9, %cst_140 {dimension_numbers = #tpu.dot_dimension_numbers<[1], [0], [0], [1], [0, 0, 1, 1], [], []>} : vector<2x32xbf16>, vector<32x32xbf16>, vector<2x32xf32> -> vector<2x32xf32>
    %cst_141 = arith.constant dense<0.000000e+00> : vector<2x32xf32>
    %275 = tpu.matmul %269, %11, %cst_141 {dimension_numbers = #tpu.dot_dimension_numbers<[1], [0], [0], [1], [0, 0, 1, 1], [], []>} : vector<2x32xbf16>, vector<32x32xbf16>, vector<2x32xf32> -> vector<2x32xf32>
    %276 = arith.addf %270, %273 : vector<2x32xf32>
    %277 = vector.broadcast %13 : vector<1x32xf32> to vector<2x32xf32>
    %278 = arith.addf %276, %277 : vector<2x32xf32>
    %279 = arith.negf %278 : vector<2x32xf32>
    %280 = math.exp %279 : vector<2x32xf32>
    %cst_142 = arith.constant 1.000000e+00 : f32
    %281 = vector.broadcast %cst_142 : f32 to vector<2x32xf32>
    %282 = arith.addf %281, %280 : vector<2x32xf32>
    %283 = arith.divf %281, %282 : vector<2x32xf32>
    %284 = arith.addf %271, %274 : vector<2x32xf32>
    %285 = vector.broadcast %15 : vector<1x32xf32> to vector<2x32xf32>
    %286 = arith.addf %284, %285 : vector<2x32xf32>
    %287 = arith.negf %286 : vector<2x32xf32>
    %288 = math.exp %287 : vector<2x32xf32>
    %cst_143 = arith.constant 1.000000e+00 : f32
    %289 = vector.broadcast %cst_143 : f32 to vector<2x32xf32>
    %290 = arith.addf %289, %288 : vector<2x32xf32>
    %291 = arith.divf %289, %290 : vector<2x32xf32>
    %292 = vector.broadcast %17 : vector<1x32xf32> to vector<2x32xf32>
    %293 = arith.addf %272, %292 : vector<2x32xf32>
    %294 = vector.broadcast %19 : vector<1x32xf32> to vector<2x32xf32>
    %295 = arith.addf %275, %294 : vector<2x32xf32>
    %296 = arith.mulf %283, %295 : vector<2x32xf32>
    %297 = arith.addf %293, %296 : vector<2x32xf32>
    %298 = math.tanh %297 : vector<2x32xf32>
    %cst_144 = arith.constant 1.000000e+00 : f32
    %299 = vector.broadcast %cst_144 : f32 to vector<2x32xf32>
    %300 = arith.subf %299, %291 : vector<2x32xf32>
    %301 = arith.mulf %300, %298 : vector<2x32xf32>
    %302 = arith.mulf %291, %266 : vector<2x32xf32>
    %303 = arith.addf %301, %302 : vector<2x32xf32>
    %c7 = arith.constant 7 : index
    %c0_145 = arith.constant 0 : index
    %c0_146 = arith.constant 0 : index
    %304 = vector.load %arg1[%c7, %c0_145, %c0_146] : memref<8x2x48xbf16, #tpu.memory_space<vmem>>, vector<1x2x48xbf16>
    %305 = vector.shape_cast %304 : vector<1x2x48xbf16> to vector<2x48xbf16>
    %306 = arith.truncf %303 : vector<2x32xf32> to vector<2x32xbf16>
    %cst_147 = arith.constant dense<0.000000e+00> : vector<2x32xf32>
    %307 = tpu.matmul %305, %1, %cst_147 {dimension_numbers = #tpu.dot_dimension_numbers<[1], [0], [0], [1], [0, 0, 1, 1], [], []>} : vector<2x48xbf16>, vector<48x32xbf16>, vector<2x32xf32> -> vector<2x32xf32>
    %cst_148 = arith.constant dense<0.000000e+00> : vector<2x32xf32>
    %308 = tpu.matmul %305, %3, %cst_148 {dimension_numbers = #tpu.dot_dimension_numbers<[1], [0], [0], [1], [0, 0, 1, 1], [], []>} : vector<2x48xbf16>, vector<48x32xbf16>, vector<2x32xf32> -> vector<2x32xf32>
    %cst_149 = arith.constant dense<0.000000e+00> : vector<2x32xf32>
    %309 = tpu.matmul %305, %5, %cst_149 {dimension_numbers = #tpu.dot_dimension_numbers<[1], [0], [0], [1], [0, 0, 1, 1], [], []>} : vector<2x48xbf16>, vector<48x32xbf16>, vector<2x32xf32> -> vector<2x32xf32>
    %cst_150 = arith.constant dense<0.000000e+00> : vector<2x32xf32>
    %310 = tpu.matmul %306, %7, %cst_150 {dimension_numbers = #tpu.dot_dimension_numbers<[1], [0], [0], [1], [0, 0, 1, 1], [], []>} : vector<2x32xbf16>, vector<32x32xbf16>, vector<2x32xf32> -> vector<2x32xf32>
    %cst_151 = arith.constant dense<0.000000e+00> : vector<2x32xf32>
    %311 = tpu.matmul %306, %9, %cst_151 {dimension_numbers = #tpu.dot_dimension_numbers<[1], [0], [0], [1], [0, 0, 1, 1], [], []>} : vector<2x32xbf16>, vector<32x32xbf16>, vector<2x32xf32> -> vector<2x32xf32>
    %cst_152 = arith.constant dense<0.000000e+00> : vector<2x32xf32>
    %312 = tpu.matmul %306, %11, %cst_152 {dimension_numbers = #tpu.dot_dimension_numbers<[1], [0], [0], [1], [0, 0, 1, 1], [], []>} : vector<2x32xbf16>, vector<32x32xbf16>, vector<2x32xf32> -> vector<2x32xf32>
    %313 = arith.addf %307, %310 : vector<2x32xf32>
    %314 = vector.broadcast %13 : vector<1x32xf32> to vector<2x32xf32>
    %315 = arith.addf %313, %314 : vector<2x32xf32>
    %316 = arith.negf %315 : vector<2x32xf32>
    %317 = math.exp %316 : vector<2x32xf32>
    %cst_153 = arith.constant 1.000000e+00 : f32
    %318 = vector.broadcast %cst_153 : f32 to vector<2x32xf32>
    %319 = arith.addf %318, %317 : vector<2x32xf32>
    %320 = arith.divf %318, %319 : vector<2x32xf32>
    %321 = arith.addf %308, %311 : vector<2x32xf32>
    %322 = vector.broadcast %15 : vector<1x32xf32> to vector<2x32xf32>
    %323 = arith.addf %321, %322 : vector<2x32xf32>
    %324 = arith.negf %323 : vector<2x32xf32>
    %325 = math.exp %324 : vector<2x32xf32>
    %cst_154 = arith.constant 1.000000e+00 : f32
    %326 = vector.broadcast %cst_154 : f32 to vector<2x32xf32>
    %327 = arith.addf %326, %325 : vector<2x32xf32>
    %328 = arith.divf %326, %327 : vector<2x32xf32>
    %329 = vector.broadcast %17 : vector<1x32xf32> to vector<2x32xf32>
    %330 = arith.addf %309, %329 : vector<2x32xf32>
    %331 = vector.broadcast %19 : vector<1x32xf32> to vector<2x32xf32>
    %332 = arith.addf %312, %331 : vector<2x32xf32>
    %333 = arith.mulf %320, %332 : vector<2x32xf32>
    %334 = arith.addf %330, %333 : vector<2x32xf32>
    %335 = math.tanh %334 : vector<2x32xf32>
    %cst_155 = arith.constant 1.000000e+00 : f32
    %336 = vector.broadcast %cst_155 : f32 to vector<2x32xf32>
    %337 = arith.subf %336, %328 : vector<2x32xf32>
    %338 = arith.mulf %337, %335 : vector<2x32xf32>
    %339 = arith.mulf %328, %303 : vector<2x32xf32>
    %340 = arith.addf %338, %339 : vector<2x32xf32>
    %c0_156 = arith.constant 0 : index
    %c0_157 = arith.constant 0 : index
    %c0_158 = arith.constant 0 : index
    %341 = vector.load %arg2[%c0_156, %c0_157, %c0_158] : memref<8x2x32xbf16, #tpu.memory_space<vmem>>, vector<1x2x32xbf16>
    %342 = vector.shape_cast %341 : vector<1x2x32xbf16> to vector<2x32xbf16>
    %343 = arith.truncf %340 : vector<2x32xf32> to vector<2x32xbf16>
    %cst_159 = arith.constant dense<0.000000e+00> : vector<2x32xf32>
    %344 = tpu.matmul %342, %21, %cst_159 {dimension_numbers = #tpu.dot_dimension_numbers<[1], [0], [0], [1], [0, 0, 1, 1], [], []>} : vector<2x32xbf16>, vector<32x32xbf16>, vector<2x32xf32> -> vector<2x32xf32>
    %cst_160 = arith.constant dense<0.000000e+00> : vector<2x32xf32>
    %345 = tpu.matmul %342, %23, %cst_160 {dimension_numbers = #tpu.dot_dimension_numbers<[1], [0], [0], [1], [0, 0, 1, 1], [], []>} : vector<2x32xbf16>, vector<32x32xbf16>, vector<2x32xf32> -> vector<2x32xf32>
    %cst_161 = arith.constant dense<0.000000e+00> : vector<2x32xf32>
    %346 = tpu.matmul %342, %25, %cst_161 {dimension_numbers = #tpu.dot_dimension_numbers<[1], [0], [0], [1], [0, 0, 1, 1], [], []>} : vector<2x32xbf16>, vector<32x32xbf16>, vector<2x32xf32> -> vector<2x32xf32>
    %cst_162 = arith.constant dense<0.000000e+00> : vector<2x32xf32>
    %347 = tpu.matmul %343, %27, %cst_162 {dimension_numbers = #tpu.dot_dimension_numbers<[1], [0], [0], [1], [0, 0, 1, 1], [], []>} : vector<2x32xbf16>, vector<32x32xbf16>, vector<2x32xf32> -> vector<2x32xf32>
    %cst_163 = arith.constant dense<0.000000e+00> : vector<2x32xf32>
    %348 = tpu.matmul %343, %29, %cst_163 {dimension_numbers = #tpu.dot_dimension_numbers<[1], [0], [0], [1], [0, 0, 1, 1], [], []>} : vector<2x32xbf16>, vector<32x32xbf16>, vector<2x32xf32> -> vector<2x32xf32>
    %cst_164 = arith.constant dense<0.000000e+00> : vector<2x32xf32>
    %349 = tpu.matmul %343, %31, %cst_164 {dimension_numbers = #tpu.dot_dimension_numbers<[1], [0], [0], [1], [0, 0, 1, 1], [], []>} : vector<2x32xbf16>, vector<32x32xbf16>, vector<2x32xf32> -> vector<2x32xf32>
    %350 = arith.addf %344, %347 : vector<2x32xf32>
    %351 = vector.broadcast %33 : vector<1x32xf32> to vector<2x32xf32>
    %352 = arith.addf %350, %351 : vector<2x32xf32>
    %353 = arith.negf %352 : vector<2x32xf32>
    %354 = math.exp %353 : vector<2x32xf32>
    %cst_165 = arith.constant 1.000000e+00 : f32
    %355 = vector.broadcast %cst_165 : f32 to vector<2x32xf32>
    %356 = arith.addf %355, %354 : vector<2x32xf32>
    %357 = arith.divf %355, %356 : vector<2x32xf32>
    %358 = arith.addf %345, %348 : vector<2x32xf32>
    %359 = vector.broadcast %35 : vector<1x32xf32> to vector<2x32xf32>
    %360 = arith.addf %358, %359 : vector<2x32xf32>
    %361 = arith.negf %360 : vector<2x32xf32>
    %362 = math.exp %361 : vector<2x32xf32>
    %cst_166 = arith.constant 1.000000e+00 : f32
    %363 = vector.broadcast %cst_166 : f32 to vector<2x32xf32>
    %364 = arith.addf %363, %362 : vector<2x32xf32>
    %365 = arith.divf %363, %364 : vector<2x32xf32>
    %366 = vector.broadcast %37 : vector<1x32xf32> to vector<2x32xf32>
    %367 = arith.addf %346, %366 : vector<2x32xf32>
    %368 = vector.broadcast %39 : vector<1x32xf32> to vector<2x32xf32>
    %369 = arith.addf %349, %368 : vector<2x32xf32>
    %370 = arith.mulf %357, %369 : vector<2x32xf32>
    %371 = arith.addf %367, %370 : vector<2x32xf32>
    %372 = math.tanh %371 : vector<2x32xf32>
    %cst_167 = arith.constant 1.000000e+00 : f32
    %373 = vector.broadcast %cst_167 : f32 to vector<2x32xf32>
    %374 = arith.subf %373, %365 : vector<2x32xf32>
    %375 = arith.mulf %374, %372 : vector<2x32xf32>
    %376 = arith.mulf %365, %340 : vector<2x32xf32>
    %377 = arith.addf %375, %376 : vector<2x32xf32>
    %378 = arith.mulf %377, %81 : vector<2x32xf32>
    %cst_168 = arith.constant dense<0.000000e+00> : vector<2xf32>
    %379 = vector.multi_reduction <add>, %378, %cst_168 [1] : vector<2x32xf32> to vector<2xf32>
    %380 = vector.shape_cast %379 : vector<2xf32> to vector<2x1xf32>
    %381 = arith.mulf %377, %118 : vector<2x32xf32>
    %cst_169 = arith.constant dense<0.000000e+00> : vector<2xf32>
    %382 = vector.multi_reduction <add>, %381, %cst_169 [1] : vector<2x32xf32> to vector<2xf32>
    %383 = vector.shape_cast %382 : vector<2xf32> to vector<2x1xf32>
    %384 = arith.mulf %377, %155 : vector<2x32xf32>
    %cst_170 = arith.constant dense<0.000000e+00> : vector<2xf32>
    %385 = vector.multi_reduction <add>, %384, %cst_170 [1] : vector<2x32xf32> to vector<2xf32>
    %386 = vector.shape_cast %385 : vector<2xf32> to vector<2x1xf32>
    %387 = arith.mulf %377, %192 : vector<2x32xf32>
    %cst_171 = arith.constant dense<0.000000e+00> : vector<2xf32>
    %388 = vector.multi_reduction <add>, %387, %cst_171 [1] : vector<2x32xf32> to vector<2xf32>
    %389 = vector.shape_cast %388 : vector<2xf32> to vector<2x1xf32>
    %390 = arith.mulf %377, %229 : vector<2x32xf32>
    %cst_172 = arith.constant dense<0.000000e+00> : vector<2xf32>
    %391 = vector.multi_reduction <add>, %390, %cst_172 [1] : vector<2x32xf32> to vector<2xf32>
    %392 = vector.shape_cast %391 : vector<2xf32> to vector<2x1xf32>
    %393 = arith.mulf %377, %266 : vector<2x32xf32>
    %cst_173 = arith.constant dense<0.000000e+00> : vector<2xf32>
    %394 = vector.multi_reduction <add>, %393, %cst_173 [1] : vector<2x32xf32> to vector<2xf32>
    %395 = vector.shape_cast %394 : vector<2xf32> to vector<2x1xf32>
    %396 = arith.mulf %377, %303 : vector<2x32xf32>
    %cst_174 = arith.constant dense<0.000000e+00> : vector<2xf32>
    %397 = vector.multi_reduction <add>, %396, %cst_174 [1] : vector<2x32xf32> to vector<2xf32>
    %398 = vector.shape_cast %397 : vector<2xf32> to vector<2x1xf32>
    %399 = arith.mulf %377, %340 : vector<2x32xf32>
    %cst_175 = arith.constant dense<0.000000e+00> : vector<2xf32>
    %400 = vector.multi_reduction <add>, %399, %cst_175 [1] : vector<2x32xf32> to vector<2xf32>
    %401 = vector.shape_cast %400 : vector<2xf32> to vector<2x1xf32>
    %402 = tpu.concatenate %380, %383, %386, %389, %392, %395, %398, %401 in 1 : vector<2x1xf32>, vector<2x1xf32>, vector<2x1xf32>, vector<2x1xf32>, vector<2x1xf32>, vector<2x1xf32>, vector<2x1xf32>, vector<2x1xf32> -> vector<2x8xf32>
    %403 = arith.addf %402, %43 : vector<2x8xf32>
    %cst_176 = arith.constant dense<0xFF800000> : vector<2xf32>
    %404 = vector.multi_reduction <maximumf>, %403, %cst_176 [1] : vector<2x8xf32> to vector<2xf32>
    %405 = vector.shape_cast %404 : vector<2xf32> to vector<2x1xf32>
    %406 = vector.broadcast %405 : vector<2x1xf32> to vector<2x8xf32>
    %407 = arith.subf %403, %406 : vector<2x8xf32>
    %408 = math.exp %407 : vector<2x8xf32>
    %cst_177 = arith.constant dense<0.000000e+00> : vector<2xf32>
    %409 = vector.multi_reduction <add>, %408, %cst_177 [1] : vector<2x8xf32> to vector<2xf32>
    %410 = vector.shape_cast %409 : vector<2xf32> to vector<2x1xf32>
    %411 = tpu.reciprocal %410 {approx = true} : vector<2x1xf32> -> vector<2x1xf32>
    %412 = vector.broadcast %411 : vector<2x1xf32> to vector<2x8xf32>
    %413 = arith.mulf %408, %412 : vector<2x8xf32>
    %414 = vector.extract_strided_slice %413 {offsets = [0, 0], sizes = [2, 1], strides = [1, 1]} : vector<2x8xf32> to vector<2x1xf32>
    %415 = vector.broadcast %414 : vector<2x1xf32> to vector<2x32xf32>
    %416 = arith.mulf %415, %81 : vector<2x32xf32>
    %417 = vector.extract_strided_slice %413 {offsets = [0, 1], sizes = [2, 1], strides = [1, 1]} : vector<2x8xf32> to vector<2x1xf32>
    %418 = vector.broadcast %417 : vector<2x1xf32> to vector<2x32xf32>
    %419 = arith.mulf %418, %118 : vector<2x32xf32>
    %420 = arith.addf %416, %419 : vector<2x32xf32>
    %421 = vector.extract_strided_slice %413 {offsets = [0, 2], sizes = [2, 1], strides = [1, 1]} : vector<2x8xf32> to vector<2x1xf32>
    %422 = vector.broadcast %421 : vector<2x1xf32> to vector<2x32xf32>
    %423 = arith.mulf %422, %155 : vector<2x32xf32>
    %424 = arith.addf %420, %423 : vector<2x32xf32>
    %425 = vector.extract_strided_slice %413 {offsets = [0, 3], sizes = [2, 1], strides = [1, 1]} : vector<2x8xf32> to vector<2x1xf32>
    %426 = vector.broadcast %425 : vector<2x1xf32> to vector<2x32xf32>
    %427 = arith.mulf %426, %192 : vector<2x32xf32>
    %428 = arith.addf %424, %427 : vector<2x32xf32>
    %429 = vector.extract_strided_slice %413 {offsets = [0, 4], sizes = [2, 1], strides = [1, 1]} : vector<2x8xf32> to vector<2x1xf32>
    %430 = vector.broadcast %429 : vector<2x1xf32> to vector<2x32xf32>
    %431 = arith.mulf %430, %229 : vector<2x32xf32>
    %432 = arith.addf %428, %431 : vector<2x32xf32>
    %433 = vector.extract_strided_slice %413 {offsets = [0, 5], sizes = [2, 1], strides = [1, 1]} : vector<2x8xf32> to vector<2x1xf32>
    %434 = vector.broadcast %433 : vector<2x1xf32> to vector<2x32xf32>
    %435 = arith.mulf %434, %266 : vector<2x32xf32>
    %436 = arith.addf %432, %435 : vector<2x32xf32>
    %437 = vector.extract_strided_slice %413 {offsets = [0, 6], sizes = [2, 1], strides = [1, 1]} : vector<2x8xf32> to vector<2x1xf32>
    %438 = vector.broadcast %437 : vector<2x1xf32> to vector<2x32xf32>
    %439 = arith.mulf %438, %303 : vector<2x32xf32>
    %440 = arith.addf %436, %439 : vector<2x32xf32>
    %441 = vector.extract_strided_slice %413 {offsets = [0, 7], sizes = [2, 1], strides = [1, 1]} : vector<2x8xf32> to vector<2x1xf32>
    %442 = vector.broadcast %441 : vector<2x1xf32> to vector<2x32xf32>
    %443 = arith.mulf %442, %340 : vector<2x32xf32>
    %444 = arith.addf %440, %443 : vector<2x32xf32>
    %445 = arith.truncf %444 : vector<2x32xf32> to vector<2x32xbf16>
    %cst_178 = arith.constant dense<0.000000e+00> : vector<2x32xf32>
    %446 = tpu.matmul %445, %40, %cst_178 {dimension_numbers = #tpu.dot_dimension_numbers<[1], [0], [0], [1], [0, 0, 1, 1], [], []>} : vector<2x32xbf16>, vector<32x32xbf16>, vector<2x32xf32> -> vector<2x32xf32>
    %447 = arith.truncf %377 : vector<2x32xf32> to vector<2x32xbf16>
    %cst_179 = arith.constant dense<0.000000e+00> : vector<2x32xf32>
    %448 = tpu.matmul %447, %41, %cst_179 {dimension_numbers = #tpu.dot_dimension_numbers<[1], [0], [0], [1], [0, 0, 1, 1], [], []>} : vector<2x32xbf16>, vector<32x32xbf16>, vector<2x32xf32> -> vector<2x32xf32>
    %449 = arith.addf %446, %448 : vector<2x32xf32>
    %450 = vector.broadcast %42 : vector<1x32xf32> to vector<2x32xf32>
    %451 = arith.addf %449, %450 : vector<2x32xf32>
    %452 = math.tanh %451 : vector<2x32xf32>
    %c0_180 = arith.constant 0 : index
    %c0_181 = arith.constant 0 : index
    %c0_182 = arith.constant 0 : index
    %453 = vector.load %arg13[%c0_180, %c0_181, %c0_182] : memref<8x2x32xf32, #tpu.memory_space<vmem>>, vector<1x2x32xf32>
    %454 = vector.shape_cast %453 : vector<1x2x32xf32> to vector<2x32xf32>
    %455 = vector.shape_cast %452 : vector<2x32xf32> to vector<1x2x32xf32>
    tpu.vector_store %arg13[%c0_180, %c0_181, %c0_182], %455 {strides = array<i32>} : memref<8x2x32xf32, #tpu.memory_space<vmem>>, vector<1x2x32xf32>,
    %c0_183 = arith.constant 0 : index
    %c0_184 = arith.constant 0 : index
    %c0_185 = arith.constant 0 : index
    %456 = vector.load %arg14[%c0_183, %c0_184, %c0_185] : memref<8x2x8xf32, #tpu.memory_space<vmem>>, vector<1x2x8xf32>
    %457 = vector.shape_cast %456 : vector<1x2x8xf32> to vector<2x8xf32>
    %458 = vector.shape_cast %413 : vector<2x8xf32> to vector<1x2x8xf32>
    tpu.vector_store %arg14[%c0_183, %c0_184, %c0_185], %458 {strides = array<i32>} : memref<8x2x8xf32, #tpu.memory_space<vmem>>, vector<1x2x8xf32>,
    %c1_186 = arith.constant 1 : index
    %c0_187 = arith.constant 0 : index
    %c0_188 = arith.constant 0 : index
    %459 = vector.load %arg2[%c1_186, %c0_187, %c0_188] : memref<8x2x32xbf16, #tpu.memory_space<vmem>>, vector<1x2x32xbf16>
    %460 = vector.shape_cast %459 : vector<1x2x32xbf16> to vector<2x32xbf16>
    %461 = arith.truncf %377 : vector<2x32xf32> to vector<2x32xbf16>
    %cst_189 = arith.constant dense<0.000000e+00> : vector<2x32xf32>
    %462 = tpu.matmul %460, %21, %cst_189 {dimension_numbers = #tpu.dot_dimension_numbers<[1], [0], [0], [1], [0, 0, 1, 1], [], []>} : vector<2x32xbf16>, vector<32x32xbf16>, vector<2x32xf32> -> vector<2x32xf32>
    %cst_190 = arith.constant dense<0.000000e+00> : vector<2x32xf32>
    %463 = tpu.matmul %460, %23, %cst_190 {dimension_numbers = #tpu.dot_dimension_numbers<[1], [0], [0], [1], [0, 0, 1, 1], [], []>} : vector<2x32xbf16>, vector<32x32xbf16>, vector<2x32xf32> -> vector<2x32xf32>
    %cst_191 = arith.constant dense<0.000000e+00> : vector<2x32xf32>
    %464 = tpu.matmul %460, %25, %cst_191 {dimension_numbers = #tpu.dot_dimension_numbers<[1], [0], [0], [1], [0, 0, 1, 1], [], []>} : vector<2x32xbf16>, vector<32x32xbf16>, vector<2x32xf32> -> vector<2x32xf32>
    %cst_192 = arith.constant dense<0.000000e+00> : vector<2x32xf32>
    %465 = tpu.matmul %461, %27, %cst_192 {dimension_numbers = #tpu.dot_dimension_numbers<[1], [0], [0], [1], [0, 0, 1, 1], [], []>} : vector<2x32xbf16>, vector<32x32xbf16>, vector<2x32xf32> -> vector<2x32xf32>
    %cst_193 = arith.constant dense<0.000000e+00> : vector<2x32xf32>
    %466 = tpu.matmul %461, %29, %cst_193 {dimension_numbers = #tpu.dot_dimension_numbers<[1], [0], [0], [1], [0, 0, 1, 1], [], []>} : vector<2x32xbf16>, vector<32x32xbf16>, vector<2x32xf32> -> vector<2x32xf32>
    %cst_194 = arith.constant dense<0.000000e+00> : vector<2x32xf32>
    %467 = tpu.matmul %461, %31, %cst_194 {dimension_numbers = #tpu.dot_dimension_numbers<[1], [0], [0], [1], [0, 0, 1, 1], [], []>} : vector<2x32xbf16>, vector<32x32xbf16>, vector<2x32xf32> -> vector<2x32xf32>
    %468 = arith.addf %462, %465 : vector<2x32xf32>
    %469 = vector.broadcast %33 : vector<1x32xf32> to vector<2x32xf32>
    %470 = arith.addf %468, %469 : vector<2x32xf32>
    %471 = arith.negf %470 : vector<2x32xf32>
    %472 = math.exp %471 : vector<2x32xf32>
    %cst_195 = arith.constant 1.000000e+00 : f32
    %473 = vector.broadcast %cst_195 : f32 to vector<2x32xf32>
    %474 = arith.addf %473, %472 : vector<2x32xf32>
    %475 = arith.divf %473, %474 : vector<2x32xf32>
    %476 = arith.addf %463, %466 : vector<2x32xf32>
    %477 = vector.broadcast %35 : vector<1x32xf32> to vector<2x32xf32>
    %478 = arith.addf %476, %477 : vector<2x32xf32>
    %479 = arith.negf %478 : vector<2x32xf32>
    %480 = math.exp %479 : vector<2x32xf32>
    %cst_196 = arith.constant 1.000000e+00 : f32
    %481 = vector.broadcast %cst_196 : f32 to vector<2x32xf32>
    %482 = arith.addf %481, %480 : vector<2x32xf32>
    %483 = arith.divf %481, %482 : vector<2x32xf32>
    %484 = vector.broadcast %37 : vector<1x32xf32> to vector<2x32xf32>
    %485 = arith.addf %464, %484 : vector<2x32xf32>
    %486 = vector.broadcast %39 : vector<1x32xf32> to vector<2x32xf32>
    %487 = arith.addf %467, %486 : vector<2x32xf32>
    %488 = arith.mulf %475, %487 : vector<2x32xf32>
    %489 = arith.addf %485, %488 : vector<2x32xf32>
    %490 = math.tanh %489 : vector<2x32xf32>
    %cst_197 = arith.constant 1.000000e+00 : f32
    %491 = vector.broadcast %cst_197 : f32 to vector<2x32xf32>
    %492 = arith.subf %491, %483 : vector<2x32xf32>
    %493 = arith.mulf %492, %490 : vector<2x32xf32>
    %494 = arith.mulf %483, %377 : vector<2x32xf32>
    %495 = arith.addf %493, %494 : vector<2x32xf32>
    %496 = arith.mulf %495, %81 : vector<2x32xf32>
    %cst_198 = arith.constant dense<0.000000e+00> : vector<2xf32>
    %497 = vector.multi_reduction <add>, %496, %cst_198 [1] : vector<2x32xf32> to vector<2xf32>
    %498 = vector.shape_cast %497 : vector<2xf32> to vector<2x1xf32>
    %499 = arith.mulf %495, %118 : vector<2x32xf32>
    %cst_199 = arith.constant dense<0.000000e+00> : vector<2xf32>
    %500 = vector.multi_reduction <add>, %499, %cst_199 [1] : vector<2x32xf32> to vector<2xf32>
    %501 = vector.shape_cast %500 : vector<2xf32> to vector<2x1xf32>
    %502 = arith.mulf %495, %155 : vector<2x32xf32>
    %cst_200 = arith.constant dense<0.000000e+00> : vector<2xf32>
    %503 = vector.multi_reduction <add>, %502, %cst_200 [1] : vector<2x32xf32> to vector<2xf32>
    %504 = vector.shape_cast %503 : vector<2xf32> to vector<2x1xf32>
    %505 = arith.mulf %495, %192 : vector<2x32xf32>
    %cst_201 = arith.constant dense<0.000000e+00> : vector<2xf32>
    %506 = vector.multi_reduction <add>, %505, %cst_201 [1] : vector<2x32xf32> to vector<2xf32>
    %507 = vector.shape_cast %506 : vector<2xf32> to vector<2x1xf32>
    %508 = arith.mulf %495, %229 : vector<2x32xf32>
    %cst_202 = arith.constant dense<0.000000e+00> : vector<2xf32>
    %509 = vector.multi_reduction <add>, %508, %cst_202 [1] : vector<2x32xf32> to vector<2xf32>
    %510 = vector.shape_cast %509 : vector<2xf32> to vector<2x1xf32>
    %511 = arith.mulf %495, %266 : vector<2x32xf32>
    %cst_203 = arith.constant dense<0.000000e+00> : vector<2xf32>
    %512 = vector.multi_reduction <add>, %511, %cst_203 [1] : vector<2x32xf32> to vector<2xf32>
    %513 = vector.shape_cast %512 : vector<2xf32> to vector<2x1xf32>
    %514 = arith.mulf %495, %303 : vector<2x32xf32>
    %cst_204 = arith.constant dense<0.000000e+00> : vector<2xf32>
    %515 = vector.multi_reduction <add>, %514, %cst_204 [1] : vector<2x32xf32> to vector<2xf32>
    %516 = vector.shape_cast %515 : vector<2xf32> to vector<2x1xf32>
    %517 = arith.mulf %495, %340 : vector<2x32xf32>
    %cst_205 = arith.constant dense<0.000000e+00> : vector<2xf32>
    %518 = vector.multi_reduction <add>, %517, %cst_205 [1] : vector<2x32xf32> to vector<2xf32>
    %519 = vector.shape_cast %518 : vector<2xf32> to vector<2x1xf32>
    %520 = tpu.concatenate %498, %501, %504, %507, %510, %513, %516, %519 in 1 : vector<2x1xf32>, vector<2x1xf32>, vector<2x1xf32>, vector<2x1xf32>, vector<2x1xf32>, vector<2x1xf32>, vector<2x1xf32>, vector<2x1xf32> -> vector<2x8xf32>
    %521 = arith.addf %520, %43 : vector<2x8xf32>
    %cst_206 = arith.constant dense<0xFF800000> : vector<2xf32>
    %522 = vector.multi_reduction <maximumf>, %521, %cst_206 [1] : vector<2x8xf32> to vector<2xf32>
    %523 = vector.shape_cast %522 : vector<2xf32> to vector<2x1xf32>
    %524 = vector.broadcast %523 : vector<2x1xf32> to vector<2x8xf32>
    %525 = arith.subf %521, %524 : vector<2x8xf32>
    %526 = math.exp %525 : vector<2x8xf32>
    %cst_207 = arith.constant dense<0.000000e+00> : vector<2xf32>
    %527 = vector.multi_reduction <add>, %526, %cst_207 [1] : vector<2x8xf32> to vector<2xf32>
    %528 = vector.shape_cast %527 : vector<2xf32> to vector<2x1xf32>
    %529 = tpu.reciprocal %528 {approx = true} : vector<2x1xf32> -> vector<2x1xf32>
    %530 = vector.broadcast %529 : vector<2x1xf32> to vector<2x8xf32>
    %531 = arith.mulf %526, %530 : vector<2x8xf32>
    %532 = vector.extract_strided_slice %531 {offsets = [0, 0], sizes = [2, 1], strides = [1, 1]} : vector<2x8xf32> to vector<2x1xf32>
    %533 = vector.broadcast %532 : vector<2x1xf32> to vector<2x32xf32>
    %534 = arith.mulf %533, %81 : vector<2x32xf32>
    %535 = vector.extract_strided_slice %531 {offsets = [0, 1], sizes = [2, 1], strides = [1, 1]} : vector<2x8xf32> to vector<2x1xf32>
    %536 = vector.broadcast %535 : vector<2x1xf32> to vector<2x32xf32>
    %537 = arith.mulf %536, %118 : vector<2x32xf32>
    %538 = arith.addf %534, %537 : vector<2x32xf32>
    %539 = vector.extract_strided_slice %531 {offsets = [0, 2], sizes = [2, 1], strides = [1, 1]} : vector<2x8xf32> to vector<2x1xf32>
    %540 = vector.broadcast %539 : vector<2x1xf32> to vector<2x32xf32>
    %541 = arith.mulf %540, %155 : vector<2x32xf32>
    %542 = arith.addf %538, %541 : vector<2x32xf32>
    %543 = vector.extract_strided_slice %531 {offsets = [0, 3], sizes = [2, 1], strides = [1, 1]} : vector<2x8xf32> to vector<2x1xf32>
    %544 = vector.broadcast %543 : vector<2x1xf32> to vector<2x32xf32>
    %545 = arith.mulf %544, %192 : vector<2x32xf32>
    %546 = arith.addf %542, %545 : vector<2x32xf32>
    %547 = vector.extract_strided_slice %531 {offsets = [0, 4], sizes = [2, 1], strides = [1, 1]} : vector<2x8xf32> to vector<2x1xf32>
    %548 = vector.broadcast %547 : vector<2x1xf32> to vector<2x32xf32>
    %549 = arith.mulf %548, %229 : vector<2x32xf32>
    %550 = arith.addf %546, %549 : vector<2x32xf32>
    %551 = vector.extract_strided_slice %531 {offsets = [0, 5], sizes = [2, 1], strides = [1, 1]} : vector<2x8xf32> to vector<2x1xf32>
    %552 = vector.broadcast %551 : vector<2x1xf32> to vector<2x32xf32>
    %553 = arith.mulf %552, %266 : vector<2x32xf32>
    %554 = arith.addf %550, %553 : vector<2x32xf32>
    %555 = vector.extract_strided_slice %531 {offsets = [0, 6], sizes = [2, 1], strides = [1, 1]} : vector<2x8xf32> to vector<2x1xf32>
    %556 = vector.broadcast %555 : vector<2x1xf32> to vector<2x32xf32>
    %557 = arith.mulf %556, %303 : vector<2x32xf32>
    %558 = arith.addf %554, %557 : vector<2x32xf32>
    %559 = vector.extract_strided_slice %531 {offsets = [0, 7], sizes = [2, 1], strides = [1, 1]} : vector<2x8xf32> to vector<2x1xf32>
    %560 = vector.broadcast %559 : vector<2x1xf32> to vector<2x32xf32>
    %561 = arith.mulf %560, %340 : vector<2x32xf32>
    %562 = arith.addf %558, %561 : vector<2x32xf32>
    %563 = arith.truncf %562 : vector<2x32xf32> to vector<2x32xbf16>
    %cst_208 = arith.constant dense<0.000000e+00> : vector<2x32xf32>
    %564 = tpu.matmul %563, %40, %cst_208 {dimension_numbers = #tpu.dot_dimension_numbers<[1], [0], [0], [1], [0, 0, 1, 1], [], []>} : vector<2x32xbf16>, vector<32x32xbf16>, vector<2x32xf32> -> vector<2x32xf32>
    %565 = arith.truncf %495 : vector<2x32xf32> to vector<2x32xbf16>
    %cst_209 = arith.constant dense<0.000000e+00> : vector<2x32xf32>
    %566 = tpu.matmul %565, %41, %cst_209 {dimension_numbers = #tpu.dot_dimension_numbers<[1], [0], [0], [1], [0, 0, 1, 1], [], []>} : vector<2x32xbf16>, vector<32x32xbf16>, vector<2x32xf32> -> vector<2x32xf32>
    %567 = arith.addf %564, %566 : vector<2x32xf32>
    %568 = vector.broadcast %42 : vector<1x32xf32> to vector<2x32xf32>
    %569 = arith.addf %567, %568 : vector<2x32xf32>
    %570 = math.tanh %569 : vector<2x32xf32>
    %c1_210 = arith.constant 1 : index
    %c0_211 = arith.constant 0 : index
    %c0_212 = arith.constant 0 : index
    %571 = vector.load %arg13[%c1_210, %c0_211, %c0_212] : memref<8x2x32xf32, #tpu.memory_space<vmem>>, vector<1x2x32xf32>
    %572 = vector.shape_cast %571 : vector<1x2x32xf32> to vector<2x32xf32>
    %573 = vector.shape_cast %570 : vector<2x32xf32> to vector<1x2x32xf32>
    tpu.vector_store %arg13[%c1_210, %c0_211, %c0_212], %573 {strides = array<i32>} : memref<8x2x32xf32, #tpu.memory_space<vmem>>, vector<1x2x32xf32>,
    %c1_213 = arith.constant 1 : index
    %c0_214 = arith.constant 0 : index
    %c0_215 = arith.constant 0 : index
    %574 = vector.load %arg14[%c1_213, %c0_214, %c0_215] : memref<8x2x8xf32, #tpu.memory_space<vmem>>, vector<1x2x8xf32>
    %575 = vector.shape_cast %574 : vector<1x2x8xf32> to vector<2x8xf32>
    %576 = vector.shape_cast %531 : vector<2x8xf32> to vector<1x2x8xf32>
    tpu.vector_store %arg14[%c1_213, %c0_214, %c0_215], %576 {strides = array<i32>} : memref<8x2x8xf32, #tpu.memory_space<vmem>>, vector<1x2x8xf32>,
    %c2_216 = arith.constant 2 : index
    %c0_217 = arith.constant 0 : index
    %c0_218 = arith.constant 0 : index
    %577 = vector.load %arg2[%c2_216, %c0_217, %c0_218] : memref<8x2x32xbf16, #tpu.memory_space<vmem>>, vector<1x2x32xbf16>
    %578 = vector.shape_cast %577 : vector<1x2x32xbf16> to vector<2x32xbf16>
    %579 = arith.truncf %495 : vector<2x32xf32> to vector<2x32xbf16>
    %cst_219 = arith.constant dense<0.000000e+00> : vector<2x32xf32>
    %580 = tpu.matmul %578, %21, %cst_219 {dimension_numbers = #tpu.dot_dimension_numbers<[1], [0], [0], [1], [0, 0, 1, 1], [], []>} : vector<2x32xbf16>, vector<32x32xbf16>, vector<2x32xf32> -> vector<2x32xf32>
    %cst_220 = arith.constant dense<0.000000e+00> : vector<2x32xf32>
    %581 = tpu.matmul %578, %23, %cst_220 {dimension_numbers = #tpu.dot_dimension_numbers<[1], [0], [0], [1], [0, 0, 1, 1], [], []>} : vector<2x32xbf16>, vector<32x32xbf16>, vector<2x32xf32> -> vector<2x32xf32>
    %cst_221 = arith.constant dense<0.000000e+00> : vector<2x32xf32>
    %582 = tpu.matmul %578, %25, %cst_221 {dimension_numbers = #tpu.dot_dimension_numbers<[1], [0], [0], [1], [0, 0, 1, 1], [], []>} : vector<2x32xbf16>, vector<32x32xbf16>, vector<2x32xf32> -> vector<2x32xf32>
    %cst_222 = arith.constant dense<0.000000e+00> : vector<2x32xf32>
    %583 = tpu.matmul %579, %27, %cst_222 {dimension_numbers = #tpu.dot_dimension_numbers<[1], [0], [0], [1], [0, 0, 1, 1], [], []>} : vector<2x32xbf16>, vector<32x32xbf16>, vector<2x32xf32> -> vector<2x32xf32>
    %cst_223 = arith.constant dense<0.000000e+00> : vector<2x32xf32>
    %584 = tpu.matmul %579, %29, %cst_223 {dimension_numbers = #tpu.dot_dimension_numbers<[1], [0], [0], [1], [0, 0, 1, 1], [], []>} : vector<2x32xbf16>, vector<32x32xbf16>, vector<2x32xf32> -> vector<2x32xf32>
    %cst_224 = arith.constant dense<0.000000e+00> : vector<2x32xf32>
    %585 = tpu.matmul %579, %31, %cst_224 {dimension_numbers = #tpu.dot_dimension_numbers<[1], [0], [0], [1], [0, 0, 1, 1], [], []>} : vector<2x32xbf16>, vector<32x32xbf16>, vector<2x32xf32> -> vector<2x32xf32>
    %586 = arith.addf %580, %583 : vector<2x32xf32>
    %587 = vector.broadcast %33 : vector<1x32xf32> to vector<2x32xf32>
    %588 = arith.addf %586, %587 : vector<2x32xf32>
    %589 = arith.negf %588 : vector<2x32xf32>
    %590 = math.exp %589 : vector<2x32xf32>
    %cst_225 = arith.constant 1.000000e+00 : f32
    %591 = vector.broadcast %cst_225 : f32 to vector<2x32xf32>
    %592 = arith.addf %591, %590 : vector<2x32xf32>
    %593 = arith.divf %591, %592 : vector<2x32xf32>
    %594 = arith.addf %581, %584 : vector<2x32xf32>
    %595 = vector.broadcast %35 : vector<1x32xf32> to vector<2x32xf32>
    %596 = arith.addf %594, %595 : vector<2x32xf32>
    %597 = arith.negf %596 : vector<2x32xf32>
    %598 = math.exp %597 : vector<2x32xf32>
    %cst_226 = arith.constant 1.000000e+00 : f32
    %599 = vector.broadcast %cst_226 : f32 to vector<2x32xf32>
    %600 = arith.addf %599, %598 : vector<2x32xf32>
    %601 = arith.divf %599, %600 : vector<2x32xf32>
    %602 = vector.broadcast %37 : vector<1x32xf32> to vector<2x32xf32>
    %603 = arith.addf %582, %602 : vector<2x32xf32>
    %604 = vector.broadcast %39 : vector<1x32xf32> to vector<2x32xf32>
    %605 = arith.addf %585, %604 : vector<2x32xf32>
    %606 = arith.mulf %593, %605 : vector<2x32xf32>
    %607 = arith.addf %603, %606 : vector<2x32xf32>
    %608 = math.tanh %607 : vector<2x32xf32>
    %cst_227 = arith.constant 1.000000e+00 : f32
    %609 = vector.broadcast %cst_227 : f32 to vector<2x32xf32>
    %610 = arith.subf %609, %601 : vector<2x32xf32>
    %611 = arith.mulf %610, %608 : vector<2x32xf32>
    %612 = arith.mulf %601, %495 : vector<2x32xf32>
    %613 = arith.addf %611, %612 : vector<2x32xf32>
    %614 = arith.mulf %613, %81 : vector<2x32xf32>
    %cst_228 = arith.constant dense<0.000000e+00> : vector<2xf32>
    %615 = vector.multi_reduction <add>, %614, %cst_228 [1] : vector<2x32xf32> to vector<2xf32>
    %616 = vector.shape_cast %615 : vector<2xf32> to vector<2x1xf32>
    %617 = arith.mulf %613, %118 : vector<2x32xf32>
    %cst_229 = arith.constant dense<0.000000e+00> : vector<2xf32>
    %618 = vector.multi_reduction <add>, %617, %cst_229 [1] : vector<2x32xf32> to vector<2xf32>
    %619 = vector.shape_cast %618 : vector<2xf32> to vector<2x1xf32>
    %620 = arith.mulf %613, %155 : vector<2x32xf32>
    %cst_230 = arith.constant dense<0.000000e+00> : vector<2xf32>
    %621 = vector.multi_reduction <add>, %620, %cst_230 [1] : vector<2x32xf32> to vector<2xf32>
    %622 = vector.shape_cast %621 : vector<2xf32> to vector<2x1xf32>
    %623 = arith.mulf %613, %192 : vector<2x32xf32>
    %cst_231 = arith.constant dense<0.000000e+00> : vector<2xf32>
    %624 = vector.multi_reduction <add>, %623, %cst_231 [1] : vector<2x32xf32> to vector<2xf32>
    %625 = vector.shape_cast %624 : vector<2xf32> to vector<2x1xf32>
    %626 = arith.mulf %613, %229 : vector<2x32xf32>
    %cst_232 = arith.constant dense<0.000000e+00> : vector<2xf32>
    %627 = vector.multi_reduction <add>, %626, %cst_232 [1] : vector<2x32xf32> to vector<2xf32>
    %628 = vector.shape_cast %627 : vector<2xf32> to vector<2x1xf32>
    %629 = arith.mulf %613, %266 : vector<2x32xf32>
    %cst_233 = arith.constant dense<0.000000e+00> : vector<2xf32>
    %630 = vector.multi_reduction <add>, %629, %cst_233 [1] : vector<2x32xf32> to vector<2xf32>
    %631 = vector.shape_cast %630 : vector<2xf32> to vector<2x1xf32>
    %632 = arith.mulf %613, %303 : vector<2x32xf32>
    %cst_234 = arith.constant dense<0.000000e+00> : vector<2xf32>
    %633 = vector.multi_reduction <add>, %632, %cst_234 [1] : vector<2x32xf32> to vector<2xf32>
    %634 = vector.shape_cast %633 : vector<2xf32> to vector<2x1xf32>
    %635 = arith.mulf %613, %340 : vector<2x32xf32>
    %cst_235 = arith.constant dense<0.000000e+00> : vector<2xf32>
    %636 = vector.multi_reduction <add>, %635, %cst_235 [1] : vector<2x32xf32> to vector<2xf32>
    %637 = vector.shape_cast %636 : vector<2xf32> to vector<2x1xf32>
    %638 = tpu.concatenate %616, %619, %622, %625, %628, %631, %634, %637 in 1 : vector<2x1xf32>, vector<2x1xf32>, vector<2x1xf32>, vector<2x1xf32>, vector<2x1xf32>, vector<2x1xf32>, vector<2x1xf32>, vector<2x1xf32> -> vector<2x8xf32>
    %639 = arith.addf %638, %43 : vector<2x8xf32>
    %cst_236 = arith.constant dense<0xFF800000> : vector<2xf32>
    %640 = vector.multi_reduction <maximumf>, %639, %cst_236 [1] : vector<2x8xf32> to vector<2xf32>
    %641 = vector.shape_cast %640 : vector<2xf32> to vector<2x1xf32>
    %642 = vector.broadcast %641 : vector<2x1xf32> to vector<2x8xf32>
    %643 = arith.subf %639, %642 : vector<2x8xf32>
    %644 = math.exp %643 : vector<2x8xf32>
    %cst_237 = arith.constant dense<0.000000e+00> : vector<2xf32>
    %645 = vector.multi_reduction <add>, %644, %cst_237 [1] : vector<2x8xf32> to vector<2xf32>
    %646 = vector.shape_cast %645 : vector<2xf32> to vector<2x1xf32>
    %647 = tpu.reciprocal %646 {approx = true} : vector<2x1xf32> -> vector<2x1xf32>
    %648 = vector.broadcast %647 : vector<2x1xf32> to vector<2x8xf32>
    %649 = arith.mulf %644, %648 : vector<2x8xf32>
    %650 = vector.extract_strided_slice %649 {offsets = [0, 0], sizes = [2, 1], strides = [1, 1]} : vector<2x8xf32> to vector<2x1xf32>
    %651 = vector.broadcast %650 : vector<2x1xf32> to vector<2x32xf32>
    %652 = arith.mulf %651, %81 : vector<2x32xf32>
    %653 = vector.extract_strided_slice %649 {offsets = [0, 1], sizes = [2, 1], strides = [1, 1]} : vector<2x8xf32> to vector<2x1xf32>
    %654 = vector.broadcast %653 : vector<2x1xf32> to vector<2x32xf32>
    %655 = arith.mulf %654, %118 : vector<2x32xf32>
    %656 = arith.addf %652, %655 : vector<2x32xf32>
    %657 = vector.extract_strided_slice %649 {offsets = [0, 2], sizes = [2, 1], strides = [1, 1]} : vector<2x8xf32> to vector<2x1xf32>
    %658 = vector.broadcast %657 : vector<2x1xf32> to vector<2x32xf32>
    %659 = arith.mulf %658, %155 : vector<2x32xf32>
    %660 = arith.addf %656, %659 : vector<2x32xf32>
    %661 = vector.extract_strided_slice %649 {offsets = [0, 3], sizes = [2, 1], strides = [1, 1]} : vector<2x8xf32> to vector<2x1xf32>
    %662 = vector.broadcast %661 : vector<2x1xf32> to vector<2x32xf32>
    %663 = arith.mulf %662, %192 : vector<2x32xf32>
    %664 = arith.addf %660, %663 : vector<2x32xf32>
    %665 = vector.extract_strided_slice %649 {offsets = [0, 4], sizes = [2, 1], strides = [1, 1]} : vector<2x8xf32> to vector<2x1xf32>
    %666 = vector.broadcast %665 : vector<2x1xf32> to vector<2x32xf32>
    %667 = arith.mulf %666, %229 : vector<2x32xf32>
    %668 = arith.addf %664, %667 : vector<2x32xf32>
    %669 = vector.extract_strided_slice %649 {offsets = [0, 5], sizes = [2, 1], strides = [1, 1]} : vector<2x8xf32> to vector<2x1xf32>
    %670 = vector.broadcast %669 : vector<2x1xf32> to vector<2x32xf32>
    %671 = arith.mulf %670, %266 : vector<2x32xf32>
    %672 = arith.addf %668, %671 : vector<2x32xf32>
    %673 = vector.extract_strided_slice %649 {offsets = [0, 6], sizes = [2, 1], strides = [1, 1]} : vector<2x8xf32> to vector<2x1xf32>
    %674 = vector.broadcast %673 : vector<2x1xf32> to vector<2x32xf32>
    %675 = arith.mulf %674, %303 : vector<2x32xf32>
    %676 = arith.addf %672, %675 : vector<2x32xf32>
    %677 = vector.extract_strided_slice %649 {offsets = [0, 7], sizes = [2, 1], strides = [1, 1]} : vector<2x8xf32> to vector<2x1xf32>
    %678 = vector.broadcast %677 : vector<2x1xf32> to vector<2x32xf32>
    %679 = arith.mulf %678, %340 : vector<2x32xf32>
    %680 = arith.addf %676, %679 : vector<2x32xf32>
    %681 = arith.truncf %680 : vector<2x32xf32> to vector<2x32xbf16>
    %cst_238 = arith.constant dense<0.000000e+00> : vector<2x32xf32>
    %682 = tpu.matmul %681, %40, %cst_238 {dimension_numbers = #tpu.dot_dimension_numbers<[1], [0], [0], [1], [0, 0, 1, 1], [], []>} : vector<2x32xbf16>, vector<32x32xbf16>, vector<2x32xf32> -> vector<2x32xf32>
    %683 = arith.truncf %613 : vector<2x32xf32> to vector<2x32xbf16>
    %cst_239 = arith.constant dense<0.000000e+00> : vector<2x32xf32>
    %684 = tpu.matmul %683, %41, %cst_239 {dimension_numbers = #tpu.dot_dimension_numbers<[1], [0], [0], [1], [0, 0, 1, 1], [], []>} : vector<2x32xbf16>, vector<32x32xbf16>, vector<2x32xf32> -> vector<2x32xf32>
    %685 = arith.addf %682, %684 : vector<2x32xf32>
    %686 = vector.broadcast %42 : vector<1x32xf32> to vector<2x32xf32>
    %687 = arith.addf %685, %686 : vector<2x32xf32>
    %688 = math.tanh %687 : vector<2x32xf32>
    %c2_240 = arith.constant 2 : index
    %c0_241 = arith.constant 0 : index
    %c0_242 = arith.constant 0 : index
    %689 = vector.load %arg13[%c2_240, %c0_241, %c0_242] : memref<8x2x32xf32, #tpu.memory_space<vmem>>, vector<1x2x32xf32>
    %690 = vector.shape_cast %689 : vector<1x2x32xf32> to vector<2x32xf32>
    %691 = vector.shape_cast %688 : vector<2x32xf32> to vector<1x2x32xf32>
    tpu.vector_store %arg13[%c2_240, %c0_241, %c0_242], %691 {strides = array<i32>} : memref<8x2x32xf32, #tpu.memory_space<vmem>>, vector<1x2x32xf32>,
    %c2_243 = arith.constant 2 : index
    %c0_244 = arith.constant 0 : index
    %c0_245 = arith.constant 0 : index
    %692 = vector.load %arg14[%c2_243, %c0_244, %c0_245] : memref<8x2x8xf32, #tpu.memory_space<vmem>>, vector<1x2x8xf32>
    %693 = vector.shape_cast %692 : vector<1x2x8xf32> to vector<2x8xf32>
    %694 = vector.shape_cast %649 : vector<2x8xf32> to vector<1x2x8xf32>
    tpu.vector_store %arg14[%c2_243, %c0_244, %c0_245], %694 {strides = array<i32>} : memref<8x2x8xf32, #tpu.memory_space<vmem>>, vector<1x2x8xf32>,
    %c3_246 = arith.constant 3 : index
    %c0_247 = arith.constant 0 : index
    %c0_248 = arith.constant 0 : index
    %695 = vector.load %arg2[%c3_246, %c0_247, %c0_248] : memref<8x2x32xbf16, #tpu.memory_space<vmem>>, vector<1x2x32xbf16>
    %696 = vector.shape_cast %695 : vector<1x2x32xbf16> to vector<2x32xbf16>
    %697 = arith.truncf %613 : vector<2x32xf32> to vector<2x32xbf16>
    %cst_249 = arith.constant dense<0.000000e+00> : vector<2x32xf32>
    %698 = tpu.matmul %696, %21, %cst_249 {dimension_numbers = #tpu.dot_dimension_numbers<[1], [0], [0], [1], [0, 0, 1, 1], [], []>} : vector<2x32xbf16>, vector<32x32xbf16>, vector<2x32xf32> -> vector<2x32xf32>
    %cst_250 = arith.constant dense<0.000000e+00> : vector<2x32xf32>
    %699 = tpu.matmul %696, %23, %cst_250 {dimension_numbers = #tpu.dot_dimension_numbers<[1], [0], [0], [1], [0, 0, 1, 1], [], []>} : vector<2x32xbf16>, vector<32x32xbf16>, vector<2x32xf32> -> vector<2x32xf32>
    %cst_251 = arith.constant dense<0.000000e+00> : vector<2x32xf32>
    %700 = tpu.matmul %696, %25, %cst_251 {dimension_numbers = #tpu.dot_dimension_numbers<[1], [0], [0], [1], [0, 0, 1, 1], [], []>} : vector<2x32xbf16>, vector<32x32xbf16>, vector<2x32xf32> -> vector<2x32xf32>
    %cst_252 = arith.constant dense<0.000000e+00> : vector<2x32xf32>
    %701 = tpu.matmul %697, %27, %cst_252 {dimension_numbers = #tpu.dot_dimension_numbers<[1], [0], [0], [1], [0, 0, 1, 1], [], []>} : vector<2x32xbf16>, vector<32x32xbf16>, vector<2x32xf32> -> vector<2x32xf32>
    %cst_253 = arith.constant dense<0.000000e+00> : vector<2x32xf32>
    %702 = tpu.matmul %697, %29, %cst_253 {dimension_numbers = #tpu.dot_dimension_numbers<[1], [0], [0], [1], [0, 0, 1, 1], [], []>} : vector<2x32xbf16>, vector<32x32xbf16>, vector<2x32xf32> -> vector<2x32xf32>
    %cst_254 = arith.constant dense<0.000000e+00> : vector<2x32xf32>
    %703 = tpu.matmul %697, %31, %cst_254 {dimension_numbers = #tpu.dot_dimension_numbers<[1], [0], [0], [1], [0, 0, 1, 1], [], []>} : vector<2x32xbf16>, vector<32x32xbf16>, vector<2x32xf32> -> vector<2x32xf32>
    %704 = arith.addf %698, %701 : vector<2x32xf32>
    %705 = vector.broadcast %33 : vector<1x32xf32> to vector<2x32xf32>
    %706 = arith.addf %704, %705 : vector<2x32xf32>
    %707 = arith.negf %706 : vector<2x32xf32>
    %708 = math.exp %707 : vector<2x32xf32>
    %cst_255 = arith.constant 1.000000e+00 : f32
    %709 = vector.broadcast %cst_255 : f32 to vector<2x32xf32>
    %710 = arith.addf %709, %708 : vector<2x32xf32>
    %711 = arith.divf %709, %710 : vector<2x32xf32>
    %712 = arith.addf %699, %702 : vector<2x32xf32>
    %713 = vector.broadcast %35 : vector<1x32xf32> to vector<2x32xf32>
    %714 = arith.addf %712, %713 : vector<2x32xf32>
    %715 = arith.negf %714 : vector<2x32xf32>
    %716 = math.exp %715 : vector<2x32xf32>
    %cst_256 = arith.constant 1.000000e+00 : f32
    %717 = vector.broadcast %cst_256 : f32 to vector<2x32xf32>
    %718 = arith.addf %717, %716 : vector<2x32xf32>
    %719 = arith.divf %717, %718 : vector<2x32xf32>
    %720 = vector.broadcast %37 : vector<1x32xf32> to vector<2x32xf32>
    %721 = arith.addf %700, %720 : vector<2x32xf32>
    %722 = vector.broadcast %39 : vector<1x32xf32> to vector<2x32xf32>
    %723 = arith.addf %703, %722 : vector<2x32xf32>
    %724 = arith.mulf %711, %723 : vector<2x32xf32>
    %725 = arith.addf %721, %724 : vector<2x32xf32>
    %726 = math.tanh %725 : vector<2x32xf32>
    %cst_257 = arith.constant 1.000000e+00 : f32
    %727 = vector.broadcast %cst_257 : f32 to vector<2x32xf32>
    %728 = arith.subf %727, %719 : vector<2x32xf32>
    %729 = arith.mulf %728, %726 : vector<2x32xf32>
    %730 = arith.mulf %719, %613 : vector<2x32xf32>
    %731 = arith.addf %729, %730 : vector<2x32xf32>
    %732 = arith.mulf %731, %81 : vector<2x32xf32>
    %cst_258 = arith.constant dense<0.000000e+00> : vector<2xf32>
    %733 = vector.multi_reduction <add>, %732, %cst_258 [1] : vector<2x32xf32> to vector<2xf32>
    %734 = vector.shape_cast %733 : vector<2xf32> to vector<2x1xf32>
    %735 = arith.mulf %731, %118 : vector<2x32xf32>
    %cst_259 = arith.constant dense<0.000000e+00> : vector<2xf32>
    %736 = vector.multi_reduction <add>, %735, %cst_259 [1] : vector<2x32xf32> to vector<2xf32>
    %737 = vector.shape_cast %736 : vector<2xf32> to vector<2x1xf32>
    %738 = arith.mulf %731, %155 : vector<2x32xf32>
    %cst_260 = arith.constant dense<0.000000e+00> : vector<2xf32>
    %739 = vector.multi_reduction <add>, %738, %cst_260 [1] : vector<2x32xf32> to vector<2xf32>
    %740 = vector.shape_cast %739 : vector<2xf32> to vector<2x1xf32>
    %741 = arith.mulf %731, %192 : vector<2x32xf32>
    %cst_261 = arith.constant dense<0.000000e+00> : vector<2xf32>
    %742 = vector.multi_reduction <add>, %741, %cst_261 [1] : vector<2x32xf32> to vector<2xf32>
    %743 = vector.shape_cast %742 : vector<2xf32> to vector<2x1xf32>
    %744 = arith.mulf %731, %229 : vector<2x32xf32>
    %cst_262 = arith.constant dense<0.000000e+00> : vector<2xf32>
    %745 = vector.multi_reduction <add>, %744, %cst_262 [1] : vector<2x32xf32> to vector<2xf32>
    %746 = vector.shape_cast %745 : vector<2xf32> to vector<2x1xf32>
    %747 = arith.mulf %731, %266 : vector<2x32xf32>
    %cst_263 = arith.constant dense<0.000000e+00> : vector<2xf32>
    %748 = vector.multi_reduction <add>, %747, %cst_263 [1] : vector<2x32xf32> to vector<2xf32>
    %749 = vector.shape_cast %748 : vector<2xf32> to vector<2x1xf32>
    %750 = arith.mulf %731, %303 : vector<2x32xf32>
    %cst_264 = arith.constant dense<0.000000e+00> : vector<2xf32>
    %751 = vector.multi_reduction <add>, %750, %cst_264 [1] : vector<2x32xf32> to vector<2xf32>
    %752 = vector.shape_cast %751 : vector<2xf32> to vector<2x1xf32>
    %753 = arith.mulf %731, %340 : vector<2x32xf32>
    %cst_265 = arith.constant dense<0.000000e+00> : vector<2xf32>
    %754 = vector.multi_reduction <add>, %753, %cst_265 [1] : vector<2x32xf32> to vector<2xf32>
    %755 = vector.shape_cast %754 : vector<2xf32> to vector<2x1xf32>
    %756 = tpu.concatenate %734, %737, %740, %743, %746, %749, %752, %755 in 1 : vector<2x1xf32>, vector<2x1xf32>, vector<2x1xf32>, vector<2x1xf32>, vector<2x1xf32>, vector<2x1xf32>, vector<2x1xf32>, vector<2x1xf32> -> vector<2x8xf32>
    %757 = arith.addf %756, %43 : vector<2x8xf32>
    %cst_266 = arith.constant dense<0xFF800000> : vector<2xf32>
    %758 = vector.multi_reduction <maximumf>, %757, %cst_266 [1] : vector<2x8xf32> to vector<2xf32>
    %759 = vector.shape_cast %758 : vector<2xf32> to vector<2x1xf32>
    %760 = vector.broadcast %759 : vector<2x1xf32> to vector<2x8xf32>
    %761 = arith.subf %757, %760 : vector<2x8xf32>
    %762 = math.exp %761 : vector<2x8xf32>
    %cst_267 = arith.constant dense<0.000000e+00> : vector<2xf32>
    %763 = vector.multi_reduction <add>, %762, %cst_267 [1] : vector<2x8xf32> to vector<2xf32>
    %764 = vector.shape_cast %763 : vector<2xf32> to vector<2x1xf32>
    %765 = tpu.reciprocal %764 {approx = true} : vector<2x1xf32> -> vector<2x1xf32>
    %766 = vector.broadcast %765 : vector<2x1xf32> to vector<2x8xf32>
    %767 = arith.mulf %762, %766 : vector<2x8xf32>
    %768 = vector.extract_strided_slice %767 {offsets = [0, 0], sizes = [2, 1], strides = [1, 1]} : vector<2x8xf32> to vector<2x1xf32>
    %769 = vector.broadcast %768 : vector<2x1xf32> to vector<2x32xf32>
    %770 = arith.mulf %769, %81 : vector<2x32xf32>
    %771 = vector.extract_strided_slice %767 {offsets = [0, 1], sizes = [2, 1], strides = [1, 1]} : vector<2x8xf32> to vector<2x1xf32>
    %772 = vector.broadcast %771 : vector<2x1xf32> to vector<2x32xf32>
    %773 = arith.mulf %772, %118 : vector<2x32xf32>
    %774 = arith.addf %770, %773 : vector<2x32xf32>
    %775 = vector.extract_strided_slice %767 {offsets = [0, 2], sizes = [2, 1], strides = [1, 1]} : vector<2x8xf32> to vector<2x1xf32>
    %776 = vector.broadcast %775 : vector<2x1xf32> to vector<2x32xf32>
    %777 = arith.mulf %776, %155 : vector<2x32xf32>
    %778 = arith.addf %774, %777 : vector<2x32xf32>
    %779 = vector.extract_strided_slice %767 {offsets = [0, 3], sizes = [2, 1], strides = [1, 1]} : vector<2x8xf32> to vector<2x1xf32>
    %780 = vector.broadcast %779 : vector<2x1xf32> to vector<2x32xf32>
    %781 = arith.mulf %780, %192 : vector<2x32xf32>
    %782 = arith.addf %778, %781 : vector<2x32xf32>
    %783 = vector.extract_strided_slice %767 {offsets = [0, 4], sizes = [2, 1], strides = [1, 1]} : vector<2x8xf32> to vector<2x1xf32>
    %784 = vector.broadcast %783 : vector<2x1xf32> to vector<2x32xf32>
    %785 = arith.mulf %784, %229 : vector<2x32xf32>
    %786 = arith.addf %782, %785 : vector<2x32xf32>
    %787 = vector.extract_strided_slice %767 {offsets = [0, 5], sizes = [2, 1], strides = [1, 1]} : vector<2x8xf32> to vector<2x1xf32>
    %788 = vector.broadcast %787 : vector<2x1xf32> to vector<2x32xf32>
    %789 = arith.mulf %788, %266 : vector<2x32xf32>
    %790 = arith.addf %786, %789 : vector<2x32xf32>
    %791 = vector.extract_strided_slice %767 {offsets = [0, 6], sizes = [2, 1], strides = [1, 1]} : vector<2x8xf32> to vector<2x1xf32>
    %792 = vector.broadcast %791 : vector<2x1xf32> to vector<2x32xf32>
    %793 = arith.mulf %792, %303 : vector<2x32xf32>
    %794 = arith.addf %790, %793 : vector<2x32xf32>
    %795 = vector.extract_strided_slice %767 {offsets = [0, 7], sizes = [2, 1], strides = [1, 1]} : vector<2x8xf32> to vector<2x1xf32>
    %796 = vector.broadcast %795 : vector<2x1xf32> to vector<2x32xf32>
    %797 = arith.mulf %796, %340 : vector<2x32xf32>
    %798 = arith.addf %794, %797 : vector<2x32xf32>
    %799 = arith.truncf %798 : vector<2x32xf32> to vector<2x32xbf16>
    %cst_268 = arith.constant dense<0.000000e+00> : vector<2x32xf32>
    %800 = tpu.matmul %799, %40, %cst_268 {dimension_numbers = #tpu.dot_dimension_numbers<[1], [0], [0], [1], [0, 0, 1, 1], [], []>} : vector<2x32xbf16>, vector<32x32xbf16>, vector<2x32xf32> -> vector<2x32xf32>
    %801 = arith.truncf %731 : vector<2x32xf32> to vector<2x32xbf16>
    %cst_269 = arith.constant dense<0.000000e+00> : vector<2x32xf32>
    %802 = tpu.matmul %801, %41, %cst_269 {dimension_numbers = #tpu.dot_dimension_numbers<[1], [0], [0], [1], [0, 0, 1, 1], [], []>} : vector<2x32xbf16>, vector<32x32xbf16>, vector<2x32xf32> -> vector<2x32xf32>
    %803 = arith.addf %800, %802 : vector<2x32xf32>
    %804 = vector.broadcast %42 : vector<1x32xf32> to vector<2x32xf32>
    %805 = arith.addf %803, %804 : vector<2x32xf32>
    %806 = math.tanh %805 : vector<2x32xf32>
    %c3_270 = arith.constant 3 : index
    %c0_271 = arith.constant 0 : index
    %c0_272 = arith.constant 0 : index
    %807 = vector.load %arg13[%c3_270, %c0_271, %c0_272] : memref<8x2x32xf32, #tpu.memory_space<vmem>>, vector<1x2x32xf32>
    %808 = vector.shape_cast %807 : vector<1x2x32xf32> to vector<2x32xf32>
    %809 = vector.shape_cast %806 : vector<2x32xf32> to vector<1x2x32xf32>
    tpu.vector_store %arg13[%c3_270, %c0_271, %c0_272], %809 {strides = array<i32>} : memref<8x2x32xf32, #tpu.memory_space<vmem>>, vector<1x2x32xf32>,
    %c3_273 = arith.constant 3 : index
    %c0_274 = arith.constant 0 : index
    %c0_275 = arith.constant 0 : index
    %810 = vector.load %arg14[%c3_273, %c0_274, %c0_275] : memref<8x2x8xf32, #tpu.memory_space<vmem>>, vector<1x2x8xf32>
    %811 = vector.shape_cast %810 : vector<1x2x8xf32> to vector<2x8xf32>
    %812 = vector.shape_cast %767 : vector<2x8xf32> to vector<1x2x8xf32>
    tpu.vector_store %arg14[%c3_273, %c0_274, %c0_275], %812 {strides = array<i32>} : memref<8x2x8xf32, #tpu.memory_space<vmem>>, vector<1x2x8xf32>,
    %c4_276 = arith.constant 4 : index
    %c0_277 = arith.constant 0 : index
    %c0_278 = arith.constant 0 : index
    %813 = vector.load %arg2[%c4_276, %c0_277, %c0_278] : memref<8x2x32xbf16, #tpu.memory_space<vmem>>, vector<1x2x32xbf16>
    %814 = vector.shape_cast %813 : vector<1x2x32xbf16> to vector<2x32xbf16>
    %815 = arith.truncf %731 : vector<2x32xf32> to vector<2x32xbf16>
    %cst_279 = arith.constant dense<0.000000e+00> : vector<2x32xf32>
    %816 = tpu.matmul %814, %21, %cst_279 {dimension_numbers = #tpu.dot_dimension_numbers<[1], [0], [0], [1], [0, 0, 1, 1], [], []>} : vector<2x32xbf16>, vector<32x32xbf16>, vector<2x32xf32> -> vector<2x32xf32>
    %cst_280 = arith.constant dense<0.000000e+00> : vector<2x32xf32>
    %817 = tpu.matmul %814, %23, %cst_280 {dimension_numbers = #tpu.dot_dimension_numbers<[1], [0], [0], [1], [0, 0, 1, 1], [], []>} : vector<2x32xbf16>, vector<32x32xbf16>, vector<2x32xf32> -> vector<2x32xf32>
    %cst_281 = arith.constant dense<0.000000e+00> : vector<2x32xf32>
    %818 = tpu.matmul %814, %25, %cst_281 {dimension_numbers = #tpu.dot_dimension_numbers<[1], [0], [0], [1], [0, 0, 1, 1], [], []>} : vector<2x32xbf16>, vector<32x32xbf16>, vector<2x32xf32> -> vector<2x32xf32>
    %cst_282 = arith.constant dense<0.000000e+00> : vector<2x32xf32>
    %819 = tpu.matmul %815, %27, %cst_282 {dimension_numbers = #tpu.dot_dimension_numbers<[1], [0], [0], [1], [0, 0, 1, 1], [], []>} : vector<2x32xbf16>, vector<32x32xbf16>, vector<2x32xf32> -> vector<2x32xf32>
    %cst_283 = arith.constant dense<0.000000e+00> : vector<2x32xf32>
    %820 = tpu.matmul %815, %29, %cst_283 {dimension_numbers = #tpu.dot_dimension_numbers<[1], [0], [0], [1], [0, 0, 1, 1], [], []>} : vector<2x32xbf16>, vector<32x32xbf16>, vector<2x32xf32> -> vector<2x32xf32>
    %cst_284 = arith.constant dense<0.000000e+00> : vector<2x32xf32>
    %821 = tpu.matmul %815, %31, %cst_284 {dimension_numbers = #tpu.dot_dimension_numbers<[1], [0], [0], [1], [0, 0, 1, 1], [], []>} : vector<2x32xbf16>, vector<32x32xbf16>, vector<2x32xf32> -> vector<2x32xf32>
    %822 = arith.addf %816, %819 : vector<2x32xf32>
    %823 = vector.broadcast %33 : vector<1x32xf32> to vector<2x32xf32>
    %824 = arith.addf %822, %823 : vector<2x32xf32>
    %825 = arith.negf %824 : vector<2x32xf32>
    %826 = math.exp %825 : vector<2x32xf32>
    %cst_285 = arith.constant 1.000000e+00 : f32
    %827 = vector.broadcast %cst_285 : f32 to vector<2x32xf32>
    %828 = arith.addf %827, %826 : vector<2x32xf32>
    %829 = arith.divf %827, %828 : vector<2x32xf32>
    %830 = arith.addf %817, %820 : vector<2x32xf32>
    %831 = vector.broadcast %35 : vector<1x32xf32> to vector<2x32xf32>
    %832 = arith.addf %830, %831 : vector<2x32xf32>
    %833 = arith.negf %832 : vector<2x32xf32>
    %834 = math.exp %833 : vector<2x32xf32>
    %cst_286 = arith.constant 1.000000e+00 : f32
    %835 = vector.broadcast %cst_286 : f32 to vector<2x32xf32>
    %836 = arith.addf %835, %834 : vector<2x32xf32>
    %837 = arith.divf %835, %836 : vector<2x32xf32>
    %838 = vector.broadcast %37 : vector<1x32xf32> to vector<2x32xf32>
    %839 = arith.addf %818, %838 : vector<2x32xf32>
    %840 = vector.broadcast %39 : vector<1x32xf32> to vector<2x32xf32>
    %841 = arith.addf %821, %840 : vector<2x32xf32>
    %842 = arith.mulf %829, %841 : vector<2x32xf32>
    %843 = arith.addf %839, %842 : vector<2x32xf32>
    %844 = math.tanh %843 : vector<2x32xf32>
    %cst_287 = arith.constant 1.000000e+00 : f32
    %845 = vector.broadcast %cst_287 : f32 to vector<2x32xf32>
    %846 = arith.subf %845, %837 : vector<2x32xf32>
    %847 = arith.mulf %846, %844 : vector<2x32xf32>
    %848 = arith.mulf %837, %731 : vector<2x32xf32>
    %849 = arith.addf %847, %848 : vector<2x32xf32>
    %850 = arith.mulf %849, %81 : vector<2x32xf32>
    %cst_288 = arith.constant dense<0.000000e+00> : vector<2xf32>
    %851 = vector.multi_reduction <add>, %850, %cst_288 [1] : vector<2x32xf32> to vector<2xf32>
    %852 = vector.shape_cast %851 : vector<2xf32> to vector<2x1xf32>
    %853 = arith.mulf %849, %118 : vector<2x32xf32>
    %cst_289 = arith.constant dense<0.000000e+00> : vector<2xf32>
    %854 = vector.multi_reduction <add>, %853, %cst_289 [1] : vector<2x32xf32> to vector<2xf32>
    %855 = vector.shape_cast %854 : vector<2xf32> to vector<2x1xf32>
    %856 = arith.mulf %849, %155 : vector<2x32xf32>
    %cst_290 = arith.constant dense<0.000000e+00> : vector<2xf32>
    %857 = vector.multi_reduction <add>, %856, %cst_290 [1] : vector<2x32xf32> to vector<2xf32>
    %858 = vector.shape_cast %857 : vector<2xf32> to vector<2x1xf32>
    %859 = arith.mulf %849, %192 : vector<2x32xf32>
    %cst_291 = arith.constant dense<0.000000e+00> : vector<2xf32>
    %860 = vector.multi_reduction <add>, %859, %cst_291 [1] : vector<2x32xf32> to vector<2xf32>
    %861 = vector.shape_cast %860 : vector<2xf32> to vector<2x1xf32>
    %862 = arith.mulf %849, %229 : vector<2x32xf32>
    %cst_292 = arith.constant dense<0.000000e+00> : vector<2xf32>
    %863 = vector.multi_reduction <add>, %862, %cst_292 [1] : vector<2x32xf32> to vector<2xf32>
    %864 = vector.shape_cast %863 : vector<2xf32> to vector<2x1xf32>
    %865 = arith.mulf %849, %266 : vector<2x32xf32>
    %cst_293 = arith.constant dense<0.000000e+00> : vector<2xf32>
    %866 = vector.multi_reduction <add>, %865, %cst_293 [1] : vector<2x32xf32> to vector<2xf32>
    %867 = vector.shape_cast %866 : vector<2xf32> to vector<2x1xf32>
    %868 = arith.mulf %849, %303 : vector<2x32xf32>
    %cst_294 = arith.constant dense<0.000000e+00> : vector<2xf32>
    %869 = vector.multi_reduction <add>, %868, %cst_294 [1] : vector<2x32xf32> to vector<2xf32>
    %870 = vector.shape_cast %869 : vector<2xf32> to vector<2x1xf32>
    %871 = arith.mulf %849, %340 : vector<2x32xf32>
    %cst_295 = arith.constant dense<0.000000e+00> : vector<2xf32>
    %872 = vector.multi_reduction <add>, %871, %cst_295 [1] : vector<2x32xf32> to vector<2xf32>
    %873 = vector.shape_cast %872 : vector<2xf32> to vector<2x1xf32>
    %874 = tpu.concatenate %852, %855, %858, %861, %864, %867, %870, %873 in 1 : vector<2x1xf32>, vector<2x1xf32>, vector<2x1xf32>, vector<2x1xf32>, vector<2x1xf32>, vector<2x1xf32>, vector<2x1xf32>, vector<2x1xf32> -> vector<2x8xf32>
    %875 = arith.addf %874, %43 : vector<2x8xf32>
    %cst_296 = arith.constant dense<0xFF800000> : vector<2xf32>
    %876 = vector.multi_reduction <maximumf>, %875, %cst_296 [1] : vector<2x8xf32> to vector<2xf32>
    %877 = vector.shape_cast %876 : vector<2xf32> to vector<2x1xf32>
    %878 = vector.broadcast %877 : vector<2x1xf32> to vector<2x8xf32>
    %879 = arith.subf %875, %878 : vector<2x8xf32>
    %880 = math.exp %879 : vector<2x8xf32>
    %cst_297 = arith.constant dense<0.000000e+00> : vector<2xf32>
    %881 = vector.multi_reduction <add>, %880, %cst_297 [1] : vector<2x8xf32> to vector<2xf32>
    %882 = vector.shape_cast %881 : vector<2xf32> to vector<2x1xf32>
    %883 = tpu.reciprocal %882 {approx = true} : vector<2x1xf32> -> vector<2x1xf32>
    %884 = vector.broadcast %883 : vector<2x1xf32> to vector<2x8xf32>
    %885 = arith.mulf %880, %884 : vector<2x8xf32>
    %886 = vector.extract_strided_slice %885 {offsets = [0, 0], sizes = [2, 1], strides = [1, 1]} : vector<2x8xf32> to vector<2x1xf32>
    %887 = vector.broadcast %886 : vector<2x1xf32> to vector<2x32xf32>
    %888 = arith.mulf %887, %81 : vector<2x32xf32>
    %889 = vector.extract_strided_slice %885 {offsets = [0, 1], sizes = [2, 1], strides = [1, 1]} : vector<2x8xf32> to vector<2x1xf32>
    %890 = vector.broadcast %889 : vector<2x1xf32> to vector<2x32xf32>
    %891 = arith.mulf %890, %118 : vector<2x32xf32>
    %892 = arith.addf %888, %891 : vector<2x32xf32>
    %893 = vector.extract_strided_slice %885 {offsets = [0, 2], sizes = [2, 1], strides = [1, 1]} : vector<2x8xf32> to vector<2x1xf32>
    %894 = vector.broadcast %893 : vector<2x1xf32> to vector<2x32xf32>
    %895 = arith.mulf %894, %155 : vector<2x32xf32>
    %896 = arith.addf %892, %895 : vector<2x32xf32>
    %897 = vector.extract_strided_slice %885 {offsets = [0, 3], sizes = [2, 1], strides = [1, 1]} : vector<2x8xf32> to vector<2x1xf32>
    %898 = vector.broadcast %897 : vector<2x1xf32> to vector<2x32xf32>
    %899 = arith.mulf %898, %192 : vector<2x32xf32>
    %900 = arith.addf %896, %899 : vector<2x32xf32>
    %901 = vector.extract_strided_slice %885 {offsets = [0, 4], sizes = [2, 1], strides = [1, 1]} : vector<2x8xf32> to vector<2x1xf32>
    %902 = vector.broadcast %901 : vector<2x1xf32> to vector<2x32xf32>
    %903 = arith.mulf %902, %229 : vector<2x32xf32>
    %904 = arith.addf %900, %903 : vector<2x32xf32>
    %905 = vector.extract_strided_slice %885 {offsets = [0, 5], sizes = [2, 1], strides = [1, 1]} : vector<2x8xf32> to vector<2x1xf32>
    %906 = vector.broadcast %905 : vector<2x1xf32> to vector<2x32xf32>
    %907 = arith.mulf %906, %266 : vector<2x32xf32>
    %908 = arith.addf %904, %907 : vector<2x32xf32>
    %909 = vector.extract_strided_slice %885 {offsets = [0, 6], sizes = [2, 1], strides = [1, 1]} : vector<2x8xf32> to vector<2x1xf32>
    %910 = vector.broadcast %909 : vector<2x1xf32> to vector<2x32xf32>
    %911 = arith.mulf %910, %303 : vector<2x32xf32>
    %912 = arith.addf %908, %911 : vector<2x32xf32>
    %913 = vector.extract_strided_slice %885 {offsets = [0, 7], sizes = [2, 1], strides = [1, 1]} : vector<2x8xf32> to vector<2x1xf32>
    %914 = vector.broadcast %913 : vector<2x1xf32> to vector<2x32xf32>
    %915 = arith.mulf %914, %340 : vector<2x32xf32>
    %916 = arith.addf %912, %915 : vector<2x32xf32>
    %917 = arith.truncf %916 : vector<2x32xf32> to vector<2x32xbf16>
    %cst_298 = arith.constant dense<0.000000e+00> : vector<2x32xf32>
    %918 = tpu.matmul %917, %40, %cst_298 {dimension_numbers = #tpu.dot_dimension_numbers<[1], [0], [0], [1], [0, 0, 1, 1], [], []>} : vector<2x32xbf16>, vector<32x32xbf16>, vector<2x32xf32> -> vector<2x32xf32>
    %919 = arith.truncf %849 : vector<2x32xf32> to vector<2x32xbf16>
    %cst_299 = arith.constant dense<0.000000e+00> : vector<2x32xf32>
    %920 = tpu.matmul %919, %41, %cst_299 {dimension_numbers = #tpu.dot_dimension_numbers<[1], [0], [0], [1], [0, 0, 1, 1], [], []>} : vector<2x32xbf16>, vector<32x32xbf16>, vector<2x32xf32> -> vector<2x32xf32>
    %921 = arith.addf %918, %920 : vector<2x32xf32>
    %922 = vector.broadcast %42 : vector<1x32xf32> to vector<2x32xf32>
    %923 = arith.addf %921, %922 : vector<2x32xf32>
    %924 = math.tanh %923 : vector<2x32xf32>
    %c4_300 = arith.constant 4 : index
    %c0_301 = arith.constant 0 : index
    %c0_302 = arith.constant 0 : index
    %925 = vector.load %arg13[%c4_300, %c0_301, %c0_302] : memref<8x2x32xf32, #tpu.memory_space<vmem>>, vector<1x2x32xf32>
    %926 = vector.shape_cast %925 : vector<1x2x32xf32> to vector<2x32xf32>
    %927 = vector.shape_cast %924 : vector<2x32xf32> to vector<1x2x32xf32>
    tpu.vector_store %arg13[%c4_300, %c0_301, %c0_302], %927 {strides = array<i32>} : memref<8x2x32xf32, #tpu.memory_space<vmem>>, vector<1x2x32xf32>,
    %c4_303 = arith.constant 4 : index
    %c0_304 = arith.constant 0 : index
    %c0_305 = arith.constant 0 : index
    %928 = vector.load %arg14[%c4_303, %c0_304, %c0_305] : memref<8x2x8xf32, #tpu.memory_space<vmem>>, vector<1x2x8xf32>
    %929 = vector.shape_cast %928 : vector<1x2x8xf32> to vector<2x8xf32>
    %930 = vector.shape_cast %885 : vector<2x8xf32> to vector<1x2x8xf32>
    tpu.vector_store %arg14[%c4_303, %c0_304, %c0_305], %930 {strides = array<i32>} : memref<8x2x8xf32, #tpu.memory_space<vmem>>, vector<1x2x8xf32>,
    %c5_306 = arith.constant 5 : index
    %c0_307 = arith.constant 0 : index
    %c0_308 = arith.constant 0 : index
    %931 = vector.load %arg2[%c5_306, %c0_307, %c0_308] : memref<8x2x32xbf16, #tpu.memory_space<vmem>>, vector<1x2x32xbf16>
    %932 = vector.shape_cast %931 : vector<1x2x32xbf16> to vector<2x32xbf16>
    %933 = arith.truncf %849 : vector<2x32xf32> to vector<2x32xbf16>
    %cst_309 = arith.constant dense<0.000000e+00> : vector<2x32xf32>
    %934 = tpu.matmul %932, %21, %cst_309 {dimension_numbers = #tpu.dot_dimension_numbers<[1], [0], [0], [1], [0, 0, 1, 1], [], []>} : vector<2x32xbf16>, vector<32x32xbf16>, vector<2x32xf32> -> vector<2x32xf32>
    %cst_310 = arith.constant dense<0.000000e+00> : vector<2x32xf32>
    %935 = tpu.matmul %932, %23, %cst_310 {dimension_numbers = #tpu.dot_dimension_numbers<[1], [0], [0], [1], [0, 0, 1, 1], [], []>} : vector<2x32xbf16>, vector<32x32xbf16>, vector<2x32xf32> -> vector<2x32xf32>
    %cst_311 = arith.constant dense<0.000000e+00> : vector<2x32xf32>
    %936 = tpu.matmul %932, %25, %cst_311 {dimension_numbers = #tpu.dot_dimension_numbers<[1], [0], [0], [1], [0, 0, 1, 1], [], []>} : vector<2x32xbf16>, vector<32x32xbf16>, vector<2x32xf32> -> vector<2x32xf32>
    %cst_312 = arith.constant dense<0.000000e+00> : vector<2x32xf32>
    %937 = tpu.matmul %933, %27, %cst_312 {dimension_numbers = #tpu.dot_dimension_numbers<[1], [0], [0], [1], [0, 0, 1, 1], [], []>} : vector<2x32xbf16>, vector<32x32xbf16>, vector<2x32xf32> -> vector<2x32xf32>
    %cst_313 = arith.constant dense<0.000000e+00> : vector<2x32xf32>
    %938 = tpu.matmul %933, %29, %cst_313 {dimension_numbers = #tpu.dot_dimension_numbers<[1], [0], [0], [1], [0, 0, 1, 1], [], []>} : vector<2x32xbf16>, vector<32x32xbf16>, vector<2x32xf32> -> vector<2x32xf32>
    %cst_314 = arith.constant dense<0.000000e+00> : vector<2x32xf32>
    %939 = tpu.matmul %933, %31, %cst_314 {dimension_numbers = #tpu.dot_dimension_numbers<[1], [0], [0], [1], [0, 0, 1, 1], [], []>} : vector<2x32xbf16>, vector<32x32xbf16>, vector<2x32xf32> -> vector<2x32xf32>
    %940 = arith.addf %934, %937 : vector<2x32xf32>
    %941 = vector.broadcast %33 : vector<1x32xf32> to vector<2x32xf32>
    %942 = arith.addf %940, %941 : vector<2x32xf32>
    %943 = arith.negf %942 : vector<2x32xf32>
    %944 = math.exp %943 : vector<2x32xf32>
    %cst_315 = arith.constant 1.000000e+00 : f32
    %945 = vector.broadcast %cst_315 : f32 to vector<2x32xf32>
    %946 = arith.addf %945, %944 : vector<2x32xf32>
    %947 = arith.divf %945, %946 : vector<2x32xf32>
    %948 = arith.addf %935, %938 : vector<2x32xf32>
    %949 = vector.broadcast %35 : vector<1x32xf32> to vector<2x32xf32>
    %950 = arith.addf %948, %949 : vector<2x32xf32>
    %951 = arith.negf %950 : vector<2x32xf32>
    %952 = math.exp %951 : vector<2x32xf32>
    %cst_316 = arith.constant 1.000000e+00 : f32
    %953 = vector.broadcast %cst_316 : f32 to vector<2x32xf32>
    %954 = arith.addf %953, %952 : vector<2x32xf32>
    %955 = arith.divf %953, %954 : vector<2x32xf32>
    %956 = vector.broadcast %37 : vector<1x32xf32> to vector<2x32xf32>
    %957 = arith.addf %936, %956 : vector<2x32xf32>
    %958 = vector.broadcast %39 : vector<1x32xf32> to vector<2x32xf32>
    %959 = arith.addf %939, %958 : vector<2x32xf32>
    %960 = arith.mulf %947, %959 : vector<2x32xf32>
    %961 = arith.addf %957, %960 : vector<2x32xf32>
    %962 = math.tanh %961 : vector<2x32xf32>
    %cst_317 = arith.constant 1.000000e+00 : f32
    %963 = vector.broadcast %cst_317 : f32 to vector<2x32xf32>
    %964 = arith.subf %963, %955 : vector<2x32xf32>
    %965 = arith.mulf %964, %962 : vector<2x32xf32>
    %966 = arith.mulf %955, %849 : vector<2x32xf32>
    %967 = arith.addf %965, %966 : vector<2x32xf32>
    %968 = arith.mulf %967, %81 : vector<2x32xf32>
    %cst_318 = arith.constant dense<0.000000e+00> : vector<2xf32>
    %969 = vector.multi_reduction <add>, %968, %cst_318 [1] : vector<2x32xf32> to vector<2xf32>
    %970 = vector.shape_cast %969 : vector<2xf32> to vector<2x1xf32>
    %971 = arith.mulf %967, %118 : vector<2x32xf32>
    %cst_319 = arith.constant dense<0.000000e+00> : vector<2xf32>
    %972 = vector.multi_reduction <add>, %971, %cst_319 [1] : vector<2x32xf32> to vector<2xf32>
    %973 = vector.shape_cast %972 : vector<2xf32> to vector<2x1xf32>
    %974 = arith.mulf %967, %155 : vector<2x32xf32>
    %cst_320 = arith.constant dense<0.000000e+00> : vector<2xf32>
    %975 = vector.multi_reduction <add>, %974, %cst_320 [1] : vector<2x32xf32> to vector<2xf32>
    %976 = vector.shape_cast %975 : vector<2xf32> to vector<2x1xf32>
    %977 = arith.mulf %967, %192 : vector<2x32xf32>
    %cst_321 = arith.constant dense<0.000000e+00> : vector<2xf32>
    %978 = vector.multi_reduction <add>, %977, %cst_321 [1] : vector<2x32xf32> to vector<2xf32>
    %979 = vector.shape_cast %978 : vector<2xf32> to vector<2x1xf32>
    %980 = arith.mulf %967, %229 : vector<2x32xf32>
    %cst_322 = arith.constant dense<0.000000e+00> : vector<2xf32>
    %981 = vector.multi_reduction <add>, %980, %cst_322 [1] : vector<2x32xf32> to vector<2xf32>
    %982 = vector.shape_cast %981 : vector<2xf32> to vector<2x1xf32>
    %983 = arith.mulf %967, %266 : vector<2x32xf32>
    %cst_323 = arith.constant dense<0.000000e+00> : vector<2xf32>
    %984 = vector.multi_reduction <add>, %983, %cst_323 [1] : vector<2x32xf32> to vector<2xf32>
    %985 = vector.shape_cast %984 : vector<2xf32> to vector<2x1xf32>
    %986 = arith.mulf %967, %303 : vector<2x32xf32>
    %cst_324 = arith.constant dense<0.000000e+00> : vector<2xf32>
    %987 = vector.multi_reduction <add>, %986, %cst_324 [1] : vector<2x32xf32> to vector<2xf32>
    %988 = vector.shape_cast %987 : vector<2xf32> to vector<2x1xf32>
    %989 = arith.mulf %967, %340 : vector<2x32xf32>
    %cst_325 = arith.constant dense<0.000000e+00> : vector<2xf32>
    %990 = vector.multi_reduction <add>, %989, %cst_325 [1] : vector<2x32xf32> to vector<2xf32>
    %991 = vector.shape_cast %990 : vector<2xf32> to vector<2x1xf32>
    %992 = tpu.concatenate %970, %973, %976, %979, %982, %985, %988, %991 in 1 : vector<2x1xf32>, vector<2x1xf32>, vector<2x1xf32>, vector<2x1xf32>, vector<2x1xf32>, vector<2x1xf32>, vector<2x1xf32>, vector<2x1xf32> -> vector<2x8xf32>
    %993 = arith.addf %992, %43 : vector<2x8xf32>
    %cst_326 = arith.constant dense<0xFF800000> : vector<2xf32>
    %994 = vector.multi_reduction <maximumf>, %993, %cst_326 [1] : vector<2x8xf32> to vector<2xf32>
    %995 = vector.shape_cast %994 : vector<2xf32> to vector<2x1xf32>
    %996 = vector.broadcast %995 : vector<2x1xf32> to vector<2x8xf32>
    %997 = arith.subf %993, %996 : vector<2x8xf32>
    %998 = math.exp %997 : vector<2x8xf32>
    %cst_327 = arith.constant dense<0.000000e+00> : vector<2xf32>
    %999 = vector.multi_reduction <add>, %998, %cst_327 [1] : vector<2x8xf32> to vector<2xf32>
    %1000 = vector.shape_cast %999 : vector<2xf32> to vector<2x1xf32>
    %1001 = tpu.reciprocal %1000 {approx = true} : vector<2x1xf32> -> vector<2x1xf32>
    %1002 = vector.broadcast %1001 : vector<2x1xf32> to vector<2x8xf32>
    %1003 = arith.mulf %998, %1002 : vector<2x8xf32>
    %1004 = vector.extract_strided_slice %1003 {offsets = [0, 0], sizes = [2, 1], strides = [1, 1]} : vector<2x8xf32> to vector<2x1xf32>
    %1005 = vector.broadcast %1004 : vector<2x1xf32> to vector<2x32xf32>
    %1006 = arith.mulf %1005, %81 : vector<2x32xf32>
    %1007 = vector.extract_strided_slice %1003 {offsets = [0, 1], sizes = [2, 1], strides = [1, 1]} : vector<2x8xf32> to vector<2x1xf32>
    %1008 = vector.broadcast %1007 : vector<2x1xf32> to vector<2x32xf32>
    %1009 = arith.mulf %1008, %118 : vector<2x32xf32>
    %1010 = arith.addf %1006, %1009 : vector<2x32xf32>
    %1011 = vector.extract_strided_slice %1003 {offsets = [0, 2], sizes = [2, 1], strides = [1, 1]} : vector<2x8xf32> to vector<2x1xf32>
    %1012 = vector.broadcast %1011 : vector<2x1xf32> to vector<2x32xf32>
    %1013 = arith.mulf %1012, %155 : vector<2x32xf32>
    %1014 = arith.addf %1010, %1013 : vector<2x32xf32>
    %1015 = vector.extract_strided_slice %1003 {offsets = [0, 3], sizes = [2, 1], strides = [1, 1]} : vector<2x8xf32> to vector<2x1xf32>
    %1016 = vector.broadcast %1015 : vector<2x1xf32> to vector<2x32xf32>
    %1017 = arith.mulf %1016, %192 : vector<2x32xf32>
    %1018 = arith.addf %1014, %1017 : vector<2x32xf32>
    %1019 = vector.extract_strided_slice %1003 {offsets = [0, 4], sizes = [2, 1], strides = [1, 1]} : vector<2x8xf32> to vector<2x1xf32>
    %1020 = vector.broadcast %1019 : vector<2x1xf32> to vector<2x32xf32>
    %1021 = arith.mulf %1020, %229 : vector<2x32xf32>
    %1022 = arith.addf %1018, %1021 : vector<2x32xf32>
    %1023 = vector.extract_strided_slice %1003 {offsets = [0, 5], sizes = [2, 1], strides = [1, 1]} : vector<2x8xf32> to vector<2x1xf32>
    %1024 = vector.broadcast %1023 : vector<2x1xf32> to vector<2x32xf32>
    %1025 = arith.mulf %1024, %266 : vector<2x32xf32>
    %1026 = arith.addf %1022, %1025 : vector<2x32xf32>
    %1027 = vector.extract_strided_slice %1003 {offsets = [0, 6], sizes = [2, 1], strides = [1, 1]} : vector<2x8xf32> to vector<2x1xf32>
    %1028 = vector.broadcast %1027 : vector<2x1xf32> to vector<2x32xf32>
    %1029 = arith.mulf %1028, %303 : vector<2x32xf32>
    %1030 = arith.addf %1026, %1029 : vector<2x32xf32>
    %1031 = vector.extract_strided_slice %1003 {offsets = [0, 7], sizes = [2, 1], strides = [1, 1]} : vector<2x8xf32> to vector<2x1xf32>
    %1032 = vector.broadcast %1031 : vector<2x1xf32> to vector<2x32xf32>
    %1033 = arith.mulf %1032, %340 : vector<2x32xf32>
    %1034 = arith.addf %1030, %1033 : vector<2x32xf32>
    %1035 = arith.truncf %1034 : vector<2x32xf32> to vector<2x32xbf16>
    %cst_328 = arith.constant dense<0.000000e+00> : vector<2x32xf32>
    %1036 = tpu.matmul %1035, %40, %cst_328 {dimension_numbers = #tpu.dot_dimension_numbers<[1], [0], [0], [1], [0, 0, 1, 1], [], []>} : vector<2x32xbf16>, vector<32x32xbf16>, vector<2x32xf32> -> vector<2x32xf32>
    %1037 = arith.truncf %967 : vector<2x32xf32> to vector<2x32xbf16>
    %cst_329 = arith.constant dense<0.000000e+00> : vector<2x32xf32>
    %1038 = tpu.matmul %1037, %41, %cst_329 {dimension_numbers = #tpu.dot_dimension_numbers<[1], [0], [0], [1], [0, 0, 1, 1], [], []>} : vector<2x32xbf16>, vector<32x32xbf16>, vector<2x32xf32> -> vector<2x32xf32>
    %1039 = arith.addf %1036, %1038 : vector<2x32xf32>
    %1040 = vector.broadcast %42 : vector<1x32xf32> to vector<2x32xf32>
    %1041 = arith.addf %1039, %1040 : vector<2x32xf32>
    %1042 = math.tanh %1041 : vector<2x32xf32>
    %c5_330 = arith.constant 5 : index
    %c0_331 = arith.constant 0 : index
    %c0_332 = arith.constant 0 : index
    %1043 = vector.load %arg13[%c5_330, %c0_331, %c0_332] : memref<8x2x32xf32, #tpu.memory_space<vmem>>, vector<1x2x32xf32>
    %1044 = vector.shape_cast %1043 : vector<1x2x32xf32> to vector<2x32xf32>
    %1045 = vector.shape_cast %1042 : vector<2x32xf32> to vector<1x2x32xf32>
    tpu.vector_store %arg13[%c5_330, %c0_331, %c0_332], %1045 {strides = array<i32>} : memref<8x2x32xf32, #tpu.memory_space<vmem>>, vector<1x2x32xf32>,
    %c5_333 = arith.constant 5 : index
    %c0_334 = arith.constant 0 : index
    %c0_335 = arith.constant 0 : index
    %1046 = vector.load %arg14[%c5_333, %c0_334, %c0_335] : memref<8x2x8xf32, #tpu.memory_space<vmem>>, vector<1x2x8xf32>
    %1047 = vector.shape_cast %1046 : vector<1x2x8xf32> to vector<2x8xf32>
    %1048 = vector.shape_cast %1003 : vector<2x8xf32> to vector<1x2x8xf32>
    tpu.vector_store %arg14[%c5_333, %c0_334, %c0_335], %1048 {strides = array<i32>} : memref<8x2x8xf32, #tpu.memory_space<vmem>>, vector<1x2x8xf32>,
    %c6_336 = arith.constant 6 : index
    %c0_337 = arith.constant 0 : index
    %c0_338 = arith.constant 0 : index
    %1049 = vector.load %arg2[%c6_336, %c0_337, %c0_338] : memref<8x2x32xbf16, #tpu.memory_space<vmem>>, vector<1x2x32xbf16>
    %1050 = vector.shape_cast %1049 : vector<1x2x32xbf16> to vector<2x32xbf16>
    %1051 = arith.truncf %967 : vector<2x32xf32> to vector<2x32xbf16>
    %cst_339 = arith.constant dense<0.000000e+00> : vector<2x32xf32>
    %1052 = tpu.matmul %1050, %21, %cst_339 {dimension_numbers = #tpu.dot_dimension_numbers<[1], [0], [0], [1], [0, 0, 1, 1], [], []>} : vector<2x32xbf16>, vector<32x32xbf16>, vector<2x32xf32> -> vector<2x32xf32>
    %cst_340 = arith.constant dense<0.000000e+00> : vector<2x32xf32>
    %1053 = tpu.matmul %1050, %23, %cst_340 {dimension_numbers = #tpu.dot_dimension_numbers<[1], [0], [0], [1], [0, 0, 1, 1], [], []>} : vector<2x32xbf16>, vector<32x32xbf16>, vector<2x32xf32> -> vector<2x32xf32>
    %cst_341 = arith.constant dense<0.000000e+00> : vector<2x32xf32>
    %1054 = tpu.matmul %1050, %25, %cst_341 {dimension_numbers = #tpu.dot_dimension_numbers<[1], [0], [0], [1], [0, 0, 1, 1], [], []>} : vector<2x32xbf16>, vector<32x32xbf16>, vector<2x32xf32> -> vector<2x32xf32>
    %cst_342 = arith.constant dense<0.000000e+00> : vector<2x32xf32>
    %1055 = tpu.matmul %1051, %27, %cst_342 {dimension_numbers = #tpu.dot_dimension_numbers<[1], [0], [0], [1], [0, 0, 1, 1], [], []>} : vector<2x32xbf16>, vector<32x32xbf16>, vector<2x32xf32> -> vector<2x32xf32>
    %cst_343 = arith.constant dense<0.000000e+00> : vector<2x32xf32>
    %1056 = tpu.matmul %1051, %29, %cst_343 {dimension_numbers = #tpu.dot_dimension_numbers<[1], [0], [0], [1], [0, 0, 1, 1], [], []>} : vector<2x32xbf16>, vector<32x32xbf16>, vector<2x32xf32> -> vector<2x32xf32>
    %cst_344 = arith.constant dense<0.000000e+00> : vector<2x32xf32>
    %1057 = tpu.matmul %1051, %31, %cst_344 {dimension_numbers = #tpu.dot_dimension_numbers<[1], [0], [0], [1], [0, 0, 1, 1], [], []>} : vector<2x32xbf16>, vector<32x32xbf16>, vector<2x32xf32> -> vector<2x32xf32>
    %1058 = arith.addf %1052, %1055 : vector<2x32xf32>
    %1059 = vector.broadcast %33 : vector<1x32xf32> to vector<2x32xf32>
    %1060 = arith.addf %1058, %1059 : vector<2x32xf32>
    %1061 = arith.negf %1060 : vector<2x32xf32>
    %1062 = math.exp %1061 : vector<2x32xf32>
    %cst_345 = arith.constant 1.000000e+00 : f32
    %1063 = vector.broadcast %cst_345 : f32 to vector<2x32xf32>
    %1064 = arith.addf %1063, %1062 : vector<2x32xf32>
    %1065 = arith.divf %1063, %1064 : vector<2x32xf32>
    %1066 = arith.addf %1053, %1056 : vector<2x32xf32>
    %1067 = vector.broadcast %35 : vector<1x32xf32> to vector<2x32xf32>
    %1068 = arith.addf %1066, %1067 : vector<2x32xf32>
    %1069 = arith.negf %1068 : vector<2x32xf32>
    %1070 = math.exp %1069 : vector<2x32xf32>
    %cst_346 = arith.constant 1.000000e+00 : f32
    %1071 = vector.broadcast %cst_346 : f32 to vector<2x32xf32>
    %1072 = arith.addf %1071, %1070 : vector<2x32xf32>
    %1073 = arith.divf %1071, %1072 : vector<2x32xf32>
    %1074 = vector.broadcast %37 : vector<1x32xf32> to vector<2x32xf32>
    %1075 = arith.addf %1054, %1074 : vector<2x32xf32>
    %1076 = vector.broadcast %39 : vector<1x32xf32> to vector<2x32xf32>
    %1077 = arith.addf %1057, %1076 : vector<2x32xf32>
    %1078 = arith.mulf %1065, %1077 : vector<2x32xf32>
    %1079 = arith.addf %1075, %1078 : vector<2x32xf32>
    %1080 = math.tanh %1079 : vector<2x32xf32>
    %cst_347 = arith.constant 1.000000e+00 : f32
    %1081 = vector.broadcast %cst_347 : f32 to vector<2x32xf32>
    %1082 = arith.subf %1081, %1073 : vector<2x32xf32>
    %1083 = arith.mulf %1082, %1080 : vector<2x32xf32>
    %1084 = arith.mulf %1073, %967 : vector<2x32xf32>
    %1085 = arith.addf %1083, %1084 : vector<2x32xf32>
    %1086 = arith.mulf %1085, %81 : vector<2x32xf32>
    %cst_348 = arith.constant dense<0.000000e+00> : vector<2xf32>
    %1087 = vector.multi_reduction <add>, %1086, %cst_348 [1] : vector<2x32xf32> to vector<2xf32>
    %1088 = vector.shape_cast %1087 : vector<2xf32> to vector<2x1xf32>
    %1089 = arith.mulf %1085, %118 : vector<2x32xf32>
    %cst_349 = arith.constant dense<0.000000e+00> : vector<2xf32>
    %1090 = vector.multi_reduction <add>, %1089, %cst_349 [1] : vector<2x32xf32> to vector<2xf32>
    %1091 = vector.shape_cast %1090 : vector<2xf32> to vector<2x1xf32>
    %1092 = arith.mulf %1085, %155 : vector<2x32xf32>
    %cst_350 = arith.constant dense<0.000000e+00> : vector<2xf32>
    %1093 = vector.multi_reduction <add>, %1092, %cst_350 [1] : vector<2x32xf32> to vector<2xf32>
    %1094 = vector.shape_cast %1093 : vector<2xf32> to vector<2x1xf32>
    %1095 = arith.mulf %1085, %192 : vector<2x32xf32>
    %cst_351 = arith.constant dense<0.000000e+00> : vector<2xf32>
    %1096 = vector.multi_reduction <add>, %1095, %cst_351 [1] : vector<2x32xf32> to vector<2xf32>
    %1097 = vector.shape_cast %1096 : vector<2xf32> to vector<2x1xf32>
    %1098 = arith.mulf %1085, %229 : vector<2x32xf32>
    %cst_352 = arith.constant dense<0.000000e+00> : vector<2xf32>
    %1099 = vector.multi_reduction <add>, %1098, %cst_352 [1] : vector<2x32xf32> to vector<2xf32>
    %1100 = vector.shape_cast %1099 : vector<2xf32> to vector<2x1xf32>
    %1101 = arith.mulf %1085, %266 : vector<2x32xf32>
    %cst_353 = arith.constant dense<0.000000e+00> : vector<2xf32>
    %1102 = vector.multi_reduction <add>, %1101, %cst_353 [1] : vector<2x32xf32> to vector<2xf32>
    %1103 = vector.shape_cast %1102 : vector<2xf32> to vector<2x1xf32>
    %1104 = arith.mulf %1085, %303 : vector<2x32xf32>
    %cst_354 = arith.constant dense<0.000000e+00> : vector<2xf32>
    %1105 = vector.multi_reduction <add>, %1104, %cst_354 [1] : vector<2x32xf32> to vector<2xf32>
    %1106 = vector.shape_cast %1105 : vector<2xf32> to vector<2x1xf32>
    %1107 = arith.mulf %1085, %340 : vector<2x32xf32>
    %cst_355 = arith.constant dense<0.000000e+00> : vector<2xf32>
    %1108 = vector.multi_reduction <add>, %1107, %cst_355 [1] : vector<2x32xf32> to vector<2xf32>
    %1109 = vector.shape_cast %1108 : vector<2xf32> to vector<2x1xf32>
    %1110 = tpu.concatenate %1088, %1091, %1094, %1097, %1100, %1103, %1106, %1109 in 1 : vector<2x1xf32>, vector<2x1xf32>, vector<2x1xf32>, vector<2x1xf32>, vector<2x1xf32>, vector<2x1xf32>, vector<2x1xf32>, vector<2x1xf32> -> vector<2x8xf32>
    %1111 = arith.addf %1110, %43 : vector<2x8xf32>
    %cst_356 = arith.constant dense<0xFF800000> : vector<2xf32>
    %1112 = vector.multi_reduction <maximumf>, %1111, %cst_356 [1] : vector<2x8xf32> to vector<2xf32>
    %1113 = vector.shape_cast %1112 : vector<2xf32> to vector<2x1xf32>
    %1114 = vector.broadcast %1113 : vector<2x1xf32> to vector<2x8xf32>
    %1115 = arith.subf %1111, %1114 : vector<2x8xf32>
    %1116 = math.exp %1115 : vector<2x8xf32>
    %cst_357 = arith.constant dense<0.000000e+00> : vector<2xf32>
    %1117 = vector.multi_reduction <add>, %1116, %cst_357 [1] : vector<2x8xf32> to vector<2xf32>
    %1118 = vector.shape_cast %1117 : vector<2xf32> to vector<2x1xf32>
    %1119 = tpu.reciprocal %1118 {approx = true} : vector<2x1xf32> -> vector<2x1xf32>
    %1120 = vector.broadcast %1119 : vector<2x1xf32> to vector<2x8xf32>
    %1121 = arith.mulf %1116, %1120 : vector<2x8xf32>
    %1122 = vector.extract_strided_slice %1121 {offsets = [0, 0], sizes = [2, 1], strides = [1, 1]} : vector<2x8xf32> to vector<2x1xf32>
    %1123 = vector.broadcast %1122 : vector<2x1xf32> to vector<2x32xf32>
    %1124 = arith.mulf %1123, %81 : vector<2x32xf32>
    %1125 = vector.extract_strided_slice %1121 {offsets = [0, 1], sizes = [2, 1], strides = [1, 1]} : vector<2x8xf32> to vector<2x1xf32>
    %1126 = vector.broadcast %1125 : vector<2x1xf32> to vector<2x32xf32>
    %1127 = arith.mulf %1126, %118 : vector<2x32xf32>
    %1128 = arith.addf %1124, %1127 : vector<2x32xf32>
    %1129 = vector.extract_strided_slice %1121 {offsets = [0, 2], sizes = [2, 1], strides = [1, 1]} : vector<2x8xf32> to vector<2x1xf32>
    %1130 = vector.broadcast %1129 : vector<2x1xf32> to vector<2x32xf32>
    %1131 = arith.mulf %1130, %155 : vector<2x32xf32>
    %1132 = arith.addf %1128, %1131 : vector<2x32xf32>
    %1133 = vector.extract_strided_slice %1121 {offsets = [0, 3], sizes = [2, 1], strides = [1, 1]} : vector<2x8xf32> to vector<2x1xf32>
    %1134 = vector.broadcast %1133 : vector<2x1xf32> to vector<2x32xf32>
    %1135 = arith.mulf %1134, %192 : vector<2x32xf32>
    %1136 = arith.addf %1132, %1135 : vector<2x32xf32>
    %1137 = vector.extract_strided_slice %1121 {offsets = [0, 4], sizes = [2, 1], strides = [1, 1]} : vector<2x8xf32> to vector<2x1xf32>
    %1138 = vector.broadcast %1137 : vector<2x1xf32> to vector<2x32xf32>
    %1139 = arith.mulf %1138, %229 : vector<2x32xf32>
    %1140 = arith.addf %1136, %1139 : vector<2x32xf32>
    %1141 = vector.extract_strided_slice %1121 {offsets = [0, 5], sizes = [2, 1], strides = [1, 1]} : vector<2x8xf32> to vector<2x1xf32>
    %1142 = vector.broadcast %1141 : vector<2x1xf32> to vector<2x32xf32>
    %1143 = arith.mulf %1142, %266 : vector<2x32xf32>
    %1144 = arith.addf %1140, %1143 : vector<2x32xf32>
    %1145 = vector.extract_strided_slice %1121 {offsets = [0, 6], sizes = [2, 1], strides = [1, 1]} : vector<2x8xf32> to vector<2x1xf32>
    %1146 = vector.broadcast %1145 : vector<2x1xf32> to vector<2x32xf32>
    %1147 = arith.mulf %1146, %303 : vector<2x32xf32>
    %1148 = arith.addf %1144, %1147 : vector<2x32xf32>
    %1149 = vector.extract_strided_slice %1121 {offsets = [0, 7], sizes = [2, 1], strides = [1, 1]} : vector<2x8xf32> to vector<2x1xf32>
    %1150 = vector.broadcast %1149 : vector<2x1xf32> to vector<2x32xf32>
    %1151 = arith.mulf %1150, %340 : vector<2x32xf32>
    %1152 = arith.addf %1148, %1151 : vector<2x32xf32>
    %1153 = arith.truncf %1152 : vector<2x32xf32> to vector<2x32xbf16>
    %cst_358 = arith.constant dense<0.000000e+00> : vector<2x32xf32>
    %1154 = tpu.matmul %1153, %40, %cst_358 {dimension_numbers = #tpu.dot_dimension_numbers<[1], [0], [0], [1], [0, 0, 1, 1], [], []>} : vector<2x32xbf16>, vector<32x32xbf16>, vector<2x32xf32> -> vector<2x32xf32>
    %1155 = arith.truncf %1085 : vector<2x32xf32> to vector<2x32xbf16>
    %cst_359 = arith.constant dense<0.000000e+00> : vector<2x32xf32>
    %1156 = tpu.matmul %1155, %41, %cst_359 {dimension_numbers = #tpu.dot_dimension_numbers<[1], [0], [0], [1], [0, 0, 1, 1], [], []>} : vector<2x32xbf16>, vector<32x32xbf16>, vector<2x32xf32> -> vector<2x32xf32>
    %1157 = arith.addf %1154, %1156 : vector<2x32xf32>
    %1158 = vector.broadcast %42 : vector<1x32xf32> to vector<2x32xf32>
    %1159 = arith.addf %1157, %1158 : vector<2x32xf32>
    %1160 = math.tanh %1159 : vector<2x32xf32>
    %c6_360 = arith.constant 6 : index
    %c0_361 = arith.constant 0 : index
    %c0_362 = arith.constant 0 : index
    %1161 = vector.load %arg13[%c6_360, %c0_361, %c0_362] : memref<8x2x32xf32, #tpu.memory_space<vmem>>, vector<1x2x32xf32>
    %1162 = vector.shape_cast %1161 : vector<1x2x32xf32> to vector<2x32xf32>
    %1163 = vector.shape_cast %1160 : vector<2x32xf32> to vector<1x2x32xf32>
    tpu.vector_store %arg13[%c6_360, %c0_361, %c0_362], %1163 {strides = array<i32>} : memref<8x2x32xf32, #tpu.memory_space<vmem>>, vector<1x2x32xf32>,
    %c6_363 = arith.constant 6 : index
    %c0_364 = arith.constant 0 : index
    %c0_365 = arith.constant 0 : index
    %1164 = vector.load %arg14[%c6_363, %c0_364, %c0_365] : memref<8x2x8xf32, #tpu.memory_space<vmem>>, vector<1x2x8xf32>
    %1165 = vector.shape_cast %1164 : vector<1x2x8xf32> to vector<2x8xf32>
    %1166 = vector.shape_cast %1121 : vector<2x8xf32> to vector<1x2x8xf32>
    tpu.vector_store %arg14[%c6_363, %c0_364, %c0_365], %1166 {strides = array<i32>} : memref<8x2x8xf32, #tpu.memory_space<vmem>>, vector<1x2x8xf32>,
    %c7_366 = arith.constant 7 : index
    %c0_367 = arith.constant 0 : index
    %c0_368 = arith.constant 0 : index
    %1167 = vector.load %arg2[%c7_366, %c0_367, %c0_368] : memref<8x2x32xbf16, #tpu.memory_space<vmem>>, vector<1x2x32xbf16>
    %1168 = vector.shape_cast %1167 : vector<1x2x32xbf16> to vector<2x32xbf16>
    %1169 = arith.truncf %1085 : vector<2x32xf32> to vector<2x32xbf16>
    %cst_369 = arith.constant dense<0.000000e+00> : vector<2x32xf32>
    %1170 = tpu.matmul %1168, %21, %cst_369 {dimension_numbers = #tpu.dot_dimension_numbers<[1], [0], [0], [1], [0, 0, 1, 1], [], []>} : vector<2x32xbf16>, vector<32x32xbf16>, vector<2x32xf32> -> vector<2x32xf32>
    %cst_370 = arith.constant dense<0.000000e+00> : vector<2x32xf32>
    %1171 = tpu.matmul %1168, %23, %cst_370 {dimension_numbers = #tpu.dot_dimension_numbers<[1], [0], [0], [1], [0, 0, 1, 1], [], []>} : vector<2x32xbf16>, vector<32x32xbf16>, vector<2x32xf32> -> vector<2x32xf32>
    %cst_371 = arith.constant dense<0.000000e+00> : vector<2x32xf32>
    %1172 = tpu.matmul %1168, %25, %cst_371 {dimension_numbers = #tpu.dot_dimension_numbers<[1], [0], [0], [1], [0, 0, 1, 1], [], []>} : vector<2x32xbf16>, vector<32x32xbf16>, vector<2x32xf32> -> vector<2x32xf32>
    %cst_372 = arith.constant dense<0.000000e+00> : vector<2x32xf32>
    %1173 = tpu.matmul %1169, %27, %cst_372 {dimension_numbers = #tpu.dot_dimension_numbers<[1], [0], [0], [1], [0, 0, 1, 1], [], []>} : vector<2x32xbf16>, vector<32x32xbf16>, vector<2x32xf32> -> vector<2x32xf32>
    %cst_373 = arith.constant dense<0.000000e+00> : vector<2x32xf32>
    %1174 = tpu.matmul %1169, %29, %cst_373 {dimension_numbers = #tpu.dot_dimension_numbers<[1], [0], [0], [1], [0, 0, 1, 1], [], []>} : vector<2x32xbf16>, vector<32x32xbf16>, vector<2x32xf32> -> vector<2x32xf32>
    %cst_374 = arith.constant dense<0.000000e+00> : vector<2x32xf32>
    %1175 = tpu.matmul %1169, %31, %cst_374 {dimension_numbers = #tpu.dot_dimension_numbers<[1], [0], [0], [1], [0, 0, 1, 1], [], []>} : vector<2x32xbf16>, vector<32x32xbf16>, vector<2x32xf32> -> vector<2x32xf32>
    %1176 = arith.addf %1170, %1173 : vector<2x32xf32>
    %1177 = vector.broadcast %33 : vector<1x32xf32> to vector<2x32xf32>
    %1178 = arith.addf %1176, %1177 : vector<2x32xf32>
    %1179 = arith.negf %1178 : vector<2x32xf32>
    %1180 = math.exp %1179 : vector<2x32xf32>
    %cst_375 = arith.constant 1.000000e+00 : f32
    %1181 = vector.broadcast %cst_375 : f32 to vector<2x32xf32>
    %1182 = arith.addf %1181, %1180 : vector<2x32xf32>
    %1183 = arith.divf %1181, %1182 : vector<2x32xf32>
    %1184 = arith.addf %1171, %1174 : vector<2x32xf32>
    %1185 = vector.broadcast %35 : vector<1x32xf32> to vector<2x32xf32>
    %1186 = arith.addf %1184, %1185 : vector<2x32xf32>
    %1187 = arith.negf %1186 : vector<2x32xf32>
    %1188 = math.exp %1187 : vector<2x32xf32>
    %cst_376 = arith.constant 1.000000e+00 : f32
    %1189 = vector.broadcast %cst_376 : f32 to vector<2x32xf32>
    %1190 = arith.addf %1189, %1188 : vector<2x32xf32>
    %1191 = arith.divf %1189, %1190 : vector<2x32xf32>
    %1192 = vector.broadcast %37 : vector<1x32xf32> to vector<2x32xf32>
    %1193 = arith.addf %1172, %1192 : vector<2x32xf32>
    %1194 = vector.broadcast %39 : vector<1x32xf32> to vector<2x32xf32>
    %1195 = arith.addf %1175, %1194 : vector<2x32xf32>
    %1196 = arith.mulf %1183, %1195 : vector<2x32xf32>
    %1197 = arith.addf %1193, %1196 : vector<2x32xf32>
    %1198 = math.tanh %1197 : vector<2x32xf32>
    %cst_377 = arith.constant 1.000000e+00 : f32
    %1199 = vector.broadcast %cst_377 : f32 to vector<2x32xf32>
    %1200 = arith.subf %1199, %1191 : vector<2x32xf32>
    %1201 = arith.mulf %1200, %1198 : vector<2x32xf32>
    %1202 = arith.mulf %1191, %1085 : vector<2x32xf32>
    %1203 = arith.addf %1201, %1202 : vector<2x32xf32>
    %1204 = arith.mulf %1203, %81 : vector<2x32xf32>
    %cst_378 = arith.constant dense<0.000000e+00> : vector<2xf32>
    %1205 = vector.multi_reduction <add>, %1204, %cst_378 [1] : vector<2x32xf32> to vector<2xf32>
    %1206 = vector.shape_cast %1205 : vector<2xf32> to vector<2x1xf32>
    %1207 = arith.mulf %1203, %118 : vector<2x32xf32>
    %cst_379 = arith.constant dense<0.000000e+00> : vector<2xf32>
    %1208 = vector.multi_reduction <add>, %1207, %cst_379 [1] : vector<2x32xf32> to vector<2xf32>
    %1209 = vector.shape_cast %1208 : vector<2xf32> to vector<2x1xf32>
    %1210 = arith.mulf %1203, %155 : vector<2x32xf32>
    %cst_380 = arith.constant dense<0.000000e+00> : vector<2xf32>
    %1211 = vector.multi_reduction <add>, %1210, %cst_380 [1] : vector<2x32xf32> to vector<2xf32>
    %1212 = vector.shape_cast %1211 : vector<2xf32> to vector<2x1xf32>
    %1213 = arith.mulf %1203, %192 : vector<2x32xf32>
    %cst_381 = arith.constant dense<0.000000e+00> : vector<2xf32>
    %1214 = vector.multi_reduction <add>, %1213, %cst_381 [1] : vector<2x32xf32> to vector<2xf32>
    %1215 = vector.shape_cast %1214 : vector<2xf32> to vector<2x1xf32>
    %1216 = arith.mulf %1203, %229 : vector<2x32xf32>
    %cst_382 = arith.constant dense<0.000000e+00> : vector<2xf32>
    %1217 = vector.multi_reduction <add>, %1216, %cst_382 [1] : vector<2x32xf32> to vector<2xf32>
    %1218 = vector.shape_cast %1217 : vector<2xf32> to vector<2x1xf32>
    %1219 = arith.mulf %1203, %266 : vector<2x32xf32>
    %cst_383 = arith.constant dense<0.000000e+00> : vector<2xf32>
    %1220 = vector.multi_reduction <add>, %1219, %cst_383 [1] : vector<2x32xf32> to vector<2xf32>
    %1221 = vector.shape_cast %1220 : vector<2xf32> to vector<2x1xf32>
    %1222 = arith.mulf %1203, %303 : vector<2x32xf32>
    %cst_384 = arith.constant dense<0.000000e+00> : vector<2xf32>
    %1223 = vector.multi_reduction <add>, %1222, %cst_384 [1] : vector<2x32xf32> to vector<2xf32>
    %1224 = vector.shape_cast %1223 : vector<2xf32> to vector<2x1xf32>
    %1225 = arith.mulf %1203, %340 : vector<2x32xf32>
    %cst_385 = arith.constant dense<0.000000e+00> : vector<2xf32>
    %1226 = vector.multi_reduction <add>, %1225, %cst_385 [1] : vector<2x32xf32> to vector<2xf32>
    %1227 = vector.shape_cast %1226 : vector<2xf32> to vector<2x1xf32>
    %1228 = tpu.concatenate %1206, %1209, %1212, %1215, %1218, %1221, %1224, %1227 in 1 : vector<2x1xf32>, vector<2x1xf32>, vector<2x1xf32>, vector<2x1xf32>, vector<2x1xf32>, vector<2x1xf32>, vector<2x1xf32>, vector<2x1xf32> -> vector<2x8xf32>
    %1229 = arith.addf %1228, %43 : vector<2x8xf32>
    %cst_386 = arith.constant dense<0xFF800000> : vector<2xf32>
    %1230 = vector.multi_reduction <maximumf>, %1229, %cst_386 [1] : vector<2x8xf32> to vector<2xf32>
    %1231 = vector.shape_cast %1230 : vector<2xf32> to vector<2x1xf32>
    %1232 = vector.broadcast %1231 : vector<2x1xf32> to vector<2x8xf32>
    %1233 = arith.subf %1229, %1232 : vector<2x8xf32>
    %1234 = math.exp %1233 : vector<2x8xf32>
    %cst_387 = arith.constant dense<0.000000e+00> : vector<2xf32>
    %1235 = vector.multi_reduction <add>, %1234, %cst_387 [1] : vector<2x8xf32> to vector<2xf32>
    %1236 = vector.shape_cast %1235 : vector<2xf32> to vector<2x1xf32>
    %1237 = tpu.reciprocal %1236 {approx = true} : vector<2x1xf32> -> vector<2x1xf32>
    %1238 = vector.broadcast %1237 : vector<2x1xf32> to vector<2x8xf32>
    %1239 = arith.mulf %1234, %1238 : vector<2x8xf32>
    %1240 = vector.extract_strided_slice %1239 {offsets = [0, 0], sizes = [2, 1], strides = [1, 1]} : vector<2x8xf32> to vector<2x1xf32>
    %1241 = vector.broadcast %1240 : vector<2x1xf32> to vector<2x32xf32>
    %1242 = arith.mulf %1241, %81 : vector<2x32xf32>
    %1243 = vector.extract_strided_slice %1239 {offsets = [0, 1], sizes = [2, 1], strides = [1, 1]} : vector<2x8xf32> to vector<2x1xf32>
    %1244 = vector.broadcast %1243 : vector<2x1xf32> to vector<2x32xf32>
    %1245 = arith.mulf %1244, %118 : vector<2x32xf32>
    %1246 = arith.addf %1242, %1245 : vector<2x32xf32>
    %1247 = vector.extract_strided_slice %1239 {offsets = [0, 2], sizes = [2, 1], strides = [1, 1]} : vector<2x8xf32> to vector<2x1xf32>
    %1248 = vector.broadcast %1247 : vector<2x1xf32> to vector<2x32xf32>
    %1249 = arith.mulf %1248, %155 : vector<2x32xf32>
    %1250 = arith.addf %1246, %1249 : vector<2x32xf32>
    %1251 = vector.extract_strided_slice %1239 {offsets = [0, 3], sizes = [2, 1], strides = [1, 1]} : vector<2x8xf32> to vector<2x1xf32>
    %1252 = vector.broadcast %1251 : vector<2x1xf32> to vector<2x32xf32>
    %1253 = arith.mulf %1252, %192 : vector<2x32xf32>
    %1254 = arith.addf %1250, %1253 : vector<2x32xf32>
    %1255 = vector.extract_strided_slice %1239 {offsets = [0, 4], sizes = [2, 1], strides = [1, 1]} : vector<2x8xf32> to vector<2x1xf32>
    %1256 = vector.broadcast %1255 : vector<2x1xf32> to vector<2x32xf32>
    %1257 = arith.mulf %1256, %229 : vector<2x32xf32>
    %1258 = arith.addf %1254, %1257 : vector<2x32xf32>
    %1259 = vector.extract_strided_slice %1239 {offsets = [0, 5], sizes = [2, 1], strides = [1, 1]} : vector<2x8xf32> to vector<2x1xf32>
    %1260 = vector.broadcast %1259 : vector<2x1xf32> to vector<2x32xf32>
    %1261 = arith.mulf %1260, %266 : vector<2x32xf32>
    %1262 = arith.addf %1258, %1261 : vector<2x32xf32>
    %1263 = vector.extract_strided_slice %1239 {offsets = [0, 6], sizes = [2, 1], strides = [1, 1]} : vector<2x8xf32> to vector<2x1xf32>
    %1264 = vector.broadcast %1263 : vector<2x1xf32> to vector<2x32xf32>
    %1265 = arith.mulf %1264, %303 : vector<2x32xf32>
    %1266 = arith.addf %1262, %1265 : vector<2x32xf32>
    %1267 = vector.extract_strided_slice %1239 {offsets = [0, 7], sizes = [2, 1], strides = [1, 1]} : vector<2x8xf32> to vector<2x1xf32>
    %1268 = vector.broadcast %1267 : vector<2x1xf32> to vector<2x32xf32>
    %1269 = arith.mulf %1268, %340 : vector<2x32xf32>
    %1270 = arith.addf %1266, %1269 : vector<2x32xf32>
    %1271 = arith.truncf %1270 : vector<2x32xf32> to vector<2x32xbf16>
    %cst_388 = arith.constant dense<0.000000e+00> : vector<2x32xf32>
    %1272 = tpu.matmul %1271, %40, %cst_388 {dimension_numbers = #tpu.dot_dimension_numbers<[1], [0], [0], [1], [0, 0, 1, 1], [], []>} : vector<2x32xbf16>, vector<32x32xbf16>, vector<2x32xf32> -> vector<2x32xf32>
    %1273 = arith.truncf %1203 : vector<2x32xf32> to vector<2x32xbf16>
    %cst_389 = arith.constant dense<0.000000e+00> : vector<2x32xf32>
    %1274 = tpu.matmul %1273, %41, %cst_389 {dimension_numbers = #tpu.dot_dimension_numbers<[1], [0], [0], [1], [0, 0, 1, 1], [], []>} : vector<2x32xbf16>, vector<32x32xbf16>, vector<2x32xf32> -> vector<2x32xf32>
    %1275 = arith.addf %1272, %1274 : vector<2x32xf32>
    %1276 = vector.broadcast %42 : vector<1x32xf32> to vector<2x32xf32>
    %1277 = arith.addf %1275, %1276 : vector<2x32xf32>
    %1278 = math.tanh %1277 : vector<2x32xf32>
    %c7_390 = arith.constant 7 : index
    %c0_391 = arith.constant 0 : index
    %c0_392 = arith.constant 0 : index
    %1279 = vector.load %arg13[%c7_390, %c0_391, %c0_392] : memref<8x2x32xf32, #tpu.memory_space<vmem>>, vector<1x2x32xf32>
    %1280 = vector.shape_cast %1279 : vector<1x2x32xf32> to vector<2x32xf32>
    %1281 = vector.shape_cast %1278 : vector<2x32xf32> to vector<1x2x32xf32>
    tpu.vector_store %arg13[%c7_390, %c0_391, %c0_392], %1281 {strides = array<i32>} : memref<8x2x32xf32, #tpu.memory_space<vmem>>, vector<1x2x32xf32>,
    %c7_393 = arith.constant 7 : index
    %c0_394 = arith.constant 0 : index
    %c0_395 = arith.constant 0 : index
    %1282 = vector.load %arg14[%c7_393, %c0_394, %c0_395] : memref<8x2x8xf32, #tpu.memory_space<vmem>>, vector<1x2x8xf32>
    %1283 = vector.shape_cast %1282 : vector<1x2x8xf32> to vector<2x8xf32>
    %1284 = vector.shape_cast %1239 : vector<2x8xf32> to vector<1x2x8xf32>
    tpu.vector_store %arg14[%c7_393, %c0_394, %c0_395], %1284 {strides = array<i32>} : memref<8x2x8xf32, #tpu.memory_space<vmem>>, vector<1x2x8xf32>,
    %c0_396 = arith.constant 0 : index
    %c0_397 = arith.constant 0 : index
    %1285 = vector.load %arg15[%c0_396, %c0_397] : memref<2x32xf32, #tpu.memory_space<vmem>>, vector<2x32xf32>
    tpu.vector_store %arg15[%c0_396, %c0_397], %1203 {strides = array<i32>} : memref<2x32xf32, #tpu.memory_space<vmem>>, vector<2x32xf32>,
    return
  }
  func.func @transform_0(%arg0: i32) -> (i32, i32, i32) {
    %c0_i32 = arith.constant 0 : i32
    %c0_i32_0 = arith.constant 0 : i32
    %c0_i32_1 = arith.constant 0 : i32
    %c0_i32_2 = arith.constant 0 : i32
    return %c0_i32, %c0_i32_0, %c0_i32_1 : i32, i32, i32
  }
  func.func @transform_1(%arg0: i32) -> (i32, i32, i32) {
    %c0_i32 = arith.constant 0 : i32
    %c0_i32_0 = arith.constant 0 : i32
    %c0_i32_1 = arith.constant 0 : i32
    %c0_i32_2 = arith.constant 0 : i32
    return %c0_i32, %c0_i32_0, %c0_i32_1 : i32, i32, i32
  }
  func.func @transform_2(%arg0: i32) -> (i32, i32) {
    %c0_i32 = arith.constant 0 : i32
    %c0_i32_0 = arith.constant 0 : i32
    %c0_i32_1 = arith.constant 0 : i32
    return %c0_i32, %c0_i32_0 : i32, i32
  }
  func.func @transform_3(%arg0: i32) -> (i32, i32, i32) {
    %c0_i32 = arith.constant 0 : i32
    %c0_i32_0 = arith.constant 0 : i32
    %c0_i32_1 = arith.constant 0 : i32
    %c0_i32_2 = arith.constant 0 : i32
    return %c0_i32, %c0_i32_0, %c0_i32_1 : i32, i32, i32
  }
  func.func @transform_4(%arg0: i32) -> (i32, i32, i32) {
    %c0_i32 = arith.constant 0 : i32
    %c0_i32_0 = arith.constant 0 : i32
    %c0_i32_1 = arith.constant 0 : i32
    %c0_i32_2 = arith.constant 0 : i32
    return %c0_i32, %c0_i32_0, %c0_i32_1 : i32, i32, i32
  }
  func.func @transform_5(%arg0: i32) -> (i32, i32, i32) {
    %c0_i32 = arith.constant 0 : i32
    %c0_i32_0 = arith.constant 0 : i32
    %c0_i32_1 = arith.constant 0 : i32
    %c0_i32_2 = arith.constant 0 : i32
    return %c0_i32, %c0_i32_0, %c0_i32_1 : i32, i32, i32
  }
  func.func @transform_6(%arg0: i32) -> (i32, i32, i32) {
    %c0_i32 = arith.constant 0 : i32
    %c0_i32_0 = arith.constant 0 : i32
    %c0_i32_1 = arith.constant 0 : i32
    %c0_i32_2 = arith.constant 0 : i32
    return %c0_i32, %c0_i32_0, %c0_i32_1 : i32, i32, i32
  }
  func.func @transform_7(%arg0: i32) -> (i32, i32, i32) {
    %c0_i32 = arith.constant 0 : i32
    %c0_i32_0 = arith.constant 0 : i32
    %c0_i32_1 = arith.constant 0 : i32
    %c0_i32_2 = arith.constant 0 : i32
    return %c0_i32, %c0_i32_0, %c0_i32_1 : i32, i32, i32
  }
  func.func @transform_8(%arg0: i32) -> (i32, i32, i32) {
    %c0_i32 = arith.constant 0 : i32
    %c0_i32_0 = arith.constant 0 : i32
    %c0_i32_1 = arith.constant 0 : i32
    %c0_i32_2 = arith.constant 0 : i32
    return %c0_i32, %c0_i32_0, %c0_i32_1 : i32, i32, i32
  }
  func.func @transform_9(%arg0: i32) -> (i32, i32) {
    %c0_i32 = arith.constant 0 : i32
    %c0_i32_0 = arith.constant 0 : i32
    %c0_i32_1 = arith.constant 0 : i32
    return %c0_i32, %c0_i32_0 : i32, i32
  }
  func.func @transform_10(%arg0: i32) -> (i32, i32) {
    %c0_i32 = arith.constant 0 : i32
    %c0_i32_0 = arith.constant 0 : i32
    %c0_i32_1 = arith.constant 0 : i32
    return %c0_i32, %c0_i32_0 : i32, i32
  }
  func.func @transform_11(%arg0: i32) -> (i32, i32) {
    %c0_i32 = arith.constant 0 : i32
    %c0_i32_0 = arith.constant 0 : i32
    %c0_i32_1 = arith.constant 0 : i32
    return %c0_i32, %c0_i32_0 : i32, i32
  }
  func.func @transform_12(%arg0: i32) -> (i32, i32, i32) {
    %c0_i32 = arith.constant 0 : i32
    %c0_i32_0 = arith.constant 0 : i32
    %c0_i32_1 = arith.constant 0 : i32
    %c0_i32_2 = arith.constant 0 : i32
    return %c0_i32, %c0_i32_0, %c0_i32_1 : i32, i32, i32
  }
  func.func @transform_13(%arg0: i32) -> (i32, i32, i32) {
    %c0_i32 = arith.constant 0 : i32
    %c0_i32_0 = arith.constant 0 : i32
    %c0_i32_1 = arith.constant 0 : i32
    %c0_i32_2 = arith.constant 0 : i32
    return %c0_i32, %c0_i32_0, %c0_i32_1 : i32, i32, i32
  }
  func.func @transform_14(%arg0: i32) -> (i32, i32) {
    %c0_i32 = arith.constant 0 : i32
    %c0_i32_0 = arith.constant 0 : i32
    %c0_i32_1 = arith.constant 0 : i32
    return %c0_i32, %c0_i32_0 : i32, i32
  }
}

</mosaic_0001>

<llo_original>
// kernel: combine_wals_source_words_forward.1
$region0: #{combine_wals_source_words_forward.1}
  #allocation0 [shape = 'u32[]', space=smem, size = 0x4, offset = 0x4, fixed_abs, tag = 'smem constant byte address 0x4 - core index']
  #allocation1 [shape = 'u32[144,128]{1,0:T(1,128)}', space=vmem, size = 0x12000, scoped, tag = 'internal scratch']
  %s0 = inlined_call_operand.vmem [shape: bf16[8,2,48], index: 0, kind: input, shape index: {}]
  %s1 = inlined_call_operand.vmem [shape: bf16[8,2,32], index: 1, kind: input, shape index: {}]
  %s2 = inlined_call_operand.vmem [shape: f32[2,8], index: 2, kind: input, shape index: {}]
  %s3 = inlined_call_operand.vmem [shape: bf16[3,48,32], index: 3, kind: input, shape index: {}]
  %s4 = inlined_call_operand.vmem [shape: bf16[3,32,32], index: 4, kind: input, shape index: {}]
  %s5 = inlined_call_operand.vmem [shape: f32[4,1,32], index: 5, kind: input, shape index: {}]
  %s6 = inlined_call_operand.vmem [shape: bf16[3,32,32], index: 6, kind: input, shape index: {}]
  %s7 = inlined_call_operand.vmem [shape: bf16[3,32,32], index: 7, kind: input, shape index: {}]
  %s8 = inlined_call_operand.vmem [shape: f32[4,1,32], index: 8, kind: input, shape index: {}]
  %s9 = inlined_call_operand.vmem [shape: bf16[32,32], index: 9, kind: input, shape index: {}]
  %s10 = inlined_call_operand.vmem [shape: bf16[32,32], index: 10, kind: input, shape index: {}]
  %s11 = inlined_call_operand.vmem [shape: f32[1,32], index: 11, kind: input, shape index: {}]
  %s12 = inlined_call_operand.hbm [shape: f32[8,2,32], index: 12, kind: output, shape index: {0}]
  %s13 = inlined_call_operand.hbm [shape: f32[8,2,8], index: 13, kind: output, shape index: {1}]
  %s14 = inlined_call_operand.hbm [shape: f32[2,32], index: 14, kind: output, shape index: {2}]
  %15 = xla_tuple %s12, %s13, %s14
  %s16 = sld [smem:[#allocation0]]
  $region74: #{combine_wals_source_words_forward.1} parent=0
    _
  %s18 = ssub.s32 1, %s16
  %s19 = scalar_select 0, %s18, %s16
  $region1: #{combine_wals_source_words_forward.1} parent=0
    #allocation2 [shape = 'u8[8192]{0}', space=vmem, size = 0x2000, scoped, tag = 'output window, operand 0, single buffered']
    #allocation3 [shape = 's32[1]{0}', space=sflag, size = 0x4, scoped, tag = 'scoped memory for combine_wals_source_words_forward.1']
    #allocation4 [shape = 'u8[8192]{0}', space=vmem, size = 0x2000, scoped, tag = 'output window, operand 1, single buffered']
    #allocation5 [shape = 's32[1]{0}', space=sflag, size = 0x4, scoped, tag = 'scoped memory for combine_wals_source_words_forward.1']
    #allocation6 [shape = 'u8[1024]{0}', space=vmem, size = 0x400, scoped, tag = 'output window, operand 2, single buffered']
    %20 = vsyncpa [#allocation3], 0
    %21 = vsyncpa [#allocation5], 0
    // Predicated region
    $region2: #{combine_wals_source_words_forward.1} parent=1 // pred_check
      _
    $region3: #{combine_wals_source_words_forward.1} parent=1 // pred_check_branch
      %23 = sbr.rel (0) target = $region5
    $region4: #{combine_wals_source_words_forward.1} parent=1 // pred_region
      _
    $region5: #{combine_wals_source_words_forward.1} parent=1 // pred_fallthru
      _
    // Predicated region
    $region6: #{combine_wals_source_words_forward.1} parent=1 // pred_check
      _
    $region7: #{combine_wals_source_words_forward.1} parent=1 // pred_check_branch
      %25 = sbr.rel (0) target = $region9
    $region8: #{combine_wals_source_words_forward.1} parent=1 // pred_region
      _
    $region9: #{combine_wals_source_words_forward.1} parent=1 // pred_fallthru
      _
    // Predicated region
    $region10: #{combine_wals_source_words_forward.1} parent=1 // pred_check
      _
    $region11: #{combine_wals_source_words_forward.1} parent=1 // pred_check_branch
      %27 = sbr.rel (0) target = $region13
    $region12: #{combine_wals_source_words_forward.1} parent=1 // pred_region
      _
    $region13: #{combine_wals_source_words_forward.1} parent=1 // pred_fallthru
      _
    // Predicated region
    $region14: #{combine_wals_source_words_forward.1} parent=1 // pred_check
      _
    $region15: #{combine_wals_source_words_forward.1} parent=1 // pred_check_branch
      %29 = sbr.rel (0) target = $region17
    $region16: #{combine_wals_source_words_forward.1} parent=1 // pred_region
      _
    $region17: #{combine_wals_source_words_forward.1} parent=1 // pred_fallthru
      _
    // Predicated region
    $region18: #{combine_wals_source_words_forward.1} parent=1 // pred_check
      _
    $region19: #{combine_wals_source_words_forward.1} parent=1 // pred_check_branch
      %31 = sbr.rel (0) target = $region21
    $region20: #{combine_wals_source_words_forward.1} parent=1 // pred_region
      _
    $region21: #{combine_wals_source_words_forward.1} parent=1 // pred_fallthru
      _
    // Predicated region
    $region22: #{combine_wals_source_words_forward.1} parent=1 // pred_check
      _
    $region23: #{combine_wals_source_words_forward.1} parent=1 // pred_check_branch
      %33 = sbr.rel (0) target = $region25
    $region24: #{combine_wals_source_words_forward.1} parent=1 // pred_region
      _
    $region25: #{combine_wals_source_words_forward.1} parent=1 // pred_fallthru
      _
    // Predicated region
    $region26: #{combine_wals_source_words_forward.1} parent=1 // pred_check
      _
    $region27: #{combine_wals_source_words_forward.1} parent=1 // pred_check_branch
      %35 = sbr.rel (0) target = $region29
    $region28: #{combine_wals_source_words_forward.1} parent=1 // pred_region
      _
    $region29: #{combine_wals_source_words_forward.1} parent=1 // pred_fallthru
      _
    // Predicated region
    $region30: #{combine_wals_source_words_forward.1} parent=1 // pred_check
      _
    $region31: #{combine_wals_source_words_forward.1} parent=1 // pred_check_branch
      %37 = sbr.rel (0) target = $region33
    $region32: #{combine_wals_source_words_forward.1} parent=1 // pred_region
      _
    $region33: #{combine_wals_source_words_forward.1} parent=1 // pred_fallthru
      _
    // Predicated region
    $region34: #{combine_wals_source_words_forward.1} parent=1 // pred_check
      _
    $region35: #{combine_wals_source_words_forward.1} parent=1 // pred_check_branch
      %39 = sbr.rel (0) target = $region37
    $region36: #{combine_wals_source_words_forward.1} parent=1 // pred_region
      _
    $region37: #{combine_wals_source_words_forward.1} parent=1 // pred_fallthru
      _
    // Predicated region
    $region38: #{combine_wals_source_words_forward.1} parent=1 // pred_check
      _
    $region39: #{combine_wals_source_words_forward.1} parent=1 // pred_check_branch
      %41 = sbr.rel (0) target = $region41
    $region40: #{combine_wals_source_words_forward.1} parent=1 // pred_region
      _
    $region41: #{combine_wals_source_words_forward.1} parent=1 // pred_fallthru
      _
    // Predicated region
    $region42: #{combine_wals_source_words_forward.1} parent=1 // pred_check
      _
    $region43: #{combine_wals_source_words_forward.1} parent=1 // pred_check_branch
      %43 = sbr.rel (0) target = $region45
    $region44: #{combine_wals_source_words_forward.1} parent=1 // pred_region
      _
    $region45: #{combine_wals_source_words_forward.1} parent=1 // pred_fallthru
      _
    // Predicated region
    $region46: #{combine_wals_source_words_forward.1} parent=1 // pred_check
      _
    $region47: #{combine_wals_source_words_forward.1} parent=1 // pred_check_branch
      %45 = sbr.rel (0) target = $region49
    $region48: #{combine_wals_source_words_forward.1} parent=1 // pred_region
      _
    $region49: #{combine_wals_source_words_forward.1} parent=1 // pred_fallthru
      _
    %v47 = vld [vmem:[%s3] sm:$0xf]
    %v48 = vld [vmem:[%s3 + $0x4] sm:$0xf]
    %v49 = vld [vmem:[%s3 + $0x8] sm:$0xf]
    %v50 = vld [vmem:[%s3 + $0xc] sm:$0xf]
    %v51 = vld [vmem:[%s3 + $0x10] sm:$0xf]
    %v52 = vld [vmem:[%s3 + $0x14] sm:$0xf]
    %s53 = scalar_lea.vmem %s3, 24
    %v54 = vld [vmem:[%s53] sm:$0xf]
    %v55 = vld [vmem:[%s53 + $0x4] sm:$0xf]
    %v56 = vld [vmem:[%s53 + $0x8] sm:$0xf]
    %v57 = vld [vmem:[%s53 + $0xc] sm:$0xf]
    %v58 = vld [vmem:[%s53 + $0x10] sm:$0xf]
    %v59 = vld [vmem:[%s53 + $0x14] sm:$0xf]
    %s60 = scalar_lea.vmem %s3, 48
    %v61 = vld [vmem:[%s60] sm:$0xf]
    %v62 = vld [vmem:[%s60 + $0x4] sm:$0xf]
    %v63 = vld [vmem:[%s60 + $0x8] sm:$0xf]
    %v64 = vld [vmem:[%s60 + $0xc] sm:$0xf]
    %v65 = vld [vmem:[%s60 + $0x10] sm:$0xf]
    %v66 = vld [vmem:[%s60 + $0x14] sm:$0xf]
    %v67 = vld [vmem:[%s4] sm:$0xf]
    %v68 = vld [vmem:[%s4 + $0x4] sm:$0xf]
    %v69 = vld [vmem:[%s4 + $0x8] sm:$0xf]
    %v70 = vld [vmem:[%s4 + $0xc] sm:$0xf]
    %s71 = scalar_lea.vmem %s4, 16
    %v72 = vld [vmem:[%s71] sm:$0xf]
    %v73 = vld [vmem:[%s71 + $0x4] sm:$0xf]
    %v74 = vld [vmem:[%s71 + $0x8] sm:$0xf]
    %v75 = vld [vmem:[%s71 + $0xc] sm:$0xf]
    %s76 = scalar_lea.vmem %s4, 32
    %v77 = vld [vmem:[%s76] sm:$0xf]
    %v78 = vld [vmem:[%s76 + $0x4] sm:$0xf]
    %v79 = vld [vmem:[%s76 + $0x8] sm:$0xf]
    %v80 = vld [vmem:[%s76 + $0xc] sm:$0xf]
    %v81 = vld [vmem:[%s5] sm:$0x1]
    %s82 = scalar_lea.vmem %s5, 1
    %v83 = vld [vmem:[%s82] sm:$0x1]
    %s84 = scalar_lea.vmem %s5, 2
    %v85 = vld [vmem:[%s84] sm:$0x1]
    %s86 = scalar_lea.vmem %s5, 3
    %v87 = vld [vmem:[%s86] sm:$0x1]
    %v88 = vld [vmem:[%s6] sm:$0xf]
    %v89 = vld [vmem:[%s6 + $0x4] sm:$0xf]
    %v90 = vld [vmem:[%s6 + $0x8] sm:$0xf]
    %v91 = vld [vmem:[%s6 + $0xc] sm:$0xf]
    %s92 = scalar_lea.vmem %s6, 16
    %v93 = vld [vmem:[%s92] sm:$0xf]
    %v94 = vld [vmem:[%s92 + $0x4] sm:$0xf]
    %v95 = vld [vmem:[%s92 + $0x8] sm:$0xf]
    %v96 = vld [vmem:[%s92 + $0xc] sm:$0xf]
    %s97 = scalar_lea.vmem %s6, 32
    %v98 = vld [vmem:[%s97] sm:$0xf]
    %v99 = vld [vmem:[%s97 + $0x4] sm:$0xf]
    %v100 = vld [vmem:[%s97 + $0x8] sm:$0xf]
    %v101 = vld [vmem:[%s97 + $0xc] sm:$0xf]
    %v102 = vld [vmem:[%s7] sm:$0xf]
    %v103 = vld [vmem:[%s7 + $0x4] sm:$0xf]
    %v104 = vld [vmem:[%s7 + $0x8] sm:$0xf]
    %v105 = vld [vmem:[%s7 + $0xc] sm:$0xf]
    %s106 = scalar_lea.vmem %s7, 16
    %v107 = vld [vmem:[%s106] sm:$0xf]
    %v108 = vld [vmem:[%s106 + $0x4] sm:$0xf]
    %v109 = vld [vmem:[%s106 + $0x8] sm:$0xf]
    %v110 = vld [vmem:[%s106 + $0xc] sm:$0xf]
    %s111 = scalar_lea.vmem %s7, 32
    %v112 = vld [vmem:[%s111] sm:$0xf]
    %v113 = vld [vmem:[%s111 + $0x4] sm:$0xf]
    %v114 = vld [vmem:[%s111 + $0x8] sm:$0xf]
    %v115 = vld [vmem:[%s111 + $0xc] sm:$0xf]
    %v116 = vld [vmem:[%s8] sm:$0x1]
    %s117 = scalar_lea.vmem %s8, 1
    %v118 = vld [vmem:[%s117] sm:$0x1]
    %s119 = scalar_lea.vmem %s8, 2
    %v120 = vld [vmem:[%s119] sm:$0x1]
    %s121 = scalar_lea.vmem %s8, 3
    %v122 = vld [vmem:[%s121] sm:$0x1]
    %v123 = vld [vmem:[%s9] sm:$0xf]
    %v124 = vld [vmem:[%s9 + $0x4] sm:$0xf]
    %v125 = vld [vmem:[%s9 + $0x8] sm:$0xf]
    %v126 = vld [vmem:[%s9 + $0xc] sm:$0xf]
    %v127 = vld [vmem:[%s10] sm:$0xf]
    %v128 = vld [vmem:[%s10 + $0x4] sm:$0xf]
    %v129 = vld [vmem:[%s10 + $0x8] sm:$0xf]
    %v130 = vld [vmem:[%s10 + $0xc] sm:$0xf]
    %v131 = vld [vmem:[%s11] sm:$0x1]
    %v132 = vld [vmem:[%s2] sm:$0x3]
    %v133 = vld [vmem:[%s0] sm:$0x1]
    %v138 = vunpack.c.l.b16 %v67
    %v139 = vunpack.c.l.b16 %v68
    %v140 = vunpack.c.l.b16 %v69
    %v141 = vunpack.c.l.b16 %v70
    %v142 = vpack.c.b16 %v139, %v138
    %v143 = vpack.c.b16 %v141, %v140
    %vm146 = vcmask 261120
    %v148 = vsel %vm146, 0, 0
    %150 = vmatprep.subr.bf16.mxu0 0
    %151 = vmatpush1.bf16.msra.mxu0 0
    %152 = vmatprep.subr.bf16.mxu0 0
    %153 = vmatpush1.bf16.msra.mxu0 0
    %154 = vmatprep.subr.bf16.mxu0 0
    %155 = vmatpush1.bf16.msra.mxu0 0
    %156 = vmatprep.subr.bf16.mxu0 0
    %157 = vmatpush1.bf16.msra.mxu0 0
    %158 = vmatprep.subr.bf16.mxu0 0
    %159 = vmatpush1.bf16.msra.mxu0 0
    %160 = vmatprep.subr.bf16.mxu0 0
    %161 = vmatpush1.bf16.msra.mxu0 0
    %162 = vmatprep.subr.bf16.mxu0 0
    %163 = vmatpush1.bf16.msra.mxu0 %v143
    %164 = vmatprep.subr.bf16.mxu0 0
    %165 = vmatpush1.bf16.msra.mxu0 %v142
    %166 = vmatprep.subr.bf16.mxu0 0
    %167 = vmatpush2.bf16.msra.mxu0 0
    %168 = vmatprep.subr.bf16.mxu0 0
    %169 = vmatpush2.bf16.msra.mxu0 0
    %170 = vmatprep.subr.bf16.mxu0 0
    %171 = vmatpush2.bf16.msra.mxu0 0
    %172 = vmatprep.subr.bf16.mxu0 0
    %173 = vmatpush2.bf16.msra.mxu0 0
    %174 = vmatprep.subr.bf16.mxu0 0
    %175 = vmatpush2.bf16.msra.mxu0 0
    %176 = vmatprep.subr.bf16.mxu0 0
    %177 = vmatpush2.bf16.msra.mxu0 0
    %178 = vmatprep.subr.bf16.mxu0 0
    %179 = vmatpush2.bf16.msra.mxu0 0
    %180 = vmatprep.subr.bf16.mxu0 0
    %181 = vmatpush2.bf16.msra.mxu0 0
    %182 = vmatprep.mubr.bf16.mxu0 0
    %183 = vmatmul.mubr.bf16.gmra.mxu0 %v148
    %v184 = vpop.f32.mrf.mxu0
    %v185 = vadd.f32 0.0, %v184
    %v186 = vpop.f32.mrf.mxu0
    %v187 = vpop.f32.mrf.mxu0
    %v188 = vpop.f32.mrf.mxu0
    %189 = vdwg.mxu0
    %v194 = vunpack.c.l.b16 %v72
    %v195 = vunpack.c.l.b16 %v73
    %v196 = vunpack.c.l.b16 %v74
    %v197 = vunpack.c.l.b16 %v75
    %v198 = vpack.c.b16 %v195, %v194
    %v199 = vpack.c.b16 %v197, %v196
    %202 = vmatprep.subr.bf16.mxu0 0
    %203 = vmatpush1.bf16.msra.mxu0 0
    %204 = vmatprep.subr.bf16.mxu0 0
    %205 = vmatpush1.bf16.msra.mxu0 0
    %206 = vmatprep.subr.bf16.mxu0 0
    %207 = vmatpush1.bf16.msra.mxu0 0
    %208 = vmatprep.subr.bf16.mxu0 0
    %209 = vmatpush1.bf16.msra.mxu0 0
    %210 = vmatprep.subr.bf16.mxu0 0
    %211 = vmatpush1.bf16.msra.mxu0 0
    %212 = vmatprep.subr.bf16.mxu0 0
    %213 = vmatpush1.bf16.msra.mxu0 0
    %214 = vmatprep.subr.bf16.mxu0 0
    %215 = vmatpush1.bf16.msra.mxu0 %v199
    %216 = vmatprep.subr.bf16.mxu0 0
    %217 = vmatpush1.bf16.msra.mxu0 %v198
    %218 = vmatprep.subr.bf16.mxu0 0
    %219 = vmatpush2.bf16.msra.mxu0 0
    %220 = vmatprep.subr.bf16.mxu0 0
    %221 = vmatpush2.bf16.msra.mxu0 0
    %222 = vmatprep.subr.bf16.mxu0 0
    %223 = vmatpush2.bf16.msra.mxu0 0
    %224 = vmatprep.subr.bf16.mxu0 0
    %225 = vmatpush2.bf16.msra.mxu0 0
    %226 = vmatprep.subr.bf16.mxu0 0
    %227 = vmatpush2.bf16.msra.mxu0 0
    %228 = vmatprep.subr.bf16.mxu0 0
    %229 = vmatpush2.bf16.msra.mxu0 0
    %230 = vmatprep.subr.bf16.mxu0 0
    %231 = vmatpush2.bf16.msra.mxu0 0
    %232 = vmatprep.subr.bf16.mxu0 0
    %233 = vmatpush2.bf16.msra.mxu0 0
    %234 = vmatprep.mubr.bf16.mxu0 0
    %235 = vmatmul.mubr.bf16.gmra.mxu0 %v148
    %v236 = vpop.f32.mrf.mxu0
    %v237 = vadd.f32 0.0, %v236
    %v238 = vpop.f32.mrf.mxu0
    %v239 = vpop.f32.mrf.mxu0
    %v240 = vpop.f32.mrf.mxu0
    %241 = vdwg.mxu0
    %v248 = vunpack.c.l.b16 %v47
    %v249 = vunpack.c.l.b16 %v48
    %v250 = vunpack.c.l.b16 %v49
    %v251 = vunpack.c.l.b16 %v50
    %v252 = vunpack.c.l.b16 %v51
    %v253 = vunpack.c.l.b16 %v52
    %v254 = vpack.c.b16 %v249, %v248
    %v255 = vpack.c.b16 %v251, %v250
    %v256 = vpack.c.b16 %v253, %v252
    %vm260 = vcmask 392192
    %v262 = vsel %vm260, %v133, 0
    %264 = vmatprep.subr.bf16.mxu0 0
    %265 = vmatpush1.bf16.msra.mxu0 0
    %266 = vmatprep.subr.bf16.mxu0 0
    %267 = vmatpush1.bf16.msra.mxu0 0
    %268 = vmatprep.subr.bf16.mxu0 0
    %269 = vmatpush1.bf16.msra.mxu0 0
    %270 = vmatprep.subr.bf16.mxu0 0
    %271 = vmatpush1.bf16.msra.mxu0 0
    %272 = vmatprep.subr.bf16.mxu0 0
    %273 = vmatpush1.bf16.msra.mxu0 0
    %274 = vmatprep.subr.bf16.mxu0 0
    %275 = vmatpush1.bf16.msra.mxu0 %v256
    %276 = vmatprep.subr.bf16.mxu0 0
    %277 = vmatpush1.bf16.msra.mxu0 %v255
    %278 = vmatprep.subr.bf16.mxu0 0
    %279 = vmatpush1.bf16.msra.mxu0 %v254
    %280 = vmatprep.subr.bf16.mxu0 0
    %281 = vmatpush2.bf16.msra.mxu0 0
    %282 = vmatprep.subr.bf16.mxu0 0
    %283 = vmatpush2.bf16.msra.mxu0 0
    %284 = vmatprep.subr.bf16.mxu0 0
    %285 = vmatpush2.bf16.msra.mxu0 0
    %286 = vmatprep.subr.bf16.mxu0 0
    %287 = vmatpush2.bf16.msra.mxu0 0
    %288 = vmatprep.subr.bf16.mxu0 0
    %289 = vmatpush2.bf16.msra.mxu0 0
    %290 = vmatprep.subr.bf16.mxu0 0
    %291 = vmatpush2.bf16.msra.mxu0 0
    %292 = vmatprep.subr.bf16.mxu0 0
    %293 = vmatpush2.bf16.msra.mxu0 0
    %294 = vmatprep.subr.bf16.mxu0 0
    %295 = vmatpush2.bf16.msra.mxu0 0
    %296 = vmatprep.mubr.bf16.mxu0 0
    %297 = vmatmul.mubr.bf16.gmra.mxu0 %v262
    %v298 = vpop.f32.mrf.mxu0
    %v299 = vadd.f32 %v185, %v298
    %v300 = vpop.f32.mrf.mxu0
    %v301 = vpop.f32.mrf.mxu0
    %v302 = vpop.f32.mrf.mxu0
    %303 = vdwg.mxu0
    %v305 = vlaneseq
    %v306 = vshrl.u32 %v305, 7
    %v307 = vsub.s32 0, %v306
    %v308 = vrot.slane %v81, %v307
    %v310 = vadd.f32 %v299, %v308
    %v311 = vxor.u32 %v310, 2147483648
    %v312 = vmul.f32 %v311, 1.442695
    %v313 = vpow.pop %v312
    %v314 = vadd.f32 %v313, 1.0
    %v315 = vrcp.pop %v314
    %v316 = vmul.f32 1.0, %v315
    %v323 = vunpack.c.l.b16 %v54
    %v324 = vunpack.c.l.b16 %v55
    %v325 = vunpack.c.l.b16 %v56
    %v326 = vunpack.c.l.b16 %v57
    %v327 = vunpack.c.l.b16 %v58
    %v328 = vunpack.c.l.b16 %v59
    %v329 = vpack.c.b16 %v324, %v323
    %v330 = vpack.c.b16 %v326, %v325
    %v331 = vpack.c.b16 %v328, %v327
    %335 = vmatprep.subr.bf16.mxu0 0
    %336 = vmatpush1.bf16.msra.mxu0 0
    %337 = vmatprep.subr.bf16.mxu0 0
    %338 = vmatpush1.bf16.msra.mxu0 0
    %339 = vmatprep.subr.bf16.mxu0 0
    %340 = vmatpush1.bf16.msra.mxu0 0
    %341 = vmatprep.subr.bf16.mxu0 0
    %342 = vmatpush1.bf16.msra.mxu0 0
    %343 = vmatprep.subr.bf16.mxu0 0
    %344 = vmatpush1.bf16.msra.mxu0 0
    %345 = vmatprep.subr.bf16.mxu0 0
    %346 = vmatpush1.bf16.msra.mxu0 %v331
    %347 = vmatprep.subr.bf16.mxu0 0
    %348 = vmatpush1.bf16.msra.mxu0 %v330
    %349 = vmatprep.subr.bf16.mxu0 0
    %350 = vmatpush1.bf16.msra.mxu0 %v329
    %351 = vmatprep.subr.bf16.mxu0 0
    %352 = vmatpush2.bf16.msra.mxu0 0
    %353 = vmatprep.subr.bf16.mxu0 0
    %354 = vmatpush2.bf16.msra.mxu0 0
    %355 = vmatprep.subr.bf16.mxu0 0
    %356 = vmatpush2.bf16.msra.mxu0 0
    %357 = vmatprep.subr.bf16.mxu0 0
    %358 = vmatpush2.bf16.msra.mxu0 0
    %359 = vmatprep.subr.bf16.mxu0 0
    %360 = vmatpush2.bf16.msra.mxu0 0
    %361 = vmatprep.subr.bf16.mxu0 0
    %362 = vmatpush2.bf16.msra.mxu0 0
    %363 = vmatprep.subr.bf16.mxu0 0
    %364 = vmatpush2.bf16.msra.mxu0 0
    %365 = vmatprep.subr.bf16.mxu0 0
    %366 = vmatpush2.bf16.msra.mxu0 0
    %367 = vmatprep.mubr.bf16.mxu0 0
    %368 = vmatmul.mubr.bf16.gmra.mxu0 %v262
    %v369 = vpop.f32.mrf.mxu0
    %v370 = vadd.f32 %v237, %v369
    %v371 = vpop.f32.mrf.mxu0
    %v372 = vpop.f32.mrf.mxu0
    %v373 = vpop.f32.mrf.mxu0
    %374 = vdwg.mxu0
    %v376 = vlaneseq
    %v377 = vshrl.u32 %v376, 7
    %v378 = vsub.s32 0, %v377
    %v379 = vrot.slane %v83, %v378
    %v381 = vadd.f32 %v370, %v379
    %v382 = vxor.u32 %v381, 2147483648
    %v383 = vmul.f32 %v382, 1.442695
    %v384 = vpow.pop %v383
    %v385 = vadd.f32 %v384, 1.0
    %v386 = vrcp.pop %v385
    %v387 = vmul.f32 1.0, %v386
    %v389 = vlaneseq
    %v390 = vshrl.u32 %v389, 7
    %v391 = vsub.s32 0, %v390
    %v392 = vrot.slane %v85, %v391
    %v400 = vunpack.c.l.b16 %v61
    %v401 = vunpack.c.l.b16 %v62
    %v402 = vunpack.c.l.b16 %v63
    %v403 = vunpack.c.l.b16 %v64
    %v404 = vunpack.c.l.b16 %v65
    %v405 = vunpack.c.l.b16 %v66
    %v406 = vpack.c.b16 %v401, %v400
    %v407 = vpack.c.b16 %v403, %v402
    %v408 = vpack.c.b16 %v405, %v404
    %412 = vmatprep.subr.bf16.mxu0 0
    %413 = vmatpush1.bf16.msra.mxu0 0
    %414 = vmatprep.subr.bf16.mxu0 0
    %415 = vmatpush1.bf16.msra.mxu0 0
    %416 = vmatprep.subr.bf16.mxu0 0
    %417 = vmatpush1.bf16.msra.mxu0 0
    %418 = vmatprep.subr.bf16.mxu0 0
    %419 = vmatpush1.bf16.msra.mxu0 0
    %420 = vmatprep.subr.bf16.mxu0 0
    %421 = vmatpush1.bf16.msra.mxu0 0
    %422 = vmatprep.subr.bf16.mxu0 0
    %423 = vmatpush1.bf16.msra.mxu0 %v408
    %424 = vmatprep.subr.bf16.mxu0 0
    %425 = vmatpush1.bf16.msra.mxu0 %v407
    %426 = vmatprep.subr.bf16.mxu0 0
    %427 = vmatpush1.bf16.msra.mxu0 %v406
    %428 = vmatprep.subr.bf16.mxu0 0
    %429 = vmatpush2.bf16.msra.mxu0 0
    %430 = vmatprep.subr.bf16.mxu0 0
    %431 = vmatpush2.bf16.msra.mxu0 0
    %432 = vmatprep.subr.bf16.mxu0 0
    %433 = vmatpush2.bf16.msra.mxu0 0
    %434 = vmatprep.subr.bf16.mxu0 0
    %435 = vmatpush2.bf16.msra.mxu0 0
    %436 = vmatprep.subr.bf16.mxu0 0
    %437 = vmatpush2.bf16.msra.mxu0 0
    %438 = vmatprep.subr.bf16.mxu0 0
    %439 = vmatpush2.bf16.msra.mxu0 0
    %440 = vmatprep.subr.bf16.mxu0 0
    %441 = vmatpush2.bf16.msra.mxu0 0
    %442 = vmatprep.subr.bf16.mxu0 0
    %443 = vmatpush2.bf16.msra.mxu0 0
    %444 = vmatprep.mubr.bf16.mxu0 0
    %445 = vmatmul.mubr.bf16.gmra.mxu0 %v262
    %v446 = vpop.f32.mrf.mxu0
    %v447 = vadd.f32 %v392, %v446
    %v448 = vpop.f32.mrf.mxu0
    %v449 = vpop.f32.mrf.mxu0
    %v450 = vpop.f32.mrf.mxu0
    %451 = vdwg.mxu0
    %v453 = vlaneseq
    %v454 = vshrl.u32 %v453, 7
    %v455 = vsub.s32 0, %v454
    %v456 = vrot.slane %v87, %v455
    %v462 = vunpack.c.l.b16 %v77
    %v463 = vunpack.c.l.b16 %v78
    %v464 = vunpack.c.l.b16 %v79
    %v465 = vunpack.c.l.b16 %v80
    %v466 = vpack.c.b16 %v463, %v462
    %v467 = vpack.c.b16 %v465, %v464
    %470 = vmatprep.subr.bf16.mxu0 0
    %471 = vmatpush1.bf16.msra.mxu0 0
    %472 = vmatprep.subr.bf16.mxu0 0
    %473 = vmatpush1.bf16.msra.mxu0 0
    %474 = vmatprep.subr.bf16.mxu0 0
    %475 = vmatpush1.bf16.msra.mxu0 0
    %476 = vmatprep.subr.bf16.mxu0 0
    %477 = vmatpush1.bf16.msra.mxu0 0
    %478 = vmatprep.subr.bf16.mxu0 0
    %479 = vmatpush1.bf16.msra.mxu0 0
    %480 = vmatprep.subr.bf16.mxu0 0
    %481 = vmatpush1.bf16.msra.mxu0 0
    %482 = vmatprep.subr.bf16.mxu0 0
    %483 = vmatpush1.bf16.msra.mxu0 %v467
    %484 = vmatprep.subr.bf16.mxu0 0
    %485 = vmatpush1.bf16.msra.mxu0 %v466
    %486 = vmatprep.subr.bf16.mxu0 0
    %487 = vmatpush2.bf16.msra.mxu0 0
    %488 = vmatprep.subr.bf16.mxu0 0
    %489 = vmatpush2.bf16.msra.mxu0 0
    %490 = vmatprep.subr.bf16.mxu0 0
    %491 = vmatpush2.bf16.msra.mxu0 0
    %492 = vmatprep.subr.bf16.mxu0 0
    %493 = vmatpush2.bf16.msra.mxu0 0
    %494 = vmatprep.subr.bf16.mxu0 0
    %495 = vmatpush2.bf16.msra.mxu0 0
    %496 = vmatprep.subr.bf16.mxu0 0
    %497 = vmatpush2.bf16.msra.mxu0 0
    %498 = vmatprep.subr.bf16.mxu0 0
    %499 = vmatpush2.bf16.msra.mxu0 0
    %500 = vmatprep.subr.bf16.mxu0 0
    %501 = vmatpush2.bf16.msra.mxu0 0
    %502 = vmatprep.mubr.bf16.mxu0 0
    %503 = vmatmul.mubr.bf16.gmra.mxu0 %v148
    %v504 = vpop.f32.mrf.mxu0
    %v505 = vadd.f32 %v456, %v504
    %v506 = vpop.f32.mrf.mxu0
    %v507 = vpop.f32.mrf.mxu0
    %v508 = vpop.f32.mrf.mxu0
    %509 = vdwg.mxu0
    %v510 = vmul.f32 %v316, %v505
    %v511 = vadd.f32 %v447, %v510
    %v512 = vtanh.pop %v511
    %v513 = vsub.f32 1.0, %v387
    %v514 = vmul.f32 %v513, %v512
    %v515 = vmul.f32 %v387, 0.0
    %v516 = vadd.f32 %v514, %v515
    %s517 = scalar_lea.vmem %s0, 1
    %v518 = vld [vmem:[%s517] sm:$0x1]
    %v519 = vpack.c.bf16 %v516, %v516
    %v521 = vsel %vm146, %v519, 0
    %523 = vmatprep.subr.bf16.mxu0 0
    %524 = vmatpush1.bf16.msra.mxu0 0
    %525 = vmatprep.subr.bf16.mxu0 0
    %526 = vmatpush1.bf16.msra.mxu0 0
    %527 = vmatprep.subr.bf16.mxu0 0
    %528 = vmatpush1.bf16.msra.mxu0 0
    %529 = vmatprep.subr.bf16.mxu0 0
    %530 = vmatpush1.bf16.msra.mxu0 0
    %531 = vmatprep.subr.bf16.mxu0 0
    %532 = vmatpush1.bf16.msra.mxu0 0
    %533 = vmatprep.subr.bf16.mxu0 0
    %534 = vmatpush1.bf16.msra.mxu0 0
    %535 = vmatprep.subr.bf16.mxu0 0
    %536 = vmatpush1.bf16.msra.mxu0 %v143
    %537 = vmatprep.subr.bf16.mxu0 0
    %538 = vmatpush1.bf16.msra.mxu0 %v142
    %539 = vmatprep.subr.bf16.mxu0 0
    %540 = vmatpush2.bf16.msra.mxu0 0
    %541 = vmatprep.subr.bf16.mxu0 0
    %542 = vmatpush2.bf16.msra.mxu0 0
    %543 = vmatprep.subr.bf16.mxu0 0
    %544 = vmatpush2.bf16.msra.mxu0 0
    %545 = vmatprep.subr.bf16.mxu0 0
    %546 = vmatpush2.bf16.msra.mxu0 0
    %547 = vmatprep.subr.bf16.mxu0 0
    %548 = vmatpush2.bf16.msra.mxu0 0
    %549 = vmatprep.subr.bf16.mxu0 0
    %550 = vmatpush2.bf16.msra.mxu0 0
    %551 = vmatprep.subr.bf16.mxu0 0
    %552 = vmatpush2.bf16.msra.mxu0 0
    %553 = vmatprep.subr.bf16.mxu0 0
    %554 = vmatpush2.bf16.msra.mxu0 0
    %555 = vmatprep.mubr.bf16.mxu0 0
    %556 = vmatmul.mubr.bf16.gmra.mxu0 %v521
    %v557 = vpop.f32.mrf.mxu0
    %v558 = vadd.f32 0.0, %v557
    %v559 = vpop.f32.mrf.mxu0
    %v560 = vpop.f32.mrf.mxu0
    %v561 = vpop.f32.mrf.mxu0
    %562 = vdwg.mxu0
    %563 = vmatprep.subr.bf16.mxu0 0
    %564 = vmatpush1.bf16.msra.mxu0 0
    %565 = vmatprep.subr.bf16.mxu0 0
    %566 = vmatpush1.bf16.msra.mxu0 0
    %567 = vmatprep.subr.bf16.mxu0 0
    %568 = vmatpush1.bf16.msra.mxu0 0
    %569 = vmatprep.subr.bf16.mxu0 0
    %570 = vmatpush1.bf16.msra.mxu0 0
    %571 = vmatprep.subr.bf16.mxu0 0
    %572 = vmatpush1.bf16.msra.mxu0 0
    %573 = vmatprep.subr.bf16.mxu0 0
    %574 = vmatpush1.bf16.msra.mxu0 0
    %575 = vmatprep.subr.bf16.mxu0 0
    %576 = vmatpush1.bf16.msra.mxu0 %v199
    %577 = vmatprep.subr.bf16.mxu0 0
    %578 = vmatpush1.bf16.msra.mxu0 %v198
    %579 = vmatprep.subr.bf16.mxu0 0
    %580 = vmatpush2.bf16.msra.mxu0 0
    %581 = vmatprep.subr.bf16.mxu0 0
    %582 = vmatpush2.bf16.msra.mxu0 0
    %583 = vmatprep.subr.bf16.mxu0 0
    %584 = vmatpush2.bf16.msra.mxu0 0
    %585 = vmatprep.subr.bf16.mxu0 0
    %586 = vmatpush2.bf16.msra.mxu0 0
    %587 = vmatprep.subr.bf16.mxu0 0
    %588 = vmatpush2.bf16.msra.mxu0 0
    %589 = vmatprep.subr.bf16.mxu0 0
    %590 = vmatpush2.bf16.msra.mxu0 0
    %591 = vmatprep.subr.bf16.mxu0 0
    %592 = vmatpush2.bf16.msra.mxu0 0
    %593 = vmatprep.subr.bf16.mxu0 0
    %594 = vmatpush2.bf16.msra.mxu0 0
    %595 = vmatprep.mubr.bf16.mxu0 0
    %596 = vmatmul.mubr.bf16.gmra.mxu0 %v521
    %v597 = vpop.f32.mrf.mxu0
    %v598 = vadd.f32 0.0, %v597
    %v599 = vpop.f32.mrf.mxu0
    %v600 = vpop.f32.mrf.mxu0
    %v601 = vpop.f32.mrf.mxu0
    %602 = vdwg.mxu0
    %v604 = vsel %vm260, %v518, 0
    %606 = vmatprep.subr.bf16.mxu0 0
    %607 = vmatpush1.bf16.msra.mxu0 0
    %608 = vmatprep.subr.bf16.mxu0 0
    %609 = vmatpush1.bf16.msra.mxu0 0
    %610 = vmatprep.subr.bf16.mxu0 0
    %611 = vmatpush1.bf16.msra.mxu0 0
    %612 = vmatprep.subr.bf16.mxu0 0
    %613 = vmatpush1.bf16.msra.mxu0 0
    %614 = vmatprep.subr.bf16.mxu0 0
    %615 = vmatpush1.bf16.msra.mxu0 0
    %616 = vmatprep.subr.bf16.mxu0 0
    %617 = vmatpush1.bf16.msra.mxu0 %v256
    %618 = vmatprep.subr.bf16.mxu0 0
    %619 = vmatpush1.bf16.msra.mxu0 %v255
    %620 = vmatprep.subr.bf16.mxu0 0
    %621 = vmatpush1.bf16.msra.mxu0 %v254
    %622 = vmatprep.subr.bf16.mxu0 0
    %623 = vmatpush2.bf16.msra.mxu0 0
    %624 = vmatprep.subr.bf16.mxu0 0
    %625 = vmatpush2.bf16.msra.mxu0 0
    %626 = vmatprep.subr.bf16.mxu0 0
    %627 = vmatpush2.bf16.msra.mxu0 0
    %628 = vmatprep.subr.bf16.mxu0 0
    %629 = vmatpush2.bf16.msra.mxu0 0
    %630 = vmatprep.subr.bf16.mxu0 0
    %631 = vmatpush2.bf16.msra.mxu0 0
    %632 = vmatprep.subr.bf16.mxu0 0
    %633 = vmatpush2.bf16.msra.mxu0 0
    %634 = vmatprep.subr.bf16.mxu0 0
    %635 = vmatpush2.bf16.msra.mxu0 0
    %636 = vmatprep.subr.bf16.mxu0 0
    %637 = vmatpush2.bf16.msra.mxu0 0
    %638 = vmatprep.mubr.bf16.mxu0 0
    %639 = vmatmul.mubr.bf16.gmra.mxu0 %v604
    %v640 = vpop.f32.mrf.mxu0
    %v641 = vadd.f32 %v558, %v640
    %v642 = vpop.f32.mrf.mxu0
    %v643 = vpop.f32.mrf.mxu0
    %v644 = vpop.f32.mrf.mxu0
    %645 = vdwg.mxu0
    %v646 = vadd.f32 %v641, %v308
    %v647 = vxor.u32 %v646, 2147483648
    %v648 = vmul.f32 %v647, 1.442695
    %v649 = vpow.pop %v648
    %v650 = vadd.f32 %v649, 1.0
    %v651 = vrcp.pop %v650
    %v652 = vmul.f32 1.0, %v651
    %653 = vmatprep.subr.bf16.mxu0 0
    %654 = vmatpush1.bf16.msra.mxu0 0
    %655 = vmatprep.subr.bf16.mxu0 0
    %656 = vmatpush1.bf16.msra.mxu0 0
    %657 = vmatprep.subr.bf16.mxu0 0
    %658 = vmatpush1.bf16.msra.mxu0 0
    %659 = vmatprep.subr.bf16.mxu0 0
    %660 = vmatpush1.bf16.msra.mxu0 0
    %661 = vmatprep.subr.bf16.mxu0 0
    %662 = vmatpush1.bf16.msra.mxu0 0
    %663 = vmatprep.subr.bf16.mxu0 0
    %664 = vmatpush1.bf16.msra.mxu0 %v331
    %665 = vmatprep.subr.bf16.mxu0 0
    %666 = vmatpush1.bf16.msra.mxu0 %v330
    %667 = vmatprep.subr.bf16.mxu0 0
    %668 = vmatpush1.bf16.msra.mxu0 %v329
    %669 = vmatprep.subr.bf16.mxu0 0
    %670 = vmatpush2.bf16.msra.mxu0 0
    %671 = vmatprep.subr.bf16.mxu0 0
    %672 = vmatpush2.bf16.msra.mxu0 0
    %673 = vmatprep.subr.bf16.mxu0 0
    %674 = vmatpush2.bf16.msra.mxu0 0
    %675 = vmatprep.subr.bf16.mxu0 0
    %676 = vmatpush2.bf16.msra.mxu0 0
    %677 = vmatprep.subr.bf16.mxu0 0
    %678 = vmatpush2.bf16.msra.mxu0 0
    %679 = vmatprep.subr.bf16.mxu0 0
    %680 = vmatpush2.bf16.msra.mxu0 0
    %681 = vmatprep.subr.bf16.mxu0 0
    %682 = vmatpush2.bf16.msra.mxu0 0
    %683 = vmatprep.subr.bf16.mxu0 0
    %684 = vmatpush2.bf16.msra.mxu0 0
    %685 = vmatprep.mubr.bf16.mxu0 0
    %686 = vmatmul.mubr.bf16.gmra.mxu0 %v604
    %v687 = vpop.f32.mrf.mxu0
    %v688 = vadd.f32 %v598, %v687
    %v689 = vpop.f32.mrf.mxu0
    %v690 = vpop.f32.mrf.mxu0
    %v691 = vpop.f32.mrf.mxu0
    %692 = vdwg.mxu0
    %v693 = vadd.f32 %v688, %v379
    %v694 = vxor.u32 %v693, 2147483648
    %v695 = vmul.f32 %v694, 1.442695
    %v696 = vpow.pop %v695
    %v697 = vadd.f32 %v696, 1.0
    %v698 = vrcp.pop %v697
    %v699 = vmul.f32 1.0, %v698
    %700 = vmatprep.subr.bf16.mxu0 0
    %701 = vmatpush1.bf16.msra.mxu0 0
    %702 = vmatprep.subr.bf16.mxu0 0
    %703 = vmatpush1.bf16.msra.mxu0 0
    %704 = vmatprep.subr.bf16.mxu0 0
    %705 = vmatpush1.bf16.msra.mxu0 0
    %706 = vmatprep.subr.bf16.mxu0 0
    %707 = vmatpush1.bf16.msra.mxu0 0
    %708 = vmatprep.subr.bf16.mxu0 0
    %709 = vmatpush1.bf16.msra.mxu0 0
    %710 = vmatprep.subr.bf16.mxu0 0
    %711 = vmatpush1.bf16.msra.mxu0 %v408
    %712 = vmatprep.subr.bf16.mxu0 0
    %713 = vmatpush1.bf16.msra.mxu0 %v407
    %714 = vmatprep.subr.bf16.mxu0 0
    %715 = vmatpush1.bf16.msra.mxu0 %v406
    %716 = vmatprep.subr.bf16.mxu0 0
    %717 = vmatpush2.bf16.msra.mxu0 0
    %718 = vmatprep.subr.bf16.mxu0 0
    %719 = vmatpush2.bf16.msra.mxu0 0
    %720 = vmatprep.subr.bf16.mxu0 0
    %721 = vmatpush2.bf16.msra.mxu0 0
    %722 = vmatprep.subr.bf16.mxu0 0
    %723 = vmatpush2.bf16.msra.mxu0 0
    %724 = vmatprep.subr.bf16.mxu0 0
    %725 = vmatpush2.bf16.msra.mxu0 0
    %726 = vmatprep.subr.bf16.mxu0 0
    %727 = vmatpush2.bf16.msra.mxu0 0
    %728 = vmatprep.subr.bf16.mxu0 0
    %729 = vmatpush2.bf16.msra.mxu0 0
    %730 = vmatprep.subr.bf16.mxu0 0
    %731 = vmatpush2.bf16.msra.mxu0 0
    %732 = vmatprep.mubr.bf16.mxu0 0
    %733 = vmatmul.mubr.bf16.gmra.mxu0 %v604
    %v734 = vpop.f32.mrf.mxu0
    %v735 = vadd.f32 %v392, %v734
    %v736 = vpop.f32.mrf.mxu0
    %v737 = vpop.f32.mrf.mxu0
    %v738 = vpop.f32.mrf.mxu0
    %739 = vdwg.mxu0
    %740 = vmatprep.subr.bf16.mxu0 0
    %741 = vmatpush1.bf16.msra.mxu0 0
    %742 = vmatprep.subr.bf16.mxu0 0
    %743 = vmatpush1.bf16.msra.mxu0 0
    %744 = vmatprep.subr.bf16.mxu0 0
    %745 = vmatpush1.bf16.msra.mxu0 0
    %746 = vmatprep.subr.bf16.mxu0 0
    %747 = vmatpush1.bf16.msra.mxu0 0
    %748 = vmatprep.subr.bf16.mxu0 0
    %749 = vmatpush1.bf16.msra.mxu0 0
    %750 = vmatprep.subr.bf16.mxu0 0
    %751 = vmatpush1.bf16.msra.mxu0 0
    %752 = vmatprep.subr.bf16.mxu0 0
    %753 = vmatpush1.bf16.msra.mxu0 %v467
    %754 = vmatprep.subr.bf16.mxu0 0
    %755 = vmatpush1.bf16.msra.mxu0 %v466
    %756 = vmatprep.subr.bf16.mxu0 0
    %757 = vmatpush2.bf16.msra.mxu0 0
    %758 = vmatprep.subr.bf16.mxu0 0
    %759 = vmatpush2.bf16.msra.mxu0 0
    %760 = vmatprep.subr.bf16.mxu0 0
    %761 = vmatpush2.bf16.msra.mxu0 0
    %762 = vmatprep.subr.bf16.mxu0 0
    %763 = vmatpush2.bf16.msra.mxu0 0
    %764 = vmatprep.subr.bf16.mxu0 0
    %765 = vmatpush2.bf16.msra.mxu0 0
    %766 = vmatprep.subr.bf16.mxu0 0
    %767 = vmatpush2.bf16.msra.mxu0 0
    %768 = vmatprep.subr.bf16.mxu0 0
    %769 = vmatpush2.bf16.msra.mxu0 0
    %770 = vmatprep.subr.bf16.mxu0 0
    %771 = vmatpush2.bf16.msra.mxu0 0
    %772 = vmatprep.mubr.bf16.mxu0 0
    %773 = vmatmul.mubr.bf16.gmra.mxu0 %v521
    %v774 = vpop.f32.mrf.mxu0
    %v775 = vadd.f32 %v456, %v774
    %v776 = vpop.f32.mrf.mxu0
    %v777 = vpop.f32.mrf.mxu0
    %v778 = vpop.f32.mrf.mxu0
    %779 = vdwg.mxu0
    %v780 = vmul.f32 %v652, %v775
    %v781 = vadd.f32 %v735, %v780
    %v782 = vtanh.pop %v781
    %v783 = vsub.f32 1.0, %v699
    %v784 = vmul.f32 %v783, %v782
    %v785 = vmul.f32 %v699, %v516
    %v786 = vadd.f32 %v784, %v785
    %s787 = scalar_lea.vmem %s0, 2
    %v788 = vld [vmem:[%s787] sm:$0x1]
    %v789 = vpack.c.bf16 %v786, %v786
    %v791 = vsel %vm146, %v789, 0
    %793 = vmatprep.subr.bf16.mxu0 0
    %794 = vmatpush1.bf16.msra.mxu0 0
    %795 = vmatprep.subr.bf16.mxu0 0
    %796 = vmatpush1.bf16.msra.mxu0 0
    %797 = vmatprep.subr.bf16.mxu0 0
    %798 = vmatpush1.bf16.msra.mxu0 0
    %799 = vmatprep.subr.bf16.mxu0 0
    %800 = vmatpush1.bf16.msra.mxu0 0
    %801 = vmatprep.subr.bf16.mxu0 0
    %802 = vmatpush1.bf16.msra.mxu0 0
    %803 = vmatprep.subr.bf16.mxu0 0
    %804 = vmatpush1.bf16.msra.mxu0 0
    %805 = vmatprep.subr.bf16.mxu0 0
    %806 = vmatpush1.bf16.msra.mxu0 %v143
    %807 = vmatprep.subr.bf16.mxu0 0
    %808 = vmatpush1.bf16.msra.mxu0 %v142
    %809 = vmatprep.subr.bf16.mxu0 0
    %810 = vmatpush2.bf16.msra.mxu0 0
    %811 = vmatprep.subr.bf16.mxu0 0
    %812 = vmatpush2.bf16.msra.mxu0 0
    %813 = vmatprep.subr.bf16.mxu0 0
    %814 = vmatpush2.bf16.msra.mxu0 0
    %815 = vmatprep.subr.bf16.mxu0 0
    %816 = vmatpush2.bf16.msra.mxu0 0
    %817 = vmatprep.subr.bf16.mxu0 0
    %818 = vmatpush2.bf16.msra.mxu0 0
    %819 = vmatprep.subr.bf16.mxu0 0
    %820 = vmatpush2.bf16.msra.mxu0 0
    %821 = vmatprep.subr.bf16.mxu0 0
    %822 = vmatpush2.bf16.msra.mxu0 0
    %823 = vmatprep.subr.bf16.mxu0 0
    %824 = vmatpush2.bf16.msra.mxu0 0
    %825 = vmatprep.mubr.bf16.mxu0 0
    %826 = vmatmul.mubr.bf16.gmra.mxu0 %v791
    %v827 = vpop.f32.mrf.mxu0
    %v828 = vadd.f32 0.0, %v827
    %v829 = vpop.f32.mrf.mxu0
    %v830 = vpop.f32.mrf.mxu0
    %v831 = vpop.f32.mrf.mxu0
    %832 = vdwg.mxu0
    %833 = vmatprep.subr.bf16.mxu0 0
    %834 = vmatpush1.bf16.msra.mxu0 0
    %835 = vmatprep.subr.bf16.mxu0 0
    %836 = vmatpush1.bf16.msra.mxu0 0
    %837 = vmatprep.subr.bf16.mxu0 0
    %838 = vmatpush1.bf16.msra.mxu0 0
    %839 = vmatprep.subr.bf16.mxu0 0
    %840 = vmatpush1.bf16.msra.mxu0 0
    %841 = vmatprep.subr.bf16.mxu0 0
    %842 = vmatpush1.bf16.msra.mxu0 0
    %843 = vmatprep.subr.bf16.mxu0 0
    %844 = vmatpush1.bf16.msra.mxu0 0
    %845 = vmatprep.subr.bf16.mxu0 0
    %846 = vmatpush1.bf16.msra.mxu0 %v199
    %847 = vmatprep.subr.bf16.mxu0 0
    %848 = vmatpush1.bf16.msra.mxu0 %v198
    %849 = vmatprep.subr.bf16.mxu0 0
    %850 = vmatpush2.bf16.msra.mxu0 0
    %851 = vmatprep.subr.bf16.mxu0 0
    %852 = vmatpush2.bf16.msra.mxu0 0
    %853 = vmatprep.subr.bf16.mxu0 0
    %854 = vmatpush2.bf16.msra.mxu0 0
    %855 = vmatprep.subr.bf16.mxu0 0
    %856 = vmatpush2.bf16.msra.mxu0 0
    %857 = vmatprep.subr.bf16.mxu0 0
    %858 = vmatpush2.bf16.msra.mxu0 0
    %859 = vmatprep.subr.bf16.mxu0 0
    %860 = vmatpush2.bf16.msra.mxu0 0
    %861 = vmatprep.subr.bf16.mxu0 0
    %862 = vmatpush2.bf16.msra.mxu0 0
    %863 = vmatprep.subr.bf16.mxu0 0
    %864 = vmatpush2.bf16.msra.mxu0 0
    %865 = vmatprep.mubr.bf16.mxu0 0
    %866 = vmatmul.mubr.bf16.gmra.mxu0 %v791
    %v867 = vpop.f32.mrf.mxu0
    %v868 = vadd.f32 0.0, %v867
    %v869 = vpop.f32.mrf.mxu0
    %v870 = vpop.f32.mrf.mxu0
    %v871 = vpop.f32.mrf.mxu0
    %872 = vdwg.mxu0
    %v874 = vsel %vm260, %v788, 0
    %876 = vmatprep.subr.bf16.mxu0 0
    %877 = vmatpush1.bf16.msra.mxu0 0
    %878 = vmatprep.subr.bf16.mxu0 0
    %879 = vmatpush1.bf16.msra.mxu0 0
    %880 = vmatprep.subr.bf16.mxu0 0
    %881 = vmatpush1.bf16.msra.mxu0 0
    %882 = vmatprep.subr.bf16.mxu0 0
    %883 = vmatpush1.bf16.msra.mxu0 0
    %884 = vmatprep.subr.bf16.mxu0 0
    %885 = vmatpush1.bf16.msra.mxu0 0
    %886 = vmatprep.subr.bf16.mxu0 0
    %887 = vmatpush1.bf16.msra.mxu0 %v256
    %888 = vmatprep.subr.bf16.mxu0 0
    %889 = vmatpush1.bf16.msra.mxu0 %v255
    %890 = vmatprep.subr.bf16.mxu0 0
    %891 = vmatpush1.bf16.msra.mxu0 %v254
    %892 = vmatprep.subr.bf16.mxu0 0
    %893 = vmatpush2.bf16.msra.mxu0 0
    %894 = vmatprep.subr.bf16.mxu0 0
    %895 = vmatpush2.bf16.msra.mxu0 0
    %896 = vmatprep.subr.bf16.mxu0 0
    %897 = vmatpush2.bf16.msra.mxu0 0
    %898 = vmatprep.subr.bf16.mxu0 0
    %899 = vmatpush2.bf16.msra.mxu0 0
    %900 = vmatprep.subr.bf16.mxu0 0
    %901 = vmatpush2.bf16.msra.mxu0 0
    %902 = vmatprep.subr.bf16.mxu0 0
    %903 = vmatpush2.bf16.msra.mxu0 0
    %904 = vmatprep.subr.bf16.mxu0 0
    %905 = vmatpush2.bf16.msra.mxu0 0
    %906 = vmatprep.subr.bf16.mxu0 0
    %907 = vmatpush2.bf16.msra.mxu0 0
    %908 = vmatprep.mubr.bf16.mxu0 0
    %909 = vmatmul.mubr.bf16.gmra.mxu0 %v874
    %v910 = vpop.f32.mrf.mxu0
    %v911 = vadd.f32 %v828, %v910
    %v912 = vpop.f32.mrf.mxu0
    %v913 = vpop.f32.mrf.mxu0
    %v914 = vpop.f32.mrf.mxu0
    %915 = vdwg.mxu0
    %v916 = vadd.f32 %v911, %v308
    %v917 = vxor.u32 %v916, 2147483648
    %v918 = vmul.f32 %v917, 1.442695
    %v919 = vpow.pop %v918
    %v920 = vadd.f32 %v919, 1.0
    %v921 = vrcp.pop %v920
    %v922 = vmul.f32 1.0, %v921
    %923 = vmatprep.subr.bf16.mxu0 0
    %924 = vmatpush1.bf16.msra.mxu0 0
    %925 = vmatprep.subr.bf16.mxu0 0
    %926 = vmatpush1.bf16.msra.mxu0 0
    %927 = vmatprep.subr.bf16.mxu0 0
    %928 = vmatpush1.bf16.msra.mxu0 0
    %929 = vmatprep.subr.bf16.mxu0 0
    %930 = vmatpush1.bf16.msra.mxu0 0
    %931 = vmatprep.subr.bf16.mxu0 0
    %932 = vmatpush1.bf16.msra.mxu0 0
    %933 = vmatprep.subr.bf16.mxu0 0
    %934 = vmatpush1.bf16.msra.mxu0 %v331
    %935 = vmatprep.subr.bf16.mxu0 0
    %936 = vmatpush1.bf16.msra.mxu0 %v330
    %937 = vmatprep.subr.bf16.mxu0 0
    %938 = vmatpush1.bf16.msra.mxu0 %v329
    %939 = vmatprep.subr.bf16.mxu0 0
    %940 = vmatpush2.bf16.msra.mxu0 0
    %941 = vmatprep.subr.bf16.mxu0 0
    %942 = vmatpush2.bf16.msra.mxu0 0
    %943 = vmatprep.subr.bf16.mxu0 0
    %944 = vmatpush2.bf16.msra.mxu0 0
    %945 = vmatprep.subr.bf16.mxu0 0
    %946 = vmatpush2.bf16.msra.mxu0 0
    %947 = vmatprep.subr.bf16.mxu0 0
    %948 = vmatpush2.bf16.msra.mxu0 0
    %949 = vmatprep.subr.bf16.mxu0 0
    %950 = vmatpush2.bf16.msra.mxu0 0
    %951 = vmatprep.subr.bf16.mxu0 0
    %952 = vmatpush2.bf16.msra.mxu0 0
    %953 = vmatprep.subr.bf16.mxu0 0
    %954 = vmatpush2.bf16.msra.mxu0 0
    %955 = vmatprep.mubr.bf16.mxu0 0
    %956 = vmatmul.mubr.bf16.gmra.mxu0 %v874
    %v957 = vpop.f32.mrf.mxu0
    %v958 = vadd.f32 %v868, %v957
    %v959 = vpop.f32.mrf.mxu0
    %v960 = vpop.f32.mrf.mxu0
    %v961 = vpop.f32.mrf.mxu0
    %962 = vdwg.mxu0
    %v963 = vadd.f32 %v958, %v379
    %v964 = vxor.u32 %v963, 2147483648
    %v965 = vmul.f32 %v964, 1.442695
    %v966 = vpow.pop %v965
    %v967 = vadd.f32 %v966, 1.0
    %v968 = vrcp.pop %v967
    %v969 = vmul.f32 1.0, %v968
    %970 = vmatprep.subr.bf16.mxu0 0
    %971 = vmatpush1.bf16.msra.mxu0 0
    %972 = vmatprep.subr.bf16.mxu0 0
    %973 = vmatpush1.bf16.msra.mxu0 0
    %974 = vmatprep.subr.bf16.mxu0 0
    %975 = vmatpush1.bf16.msra.mxu0 0
    %976 = vmatprep.subr.bf16.mxu0 0
    %977 = vmatpush1.bf16.msra.mxu0 0
    %978 = vmatprep.subr.bf16.mxu0 0
    %979 = vmatpush1.bf16.msra.mxu0 0
    %980 = vmatprep.subr.bf16.mxu0 0
    %981 = vmatpush1.bf16.msra.mxu0 %v408
    %982 = vmatprep.subr.bf16.mxu0 0
    %983 = vmatpush1.bf16.msra.mxu0 %v407
    %984 = vmatprep.subr.bf16.mxu0 0
    %985 = vmatpush1.bf16.msra.mxu0 %v406
    %986 = vmatprep.subr.bf16.mxu0 0
    %987 = vmatpush2.bf16.msra.mxu0 0
    %988 = vmatprep.subr.bf16.mxu0 0
    %989 = vmatpush2.bf16.msra.mxu0 0
    %990 = vmatprep.subr.bf16.mxu0 0
    %991 = vmatpush2.bf16.msra.mxu0 0
    %992 = vmatprep.subr.bf16.mxu0 0
    %993 = vmatpush2.bf16.msra.mxu0 0
    %994 = vmatprep.subr.bf16.mxu0 0
    %995 = vmatpush2.bf16.msra.mxu0 0
    %996 = vmatprep.subr.bf16.mxu0 0
    %997 = vmatpush2.bf16.msra.mxu0 0
    %998 = vmatprep.subr.bf16.mxu0 0
    %999 = vmatpush2.bf16.msra.mxu0 0
    %1000 = vmatprep.subr.bf16.mxu0 0
    %1001 = vmatpush2.bf16.msra.mxu0 0
    %1002 = vmatprep.mubr.bf16.mxu0 0
    %1003 = vmatmul.mubr.bf16.gmra.mxu0 %v874
    %v1004 = vpop.f32.mrf.mxu0
    %v1005 = vadd.f32 %v392, %v1004
    %v1006 = vpop.f32.mrf.mxu0
    %v1007 = vpop.f32.mrf.mxu0
    %v1008 = vpop.f32.mrf.mxu0
    %1009 = vdwg.mxu0
    %1010 = vmatprep.subr.bf16.mxu0 0
    %1011 = vmatpush1.bf16.msra.mxu0 0
    %1012 = vmatprep.subr.bf16.mxu0 0
    %1013 = vmatpush1.bf16.msra.mxu0 0
    %1014 = vmatprep.subr.bf16.mxu0 0
    %1015 = vmatpush1.bf16.msra.mxu0 0
    %1016 = vmatprep.subr.bf16.mxu0 0
    %1017 = vmatpush1.bf16.msra.mxu0 0
    %1018 = vmatprep.subr.bf16.mxu0 0
    %1019 = vmatpush1.bf16.msra.mxu0 0
    %1020 = vmatprep.subr.bf16.mxu0 0
    %1021 = vmatpush1.bf16.msra.mxu0 0
    %1022 = vmatprep.subr.bf16.mxu0 0
    %1023 = vmatpush1.bf16.msra.mxu0 %v467
    %1024 = vmatprep.subr.bf16.mxu0 0
    %1025 = vmatpush1.bf16.msra.mxu0 %v466
    %1026 = vmatprep.subr.bf16.mxu0 0
    %1027 = vmatpush2.bf16.msra.mxu0 0
    %1028 = vmatprep.subr.bf16.mxu0 0
    %1029 = vmatpush2.bf16.msra.mxu0 0
    %1030 = vmatprep.subr.bf16.mxu0 0
    %1031 = vmatpush2.bf16.msra.mxu0 0
    %1032 = vmatprep.subr.bf16.mxu0 0
    %1033 = vmatpush2.bf16.msra.mxu0 0
    %1034 = vmatprep.subr.bf16.mxu0 0
    %1035 = vmatpush2.bf16.msra.mxu0 0
    %1036 = vmatprep.subr.bf16.mxu0 0
    %1037 = vmatpush2.bf16.msra.mxu0 0
    %1038 = vmatprep.subr.bf16.mxu0 0
    %1039 = vmatpush2.bf16.msra.mxu0 0
    %1040 = vmatprep.subr.bf16.mxu0 0
    %1041 = vmatpush2.bf16.msra.mxu0 0
    %1042 = vmatprep.mubr.bf16.mxu0 0
    %1043 = vmatmul.mubr.bf16.gmra.mxu0 %v791
    %v1044 = vpop.f32.mrf.mxu0
    %v1045 = vadd.f32 %v456, %v1044
    %v1046 = vpop.f32.mrf.mxu0
    %v1047 = vpop.f32.mrf.mxu0
    %v1048 = vpop.f32.mrf.mxu0
    %1049 = vdwg.mxu0
    %v1050 = vmul.f32 %v922, %v1045
    %v1051 = vadd.f32 %v1005, %v1050
    %v1052 = vtanh.pop %v1051
    %v1053 = vsub.f32 1.0, %v969
    %v1054 = vmul.f32 %v1053, %v1052
    %v1055 = vmul.f32 %v969, %v786
    %v1056 = vadd.f32 %v1054, %v1055
    %s1057 = scalar_lea.vmem %s0, 3
    %v1058 = vld [vmem:[%s1057] sm:$0x1]
    %v1059 = vpack.c.bf16 %v1056, %v1056
    %v1061 = vsel %vm146, %v1059, 0
    %1063 = vmatprep.subr.bf16.mxu0 0
    %1064 = vmatpush1.bf16.msra.mxu0 0
    %1065 = vmatprep.subr.bf16.mxu0 0
    %1066 = vmatpush1.bf16.msra.mxu0 0
    %1067 = vmatprep.subr.bf16.mxu0 0
    %1068 = vmatpush1.bf16.msra.mxu0 0
    %1069 = vmatprep.subr.bf16.mxu0 0
    %1070 = vmatpush1.bf16.msra.mxu0 0
    %1071 = vmatprep.subr.bf16.mxu0 0
    %1072 = vmatpush1.bf16.msra.mxu0 0
    %1073 = vmatprep.subr.bf16.mxu0 0
    %1074 = vmatpush1.bf16.msra.mxu0 0
    %1075 = vmatprep.subr.bf16.mxu0 0
    %1076 = vmatpush1.bf16.msra.mxu0 %v143
    %1077 = vmatprep.subr.bf16.mxu0 0
    %1078 = vmatpush1.bf16.msra.mxu0 %v142
    %1079 = vmatprep.subr.bf16.mxu0 0
    %1080 = vmatpush2.bf16.msra.mxu0 0
    %1081 = vmatprep.subr.bf16.mxu0 0
    %1082 = vmatpush2.bf16.msra.mxu0 0
    %1083 = vmatprep.subr.bf16.mxu0 0
    %1084 = vmatpush2.bf16.msra.mxu0 0
    %1085 = vmatprep.subr.bf16.mxu0 0
    %1086 = vmatpush2.bf16.msra.mxu0 0
    %1087 = vmatprep.subr.bf16.mxu0 0
    %1088 = vmatpush2.bf16.msra.mxu0 0
    %1089 = vmatprep.subr.bf16.mxu0 0
    %1090 = vmatpush2.bf16.msra.mxu0 0
    %1091 = vmatprep.subr.bf16.mxu0 0
    %1092 = vmatpush2.bf16.msra.mxu0 0
    %1093 = vmatprep.subr.bf16.mxu0 0
    %1094 = vmatpush2.bf16.msra.mxu0 0
    %1095 = vmatprep.mubr.bf16.mxu0 0
    %1096 = vmatmul.mubr.bf16.gmra.mxu0 %v1061
    %v1097 = vpop.f32.mrf.mxu0
    %v1098 = vadd.f32 0.0, %v1097
    %v1099 = vpop.f32.mrf.mxu0
    %v1100 = vpop.f32.mrf.mxu0
    %v1101 = vpop.f32.mrf.mxu0
    %1102 = vdwg.mxu0
    %1103 = vmatprep.subr.bf16.mxu0 0
    %1104 = vmatpush1.bf16.msra.mxu0 0
    %1105 = vmatprep.subr.bf16.mxu0 0
    %1106 = vmatpush1.bf16.msra.mxu0 0
    %1107 = vmatprep.subr.bf16.mxu0 0
    %1108 = vmatpush1.bf16.msra.mxu0 0
    %1109 = vmatprep.subr.bf16.mxu0 0
    %1110 = vmatpush1.bf16.msra.mxu0 0
    %1111 = vmatprep.subr.bf16.mxu0 0
    %1112 = vmatpush1.bf16.msra.mxu0 0
    %1113 = vmatprep.subr.bf16.mxu0 0
    %1114 = vmatpush1.bf16.msra.mxu0 0
    %1115 = vmatprep.subr.bf16.mxu0 0
    %1116 = vmatpush1.bf16.msra.mxu0 %v199
    %1117 = vmatprep.subr.bf16.mxu0 0
    %1118 = vmatpush1.bf16.msra.mxu0 %v198
    %1119 = vmatprep.subr.bf16.mxu0 0
    %1120 = vmatpush2.bf16.msra.mxu0 0
    %1121 = vmatprep.subr.bf16.mxu0 0
    %1122 = vmatpush2.bf16.msra.mxu0 0
    %1123 = vmatprep.subr.bf16.mxu0 0
    %1124 = vmatpush2.bf16.msra.mxu0 0
    %1125 = vmatprep.subr.bf16.mxu0 0
    %1126 = vmatpush2.bf16.msra.mxu0 0
    %1127 = vmatprep.subr.bf16.mxu0 0
    %1128 = vmatpush2.bf16.msra.mxu0 0
    %1129 = vmatprep.subr.bf16.mxu0 0
    %1130 = vmatpush2.bf16.msra.mxu0 0
    %1131 = vmatprep.subr.bf16.mxu0 0
    %1132 = vmatpush2.bf16.msra.mxu0 0
    %1133 = vmatprep.subr.bf16.mxu0 0
    %1134 = vmatpush2.bf16.msra.mxu0 0
    %1135 = vmatprep.mubr.bf16.mxu0 0
    %1136 = vmatmul.mubr.bf16.gmra.mxu0 %v1061
    %v1137 = vpop.f32.mrf.mxu0
    %v1138 = vadd.f32 0.0, %v1137
    %v1139 = vpop.f32.mrf.mxu0
    %v1140 = vpop.f32.mrf.mxu0
    %v1141 = vpop.f32.mrf.mxu0
    %1142 = vdwg.mxu0
    %v1144 = vsel %vm260, %v1058, 0
    %1146 = vmatprep.subr.bf16.mxu0 0
    %1147 = vmatpush1.bf16.msra.mxu0 0
    %1148 = vmatprep.subr.bf16.mxu0 0
    %1149 = vmatpush1.bf16.msra.mxu0 0
    %1150 = vmatprep.subr.bf16.mxu0 0
    %1151 = vmatpush1.bf16.msra.mxu0 0
    %1152 = vmatprep.subr.bf16.mxu0 0
    %1153 = vmatpush1.bf16.msra.mxu0 0
    %1154 = vmatprep.subr.bf16.mxu0 0
    %1155 = vmatpush1.bf16.msra.mxu0 0
    %1156 = vmatprep.subr.bf16.mxu0 0
    %1157 = vmatpush1.bf16.msra.mxu0 %v256
    %1158 = vmatprep.subr.bf16.mxu0 0
    %1159 = vmatpush1.bf16.msra.mxu0 %v255
    %1160 = vmatprep.subr.bf16.mxu0 0
    %1161 = vmatpush1.bf16.msra.mxu0 %v254
    %1162 = vmatprep.subr.bf16.mxu0 0
    %1163 = vmatpush2.bf16.msra.mxu0 0
    %1164 = vmatprep.subr.bf16.mxu0 0
    %1165 = vmatpush2.bf16.msra.mxu0 0
    %1166 = vmatprep.subr.bf16.mxu0 0
    %1167 = vmatpush2.bf16.msra.mxu0 0
    %1168 = vmatprep.subr.bf16.mxu0 0
    %1169 = vmatpush2.bf16.msra.mxu0 0
    %1170 = vmatprep.subr.bf16.mxu0 0
    %1171 = vmatpush2.bf16.msra.mxu0 0
    %1172 = vmatprep.subr.bf16.mxu0 0
    %1173 = vmatpush2.bf16.msra.mxu0 0
    %1174 = vmatprep.subr.bf16.mxu0 0
    %1175 = vmatpush2.bf16.msra.mxu0 0
    %1176 = vmatprep.subr.bf16.mxu0 0
    %1177 = vmatpush2.bf16.msra.mxu0 0
    %1178 = vmatprep.mubr.bf16.mxu0 0
    %1179 = vmatmul.mubr.bf16.gmra.mxu0 %v1144
    %v1180 = vpop.f32.mrf.mxu0
    %v1181 = vadd.f32 %v1098, %v1180
    %v1182 = vpop.f32.mrf.mxu0
    %v1183 = vpop.f32.mrf.mxu0
    %v1184 = vpop.f32.mrf.mxu0
    %1185 = vdwg.mxu0
    %v1186 = vadd.f32 %v1181, %v308
    %v1187 = vxor.u32 %v1186, 2147483648
    %v1188 = vmul.f32 %v1187, 1.442695
    %v1189 = vpow.pop %v1188
    %v1190 = vadd.f32 %v1189, 1.0
    %v1191 = vrcp.pop %v1190
    %v1192 = vmul.f32 1.0, %v1191
    %1193 = vmatprep.subr.bf16.mxu0 0
    %1194 = vmatpush1.bf16.msra.mxu0 0
    %1195 = vmatprep.subr.bf16.mxu0 0
    %1196 = vmatpush1.bf16.msra.mxu0 0
    %1197 = vmatprep.subr.bf16.mxu0 0
    %1198 = vmatpush1.bf16.msra.mxu0 0
    %1199 = vmatprep.subr.bf16.mxu0 0
    %1200 = vmatpush1.bf16.msra.mxu0 0
    %1201 = vmatprep.subr.bf16.mxu0 0
    %1202 = vmatpush1.bf16.msra.mxu0 0
    %1203 = vmatprep.subr.bf16.mxu0 0
    %1204 = vmatpush1.bf16.msra.mxu0 %v331
    %1205 = vmatprep.subr.bf16.mxu0 0
    %1206 = vmatpush1.bf16.msra.mxu0 %v330
    %1207 = vmatprep.subr.bf16.mxu0 0
    %1208 = vmatpush1.bf16.msra.mxu0 %v329
    %1209 = vmatprep.subr.bf16.mxu0 0
    %1210 = vmatpush2.bf16.msra.mxu0 0
    %1211 = vmatprep.subr.bf16.mxu0 0
    %1212 = vmatpush2.bf16.msra.mxu0 0
    %1213 = vmatprep.subr.bf16.mxu0 0
    %1214 = vmatpush2.bf16.msra.mxu0 0
    %1215 = vmatprep.subr.bf16.mxu0 0
    %1216 = vmatpush2.bf16.msra.mxu0 0
    %1217 = vmatprep.subr.bf16.mxu0 0
    %1218 = vmatpush2.bf16.msra.mxu0 0
    %1219 = vmatprep.subr.bf16.mxu0 0
    %1220 = vmatpush2.bf16.msra.mxu0 0
    %1221 = vmatprep.subr.bf16.mxu0 0
    %1222 = vmatpush2.bf16.msra.mxu0 0
    %1223 = vmatprep.subr.bf16.mxu0 0
    %1224 = vmatpush2.bf16.msra.mxu0 0
    %1225 = vmatprep.mubr.bf16.mxu0 0
    %1226 = vmatmul.mubr.bf16.gmra.mxu0 %v1144
    %v1227 = vpop.f32.mrf.mxu0
    %v1228 = vadd.f32 %v1138, %v1227
    %v1229 = vpop.f32.mrf.mxu0
    %v1230 = vpop.f32.mrf.mxu0
    %v1231 = vpop.f32.mrf.mxu0
    %1232 = vdwg.mxu0
    %v1233 = vadd.f32 %v1228, %v379
    %v1234 = vxor.u32 %v1233, 2147483648
    %v1235 = vmul.f32 %v1234, 1.442695
    %v1236 = vpow.pop %v1235
    %v1237 = vadd.f32 %v1236, 1.0
    %v1238 = vrcp.pop %v1237
    %v1239 = vmul.f32 1.0, %v1238
    %1240 = vmatprep.subr.bf16.mxu0 0
    %1241 = vmatpush1.bf16.msra.mxu0 0
    %1242 = vmatprep.subr.bf16.mxu0 0
    %1243 = vmatpush1.bf16.msra.mxu0 0
    %1244 = vmatprep.subr.bf16.mxu0 0
    %1245 = vmatpush1.bf16.msra.mxu0 0
    %1246 = vmatprep.subr.bf16.mxu0 0
    %1247 = vmatpush1.bf16.msra.mxu0 0
    %1248 = vmatprep.subr.bf16.mxu0 0
    %1249 = vmatpush1.bf16.msra.mxu0 0
    %1250 = vmatprep.subr.bf16.mxu0 0
    %1251 = vmatpush1.bf16.msra.mxu0 %v408
    %1252 = vmatprep.subr.bf16.mxu0 0
    %1253 = vmatpush1.bf16.msra.mxu0 %v407
    %1254 = vmatprep.subr.bf16.mxu0 0
    %1255 = vmatpush1.bf16.msra.mxu0 %v406
    %1256 = vmatprep.subr.bf16.mxu0 0
    %1257 = vmatpush2.bf16.msra.mxu0 0
    %1258 = vmatprep.subr.bf16.mxu0 0
    %1259 = vmatpush2.bf16.msra.mxu0 0
    %1260 = vmatprep.subr.bf16.mxu0 0
    %1261 = vmatpush2.bf16.msra.mxu0 0
    %1262 = vmatprep.subr.bf16.mxu0 0
    %1263 = vmatpush2.bf16.msra.mxu0 0
    %1264 = vmatprep.subr.bf16.mxu0 0
    %1265 = vmatpush2.bf16.msra.mxu0 0
    %1266 = vmatprep.subr.bf16.mxu0 0
    %1267 = vmatpush2.bf16.msra.mxu0 0
    %1268 = vmatprep.subr.bf16.mxu0 0
    %1269 = vmatpush2.bf16.msra.mxu0 0
    %1270 = vmatprep.subr.bf16.mxu0 0
    %1271 = vmatpush2.bf16.msra.mxu0 0
    %1272 = vmatprep.mubr.bf16.mxu0 0
    %1273 = vmatmul.mubr.bf16.gmra.mxu0 %v1144
    %v1274 = vpop.f32.mrf.mxu0
    %v1275 = vadd.f32 %v392, %v1274
    %v1276 = vpop.f32.mrf.mxu0
    %v1277 = vpop.f32.mrf.mxu0
    %v1278 = vpop.f32.mrf.mxu0
    %1279 = vdwg.mxu0
    %1280 = vmatprep.subr.bf16.mxu0 0
    %1281 = vmatpush1.bf16.msra.mxu0 0
    %1282 = vmatprep.subr.bf16.mxu0 0
    %1283 = vmatpush1.bf16.msra.mxu0 0
    %1284 = vmatprep.subr.bf16.mxu0 0
    %1285 = vmatpush1.bf16.msra.mxu0 0
    %1286 = vmatprep.subr.bf16.mxu0 0
    %1287 = vmatpush1.bf16.msra.mxu0 0
    %1288 = vmatprep.subr.bf16.mxu0 0
    %1289 = vmatpush1.bf16.msra.mxu0 0
    %1290 = vmatprep.subr.bf16.mxu0 0
    %1291 = vmatpush1.bf16.msra.mxu0 0
    %1292 = vmatprep.subr.bf16.mxu0 0
    %1293 = vmatpush1.bf16.msra.mxu0 %v467
    %1294 = vmatprep.subr.bf16.mxu0 0
    %1295 = vmatpush1.bf16.msra.mxu0 %v466
    %1296 = vmatprep.subr.bf16.mxu0 0
    %1297 = vmatpush2.bf16.msra.mxu0 0
    %1298 = vmatprep.subr.bf16.mxu0 0
    %1299 = vmatpush2.bf16.msra.mxu0 0
    %1300 = vmatprep.subr.bf16.mxu0 0
    %1301 = vmatpush2.bf16.msra.mxu0 0
    %1302 = vmatprep.subr.bf16.mxu0 0
    %1303 = vmatpush2.bf16.msra.mxu0 0
    %1304 = vmatprep.subr.bf16.mxu0 0
    %1305 = vmatpush2.bf16.msra.mxu0 0
    %1306 = vmatprep.subr.bf16.mxu0 0
    %1307 = vmatpush2.bf16.msra.mxu0 0
    %1308 = vmatprep.subr.bf16.mxu0 0
    %1309 = vmatpush2.bf16.msra.mxu0 0
    %1310 = vmatprep.subr.bf16.mxu0 0
    %1311 = vmatpush2.bf16.msra.mxu0 0
    %1312 = vmatprep.mubr.bf16.mxu0 0
    %1313 = vmatmul.mubr.bf16.gmra.mxu0 %v1061
    %v1314 = vpop.f32.mrf.mxu0
    %v1315 = vadd.f32 %v456, %v1314
    %v1316 = vpop.f32.mrf.mxu0
    %v1317 = vpop.f32.mrf.mxu0
    %v1318 = vpop.f32.mrf.mxu0
    %1319 = vdwg.mxu0
    %v1320 = vmul.f32 %v1192, %v1315
    %v1321 = vadd.f32 %v1275, %v1320
    %v1322 = vtanh.pop %v1321
    %v1323 = vsub.f32 1.0, %v1239
    %v1324 = vmul.f32 %v1323, %v1322
    %v1325 = vmul.f32 %v1239, %v1056
    %v1326 = vadd.f32 %v1324, %v1325
    %s1327 = scalar_lea.vmem %s0, 4
    %v1328 = vld [vmem:[%s1327] sm:$0x1]
    %v1329 = vpack.c.bf16 %v1326, %v1326
    %v1331 = vsel %vm146, %v1329, 0
    %1333 = vmatprep.subr.bf16.mxu0 0
    %1334 = vmatpush1.bf16.msra.mxu0 0
    %1335 = vmatprep.subr.bf16.mxu0 0
    %1336 = vmatpush1.bf16.msra.mxu0 0
    %1337 = vmatprep.subr.bf16.mxu0 0
    %1338 = vmatpush1.bf16.msra.mxu0 0
    %1339 = vmatprep.subr.bf16.mxu0 0
    %1340 = vmatpush1.bf16.msra.mxu0 0
    %1341 = vmatprep.subr.bf16.mxu0 0
    %1342 = vmatpush1.bf16.msra.mxu0 0
    %1343 = vmatprep.subr.bf16.mxu0 0
    %1344 = vmatpush1.bf16.msra.mxu0 0
    %1345 = vmatprep.subr.bf16.mxu0 0
    %1346 = vmatpush1.bf16.msra.mxu0 %v143
    %1347 = vmatprep.subr.bf16.mxu0 0
    %1348 = vmatpush1.bf16.msra.mxu0 %v142
    %1349 = vmatprep.subr.bf16.mxu0 0
    %1350 = vmatpush2.bf16.msra.mxu0 0
    %1351 = vmatprep.subr.bf16.mxu0 0
    %1352 = vmatpush2.bf16.msra.mxu0 0
    %1353 = vmatprep.subr.bf16.mxu0 0
    %1354 = vmatpush2.bf16.msra.mxu0 0
    %1355 = vmatprep.subr.bf16.mxu0 0
    %1356 = vmatpush2.bf16.msra.mxu0 0
    %1357 = vmatprep.subr.bf16.mxu0 0
    %1358 = vmatpush2.bf16.msra.mxu0 0
    %1359 = vmatprep.subr.bf16.mxu0 0
    %1360 = vmatpush2.bf16.msra.mxu0 0
    %1361 = vmatprep.subr.bf16.mxu0 0
    %1362 = vmatpush2.bf16.msra.mxu0 0
    %1363 = vmatprep.subr.bf16.mxu0 0
    %1364 = vmatpush2.bf16.msra.mxu0 0
    %1365 = vmatprep.mubr.bf16.mxu0 0
    %1366 = vmatmul.mubr.bf16.gmra.mxu0 %v1331
    %v1367 = vpop.f32.mrf.mxu0
    %v1368 = vadd.f32 0.0, %v1367
    %v1369 = vpop.f32.mrf.mxu0
    %v1370 = vpop.f32.mrf.mxu0
    %v1371 = vpop.f32.mrf.mxu0
    %1372 = vdwg.mxu0
    %1373 = vmatprep.subr.bf16.mxu0 0
    %1374 = vmatpush1.bf16.msra.mxu0 0
    %1375 = vmatprep.subr.bf16.mxu0 0
    %1376 = vmatpush1.bf16.msra.mxu0 0
    %1377 = vmatprep.subr.bf16.mxu0 0
    %1378 = vmatpush1.bf16.msra.mxu0 0
    %1379 = vmatprep.subr.bf16.mxu0 0
    %1380 = vmatpush1.bf16.msra.mxu0 0
    %1381 = vmatprep.subr.bf16.mxu0 0
    %1382 = vmatpush1.bf16.msra.mxu0 0
    %1383 = vmatprep.subr.bf16.mxu0 0
    %1384 = vmatpush1.bf16.msra.mxu0 0
    %1385 = vmatprep.subr.bf16.mxu0 0
    %1386 = vmatpush1.bf16.msra.mxu0 %v199
    %1387 = vmatprep.subr.bf16.mxu0 0
    %1388 = vmatpush1.bf16.msra.mxu0 %v198
    %1389 = vmatprep.subr.bf16.mxu0 0
    %1390 = vmatpush2.bf16.msra.mxu0 0
    %1391 = vmatprep.subr.bf16.mxu0 0
    %1392 = vmatpush2.bf16.msra.mxu0 0
    %1393 = vmatprep.subr.bf16.mxu0 0
    %1394 = vmatpush2.bf16.msra.mxu0 0
    %1395 = vmatprep.subr.bf16.mxu0 0
    %1396 = vmatpush2.bf16.msra.mxu0 0
    %1397 = vmatprep.subr.bf16.mxu0 0
    %1398 = vmatpush2.bf16.msra.mxu0 0
    %1399 = vmatprep.subr.bf16.mxu0 0
    %1400 = vmatpush2.bf16.msra.mxu0 0
    %1401 = vmatprep.subr.bf16.mxu0 0
    %1402 = vmatpush2.bf16.msra.mxu0 0
    %1403 = vmatprep.subr.bf16.mxu0 0
    %1404 = vmatpush2.bf16.msra.mxu0 0
    %1405 = vmatprep.mubr.bf16.mxu0 0
    %1406 = vmatmul.mubr.bf16.gmra.mxu0 %v1331
    %v1407 = vpop.f32.mrf.mxu0
    %v1408 = vadd.f32 0.0, %v1407
    %v1409 = vpop.f32.mrf.mxu0
    %v1410 = vpop.f32.mrf.mxu0
    %v1411 = vpop.f32.mrf.mxu0
    %1412 = vdwg.mxu0
    %v1414 = vsel %vm260, %v1328, 0
    %1416 = vmatprep.subr.bf16.mxu0 0
    %1417 = vmatpush1.bf16.msra.mxu0 0
    %1418 = vmatprep.subr.bf16.mxu0 0
    %1419 = vmatpush1.bf16.msra.mxu0 0
    %1420 = vmatprep.subr.bf16.mxu0 0
    %1421 = vmatpush1.bf16.msra.mxu0 0
    %1422 = vmatprep.subr.bf16.mxu0 0
    %1423 = vmatpush1.bf16.msra.mxu0 0
    %1424 = vmatprep.subr.bf16.mxu0 0
    %1425 = vmatpush1.bf16.msra.mxu0 0
    %1426 = vmatprep.subr.bf16.mxu0 0
    %1427 = vmatpush1.bf16.msra.mxu0 %v256
    %1428 = vmatprep.subr.bf16.mxu0 0
    %1429 = vmatpush1.bf16.msra.mxu0 %v255
    %1430 = vmatprep.subr.bf16.mxu0 0
    %1431 = vmatpush1.bf16.msra.mxu0 %v254
    %1432 = vmatprep.subr.bf16.mxu0 0
    %1433 = vmatpush2.bf16.msra.mxu0 0
    %1434 = vmatprep.subr.bf16.mxu0 0
    %1435 = vmatpush2.bf16.msra.mxu0 0
    %1436 = vmatprep.subr.bf16.mxu0 0
    %1437 = vmatpush2.bf16.msra.mxu0 0
    %1438 = vmatprep.subr.bf16.mxu0 0
    %1439 = vmatpush2.bf16.msra.mxu0 0
    %1440 = vmatprep.subr.bf16.mxu0 0
    %1441 = vmatpush2.bf16.msra.mxu0 0
    %1442 = vmatprep.subr.bf16.mxu0 0
    %1443 = vmatpush2.bf16.msra.mxu0 0
    %1444 = vmatprep.subr.bf16.mxu0 0
    %1445 = vmatpush2.bf16.msra.mxu0 0
    %1446 = vmatprep.subr.bf16.mxu0 0
    %1447 = vmatpush2.bf16.msra.mxu0 0
    %1448 = vmatprep.mubr.bf16.mxu0 0
    %1449 = vmatmul.mubr.bf16.gmra.mxu0 %v1414
    %v1450 = vpop.f32.mrf.mxu0
    %v1451 = vadd.f32 %v1368, %v1450
    %v1452 = vpop.f32.mrf.mxu0
    %v1453 = vpop.f32.mrf.mxu0
    %v1454 = vpop.f32.mrf.mxu0
    %1455 = vdwg.mxu0
    %v1456 = vadd.f32 %v1451, %v308
    %v1457 = vxor.u32 %v1456, 2147483648
    %v1458 = vmul.f32 %v1457, 1.442695
    %v1459 = vpow.pop %v1458
    %v1460 = vadd.f32 %v1459, 1.0
    %v1461 = vrcp.pop %v1460
    %v1462 = vmul.f32 1.0, %v1461
    %1463 = vmatprep.subr.bf16.mxu0 0
    %1464 = vmatpush1.bf16.msra.mxu0 0
    %1465 = vmatprep.subr.bf16.mxu0 0
    %1466 = vmatpush1.bf16.msra.mxu0 0
    %1467 = vmatprep.subr.bf16.mxu0 0
    %1468 = vmatpush1.bf16.msra.mxu0 0
    %1469 = vmatprep.subr.bf16.mxu0 0
    %1470 = vmatpush1.bf16.msra.mxu0 0
    %1471 = vmatprep.subr.bf16.mxu0 0
    %1472 = vmatpush1.bf16.msra.mxu0 0
    %1473 = vmatprep.subr.bf16.mxu0 0
    %1474 = vmatpush1.bf16.msra.mxu0 %v331
    %1475 = vmatprep.subr.bf16.mxu0 0
    %1476 = vmatpush1.bf16.msra.mxu0 %v330
    %1477 = vmatprep.subr.bf16.mxu0 0
    %1478 = vmatpush1.bf16.msra.mxu0 %v329
    %1479 = vmatprep.subr.bf16.mxu0 0
    %1480 = vmatpush2.bf16.msra.mxu0 0
    %1481 = vmatprep.subr.bf16.mxu0 0
    %1482 = vmatpush2.bf16.msra.mxu0 0
    %1483 = vmatprep.subr.bf16.mxu0 0
    %1484 = vmatpush2.bf16.msra.mxu0 0
    %1485 = vmatprep.subr.bf16.mxu0 0
    %1486 = vmatpush2.bf16.msra.mxu0 0
    %1487 = vmatprep.subr.bf16.mxu0 0
    %1488 = vmatpush2.bf16.msra.mxu0 0
    %1489 = vmatprep.subr.bf16.mxu0 0
    %1490 = vmatpush2.bf16.msra.mxu0 0
    %1491 = vmatprep.subr.bf16.mxu0 0
    %1492 = vmatpush2.bf16.msra.mxu0 0
    %1493 = vmatprep.subr.bf16.mxu0 0
    %1494 = vmatpush2.bf16.msra.mxu0 0
    %1495 = vmatprep.mubr.bf16.mxu0 0
    %1496 = vmatmul.mubr.bf16.gmra.mxu0 %v1414
    %v1497 = vpop.f32.mrf.mxu0
    %v1498 = vadd.f32 %v1408, %v1497
    %v1499 = vpop.f32.mrf.mxu0
    %v1500 = vpop.f32.mrf.mxu0
    %v1501 = vpop.f32.mrf.mxu0
    %1502 = vdwg.mxu0
    %v1503 = vadd.f32 %v1498, %v379
    %v1504 = vxor.u32 %v1503, 2147483648
    %v1505 = vmul.f32 %v1504, 1.442695
    %v1506 = vpow.pop %v1505
    %v1507 = vadd.f32 %v1506, 1.0
    %v1508 = vrcp.pop %v1507
    %v1509 = vmul.f32 1.0, %v1508
    %1510 = vmatprep.subr.bf16.mxu0 0
    %1511 = vmatpush1.bf16.msra.mxu0 0
    %1512 = vmatprep.subr.bf16.mxu0 0
    %1513 = vmatpush1.bf16.msra.mxu0 0
    %1514 = vmatprep.subr.bf16.mxu0 0
    %1515 = vmatpush1.bf16.msra.mxu0 0
    %1516 = vmatprep.subr.bf16.mxu0 0
    %1517 = vmatpush1.bf16.msra.mxu0 0
    %1518 = vmatprep.subr.bf16.mxu0 0
    %1519 = vmatpush1.bf16.msra.mxu0 0
    %1520 = vmatprep.subr.bf16.mxu0 0
    %1521 = vmatpush1.bf16.msra.mxu0 %v408
    %1522 = vmatprep.subr.bf16.mxu0 0
    %1523 = vmatpush1.bf16.msra.mxu0 %v407
    %1524 = vmatprep.subr.bf16.mxu0 0
    %1525 = vmatpush1.bf16.msra.mxu0 %v406
    %1526 = vmatprep.subr.bf16.mxu0 0
    %1527 = vmatpush2.bf16.msra.mxu0 0
    %1528 = vmatprep.subr.bf16.mxu0 0
    %1529 = vmatpush2.bf16.msra.mxu0 0
    %1530 = vmatprep.subr.bf16.mxu0 0
    %1531 = vmatpush2.bf16.msra.mxu0 0
    %1532 = vmatprep.subr.bf16.mxu0 0
    %1533 = vmatpush2.bf16.msra.mxu0 0
    %1534 = vmatprep.subr.bf16.mxu0 0
    %1535 = vmatpush2.bf16.msra.mxu0 0
    %1536 = vmatprep.subr.bf16.mxu0 0
    %1537 = vmatpush2.bf16.msra.mxu0 0
    %1538 = vmatprep.subr.bf16.mxu0 0
    %1539 = vmatpush2.bf16.msra.mxu0 0
    %1540 = vmatprep.subr.bf16.mxu0 0
    %1541 = vmatpush2.bf16.msra.mxu0 0
    %1542 = vmatprep.mubr.bf16.mxu0 0
    %1543 = vmatmul.mubr.bf16.gmra.mxu0 %v1414
    %v1544 = vpop.f32.mrf.mxu0
    %v1545 = vadd.f32 %v392, %v1544
    %v1546 = vpop.f32.mrf.mxu0
    %v1547 = vpop.f32.mrf.mxu0
    %v1548 = vpop.f32.mrf.mxu0
    %1549 = vdwg.mxu0
    %1550 = vmatprep.subr.bf16.mxu0 0
    %1551 = vmatpush1.bf16.msra.mxu0 0
    %1552 = vmatprep.subr.bf16.mxu0 0
    %1553 = vmatpush1.bf16.msra.mxu0 0
    %1554 = vmatprep.subr.bf16.mxu0 0
    %1555 = vmatpush1.bf16.msra.mxu0 0
    %1556 = vmatprep.subr.bf16.mxu0 0
    %1557 = vmatpush1.bf16.msra.mxu0 0
    %1558 = vmatprep.subr.bf16.mxu0 0
    %1559 = vmatpush1.bf16.msra.mxu0 0
    %1560 = vmatprep.subr.bf16.mxu0 0
    %1561 = vmatpush1.bf16.msra.mxu0 0
    %1562 = vmatprep.subr.bf16.mxu0 0
    %1563 = vmatpush1.bf16.msra.mxu0 %v467
    %1564 = vmatprep.subr.bf16.mxu0 0
    %1565 = vmatpush1.bf16.msra.mxu0 %v466
    %1566 = vmatprep.subr.bf16.mxu0 0
    %1567 = vmatpush2.bf16.msra.mxu0 0
    %1568 = vmatprep.subr.bf16.mxu0 0
    %1569 = vmatpush2.bf16.msra.mxu0 0
    %1570 = vmatprep.subr.bf16.mxu0 0
    %1571 = vmatpush2.bf16.msra.mxu0 0
    %1572 = vmatprep.subr.bf16.mxu0 0
    %1573 = vmatpush2.bf16.msra.mxu0 0
    %1574 = vmatprep.subr.bf16.mxu0 0
    %1575 = vmatpush2.bf16.msra.mxu0 0
    %1576 = vmatprep.subr.bf16.mxu0 0
    %1577 = vmatpush2.bf16.msra.mxu0 0
    %1578 = vmatprep.subr.bf16.mxu0 0
    %1579 = vmatpush2.bf16.msra.mxu0 0
    %1580 = vmatprep.subr.bf16.mxu0 0
    %1581 = vmatpush2.bf16.msra.mxu0 0
    %1582 = vmatprep.mubr.bf16.mxu0 0
    %1583 = vmatmul.mubr.bf16.gmra.mxu0 %v1331
    %v1584 = vpop.f32.mrf.mxu0
    %v1585 = vadd.f32 %v456, %v1584
    %v1586 = vpop.f32.mrf.mxu0
    %v1587 = vpop.f32.mrf.mxu0
    %v1588 = vpop.f32.mrf.mxu0
    %1589 = vdwg.mxu0
    %v1590 = vmul.f32 %v1462, %v1585
    %v1591 = vadd.f32 %v1545, %v1590
    %v1592 = vtanh.pop %v1591
    %v1593 = vsub.f32 1.0, %v1509
    %v1594 = vmul.f32 %v1593, %v1592
    %v1595 = vmul.f32 %v1509, %v1326
    %v1596 = vadd.f32 %v1594, %v1595
    %s1597 = scalar_lea.vmem %s0, 5
    %v1598 = vld [vmem:[%s1597] sm:$0x1]
    %v1599 = vpack.c.bf16 %v1596, %v1596
    %v1601 = vsel %vm146, %v1599, 0
    %1603 = vmatprep.subr.bf16.mxu0 0
    %1604 = vmatpush1.bf16.msra.mxu0 0
    %1605 = vmatprep.subr.bf16.mxu0 0
    %1606 = vmatpush1.bf16.msra.mxu0 0
    %1607 = vmatprep.subr.bf16.mxu0 0
    %1608 = vmatpush1.bf16.msra.mxu0 0
    %1609 = vmatprep.subr.bf16.mxu0 0
    %1610 = vmatpush1.bf16.msra.mxu0 0
    %1611 = vmatprep.subr.bf16.mxu0 0
    %1612 = vmatpush1.bf16.msra.mxu0 0
    %1613 = vmatprep.subr.bf16.mxu0 0
    %1614 = vmatpush1.bf16.msra.mxu0 0
    %1615 = vmatprep.subr.bf16.mxu0 0
    %1616 = vmatpush1.bf16.msra.mxu0 %v143
    %1617 = vmatprep.subr.bf16.mxu0 0
    %1618 = vmatpush1.bf16.msra.mxu0 %v142
    %1619 = vmatprep.subr.bf16.mxu0 0
    %1620 = vmatpush2.bf16.msra.mxu0 0
    %1621 = vmatprep.subr.bf16.mxu0 0
    %1622 = vmatpush2.bf16.msra.mxu0 0
    %1623 = vmatprep.subr.bf16.mxu0 0
    %1624 = vmatpush2.bf16.msra.mxu0 0
    %1625 = vmatprep.subr.bf16.mxu0 0
    %1626 = vmatpush2.bf16.msra.mxu0 0
    %1627 = vmatprep.subr.bf16.mxu0 0
    %1628 = vmatpush2.bf16.msra.mxu0 0
    %1629 = vmatprep.subr.bf16.mxu0 0
    %1630 = vmatpush2.bf16.msra.mxu0 0
    %1631 = vmatprep.subr.bf16.mxu0 0
    %1632 = vmatpush2.bf16.msra.mxu0 0
    %1633 = vmatprep.subr.bf16.mxu0 0
    %1634 = vmatpush2.bf16.msra.mxu0 0
    %1635 = vmatprep.mubr.bf16.mxu0 0
    %1636 = vmatmul.mubr.bf16.gmra.mxu0 %v1601
    %v1637 = vpop.f32.mrf.mxu0
    %v1638 = vadd.f32 0.0, %v1637
    %v1639 = vpop.f32.mrf.mxu0
    %v1640 = vpop.f32.mrf.mxu0
    %v1641 = vpop.f32.mrf.mxu0
    %1642 = vdwg.mxu0
    %1643 = vmatprep.subr.bf16.mxu0 0
    %1644 = vmatpush1.bf16.msra.mxu0 0
    %1645 = vmatprep.subr.bf16.mxu0 0
    %1646 = vmatpush1.bf16.msra.mxu0 0
    %1647 = vmatprep.subr.bf16.mxu0 0
    %1648 = vmatpush1.bf16.msra.mxu0 0
    %1649 = vmatprep.subr.bf16.mxu0 0
    %1650 = vmatpush1.bf16.msra.mxu0 0
    %1651 = vmatprep.subr.bf16.mxu0 0
    %1652 = vmatpush1.bf16.msra.mxu0 0
    %1653 = vmatprep.subr.bf16.mxu0 0
    %1654 = vmatpush1.bf16.msra.mxu0 0
    %1655 = vmatprep.subr.bf16.mxu0 0
    %1656 = vmatpush1.bf16.msra.mxu0 %v199
    %1657 = vmatprep.subr.bf16.mxu0 0
    %1658 = vmatpush1.bf16.msra.mxu0 %v198
    %1659 = vmatprep.subr.bf16.mxu0 0
    %1660 = vmatpush2.bf16.msra.mxu0 0
    %1661 = vmatprep.subr.bf16.mxu0 0
    %1662 = vmatpush2.bf16.msra.mxu0 0
    %1663 = vmatprep.subr.bf16.mxu0 0
    %1664 = vmatpush2.bf16.msra.mxu0 0
    %1665 = vmatprep.subr.bf16.mxu0 0
    %1666 = vmatpush2.bf16.msra.mxu0 0
    %1667 = vmatprep.subr.bf16.mxu0 0
    %1668 = vmatpush2.bf16.msra.mxu0 0
    %1669 = vmatprep.subr.bf16.mxu0 0
    %1670 = vmatpush2.bf16.msra.mxu0 0
    %1671 = vmatprep.subr.bf16.mxu0 0
    %1672 = vmatpush2.bf16.msra.mxu0 0
    %1673 = vmatprep.subr.bf16.mxu0 0
    %1674 = vmatpush2.bf16.msra.mxu0 0
    %1675 = vmatprep.mubr.bf16.mxu0 0
    %1676 = vmatmul.mubr.bf16.gmra.mxu0 %v1601
    %v1677 = vpop.f32.mrf.mxu0
    %v1678 = vadd.f32 0.0, %v1677
    %v1679 = vpop.f32.mrf.mxu0
    %v1680 = vpop.f32.mrf.mxu0
    %v1681 = vpop.f32.mrf.mxu0
    %1682 = vdwg.mxu0
    %v1684 = vsel %vm260, %v1598, 0
    %1686 = vmatprep.subr.bf16.mxu0 0
    %1687 = vmatpush1.bf16.msra.mxu0 0
    %1688 = vmatprep.subr.bf16.mxu0 0
    %1689 = vmatpush1.bf16.msra.mxu0 0
    %1690 = vmatprep.subr.bf16.mxu0 0
    %1691 = vmatpush1.bf16.msra.mxu0 0
    %1692 = vmatprep.subr.bf16.mxu0 0
    %1693 = vmatpush1.bf16.msra.mxu0 0
    %1694 = vmatprep.subr.bf16.mxu0 0
    %1695 = vmatpush1.bf16.msra.mxu0 0
    %1696 = vmatprep.subr.bf16.mxu0 0
    %1697 = vmatpush1.bf16.msra.mxu0 %v256
    %1698 = vmatprep.subr.bf16.mxu0 0
    %1699 = vmatpush1.bf16.msra.mxu0 %v255
    %1700 = vmatprep.subr.bf16.mxu0 0
    %1701 = vmatpush1.bf16.msra.mxu0 %v254
    %1702 = vmatprep.subr.bf16.mxu0 0
    %1703 = vmatpush2.bf16.msra.mxu0 0
    %1704 = vmatprep.subr.bf16.mxu0 0
    %1705 = vmatpush2.bf16.msra.mxu0 0
    %1706 = vmatprep.subr.bf16.mxu0 0
    %1707 = vmatpush2.bf16.msra.mxu0 0
    %1708 = vmatprep.subr.bf16.mxu0 0
    %1709 = vmatpush2.bf16.msra.mxu0 0
    %1710 = vmatprep.subr.bf16.mxu0 0
    %1711 = vmatpush2.bf16.msra.mxu0 0
    %1712 = vmatprep.subr.bf16.mxu0 0
    %1713 = vmatpush2.bf16.msra.mxu0 0
    %1714 = vmatprep.subr.bf16.mxu0 0
    %1715 = vmatpush2.bf16.msra.mxu0 0
    %1716 = vmatprep.subr.bf16.mxu0 0
    %1717 = vmatpush2.bf16.msra.mxu0 0
    %1718 = vmatprep.mubr.bf16.mxu0 0
    %1719 = vmatmul.mubr.bf16.gmra.mxu0 %v1684
    %v1720 = vpop.f32.mrf.mxu0
    %v1721 = vadd.f32 %v1638, %v1720
    %v1722 = vpop.f32.mrf.mxu0
    %v1723 = vpop.f32.mrf.mxu0
    %v1724 = vpop.f32.mrf.mxu0
    %1725 = vdwg.mxu0
    %v1726 = vadd.f32 %v1721, %v308
    %v1727 = vxor.u32 %v1726, 2147483648
    %v1728 = vmul.f32 %v1727, 1.442695
    %v1729 = vpow.pop %v1728
    %v1730 = vadd.f32 %v1729, 1.0
    %v1731 = vrcp.pop %v1730
    %v1732 = vmul.f32 1.0, %v1731
    %1733 = vmatprep.subr.bf16.mxu0 0
    %1734 = vmatpush1.bf16.msra.mxu0 0
    %1735 = vmatprep.subr.bf16.mxu0 0
    %1736 = vmatpush1.bf16.msra.mxu0 0
    %1737 = vmatprep.subr.bf16.mxu0 0
    %1738 = vmatpush1.bf16.msra.mxu0 0
    %1739 = vmatprep.subr.bf16.mxu0 0
    %1740 = vmatpush1.bf16.msra.mxu0 0
    %1741 = vmatprep.subr.bf16.mxu0 0
    %1742 = vmatpush1.bf16.msra.mxu0 0
    %1743 = vmatprep.subr.bf16.mxu0 0
    %1744 = vmatpush1.bf16.msra.mxu0 %v331
    %1745 = vmatprep.subr.bf16.mxu0 0
    %1746 = vmatpush1.bf16.msra.mxu0 %v330
    %1747 = vmatprep.subr.bf16.mxu0 0
    %1748 = vmatpush1.bf16.msra.mxu0 %v329
    %1749 = vmatprep.subr.bf16.mxu0 0
    %1750 = vmatpush2.bf16.msra.mxu0 0
    %1751 = vmatprep.subr.bf16.mxu0 0
    %1752 = vmatpush2.bf16.msra.mxu0 0
    %1753 = vmatprep.subr.bf16.mxu0 0
    %1754 = vmatpush2.bf16.msra.mxu0 0
    %1755 = vmatprep.subr.bf16.mxu0 0
    %1756 = vmatpush2.bf16.msra.mxu0 0
    %1757 = vmatprep.subr.bf16.mxu0 0
    %1758 = vmatpush2.bf16.msra.mxu0 0
    %1759 = vmatprep.subr.bf16.mxu0 0
    %1760 = vmatpush2.bf16.msra.mxu0 0
    %1761 = vmatprep.subr.bf16.mxu0 0
    %1762 = vmatpush2.bf16.msra.mxu0 0
    %1763 = vmatprep.subr.bf16.mxu0 0
    %1764 = vmatpush2.bf16.msra.mxu0 0
    %1765 = vmatprep.mubr.bf16.mxu0 0
    %1766 = vmatmul.mubr.bf16.gmra.mxu0 %v1684
    %v1767 = vpop.f32.mrf.mxu0
    %v1768 = vadd.f32 %v1678, %v1767
    %v1769 = vpop.f32.mrf.mxu0
    %v1770 = vpop.f32.mrf.mxu0
    %v1771 = vpop.f32.mrf.mxu0
    %1772 = vdwg.mxu0
    %v1773 = vadd.f32 %v1768, %v379
    %v1774 = vxor.u32 %v1773, 2147483648
    %v1775 = vmul.f32 %v1774, 1.442695
    %v1776 = vpow.pop %v1775
    %v1777 = vadd.f32 %v1776, 1.0
    %v1778 = vrcp.pop %v1777
    %v1779 = vmul.f32 1.0, %v1778
    %1780 = vmatprep.subr.bf16.mxu0 0
    %1781 = vmatpush1.bf16.msra.mxu0 0
    %1782 = vmatprep.subr.bf16.mxu0 0
    %1783 = vmatpush1.bf16.msra.mxu0 0
    %1784 = vmatprep.subr.bf16.mxu0 0
    %1785 = vmatpush1.bf16.msra.mxu0 0
    %1786 = vmatprep.subr.bf16.mxu0 0
    %1787 = vmatpush1.bf16.msra.mxu0 0
    %1788 = vmatprep.subr.bf16.mxu0 0
    %1789 = vmatpush1.bf16.msra.mxu0 0
    %1790 = vmatprep.subr.bf16.mxu0 0
    %1791 = vmatpush1.bf16.msra.mxu0 %v408
    %1792 = vmatprep.subr.bf16.mxu0 0
    %1793 = vmatpush1.bf16.msra.mxu0 %v407
    %1794 = vmatprep.subr.bf16.mxu0 0
    %1795 = vmatpush1.bf16.msra.mxu0 %v406
    %1796 = vmatprep.subr.bf16.mxu0 0
    %1797 = vmatpush2.bf16.msra.mxu0 0
    %1798 = vmatprep.subr.bf16.mxu0 0
    %1799 = vmatpush2.bf16.msra.mxu0 0
    %1800 = vmatprep.subr.bf16.mxu0 0
    %1801 = vmatpush2.bf16.msra.mxu0 0
    %1802 = vmatprep.subr.bf16.mxu0 0
    %1803 = vmatpush2.bf16.msra.mxu0 0
    %1804 = vmatprep.subr.bf16.mxu0 0
    %1805 = vmatpush2.bf16.msra.mxu0 0
    %1806 = vmatprep.subr.bf16.mxu0 0
    %1807 = vmatpush2.bf16.msra.mxu0 0
    %1808 = vmatprep.subr.bf16.mxu0 0
    %1809 = vmatpush2.bf16.msra.mxu0 0
    %1810 = vmatprep.subr.bf16.mxu0 0
    %1811 = vmatpush2.bf16.msra.mxu0 0
    %1812 = vmatprep.mubr.bf16.mxu0 0
    %1813 = vmatmul.mubr.bf16.gmra.mxu0 %v1684
    %v1814 = vpop.f32.mrf.mxu0
    %v1815 = vadd.f32 %v392, %v1814
    %v1816 = vpop.f32.mrf.mxu0
    %v1817 = vpop.f32.mrf.mxu0
    %v1818 = vpop.f32.mrf.mxu0
    %1819 = vdwg.mxu0
    %1820 = vmatprep.subr.bf16.mxu0 0
    %1821 = vmatpush1.bf16.msra.mxu0 0
    %1822 = vmatprep.subr.bf16.mxu0 0
    %1823 = vmatpush1.bf16.msra.mxu0 0
    %1824 = vmatprep.subr.bf16.mxu0 0
    %1825 = vmatpush1.bf16.msra.mxu0 0
    %1826 = vmatprep.subr.bf16.mxu0 0
    %1827 = vmatpush1.bf16.msra.mxu0 0
    %1828 = vmatprep.subr.bf16.mxu0 0
    %1829 = vmatpush1.bf16.msra.mxu0 0
    %1830 = vmatprep.subr.bf16.mxu0 0
    %1831 = vmatpush1.bf16.msra.mxu0 0
    %1832 = vmatprep.subr.bf16.mxu0 0
    %1833 = vmatpush1.bf16.msra.mxu0 %v467
    %1834 = vmatprep.subr.bf16.mxu0 0
    %1835 = vmatpush1.bf16.msra.mxu0 %v466
    %1836 = vmatprep.subr.bf16.mxu0 0
    %1837 = vmatpush2.bf16.msra.mxu0 0
    %1838 = vmatprep.subr.bf16.mxu0 0
    %1839 = vmatpush2.bf16.msra.mxu0 0
    %1840 = vmatprep.subr.bf16.mxu0 0
    %1841 = vmatpush2.bf16.msra.mxu0 0
    %1842 = vmatprep.subr.bf16.mxu0 0
    %1843 = vmatpush2.bf16.msra.mxu0 0
    %1844 = vmatprep.subr.bf16.mxu0 0
    %1845 = vmatpush2.bf16.msra.mxu0 0
    %1846 = vmatprep.subr.bf16.mxu0 0
    %1847 = vmatpush2.bf16.msra.mxu0 0
    %1848 = vmatprep.subr.bf16.mxu0 0
    %1849 = vmatpush2.bf16.msra.mxu0 0
    %1850 = vmatprep.subr.bf16.mxu0 0
    %1851 = vmatpush2.bf16.msra.mxu0 0
    %1852 = vmatprep.mubr.bf16.mxu0 0
    %1853 = vmatmul.mubr.bf16.gmra.mxu0 %v1601
    %v1854 = vpop.f32.mrf.mxu0
    %v1855 = vadd.f32 %v456, %v1854
    %v1856 = vpop.f32.mrf.mxu0
    %v1857 = vpop.f32.mrf.mxu0
    %v1858 = vpop.f32.mrf.mxu0
    %1859 = vdwg.mxu0
    %v1860 = vmul.f32 %v1732, %v1855
    %v1861 = vadd.f32 %v1815, %v1860
    %v1862 = vtanh.pop %v1861
    %v1863 = vsub.f32 1.0, %v1779
    %v1864 = vmul.f32 %v1863, %v1862
    %v1865 = vmul.f32 %v1779, %v1596
    %v1866 = vadd.f32 %v1864, %v1865
    %s1867 = scalar_lea.vmem %s0, 6
    %v1868 = vld [vmem:[%s1867] sm:$0x1]
    %v1869 = vpack.c.bf16 %v1866, %v1866
    %v1871 = vsel %vm146, %v1869, 0
    %1873 = vmatprep.subr.bf16.mxu0 0
    %1874 = vmatpush1.bf16.msra.mxu0 0
    %1875 = vmatprep.subr.bf16.mxu0 0
    %1876 = vmatpush1.bf16.msra.mxu0 0
    %1877 = vmatprep.subr.bf16.mxu0 0
    %1878 = vmatpush1.bf16.msra.mxu0 0
    %1879 = vmatprep.subr.bf16.mxu0 0
    %1880 = vmatpush1.bf16.msra.mxu0 0
    %1881 = vmatprep.subr.bf16.mxu0 0
    %1882 = vmatpush1.bf16.msra.mxu0 0
    %1883 = vmatprep.subr.bf16.mxu0 0
    %1884 = vmatpush1.bf16.msra.mxu0 0
    %1885 = vmatprep.subr.bf16.mxu0 0
    %1886 = vmatpush1.bf16.msra.mxu0 %v143
    %1887 = vmatprep.subr.bf16.mxu0 0
    %1888 = vmatpush1.bf16.msra.mxu0 %v142
    %1889 = vmatprep.subr.bf16.mxu0 0
    %1890 = vmatpush2.bf16.msra.mxu0 0
    %1891 = vmatprep.subr.bf16.mxu0 0
    %1892 = vmatpush2.bf16.msra.mxu0 0
    %1893 = vmatprep.subr.bf16.mxu0 0
    %1894 = vmatpush2.bf16.msra.mxu0 0
    %1895 = vmatprep.subr.bf16.mxu0 0
    %1896 = vmatpush2.bf16.msra.mxu0 0
    %1897 = vmatprep.subr.bf16.mxu0 0
    %1898 = vmatpush2.bf16.msra.mxu0 0
    %1899 = vmatprep.subr.bf16.mxu0 0
    %1900 = vmatpush2.bf16.msra.mxu0 0
    %1901 = vmatprep.subr.bf16.mxu0 0
    %1902 = vmatpush2.bf16.msra.mxu0 0
    %1903 = vmatprep.subr.bf16.mxu0 0
    %1904 = vmatpush2.bf16.msra.mxu0 0
    %1905 = vmatprep.mubr.bf16.mxu0 0
    %1906 = vmatmul.mubr.bf16.gmra.mxu0 %v1871
    %v1907 = vpop.f32.mrf.mxu0
    %v1908 = vadd.f32 0.0, %v1907
    %v1909 = vpop.f32.mrf.mxu0
    %v1910 = vpop.f32.mrf.mxu0
    %v1911 = vpop.f32.mrf.mxu0
    %1912 = vdwg.mxu0
    %1913 = vmatprep.subr.bf16.mxu0 0
    %1914 = vmatpush1.bf16.msra.mxu0 0
    %1915 = vmatprep.subr.bf16.mxu0 0
    %1916 = vmatpush1.bf16.msra.mxu0 0
    %1917 = vmatprep.subr.bf16.mxu0 0
    %1918 = vmatpush1.bf16.msra.mxu0 0
    %1919 = vmatprep.subr.bf16.mxu0 0
    %1920 = vmatpush1.bf16.msra.mxu0 0
    %1921 = vmatprep.subr.bf16.mxu0 0
    %1922 = vmatpush1.bf16.msra.mxu0 0
    %1923 = vmatprep.subr.bf16.mxu0 0
    %1924 = vmatpush1.bf16.msra.mxu0 0
    %1925 = vmatprep.subr.bf16.mxu0 0
    %1926 = vmatpush1.bf16.msra.mxu0 %v199
    %1927 = vmatprep.subr.bf16.mxu0 0
    %1928 = vmatpush1.bf16.msra.mxu0 %v198
    %1929 = vmatprep.subr.bf16.mxu0 0
    %1930 = vmatpush2.bf16.msra.mxu0 0
    %1931 = vmatprep.subr.bf16.mxu0 0
    %1932 = vmatpush2.bf16.msra.mxu0 0
    %1933 = vmatprep.subr.bf16.mxu0 0
    %1934 = vmatpush2.bf16.msra.mxu0 0
    %1935 = vmatprep.subr.bf16.mxu0 0
    %1936 = vmatpush2.bf16.msra.mxu0 0
    %1937 = vmatprep.subr.bf16.mxu0 0
    %1938 = vmatpush2.bf16.msra.mxu0 0
    %1939 = vmatprep.subr.bf16.mxu0 0
    %1940 = vmatpush2.bf16.msra.mxu0 0
    %1941 = vmatprep.subr.bf16.mxu0 0
    %1942 = vmatpush2.bf16.msra.mxu0 0
    %1943 = vmatprep.subr.bf16.mxu0 0
    %1944 = vmatpush2.bf16.msra.mxu0 0
    %1945 = vmatprep.mubr.bf16.mxu0 0
    %1946 = vmatmul.mubr.bf16.gmra.mxu0 %v1871
    %v1947 = vpop.f32.mrf.mxu0
    %v1948 = vadd.f32 0.0, %v1947
    %v1949 = vpop.f32.mrf.mxu0
    %v1950 = vpop.f32.mrf.mxu0
    %v1951 = vpop.f32.mrf.mxu0
    %1952 = vdwg.mxu0
    %v1954 = vsel %vm260, %v1868, 0
    %1956 = vmatprep.subr.bf16.mxu0 0
    %1957 = vmatpush1.bf16.msra.mxu0 0
    %1958 = vmatprep.subr.bf16.mxu0 0
    %1959 = vmatpush1.bf16.msra.mxu0 0
    %1960 = vmatprep.subr.bf16.mxu0 0
    %1961 = vmatpush1.bf16.msra.mxu0 0
    %1962 = vmatprep.subr.bf16.mxu0 0
    %1963 = vmatpush1.bf16.msra.mxu0 0
    %1964 = vmatprep.subr.bf16.mxu0 0
    %1965 = vmatpush1.bf16.msra.mxu0 0
    %1966 = vmatprep.subr.bf16.mxu0 0
    %1967 = vmatpush1.bf16.msra.mxu0 %v256
    %1968 = vmatprep.subr.bf16.mxu0 0
    %1969 = vmatpush1.bf16.msra.mxu0 %v255
    %1970 = vmatprep.subr.bf16.mxu0 0
    %1971 = vmatpush1.bf16.msra.mxu0 %v254
    %1972 = vmatprep.subr.bf16.mxu0 0
    %1973 = vmatpush2.bf16.msra.mxu0 0
    %1974 = vmatprep.subr.bf16.mxu0 0
    %1975 = vmatpush2.bf16.msra.mxu0 0
    %1976 = vmatprep.subr.bf16.mxu0 0
    %1977 = vmatpush2.bf16.msra.mxu0 0
    %1978 = vmatprep.subr.bf16.mxu0 0
    %1979 = vmatpush2.bf16.msra.mxu0 0
    %1980 = vmatprep.subr.bf16.mxu0 0
    %1981 = vmatpush2.bf16.msra.mxu0 0
    %1982 = vmatprep.subr.bf16.mxu0 0
    %1983 = vmatpush2.bf16.msra.mxu0 0
    %1984 = vmatprep.subr.bf16.mxu0 0
    %1985 = vmatpush2.bf16.msra.mxu0 0
    %1986 = vmatprep.subr.bf16.mxu0 0
    %1987 = vmatpush2.bf16.msra.mxu0 0
    %1988 = vmatprep.mubr.bf16.mxu0 0
    %1989 = vmatmul.mubr.bf16.gmra.mxu0 %v1954
    %v1990 = vpop.f32.mrf.mxu0
    %v1991 = vadd.f32 %v1908, %v1990
    %v1992 = vpop.f32.mrf.mxu0
    %v1993 = vpop.f32.mrf.mxu0
    %v1994 = vpop.f32.mrf.mxu0
    %1995 = vdwg.mxu0
    %v1996 = vadd.f32 %v1991, %v308
    %v1997 = vxor.u32 %v1996, 2147483648
    %v1998 = vmul.f32 %v1997, 1.442695
    %v1999 = vpow.pop %v1998
    %v2000 = vadd.f32 %v1999, 1.0
    %v2001 = vrcp.pop %v2000
    %v2002 = vmul.f32 1.0, %v2001
    %2003 = vmatprep.subr.bf16.mxu0 0
    %2004 = vmatpush1.bf16.msra.mxu0 0
    %2005 = vmatprep.subr.bf16.mxu0 0
    %2006 = vmatpush1.bf16.msra.mxu0 0
    %2007 = vmatprep.subr.bf16.mxu0 0
    %2008 = vmatpush1.bf16.msra.mxu0 0
    %2009 = vmatprep.subr.bf16.mxu0 0
    %2010 = vmatpush1.bf16.msra.mxu0 0
    %2011 = vmatprep.subr.bf16.mxu0 0
    %2012 = vmatpush1.bf16.msra.mxu0 0
    %2013 = vmatprep.subr.bf16.mxu0 0
    %2014 = vmatpush1.bf16.msra.mxu0 %v331
    %2015 = vmatprep.subr.bf16.mxu0 0
    %2016 = vmatpush1.bf16.msra.mxu0 %v330
    %2017 = vmatprep.subr.bf16.mxu0 0
    %2018 = vmatpush1.bf16.msra.mxu0 %v329
    %2019 = vmatprep.subr.bf16.mxu0 0
    %2020 = vmatpush2.bf16.msra.mxu0 0
    %2021 = vmatprep.subr.bf16.mxu0 0
    %2022 = vmatpush2.bf16.msra.mxu0 0
    %2023 = vmatprep.subr.bf16.mxu0 0
    %2024 = vmatpush2.bf16.msra.mxu0 0
    %2025 = vmatprep.subr.bf16.mxu0 0
    %2026 = vmatpush2.bf16.msra.mxu0 0
    %2027 = vmatprep.subr.bf16.mxu0 0
    %2028 = vmatpush2.bf16.msra.mxu0 0
    %2029 = vmatprep.subr.bf16.mxu0 0
    %2030 = vmatpush2.bf16.msra.mxu0 0
    %2031 = vmatprep.subr.bf16.mxu0 0
    %2032 = vmatpush2.bf16.msra.mxu0 0
    %2033 = vmatprep.subr.bf16.mxu0 0
    %2034 = vmatpush2.bf16.msra.mxu0 0
    %2035 = vmatprep.mubr.bf16.mxu0 0
    %2036 = vmatmul.mubr.bf16.gmra.mxu0 %v1954
    %v2037 = vpop.f32.mrf.mxu0
    %v2038 = vadd.f32 %v1948, %v2037
    %v2039 = vpop.f32.mrf.mxu0
    %v2040 = vpop.f32.mrf.mxu0
    %v2041 = vpop.f32.mrf.mxu0
    %2042 = vdwg.mxu0
    %v2043 = vadd.f32 %v2038, %v379
    %v2044 = vxor.u32 %v2043, 2147483648
    %v2045 = vmul.f32 %v2044, 1.442695
    %v2046 = vpow.pop %v2045
    %v2047 = vadd.f32 %v2046, 1.0
    %v2048 = vrcp.pop %v2047
    %v2049 = vmul.f32 1.0, %v2048
    %2050 = vmatprep.subr.bf16.mxu0 0
    %2051 = vmatpush1.bf16.msra.mxu0 0
    %2052 = vmatprep.subr.bf16.mxu0 0
    %2053 = vmatpush1.bf16.msra.mxu0 0
    %2054 = vmatprep.subr.bf16.mxu0 0
    %2055 = vmatpush1.bf16.msra.mxu0 0
    %2056 = vmatprep.subr.bf16.mxu0 0
    %2057 = vmatpush1.bf16.msra.mxu0 0
    %2058 = vmatprep.subr.bf16.mxu0 0
    %2059 = vmatpush1.bf16.msra.mxu0 0
    %2060 = vmatprep.subr.bf16.mxu0 0
    %2061 = vmatpush1.bf16.msra.mxu0 %v408
    %2062 = vmatprep.subr.bf16.mxu0 0
    %2063 = vmatpush1.bf16.msra.mxu0 %v407
    %2064 = vmatprep.subr.bf16.mxu0 0
    %2065 = vmatpush1.bf16.msra.mxu0 %v406
    %2066 = vmatprep.subr.bf16.mxu0 0
    %2067 = vmatpush2.bf16.msra.mxu0 0
    %2068 = vmatprep.subr.bf16.mxu0 0
    %2069 = vmatpush2.bf16.msra.mxu0 0
    %2070 = vmatprep.subr.bf16.mxu0 0
    %2071 = vmatpush2.bf16.msra.mxu0 0
    %2072 = vmatprep.subr.bf16.mxu0 0
    %2073 = vmatpush2.bf16.msra.mxu0 0
    %2074 = vmatprep.subr.bf16.mxu0 0
    %2075 = vmatpush2.bf16.msra.mxu0 0
    %2076 = vmatprep.subr.bf16.mxu0 0
    %2077 = vmatpush2.bf16.msra.mxu0 0
    %2078 = vmatprep.subr.bf16.mxu0 0
    %2079 = vmatpush2.bf16.msra.mxu0 0
    %2080 = vmatprep.subr.bf16.mxu0 0
    %2081 = vmatpush2.bf16.msra.mxu0 0
    %2082 = vmatprep.mubr.bf16.mxu0 0
    %2083 = vmatmul.mubr.bf16.gmra.mxu0 %v1954
    %v2084 = vpop.f32.mrf.mxu0
    %v2085 = vadd.f32 %v392, %v2084
    %v2086 = vpop.f32.mrf.mxu0
    %v2087 = vpop.f32.mrf.mxu0
    %v2088 = vpop.f32.mrf.mxu0
    %2089 = vdwg.mxu0
    %2090 = vmatprep.subr.bf16.mxu0 0
    %2091 = vmatpush1.bf16.msra.mxu0 0
    %2092 = vmatprep.subr.bf16.mxu0 0
    %2093 = vmatpush1.bf16.msra.mxu0 0
    %2094 = vmatprep.subr.bf16.mxu0 0
    %2095 = vmatpush1.bf16.msra.mxu0 0
    %2096 = vmatprep.subr.bf16.mxu0 0
    %2097 = vmatpush1.bf16.msra.mxu0 0
    %2098 = vmatprep.subr.bf16.mxu0 0
    %2099 = vmatpush1.bf16.msra.mxu0 0
    %2100 = vmatprep.subr.bf16.mxu0 0
    %2101 = vmatpush1.bf16.msra.mxu0 0
    %2102 = vmatprep.subr.bf16.mxu0 0
    %2103 = vmatpush1.bf16.msra.mxu0 %v467
    %2104 = vmatprep.subr.bf16.mxu0 0
    %2105 = vmatpush1.bf16.msra.mxu0 %v466
    %2106 = vmatprep.subr.bf16.mxu0 0
    %2107 = vmatpush2.bf16.msra.mxu0 0
    %2108 = vmatprep.subr.bf16.mxu0 0
    %2109 = vmatpush2.bf16.msra.mxu0 0
    %2110 = vmatprep.subr.bf16.mxu0 0
    %2111 = vmatpush2.bf16.msra.mxu0 0
    %2112 = vmatprep.subr.bf16.mxu0 0
    %2113 = vmatpush2.bf16.msra.mxu0 0
    %2114 = vmatprep.subr.bf16.mxu0 0
    %2115 = vmatpush2.bf16.msra.mxu0 0
    %2116 = vmatprep.subr.bf16.mxu0 0
    %2117 = vmatpush2.bf16.msra.mxu0 0
    %2118 = vmatprep.subr.bf16.mxu0 0
    %2119 = vmatpush2.bf16.msra.mxu0 0
    %2120 = vmatprep.subr.bf16.mxu0 0
    %2121 = vmatpush2.bf16.msra.mxu0 0
    %2122 = vmatprep.mubr.bf16.mxu0 0
    %2123 = vmatmul.mubr.bf16.gmra.mxu0 %v1871
    %v2124 = vpop.f32.mrf.mxu0
    %v2125 = vadd.f32 %v456, %v2124
    %v2126 = vpop.f32.mrf.mxu0
    %v2127 = vpop.f32.mrf.mxu0
    %v2128 = vpop.f32.mrf.mxu0
    %2129 = vdwg.mxu0
    %v2130 = vmul.f32 %v2002, %v2125
    %v2131 = vadd.f32 %v2085, %v2130
    %v2132 = vtanh.pop %v2131
    %v2133 = vsub.f32 1.0, %v2049
    %v2134 = vmul.f32 %v2133, %v2132
    %v2135 = vmul.f32 %v2049, %v1866
    %v2136 = vadd.f32 %v2134, %v2135
    %s2137 = scalar_lea.vmem %s0, 7
    %v2138 = vld [vmem:[%s2137] sm:$0x1]
    %v2139 = vpack.c.bf16 %v2136, %v2136
    %v2141 = vsel %vm146, %v2139, 0
    %2143 = vmatprep.subr.bf16.mxu0 0
    %2144 = vmatpush1.bf16.msra.mxu0 0
    %2145 = vmatprep.subr.bf16.mxu0 0
    %2146 = vmatpush1.bf16.msra.mxu0 0
    %2147 = vmatprep.subr.bf16.mxu0 0
    %2148 = vmatpush1.bf16.msra.mxu0 0
    %2149 = vmatprep.subr.bf16.mxu0 0
    %2150 = vmatpush1.bf16.msra.mxu0 0
    %2151 = vmatprep.subr.bf16.mxu0 0
    %2152 = vmatpush1.bf16.msra.mxu0 0
    %2153 = vmatprep.subr.bf16.mxu0 0
    %2154 = vmatpush1.bf16.msra.mxu0 0
    %2155 = vmatprep.subr.bf16.mxu0 0
    %2156 = vmatpush1.bf16.msra.mxu0 %v143
    %2157 = vmatprep.subr.bf16.mxu0 0
    %2158 = vmatpush1.bf16.msra.mxu0 %v142
    %2159 = vmatprep.subr.bf16.mxu0 0
    %2160 = vmatpush2.bf16.msra.mxu0 0
    %2161 = vmatprep.subr.bf16.mxu0 0
    %2162 = vmatpush2.bf16.msra.mxu0 0
    %2163 = vmatprep.subr.bf16.mxu0 0
    %2164 = vmatpush2.bf16.msra.mxu0 0
    %2165 = vmatprep.subr.bf16.mxu0 0
    %2166 = vmatpush2.bf16.msra.mxu0 0
    %2167 = vmatprep.subr.bf16.mxu0 0
    %2168 = vmatpush2.bf16.msra.mxu0 0
    %2169 = vmatprep.subr.bf16.mxu0 0
    %2170 = vmatpush2.bf16.msra.mxu0 0
    %2171 = vmatprep.subr.bf16.mxu0 0
    %2172 = vmatpush2.bf16.msra.mxu0 0
    %2173 = vmatprep.subr.bf16.mxu0 0
    %2174 = vmatpush2.bf16.msra.mxu0 0
    %2175 = vmatprep.mubr.bf16.mxu0 0
    %2176 = vmatmul.mubr.bf16.gmra.mxu0 %v2141
    %v2177 = vpop.f32.mrf.mxu0
    %v2178 = vadd.f32 0.0, %v2177
    %v2179 = vpop.f32.mrf.mxu0
    %v2180 = vpop.f32.mrf.mxu0
    %v2181 = vpop.f32.mrf.mxu0
    %2182 = vdwg.mxu0
    %2183 = vmatprep.subr.bf16.mxu0 0
    %2184 = vmatpush1.bf16.msra.mxu0 0
    %2185 = vmatprep.subr.bf16.mxu0 0
    %2186 = vmatpush1.bf16.msra.mxu0 0
    %2187 = vmatprep.subr.bf16.mxu0 0
    %2188 = vmatpush1.bf16.msra.mxu0 0
    %2189 = vmatprep.subr.bf16.mxu0 0
    %2190 = vmatpush1.bf16.msra.mxu0 0
    %2191 = vmatprep.subr.bf16.mxu0 0
    %2192 = vmatpush1.bf16.msra.mxu0 0
    %2193 = vmatprep.subr.bf16.mxu0 0
    %2194 = vmatpush1.bf16.msra.mxu0 0
    %2195 = vmatprep.subr.bf16.mxu0 0
    %2196 = vmatpush1.bf16.msra.mxu0 %v199
    %2197 = vmatprep.subr.bf16.mxu0 0
    %2198 = vmatpush1.bf16.msra.mxu0 %v198
    %2199 = vmatprep.subr.bf16.mxu0 0
    %2200 = vmatpush2.bf16.msra.mxu0 0
    %2201 = vmatprep.subr.bf16.mxu0 0
    %2202 = vmatpush2.bf16.msra.mxu0 0
    %2203 = vmatprep.subr.bf16.mxu0 0
    %2204 = vmatpush2.bf16.msra.mxu0 0
    %2205 = vmatprep.subr.bf16.mxu0 0
    %2206 = vmatpush2.bf16.msra.mxu0 0
    %2207 = vmatprep.subr.bf16.mxu0 0
    %2208 = vmatpush2.bf16.msra.mxu0 0
    %2209 = vmatprep.subr.bf16.mxu0 0
    %2210 = vmatpush2.bf16.msra.mxu0 0
    %2211 = vmatprep.subr.bf16.mxu0 0
    %2212 = vmatpush2.bf16.msra.mxu0 0
    %2213 = vmatprep.subr.bf16.mxu0 0
    %2214 = vmatpush2.bf16.msra.mxu0 0
    %2215 = vmatprep.mubr.bf16.mxu0 0
    %2216 = vmatmul.mubr.bf16.gmra.mxu0 %v2141
    %v2217 = vpop.f32.mrf.mxu0
    %v2218 = vadd.f32 0.0, %v2217
    %v2219 = vpop.f32.mrf.mxu0
    %v2220 = vpop.f32.mrf.mxu0
    %v2221 = vpop.f32.mrf.mxu0
    %2222 = vdwg.mxu0
    %v2224 = vsel %vm260, %v2138, 0
    %2226 = vmatprep.subr.bf16.mxu0 0
    %2227 = vmatpush1.bf16.msra.mxu0 0
    %2228 = vmatprep.subr.bf16.mxu0 0
    %2229 = vmatpush1.bf16.msra.mxu0 0
    %2230 = vmatprep.subr.bf16.mxu0 0
    %2231 = vmatpush1.bf16.msra.mxu0 0
    %2232 = vmatprep.subr.bf16.mxu0 0
    %2233 = vmatpush1.bf16.msra.mxu0 0
    %2234 = vmatprep.subr.bf16.mxu0 0
    %2235 = vmatpush1.bf16.msra.mxu0 0
    %2236 = vmatprep.subr.bf16.mxu0 0
    %2237 = vmatpush1.bf16.msra.mxu0 %v256
    %2238 = vmatprep.subr.bf16.mxu0 0
    %2239 = vmatpush1.bf16.msra.mxu0 %v255
    %2240 = vmatprep.subr.bf16.mxu0 0
    %2241 = vmatpush1.bf16.msra.mxu0 %v254
    %2242 = vmatprep.subr.bf16.mxu0 0
    %2243 = vmatpush2.bf16.msra.mxu0 0
    %2244 = vmatprep.subr.bf16.mxu0 0
    %2245 = vmatpush2.bf16.msra.mxu0 0
    %2246 = vmatprep.subr.bf16.mxu0 0
    %2247 = vmatpush2.bf16.msra.mxu0 0
    %2248 = vmatprep.subr.bf16.mxu0 0
    %2249 = vmatpush2.bf16.msra.mxu0 0
    %2250 = vmatprep.subr.bf16.mxu0 0
    %2251 = vmatpush2.bf16.msra.mxu0 0
    %2252 = vmatprep.subr.bf16.mxu0 0
    %2253 = vmatpush2.bf16.msra.mxu0 0
    %2254 = vmatprep.subr.bf16.mxu0 0
    %2255 = vmatpush2.bf16.msra.mxu0 0
    %2256 = vmatprep.subr.bf16.mxu0 0
    %2257 = vmatpush2.bf16.msra.mxu0 0
    %2258 = vmatprep.mubr.bf16.mxu0 0
    %2259 = vmatmul.mubr.bf16.gmra.mxu0 %v2224
    %v2260 = vpop.f32.mrf.mxu0
    %v2261 = vadd.f32 %v2178, %v2260
    %v2262 = vpop.f32.mrf.mxu0
    %v2263 = vpop.f32.mrf.mxu0
    %v2264 = vpop.f32.mrf.mxu0
    %2265 = vdwg.mxu0
    %v2266 = vadd.f32 %v2261, %v308
    %v2267 = vxor.u32 %v2266, 2147483648
    %v2268 = vmul.f32 %v2267, 1.442695
    %v2269 = vpow.pop %v2268
    %v2270 = vadd.f32 %v2269, 1.0
    %v2271 = vrcp.pop %v2270
    %v2272 = vmul.f32 1.0, %v2271
    %2273 = vmatprep.subr.bf16.mxu0 0
    %2274 = vmatpush1.bf16.msra.mxu0 0
    %2275 = vmatprep.subr.bf16.mxu0 0
    %2276 = vmatpush1.bf16.msra.mxu0 0
    %2277 = vmatprep.subr.bf16.mxu0 0
    %2278 = vmatpush1.bf16.msra.mxu0 0
    %2279 = vmatprep.subr.bf16.mxu0 0
    %2280 = vmatpush1.bf16.msra.mxu0 0
    %2281 = vmatprep.subr.bf16.mxu0 0
    %2282 = vmatpush1.bf16.msra.mxu0 0
    %2283 = vmatprep.subr.bf16.mxu0 0
    %2284 = vmatpush1.bf16.msra.mxu0 %v331
    %2285 = vmatprep.subr.bf16.mxu0 0
    %2286 = vmatpush1.bf16.msra.mxu0 %v330
    %2287 = vmatprep.subr.bf16.mxu0 0
    %2288 = vmatpush1.bf16.msra.mxu0 %v329
    %2289 = vmatprep.subr.bf16.mxu0 0
    %2290 = vmatpush2.bf16.msra.mxu0 0
    %2291 = vmatprep.subr.bf16.mxu0 0
    %2292 = vmatpush2.bf16.msra.mxu0 0
    %2293 = vmatprep.subr.bf16.mxu0 0
    %2294 = vmatpush2.bf16.msra.mxu0 0
    %2295 = vmatprep.subr.bf16.mxu0 0
    %2296 = vmatpush2.bf16.msra.mxu0 0
    %2297 = vmatprep.subr.bf16.mxu0 0
    %2298 = vmatpush2.bf16.msra.mxu0 0
    %2299 = vmatprep.subr.bf16.mxu0 0
    %2300 = vmatpush2.bf16.msra.mxu0 0
    %2301 = vmatprep.subr.bf16.mxu0 0
    %2302 = vmatpush2.bf16.msra.mxu0 0
    %2303 = vmatprep.subr.bf16.mxu0 0
    %2304 = vmatpush2.bf16.msra.mxu0 0
    %2305 = vmatprep.mubr.bf16.mxu0 0
    %2306 = vmatmul.mubr.bf16.gmra.mxu0 %v2224
    %v2307 = vpop.f32.mrf.mxu0
    %v2308 = vadd.f32 %v2218, %v2307
    %v2309 = vpop.f32.mrf.mxu0
    %v2310 = vpop.f32.mrf.mxu0
    %v2311 = vpop.f32.mrf.mxu0
    %2312 = vdwg.mxu0
    %v2313 = vadd.f32 %v2308, %v379
    %v2314 = vxor.u32 %v2313, 2147483648
    %v2315 = vmul.f32 %v2314, 1.442695
    %v2316 = vpow.pop %v2315
    %v2317 = vadd.f32 %v2316, 1.0
    %v2318 = vrcp.pop %v2317
    %v2319 = vmul.f32 1.0, %v2318
    %2320 = vmatprep.subr.bf16.mxu0 0
    %2321 = vmatpush1.bf16.msra.mxu0 0
    %2322 = vmatprep.subr.bf16.mxu0 0
    %2323 = vmatpush1.bf16.msra.mxu0 0
    %2324 = vmatprep.subr.bf16.mxu0 0
    %2325 = vmatpush1.bf16.msra.mxu0 0
    %2326 = vmatprep.subr.bf16.mxu0 0
    %2327 = vmatpush1.bf16.msra.mxu0 0
    %2328 = vmatprep.subr.bf16.mxu0 0
    %2329 = vmatpush1.bf16.msra.mxu0 0
    %2330 = vmatprep.subr.bf16.mxu0 0
    %2331 = vmatpush1.bf16.msra.mxu0 %v408
    %2332 = vmatprep.subr.bf16.mxu0 0
    %2333 = vmatpush1.bf16.msra.mxu0 %v407
    %2334 = vmatprep.subr.bf16.mxu0 0
    %2335 = vmatpush1.bf16.msra.mxu0 %v406
    %2336 = vmatprep.subr.bf16.mxu0 0
    %2337 = vmatpush2.bf16.msra.mxu0 0
    %2338 = vmatprep.subr.bf16.mxu0 0
    %2339 = vmatpush2.bf16.msra.mxu0 0
    %2340 = vmatprep.subr.bf16.mxu0 0
    %2341 = vmatpush2.bf16.msra.mxu0 0
    %2342 = vmatprep.subr.bf16.mxu0 0
    %2343 = vmatpush2.bf16.msra.mxu0 0
    %2344 = vmatprep.subr.bf16.mxu0 0
    %2345 = vmatpush2.bf16.msra.mxu0 0
    %2346 = vmatprep.subr.bf16.mxu0 0
    %2347 = vmatpush2.bf16.msra.mxu0 0
    %2348 = vmatprep.subr.bf16.mxu0 0
    %2349 = vmatpush2.bf16.msra.mxu0 0
    %2350 = vmatprep.subr.bf16.mxu0 0
    %2351 = vmatpush2.bf16.msra.mxu0 0
    %2352 = vmatprep.mubr.bf16.mxu0 0
    %2353 = vmatmul.mubr.bf16.gmra.mxu0 %v2224
    %v2354 = vpop.f32.mrf.mxu0
    %v2355 = vadd.f32 %v392, %v2354
    %v2356 = vpop.f32.mrf.mxu0
    %v2357 = vpop.f32.mrf.mxu0
    %v2358 = vpop.f32.mrf.mxu0
    %2359 = vdwg.mxu0
    %2360 = vmatprep.subr.bf16.mxu0 0
    %2361 = vmatpush1.bf16.msra.mxu0 0
    %2362 = vmatprep.subr.bf16.mxu0 0
    %2363 = vmatpush1.bf16.msra.mxu0 0
    %2364 = vmatprep.subr.bf16.mxu0 0
    %2365 = vmatpush1.bf16.msra.mxu0 0
    %2366 = vmatprep.subr.bf16.mxu0 0
    %2367 = vmatpush1.bf16.msra.mxu0 0
    %2368 = vmatprep.subr.bf16.mxu0 0
    %2369 = vmatpush1.bf16.msra.mxu0 0
    %2370 = vmatprep.subr.bf16.mxu0 0
    %2371 = vmatpush1.bf16.msra.mxu0 0
    %2372 = vmatprep.subr.bf16.mxu0 0
    %2373 = vmatpush1.bf16.msra.mxu0 %v467
    %2374 = vmatprep.subr.bf16.mxu0 0
    %2375 = vmatpush1.bf16.msra.mxu0 %v466
    %2376 = vmatprep.subr.bf16.mxu0 0
    %2377 = vmatpush2.bf16.msra.mxu0 0
    %2378 = vmatprep.subr.bf16.mxu0 0
    %2379 = vmatpush2.bf16.msra.mxu0 0
    %2380 = vmatprep.subr.bf16.mxu0 0
    %2381 = vmatpush2.bf16.msra.mxu0 0
    %2382 = vmatprep.subr.bf16.mxu0 0
    %2383 = vmatpush2.bf16.msra.mxu0 0
    %2384 = vmatprep.subr.bf16.mxu0 0
    %2385 = vmatpush2.bf16.msra.mxu0 0
    %2386 = vmatprep.subr.bf16.mxu0 0
    %2387 = vmatpush2.bf16.msra.mxu0 0
    %2388 = vmatprep.subr.bf16.mxu0 0
    %2389 = vmatpush2.bf16.msra.mxu0 0
    %2390 = vmatprep.subr.bf16.mxu0 0
    %2391 = vmatpush2.bf16.msra.mxu0 0
    %2392 = vmatprep.mubr.bf16.mxu0 0
    %2393 = vmatmul.mubr.bf16.gmra.mxu0 %v2141
    %v2394 = vpop.f32.mrf.mxu0
    %v2395 = vadd.f32 %v456, %v2394
    %v2396 = vpop.f32.mrf.mxu0
    %v2397 = vpop.f32.mrf.mxu0
    %v2398 = vpop.f32.mrf.mxu0
    %2399 = vdwg.mxu0
    %v2400 = vmul.f32 %v2272, %v2395
    %v2401 = vadd.f32 %v2355, %v2400
    %v2402 = vtanh.pop %v2401
    %v2403 = vsub.f32 1.0, %v2319
    %v2404 = vmul.f32 %v2403, %v2402
    %v2405 = vmul.f32 %v2319, %v2136
    %v2406 = vadd.f32 %v2404, %v2405
    %v2407 = vld [vmem:[%s1] sm:$0x1]
    %v2408 = vpack.c.bf16 %v2406, %v2406
    %v2413 = vunpack.c.l.b16 %v102
    %v2414 = vunpack.c.l.b16 %v103
    %v2415 = vunpack.c.l.b16 %v104
    %v2416 = vunpack.c.l.b16 %v105
    %v2417 = vpack.c.b16 %v2414, %v2413
    %v2418 = vpack.c.b16 %v2416, %v2415
    %v2422 = vsel %vm146, %v2408, 0
    %2424 = vmatprep.subr.bf16.mxu0 0
    %2425 = vmatpush1.bf16.msra.mxu0 0
    %2426 = vmatprep.subr.bf16.mxu0 0
    %2427 = vmatpush1.bf16.msra.mxu0 0
    %2428 = vmatprep.subr.bf16.mxu0 0
    %2429 = vmatpush1.bf16.msra.mxu0 0
    %2430 = vmatprep.subr.bf16.mxu0 0
    %2431 = vmatpush1.bf16.msra.mxu0 0
    %2432 = vmatprep.subr.bf16.mxu0 0
    %2433 = vmatpush1.bf16.msra.mxu0 0
    %2434 = vmatprep.subr.bf16.mxu0 0
    %2435 = vmatpush1.bf16.msra.mxu0 0
    %2436 = vmatprep.subr.bf16.mxu0 0
    %2437 = vmatpush1.bf16.msra.mxu0 %v2418
    %2438 = vmatprep.subr.bf16.mxu0 0
    %2439 = vmatpush1.bf16.msra.mxu0 %v2417
    %2440 = vmatprep.subr.bf16.mxu0 0
    %2441 = vmatpush2.bf16.msra.mxu0 0
    %2442 = vmatprep.subr.bf16.mxu0 0
    %2443 = vmatpush2.bf16.msra.mxu0 0
    %2444 = vmatprep.subr.bf16.mxu0 0
    %2445 = vmatpush2.bf16.msra.mxu0 0
    %2446 = vmatprep.subr.bf16.mxu0 0
    %2447 = vmatpush2.bf16.msra.mxu0 0
    %2448 = vmatprep.subr.bf16.mxu0 0
    %2449 = vmatpush2.bf16.msra.mxu0 0
    %2450 = vmatprep.subr.bf16.mxu0 0
    %2451 = vmatpush2.bf16.msra.mxu0 0
    %2452 = vmatprep.subr.bf16.mxu0 0
    %2453 = vmatpush2.bf16.msra.mxu0 0
    %2454 = vmatprep.subr.bf16.mxu0 0
    %2455 = vmatpush2.bf16.msra.mxu0 0
    %2456 = vmatprep.mubr.bf16.mxu0 0
    %2457 = vmatmul.mubr.bf16.gmra.mxu0 %v2422
    %v2458 = vpop.f32.mrf.mxu0
    %v2459 = vadd.f32 0.0, %v2458
    %v2460 = vpop.f32.mrf.mxu0
    %v2461 = vpop.f32.mrf.mxu0
    %v2462 = vpop.f32.mrf.mxu0
    %2463 = vdwg.mxu0
    %v2468 = vunpack.c.l.b16 %v107
    %v2469 = vunpack.c.l.b16 %v108
    %v2470 = vunpack.c.l.b16 %v109
    %v2471 = vunpack.c.l.b16 %v110
    %v2472 = vpack.c.b16 %v2469, %v2468
    %v2473 = vpack.c.b16 %v2471, %v2470
    %2476 = vmatprep.subr.bf16.mxu0 0
    %2477 = vmatpush1.bf16.msra.mxu0 0
    %2478 = vmatprep.subr.bf16.mxu0 0
    %2479 = vmatpush1.bf16.msra.mxu0 0
    %2480 = vmatprep.subr.bf16.mxu0 0
    %2481 = vmatpush1.bf16.msra.mxu0 0
    %2482 = vmatprep.subr.bf16.mxu0 0
    %2483 = vmatpush1.bf16.msra.mxu0 0
    %2484 = vmatprep.subr.bf16.mxu0 0
    %2485 = vmatpush1.bf16.msra.mxu0 0
    %2486 = vmatprep.subr.bf16.mxu0 0
    %2487 = vmatpush1.bf16.msra.mxu0 0
    %2488 = vmatprep.subr.bf16.mxu0 0
    %2489 = vmatpush1.bf16.msra.mxu0 %v2473
    %2490 = vmatprep.subr.bf16.mxu0 0
    %2491 = vmatpush1.bf16.msra.mxu0 %v2472
    %2492 = vmatprep.subr.bf16.mxu0 0
    %2493 = vmatpush2.bf16.msra.mxu0 0
    %2494 = vmatprep.subr.bf16.mxu0 0
    %2495 = vmatpush2.bf16.msra.mxu0 0
    %2496 = vmatprep.subr.bf16.mxu0 0
    %2497 = vmatpush2.bf16.msra.mxu0 0
    %2498 = vmatprep.subr.bf16.mxu0 0
    %2499 = vmatpush2.bf16.msra.mxu0 0
    %2500 = vmatprep.subr.bf16.mxu0 0
    %2501 = vmatpush2.bf16.msra.mxu0 0
    %2502 = vmatprep.subr.bf16.mxu0 0
    %2503 = vmatpush2.bf16.msra.mxu0 0
    %2504 = vmatprep.subr.bf16.mxu0 0
    %2505 = vmatpush2.bf16.msra.mxu0 0
    %2506 = vmatprep.subr.bf16.mxu0 0
    %2507 = vmatpush2.bf16.msra.mxu0 0
    %2508 = vmatprep.mubr.bf16.mxu0 0
    %2509 = vmatmul.mubr.bf16.gmra.mxu0 %v2422
    %v2510 = vpop.f32.mrf.mxu0
    %v2511 = vadd.f32 0.0, %v2510
    %v2512 = vpop.f32.mrf.mxu0
    %v2513 = vpop.f32.mrf.mxu0
    %v2514 = vpop.f32.mrf.mxu0
    %2515 = vdwg.mxu0
    %v2520 = vunpack.c.l.b16 %v88
    %v2521 = vunpack.c.l.b16 %v89
    %v2522 = vunpack.c.l.b16 %v90
    %v2523 = vunpack.c.l.b16 %v91
    %v2524 = vpack.c.b16 %v2521, %v2520
    %v2525 = vpack.c.b16 %v2523, %v2522
    %v2529 = vsel %vm146, %v2407, 0
    %2531 = vmatprep.subr.bf16.mxu0 0
    %2532 = vmatpush1.bf16.msra.mxu0 0
    %2533 = vmatprep.subr.bf16.mxu0 0
    %2534 = vmatpush1.bf16.msra.mxu0 0
    %2535 = vmatprep.subr.bf16.mxu0 0
    %2536 = vmatpush1.bf16.msra.mxu0 0
    %2537 = vmatprep.subr.bf16.mxu0 0
    %2538 = vmatpush1.bf16.msra.mxu0 0
    %2539 = vmatprep.subr.bf16.mxu0 0
    %2540 = vmatpush1.bf16.msra.mxu0 0
    %2541 = vmatprep.subr.bf16.mxu0 0
    %2542 = vmatpush1.bf16.msra.mxu0 0
    %2543 = vmatprep.subr.bf16.mxu0 0
    %2544 = vmatpush1.bf16.msra.mxu0 %v2525
    %2545 = vmatprep.subr.bf16.mxu0 0
    %2546 = vmatpush1.bf16.msra.mxu0 %v2524
    %2547 = vmatprep.subr.bf16.mxu0 0
    %2548 = vmatpush2.bf16.msra.mxu0 0
    %2549 = vmatprep.subr.bf16.mxu0 0
    %2550 = vmatpush2.bf16.msra.mxu0 0
    %2551 = vmatprep.subr.bf16.mxu0 0
    %2552 = vmatpush2.bf16.msra.mxu0 0
    %2553 = vmatprep.subr.bf16.mxu0 0
    %2554 = vmatpush2.bf16.msra.mxu0 0
    %2555 = vmatprep.subr.bf16.mxu0 0
    %2556 = vmatpush2.bf16.msra.mxu0 0
    %2557 = vmatprep.subr.bf16.mxu0 0
    %2558 = vmatpush2.bf16.msra.mxu0 0
    %2559 = vmatprep.subr.bf16.mxu0 0
    %2560 = vmatpush2.bf16.msra.mxu0 0
    %2561 = vmatprep.subr.bf16.mxu0 0
    %2562 = vmatpush2.bf16.msra.mxu0 0
    %2563 = vmatprep.mubr.bf16.mxu0 0
    %2564 = vmatmul.mubr.bf16.gmra.mxu0 %v2529
    %v2565 = vpop.f32.mrf.mxu0
    %v2566 = vadd.f32 %v2459, %v2565
    %v2567 = vpop.f32.mrf.mxu0
    %v2568 = vpop.f32.mrf.mxu0
    %v2569 = vpop.f32.mrf.mxu0
    %2570 = vdwg.mxu0
    %v2572 = vlaneseq
    %v2573 = vshrl.u32 %v2572, 7
    %v2574 = vsub.s32 0, %v2573
    %v2575 = vrot.slane %v116, %v2574
    %v2577 = vadd.f32 %v2566, %v2575
    %v2578 = vxor.u32 %v2577, 2147483648
    %v2579 = vmul.f32 %v2578, 1.442695
    %v2580 = vpow.pop %v2579
    %v2581 = vadd.f32 %v2580, 1.0
    %v2582 = vrcp.pop %v2581
    %v2583 = vmul.f32 1.0, %v2582
    %v2588 = vunpack.c.l.b16 %v93
    %v2589 = vunpack.c.l.b16 %v94
    %v2590 = vunpack.c.l.b16 %v95
    %v2591 = vunpack.c.l.b16 %v96
    %v2592 = vpack.c.b16 %v2589, %v2588
    %v2593 = vpack.c.b16 %v2591, %v2590
    %2596 = vmatprep.subr.bf16.mxu0 0
    %2597 = vmatpush1.bf16.msra.mxu0 0
    %2598 = vmatprep.subr.bf16.mxu0 0
    %2599 = vmatpush1.bf16.msra.mxu0 0
    %2600 = vmatprep.subr.bf16.mxu0 0
    %2601 = vmatpush1.bf16.msra.mxu0 0
    %2602 = vmatprep.subr.bf16.mxu0 0
    %2603 = vmatpush1.bf16.msra.mxu0 0
    %2604 = vmatprep.subr.bf16.mxu0 0
    %2605 = vmatpush1.bf16.msra.mxu0 0
    %2606 = vmatprep.subr.bf16.mxu0 0
    %2607 = vmatpush1.bf16.msra.mxu0 0
    %2608 = vmatprep.subr.bf16.mxu0 0
    %2609 = vmatpush1.bf16.msra.mxu0 %v2593
    %2610 = vmatprep.subr.bf16.mxu0 0
    %2611 = vmatpush1.bf16.msra.mxu0 %v2592
    %2612 = vmatprep.subr.bf16.mxu0 0
    %2613 = vmatpush2.bf16.msra.mxu0 0
    %2614 = vmatprep.subr.bf16.mxu0 0
    %2615 = vmatpush2.bf16.msra.mxu0 0
    %2616 = vmatprep.subr.bf16.mxu0 0
    %2617 = vmatpush2.bf16.msra.mxu0 0
    %2618 = vmatprep.subr.bf16.mxu0 0
    %2619 = vmatpush2.bf16.msra.mxu0 0
    %2620 = vmatprep.subr.bf16.mxu0 0
    %2621 = vmatpush2.bf16.msra.mxu0 0
    %2622 = vmatprep.subr.bf16.mxu0 0
    %2623 = vmatpush2.bf16.msra.mxu0 0
    %2624 = vmatprep.subr.bf16.mxu0 0
    %2625 = vmatpush2.bf16.msra.mxu0 0
    %2626 = vmatprep.subr.bf16.mxu0 0
    %2627 = vmatpush2.bf16.msra.mxu0 0
    %2628 = vmatprep.mubr.bf16.mxu0 0
    %2629 = vmatmul.mubr.bf16.gmra.mxu0 %v2529
    %v2630 = vpop.f32.mrf.mxu0
    %v2631 = vadd.f32 %v2511, %v2630
    %v2632 = vpop.f32.mrf.mxu0
    %v2633 = vpop.f32.mrf.mxu0
    %v2634 = vpop.f32.mrf.mxu0
    %2635 = vdwg.mxu0
    %v2637 = vlaneseq
    %v2638 = vshrl.u32 %v2637, 7
    %v2639 = vsub.s32 0, %v2638
    %v2640 = vrot.slane %v118, %v2639
    %v2642 = vadd.f32 %v2631, %v2640
    %v2643 = vxor.u32 %v2642, 2147483648
    %v2644 = vmul.f32 %v2643, 1.442695
    %v2645 = vpow.pop %v2644
    %v2646 = vadd.f32 %v2645, 1.0
    %v2647 = vrcp.pop %v2646
    %v2648 = vmul.f32 1.0, %v2647
    %v2650 = vlaneseq
    %v2651 = vshrl.u32 %v2650, 7
    %v2652 = vsub.s32 0, %v2651
    %v2653 = vrot.slane %v120, %v2652
    %v2659 = vunpack.c.l.b16 %v98
    %v2660 = vunpack.c.l.b16 %v99
    %v2661 = vunpack.c.l.b16 %v100
    %v2662 = vunpack.c.l.b16 %v101
    %v2663 = vpack.c.b16 %v2660, %v2659
    %v2664 = vpack.c.b16 %v2662, %v2661
    %2667 = vmatprep.subr.bf16.mxu0 0
    %2668 = vmatpush1.bf16.msra.mxu0 0
    %2669 = vmatprep.subr.bf16.mxu0 0
    %2670 = vmatpush1.bf16.msra.mxu0 0
    %2671 = vmatprep.subr.bf16.mxu0 0
    %2672 = vmatpush1.bf16.msra.mxu0 0
    %2673 = vmatprep.subr.bf16.mxu0 0
    %2674 = vmatpush1.bf16.msra.mxu0 0
    %2675 = vmatprep.subr.bf16.mxu0 0
    %2676 = vmatpush1.bf16.msra.mxu0 0
    %2677 = vmatprep.subr.bf16.mxu0 0
    %2678 = vmatpush1.bf16.msra.mxu0 0
    %2679 = vmatprep.subr.bf16.mxu0 0
    %2680 = vmatpush1.bf16.msra.mxu0 %v2664
    %2681 = vmatprep.subr.bf16.mxu0 0
    %2682 = vmatpush1.bf16.msra.mxu0 %v2663
    %2683 = vmatprep.subr.bf16.mxu0 0
    %2684 = vmatpush2.bf16.msra.mxu0 0
    %2685 = vmatprep.subr.bf16.mxu0 0
    %2686 = vmatpush2.bf16.msra.mxu0 0
    %2687 = vmatprep.subr.bf16.mxu0 0
    %2688 = vmatpush2.bf16.msra.mxu0 0
    %2689 = vmatprep.subr.bf16.mxu0 0
    %2690 = vmatpush2.bf16.msra.mxu0 0
    %2691 = vmatprep.subr.bf16.mxu0 0
    %2692 = vmatpush2.bf16.msra.mxu0 0
    %2693 = vmatprep.subr.bf16.mxu0 0
    %2694 = vmatpush2.bf16.msra.mxu0 0
    %2695 = vmatprep.subr.bf16.mxu0 0
    %2696 = vmatpush2.bf16.msra.mxu0 0
    %2697 = vmatprep.subr.bf16.mxu0 0
    %2698 = vmatpush2.bf16.msra.mxu0 0
    %2699 = vmatprep.mubr.bf16.mxu0 0
    %2700 = vmatmul.mubr.bf16.gmra.mxu0 %v2529
    %v2701 = vpop.f32.mrf.mxu0
    %v2702 = vadd.f32 %v2653, %v2701
    %v2703 = vpop.f32.mrf.mxu0
    %v2704 = vpop.f32.mrf.mxu0
    %v2705 = vpop.f32.mrf.mxu0
    %2706 = vdwg.mxu0
    %v2708 = vlaneseq
    %v2709 = vshrl.u32 %v2708, 7
    %v2710 = vsub.s32 0, %v2709
    %v2711 = vrot.slane %v122, %v2710
    %v2717 = vunpack.c.l.b16 %v112
    %v2718 = vunpack.c.l.b16 %v113
    %v2719 = vunpack.c.l.b16 %v114
    %v2720 = vunpack.c.l.b16 %v115
    %v2721 = vpack.c.b16 %v2718, %v2717
    %v2722 = vpack.c.b16 %v2720, %v2719
    %2725 = vmatprep.subr.bf16.mxu0 0
    %2726 = vmatpush1.bf16.msra.mxu0 0
    %2727 = vmatprep.subr.bf16.mxu0 0
    %2728 = vmatpush1.bf16.msra.mxu0 0
    %2729 = vmatprep.subr.bf16.mxu0 0
    %2730 = vmatpush1.bf16.msra.mxu0 0
    %2731 = vmatprep.subr.bf16.mxu0 0
    %2732 = vmatpush1.bf16.msra.mxu0 0
    %2733 = vmatprep.subr.bf16.mxu0 0
    %2734 = vmatpush1.bf16.msra.mxu0 0
    %2735 = vmatprep.subr.bf16.mxu0 0
    %2736 = vmatpush1.bf16.msra.mxu0 0
    %2737 = vmatprep.subr.bf16.mxu0 0
    %2738 = vmatpush1.bf16.msra.mxu0 %v2722
    %2739 = vmatprep.subr.bf16.mxu0 0
    %2740 = vmatpush1.bf16.msra.mxu0 %v2721
    %2741 = vmatprep.subr.bf16.mxu0 0
    %2742 = vmatpush2.bf16.msra.mxu0 0
    %2743 = vmatprep.subr.bf16.mxu0 0
    %2744 = vmatpush2.bf16.msra.mxu0 0
    %2745 = vmatprep.subr.bf16.mxu0 0
    %2746 = vmatpush2.bf16.msra.mxu0 0
    %2747 = vmatprep.subr.bf16.mxu0 0
    %2748 = vmatpush2.bf16.msra.mxu0 0
    %2749 = vmatprep.subr.bf16.mxu0 0
    %2750 = vmatpush2.bf16.msra.mxu0 0
    %2751 = vmatprep.subr.bf16.mxu0 0
    %2752 = vmatpush2.bf16.msra.mxu0 0
    %2753 = vmatprep.subr.bf16.mxu0 0
    %2754 = vmatpush2.bf16.msra.mxu0 0
    %2755 = vmatprep.subr.bf16.mxu0 0
    %2756 = vmatpush2.bf16.msra.mxu0 0
    %2757 = vmatprep.mubr.bf16.mxu0 0
    %2758 = vmatmul.mubr.bf16.gmra.mxu0 %v2422
    %v2759 = vpop.f32.mrf.mxu0
    %v2760 = vadd.f32 %v2711, %v2759
    %v2761 = vpop.f32.mrf.mxu0
    %v2762 = vpop.f32.mrf.mxu0
    %v2763 = vpop.f32.mrf.mxu0
    %2764 = vdwg.mxu0
    %v2765 = vmul.f32 %v2583, %v2760
    %v2766 = vadd.f32 %v2702, %v2765
    %v2767 = vtanh.pop %v2766
    %v2768 = vsub.f32 1.0, %v2648
    %v2769 = vmul.f32 %v2768, %v2767
    %v2770 = vmul.f32 %v2648, %v2406
    %v2771 = vadd.f32 %v2769, %v2770
    %v2772 = vmul.f32 %v2771, %v516
    %vm2773 = vcmask 254976
    %v2774 = vsel %vm2773, %v2772, 0.0
    %2775 = vadd.xlane.f32.xlu0 %v2774
    %v2776 = vpop.xlane.xlu0 %2775
    %v2777 = vmul.f32 %v2771, %v786
    %v2778 = vsel %vm2773, %v2777, 0.0
    %2779 = vadd.xlane.f32.xlu0 %v2778
    %v2780 = vpop.xlane.xlu0 %2779
    %v2781 = vmul.f32 %v2771, %v1056
    %v2782 = vsel %vm2773, %v2781, 0.0
    %2783 = vadd.xlane.f32.xlu0 %v2782
    %v2784 = vpop.xlane.xlu0 %2783
    %v2785 = vmul.f32 %v2771, %v1326
    %v2786 = vsel %vm2773, %v2785, 0.0
    %2787 = vadd.xlane.f32.xlu0 %v2786
    %v2788 = vpop.xlane.xlu0 %2787
    %v2789 = vmul.f32 %v2771, %v1596
    %v2790 = vsel %vm2773, %v2789, 0.0
    %2791 = vadd.xlane.f32.xlu0 %v2790
    %v2792 = vpop.xlane.xlu0 %2791
    %v2793 = vmul.f32 %v2771, %v1866
    %v2794 = vsel %vm2773, %v2793, 0.0
    %2795 = vadd.xlane.f32.xlu0 %v2794
    %v2796 = vpop.xlane.xlu0 %2795
    %v2797 = vmul.f32 %v2771, %v2136
    %v2798 = vsel %vm2773, %v2797, 0.0
    %2799 = vadd.xlane.f32.xlu0 %v2798
    %v2800 = vpop.xlane.xlu0 %2799
    %v2801 = vmul.f32 %v2771, %v2406
    %v2802 = vsel %vm2773, %v2801, 0.0
    %2803 = vadd.xlane.f32.xlu0 %v2802
    %v2804 = vpop.xlane.xlu0 %2803
    %vm2805 = vcmask 7168
    %v2806 = vsel %vm2805, %v2776, %v2780
    %vm2807 = vcmask 15360
    %v2808 = vsel %vm2807, %v2806, %v2784
    %vm2809 = vcmask 23552
    %v2810 = vsel %vm2809, %v2808, %v2788
    %vm2811 = vcmask 31744
    %v2812 = vsel %vm2811, %v2810, %v2792
    %vm2813 = vcmask 39936
    %v2814 = vsel %vm2813, %v2812, %v2796
    %vm2815 = vcmask 48128
    %v2816 = vsel %vm2815, %v2814, %v2800
    %vm2817 = vcmask 56320
    %v2818 = vsel %vm2817, %v2816, %v2804
    %v2819 = vadd.f32 %v2818, %v132
    %vm2820 = vcmask 58368
    %v2821 = vsel %vm2820, %v2819, -inf
    %2822 = vmax.xlane.f32.xlu0 %v2821
    %v2823 = vpop.xlane.xlu0 %2822
    %v2824 = vsub.f32 %v2819, %v2823
    %v2825 = vmul.f32 %v2824, 1.442695
    %v2826 = vpow.pop %v2825
    %v2827 = vsel %vm2820, %v2826, 0.0
    %2828 = vadd.xlane.f32.xlu0 %v2827
    %v2829 = vpop.xlane.xlu0 %2828
    %v2830 = vrcp.pop %v2829
    %v2831 = vmul.f32 %v2826, %v2830
    %2833 = vset.pattern.permute.xlu0 0
    %2834 = vperm.xlu0 %2833, %v2831
    %v2835 = vpop.permute.xlu0 %2834
    %v2837 = vmul.f32 %v2835, %v516
    %2838 = vset.pattern.permute.xlu0 1
    %2839 = vperm.xlu0 %2838, %v2831
    %v2840 = vpop.permute.xlu0 %2839
    %v2842 = vmul.f32 %v2840, %v786
    %v2843 = vadd.f32 %v2837, %v2842
    %2844 = vset.pattern.permute.xlu0 2
    %2845 = vperm.xlu0 %2844, %v2831
    %v2846 = vpop.permute.xlu0 %2845
    %v2848 = vmul.f32 %v2846, %v1056
    %v2849 = vadd.f32 %v2843, %v2848
    %2850 = vset.pattern.permute.xlu0 3
    %2851 = vperm.xlu0 %2850, %v2831
    %v2852 = vpop.permute.xlu0 %2851
    %v2854 = vmul.f32 %v2852, %v1326
    %v2855 = vadd.f32 %v2849, %v2854
    %2856 = vset.pattern.permute.xlu0 4
    %2857 = vperm.xlu0 %2856, %v2831
    %v2858 = vpop.permute.xlu0 %2857
    %v2860 = vmul.f32 %v2858, %v1596
    %v2861 = vadd.f32 %v2855, %v2860
    %2862 = vset.pattern.permute.xlu0 5
    %2863 = vperm.xlu0 %2862, %v2831
    %v2864 = vpop.permute.xlu0 %2863
    %v2866 = vmul.f32 %v2864, %v1866
    %v2867 = vadd.f32 %v2861, %v2866
    %2868 = vset.pattern.permute.xlu0 6
    %2869 = vperm.xlu0 %2868, %v2831
    %v2870 = vpop.permute.xlu0 %2869
    %v2872 = vmul.f32 %v2870, %v2136
    %v2873 = vadd.f32 %v2867, %v2872
    %2874 = vset.pattern.permute.xlu0 7
    %2875 = vperm.xlu0 %2874, %v2831
    %v2876 = vpop.permute.xlu0 %2875
    %v2878 = vmul.f32 %v2876, %v2406
    %v2879 = vadd.f32 %v2873, %v2878
    %v2880 = vpack.c.bf16 %v2879, %v2879
    %v2881 = vpack.c.bf16 %v2771, %v2771
    %v2886 = vunpack.c.l.b16 %v127
    %v2887 = vunpack.c.l.b16 %v128
    %v2888 = vunpack.c.l.b16 %v129
    %v2889 = vunpack.c.l.b16 %v130
    %v2890 = vpack.c.b16 %v2887, %v2886
    %v2891 = vpack.c.b16 %v2889, %v2888
    %v2895 = vsel %vm146, %v2881, 0
    %2897 = vmatprep.subr.bf16.mxu0 0
    %2898 = vmatpush1.bf16.msra.mxu0 0
    %2899 = vmatprep.subr.bf16.mxu0 0
    %2900 = vmatpush1.bf16.msra.mxu0 0
    %2901 = vmatprep.subr.bf16.mxu0 0
    %2902 = vmatpush1.bf16.msra.mxu0 0
    %2903 = vmatprep.subr.bf16.mxu0 0
    %2904 = vmatpush1.bf16.msra.mxu0 0
    %2905 = vmatprep.subr.bf16.mxu0 0
    %2906 = vmatpush1.bf16.msra.mxu0 0
    %2907 = vmatprep.subr.bf16.mxu0 0
    %2908 = vmatpush1.bf16.msra.mxu0 0
    %2909 = vmatprep.subr.bf16.mxu0 0
    %2910 = vmatpush1.bf16.msra.mxu0 %v2891
    %2911 = vmatprep.subr.bf16.mxu0 0
    %2912 = vmatpush1.bf16.msra.mxu0 %v2890
    %2913 = vmatprep.subr.bf16.mxu0 0
    %2914 = vmatpush2.bf16.msra.mxu0 0
    %2915 = vmatprep.subr.bf16.mxu0 0
    %2916 = vmatpush2.bf16.msra.mxu0 0
    %2917 = vmatprep.subr.bf16.mxu0 0
    %2918 = vmatpush2.bf16.msra.mxu0 0
    %2919 = vmatprep.subr.bf16.mxu0 0
    %2920 = vmatpush2.bf16.msra.mxu0 0
    %2921 = vmatprep.subr.bf16.mxu0 0
    %2922 = vmatpush2.bf16.msra.mxu0 0
    %2923 = vmatprep.subr.bf16.mxu0 0
    %2924 = vmatpush2.bf16.msra.mxu0 0
    %2925 = vmatprep.subr.bf16.mxu0 0
    %2926 = vmatpush2.bf16.msra.mxu0 0
    %2927 = vmatprep.subr.bf16.mxu0 0
    %2928 = vmatpush2.bf16.msra.mxu0 0
    %2929 = vmatprep.mubr.bf16.mxu0 0
    %2930 = vmatmul.mubr.bf16.gmra.mxu0 %v2895
    %v2931 = vpop.f32.mrf.mxu0
    %v2932 = vadd.f32 0.0, %v2931
    %v2933 = vpop.f32.mrf.mxu0
    %v2934 = vpop.f32.mrf.mxu0
    %v2935 = vpop.f32.mrf.mxu0
    %2936 = vdwg.mxu0
    %v2941 = vunpack.c.l.b16 %v123
    %v2942 = vunpack.c.l.b16 %v124
    %v2943 = vunpack.c.l.b16 %v125
    %v2944 = vunpack.c.l.b16 %v126
    %v2945 = vpack.c.b16 %v2942, %v2941
    %v2946 = vpack.c.b16 %v2944, %v2943
    %v2950 = vsel %vm146, %v2880, 0
    %2952 = vmatprep.subr.bf16.mxu0 0
    %2953 = vmatpush1.bf16.msra.mxu0 0
    %2954 = vmatprep.subr.bf16.mxu0 0
    %2955 = vmatpush1.bf16.msra.mxu0 0
    %2956 = vmatprep.subr.bf16.mxu0 0
    %2957 = vmatpush1.bf16.msra.mxu0 0
    %2958 = vmatprep.subr.bf16.mxu0 0
    %2959 = vmatpush1.bf16.msra.mxu0 0
    %2960 = vmatprep.subr.bf16.mxu0 0
    %2961 = vmatpush1.bf16.msra.mxu0 0
    %2962 = vmatprep.subr.bf16.mxu0 0
    %2963 = vmatpush1.bf16.msra.mxu0 0
    %2964 = vmatprep.subr.bf16.mxu0 0
    %2965 = vmatpush1.bf16.msra.mxu0 %v2946
    %2966 = vmatprep.subr.bf16.mxu0 0
    %2967 = vmatpush1.bf16.msra.mxu0 %v2945
    %2968 = vmatprep.subr.bf16.mxu0 0
    %2969 = vmatpush2.bf16.msra.mxu0 0
    %2970 = vmatprep.subr.bf16.mxu0 0
    %2971 = vmatpush2.bf16.msra.mxu0 0
    %2972 = vmatprep.subr.bf16.mxu0 0
    %2973 = vmatpush2.bf16.msra.mxu0 0
    %2974 = vmatprep.subr.bf16.mxu0 0
    %2975 = vmatpush2.bf16.msra.mxu0 0
    %2976 = vmatprep.subr.bf16.mxu0 0
    %2977 = vmatpush2.bf16.msra.mxu0 0
    %2978 = vmatprep.subr.bf16.mxu0 0
    %2979 = vmatpush2.bf16.msra.mxu0 0
    %2980 = vmatprep.subr.bf16.mxu0 0
    %2981 = vmatpush2.bf16.msra.mxu0 0
    %2982 = vmatprep.subr.bf16.mxu0 0
    %2983 = vmatpush2.bf16.msra.mxu0 0
    %2984 = vmatprep.mubr.bf16.mxu0 0
    %2985 = vmatmul.mubr.bf16.gmra.mxu0 %v2950
    %v2986 = vpop.f32.mrf.mxu0
    %v2987 = vadd.f32 %v2932, %v2986
    %v2988 = vpop.f32.mrf.mxu0
    %v2989 = vpop.f32.mrf.mxu0
    %v2990 = vpop.f32.mrf.mxu0
    %2991 = vdwg.mxu0
    %v2993 = vlaneseq
    %v2994 = vshrl.u32 %v2993, 7
    %v2995 = vsub.s32 0, %v2994
    %v2996 = vrot.slane %v131, %v2995
    %v2998 = vadd.f32 %v2987, %v2996
    %v2999 = vtanh.pop %v2998
    %3000 = vst.msk [vmem:[#allocation2] sm:$0x3] %vm2773, %v2999
    %3001 = vst.msk [vmem:[#allocation4] sm:$0x3] %vm2820, %v2831
    %s3002 = scalar_lea.vmem %s1, 1
    %v3003 = vld [vmem:[%s3002] sm:$0x1]
    %3004 = vmatprep.subr.bf16.mxu0 0
    %3005 = vmatpush1.bf16.msra.mxu0 0
    %3006 = vmatprep.subr.bf16.mxu0 0
    %3007 = vmatpush1.bf16.msra.mxu0 0
    %3008 = vmatprep.subr.bf16.mxu0 0
    %3009 = vmatpush1.bf16.msra.mxu0 0
    %3010 = vmatprep.subr.bf16.mxu0 0
    %3011 = vmatpush1.bf16.msra.mxu0 0
    %3012 = vmatprep.subr.bf16.mxu0 0
    %3013 = vmatpush1.bf16.msra.mxu0 0
    %3014 = vmatprep.subr.bf16.mxu0 0
    %3015 = vmatpush1.bf16.msra.mxu0 0
    %3016 = vmatprep.subr.bf16.mxu0 0
    %3017 = vmatpush1.bf16.msra.mxu0 %v2418
    %3018 = vmatprep.subr.bf16.mxu0 0
    %3019 = vmatpush1.bf16.msra.mxu0 %v2417
    %3020 = vmatprep.subr.bf16.mxu0 0
    %3021 = vmatpush2.bf16.msra.mxu0 0
    %3022 = vmatprep.subr.bf16.mxu0 0
    %3023 = vmatpush2.bf16.msra.mxu0 0
    %3024 = vmatprep.subr.bf16.mxu0 0
    %3025 = vmatpush2.bf16.msra.mxu0 0
    %3026 = vmatprep.subr.bf16.mxu0 0
    %3027 = vmatpush2.bf16.msra.mxu0 0
    %3028 = vmatprep.subr.bf16.mxu0 0
    %3029 = vmatpush2.bf16.msra.mxu0 0
    %3030 = vmatprep.subr.bf16.mxu0 0
    %3031 = vmatpush2.bf16.msra.mxu0 0
    %3032 = vmatprep.subr.bf16.mxu0 0
    %3033 = vmatpush2.bf16.msra.mxu0 0
    %3034 = vmatprep.subr.bf16.mxu0 0
    %3035 = vmatpush2.bf16.msra.mxu0 0
    %3036 = vmatprep.mubr.bf16.mxu0 0
    %3037 = vmatmul.mubr.bf16.gmra.mxu0 %v2895
    %v3038 = vpop.f32.mrf.mxu0
    %v3039 = vadd.f32 0.0, %v3038
    %v3040 = vpop.f32.mrf.mxu0
    %v3041 = vpop.f32.mrf.mxu0
    %v3042 = vpop.f32.mrf.mxu0
    %3043 = vdwg.mxu0
    %3044 = vmatprep.subr.bf16.mxu0 0
    %3045 = vmatpush1.bf16.msra.mxu0 0
    %3046 = vmatprep.subr.bf16.mxu0 0
    %3047 = vmatpush1.bf16.msra.mxu0 0
    %3048 = vmatprep.subr.bf16.mxu0 0
    %3049 = vmatpush1.bf16.msra.mxu0 0
    %3050 = vmatprep.subr.bf16.mxu0 0
    %3051 = vmatpush1.bf16.msra.mxu0 0
    %3052 = vmatprep.subr.bf16.mxu0 0
    %3053 = vmatpush1.bf16.msra.mxu0 0
    %3054 = vmatprep.subr.bf16.mxu0 0
    %3055 = vmatpush1.bf16.msra.mxu0 0
    %3056 = vmatprep.subr.bf16.mxu0 0
    %3057 = vmatpush1.bf16.msra.mxu0 %v2473
    %3058 = vmatprep.subr.bf16.mxu0 0
    %3059 = vmatpush1.bf16.msra.mxu0 %v2472
    %3060 = vmatprep.subr.bf16.mxu0 0
    %3061 = vmatpush2.bf16.msra.mxu0 0
    %3062 = vmatprep.subr.bf16.mxu0 0
    %3063 = vmatpush2.bf16.msra.mxu0 0
    %3064 = vmatprep.subr.bf16.mxu0 0
    %3065 = vmatpush2.bf16.msra.mxu0 0
    %3066 = vmatprep.subr.bf16.mxu0 0
    %3067 = vmatpush2.bf16.msra.mxu0 0
    %3068 = vmatprep.subr.bf16.mxu0 0
    %3069 = vmatpush2.bf16.msra.mxu0 0
    %3070 = vmatprep.subr.bf16.mxu0 0
    %3071 = vmatpush2.bf16.msra.mxu0 0
    %3072 = vmatprep.subr.bf16.mxu0 0
    %3073 = vmatpush2.bf16.msra.mxu0 0
    %3074 = vmatprep.subr.bf16.mxu0 0
    %3075 = vmatpush2.bf16.msra.mxu0 0
    %3076 = vmatprep.mubr.bf16.mxu0 0
    %3077 = vmatmul.mubr.bf16.gmra.mxu0 %v2895
    %v3078 = vpop.f32.mrf.mxu0
    %v3079 = vadd.f32 0.0, %v3078
    %v3080 = vpop.f32.mrf.mxu0
    %v3081 = vpop.f32.mrf.mxu0
    %v3082 = vpop.f32.mrf.mxu0
    %3083 = vdwg.mxu0
    %v3085 = vsel %vm146, %v3003, 0
    %3087 = vmatprep.subr.bf16.mxu0 0
    %3088 = vmatpush1.bf16.msra.mxu0 0
    %3089 = vmatprep.subr.bf16.mxu0 0
    %3090 = vmatpush1.bf16.msra.mxu0 0
    %3091 = vmatprep.subr.bf16.mxu0 0
    %3092 = vmatpush1.bf16.msra.mxu0 0
    %3093 = vmatprep.subr.bf16.mxu0 0
    %3094 = vmatpush1.bf16.msra.mxu0 0
    %3095 = vmatprep.subr.bf16.mxu0 0
    %3096 = vmatpush1.bf16.msra.mxu0 0
    %3097 = vmatprep.subr.bf16.mxu0 0
    %3098 = vmatpush1.bf16.msra.mxu0 0
    %3099 = vmatprep.subr.bf16.mxu0 0
    %3100 = vmatpush1.bf16.msra.mxu0 %v2525
    %3101 = vmatprep.subr.bf16.mxu0 0
    %3102 = vmatpush1.bf16.msra.mxu0 %v2524
    %3103 = vmatprep.subr.bf16.mxu0 0
    %3104 = vmatpush2.bf16.msra.mxu0 0
    %3105 = vmatprep.subr.bf16.mxu0 0
    %3106 = vmatpush2.bf16.msra.mxu0 0
    %3107 = vmatprep.subr.bf16.mxu0 0
    %3108 = vmatpush2.bf16.msra.mxu0 0
    %3109 = vmatprep.subr.bf16.mxu0 0
    %3110 = vmatpush2.bf16.msra.mxu0 0
    %3111 = vmatprep.subr.bf16.mxu0 0
    %3112 = vmatpush2.bf16.msra.mxu0 0
    %3113 = vmatprep.subr.bf16.mxu0 0
    %3114 = vmatpush2.bf16.msra.mxu0 0
    %3115 = vmatprep.subr.bf16.mxu0 0
    %3116 = vmatpush2.bf16.msra.mxu0 0
    %3117 = vmatprep.subr.bf16.mxu0 0
    %3118 = vmatpush2.bf16.msra.mxu0 0
    %3119 = vmatprep.mubr.bf16.mxu0 0
    %3120 = vmatmul.mubr.bf16.gmra.mxu0 %v3085
    %v3121 = vpop.f32.mrf.mxu0
    %v3122 = vadd.f32 %v3039, %v3121
    %v3123 = vpop.f32.mrf.mxu0
    %v3124 = vpop.f32.mrf.mxu0
    %v3125 = vpop.f32.mrf.mxu0
    %3126 = vdwg.mxu0
    %v3127 = vadd.f32 %v3122, %v2575
    %v3128 = vxor.u32 %v3127, 2147483648
    %v3129 = vmul.f32 %v3128, 1.442695
    %v3130 = vpow.pop %v3129
    %v3131 = vadd.f32 %v3130, 1.0
    %v3132 = vrcp.pop %v3131
    %v3133 = vmul.f32 1.0, %v3132
    %3134 = vmatprep.subr.bf16.mxu0 0
    %3135 = vmatpush1.bf16.msra.mxu0 0
    %3136 = vmatprep.subr.bf16.mxu0 0
    %3137 = vmatpush1.bf16.msra.mxu0 0
    %3138 = vmatprep.subr.bf16.mxu0 0
    %3139 = vmatpush1.bf16.msra.mxu0 0
    %3140 = vmatprep.subr.bf16.mxu0 0
    %3141 = vmatpush1.bf16.msra.mxu0 0
    %3142 = vmatprep.subr.bf16.mxu0 0
    %3143 = vmatpush1.bf16.msra.mxu0 0
    %3144 = vmatprep.subr.bf16.mxu0 0
    %3145 = vmatpush1.bf16.msra.mxu0 0
    %3146 = vmatprep.subr.bf16.mxu0 0
    %3147 = vmatpush1.bf16.msra.mxu0 %v2593
    %3148 = vmatprep.subr.bf16.mxu0 0
    %3149 = vmatpush1.bf16.msra.mxu0 %v2592
    %3150 = vmatprep.subr.bf16.mxu0 0
    %3151 = vmatpush2.bf16.msra.mxu0 0
    %3152 = vmatprep.subr.bf16.mxu0 0
    %3153 = vmatpush2.bf16.msra.mxu0 0
    %3154 = vmatprep.subr.bf16.mxu0 0
    %3155 = vmatpush2.bf16.msra.mxu0 0
    %3156 = vmatprep.subr.bf16.mxu0 0
    %3157 = vmatpush2.bf16.msra.mxu0 0
    %3158 = vmatprep.subr.bf16.mxu0 0
    %3159 = vmatpush2.bf16.msra.mxu0 0
    %3160 = vmatprep.subr.bf16.mxu0 0
    %3161 = vmatpush2.bf16.msra.mxu0 0
    %3162 = vmatprep.subr.bf16.mxu0 0
    %3163 = vmatpush2.bf16.msra.mxu0 0
    %3164 = vmatprep.subr.bf16.mxu0 0
    %3165 = vmatpush2.bf16.msra.mxu0 0
    %3166 = vmatprep.mubr.bf16.mxu0 0
    %3167 = vmatmul.mubr.bf16.gmra.mxu0 %v3085
    %v3168 = vpop.f32.mrf.mxu0
    %v3169 = vadd.f32 %v3079, %v3168
    %v3170 = vpop.f32.mrf.mxu0
    %v3171 = vpop.f32.mrf.mxu0
    %v3172 = vpop.f32.mrf.mxu0
    %3173 = vdwg.mxu0
    %v3174 = vadd.f32 %v3169, %v2640
    %v3175 = vxor.u32 %v3174, 2147483648
    %v3176 = vmul.f32 %v3175, 1.442695
    %v3177 = vpow.pop %v3176
    %v3178 = vadd.f32 %v3177, 1.0
    %v3179 = vrcp.pop %v3178
    %v3180 = vmul.f32 1.0, %v3179
    %3181 = vmatprep.subr.bf16.mxu0 0
    %3182 = vmatpush1.bf16.msra.mxu0 0
    %3183 = vmatprep.subr.bf16.mxu0 0
    %3184 = vmatpush1.bf16.msra.mxu0 0
    %3185 = vmatprep.subr.bf16.mxu0 0
    %3186 = vmatpush1.bf16.msra.mxu0 0
    %3187 = vmatprep.subr.bf16.mxu0 0
    %3188 = vmatpush1.bf16.msra.mxu0 0
    %3189 = vmatprep.subr.bf16.mxu0 0
    %3190 = vmatpush1.bf16.msra.mxu0 0
    %3191 = vmatprep.subr.bf16.mxu0 0
    %3192 = vmatpush1.bf16.msra.mxu0 0
    %3193 = vmatprep.subr.bf16.mxu0 0
    %3194 = vmatpush1.bf16.msra.mxu0 %v2664
    %3195 = vmatprep.subr.bf16.mxu0 0
    %3196 = vmatpush1.bf16.msra.mxu0 %v2663
    %3197 = vmatprep.subr.bf16.mxu0 0
    %3198 = vmatpush2.bf16.msra.mxu0 0
    %3199 = vmatprep.subr.bf16.mxu0 0
    %3200 = vmatpush2.bf16.msra.mxu0 0
    %3201 = vmatprep.subr.bf16.mxu0 0
    %3202 = vmatpush2.bf16.msra.mxu0 0
    %3203 = vmatprep.subr.bf16.mxu0 0
    %3204 = vmatpush2.bf16.msra.mxu0 0
    %3205 = vmatprep.subr.bf16.mxu0 0
    %3206 = vmatpush2.bf16.msra.mxu0 0
    %3207 = vmatprep.subr.bf16.mxu0 0
    %3208 = vmatpush2.bf16.msra.mxu0 0
    %3209 = vmatprep.subr.bf16.mxu0 0
    %3210 = vmatpush2.bf16.msra.mxu0 0
    %3211 = vmatprep.subr.bf16.mxu0 0
    %3212 = vmatpush2.bf16.msra.mxu0 0
    %3213 = vmatprep.mubr.bf16.mxu0 0
    %3214 = vmatmul.mubr.bf16.gmra.mxu0 %v3085
    %v3215 = vpop.f32.mrf.mxu0
    %v3216 = vadd.f32 %v2653, %v3215
    %v3217 = vpop.f32.mrf.mxu0
    %v3218 = vpop.f32.mrf.mxu0
    %v3219 = vpop.f32.mrf.mxu0
    %3220 = vdwg.mxu0
    %3221 = vmatprep.subr.bf16.mxu0 0
    %3222 = vmatpush1.bf16.msra.mxu0 0
    %3223 = vmatprep.subr.bf16.mxu0 0
    %3224 = vmatpush1.bf16.msra.mxu0 0
    %3225 = vmatprep.subr.bf16.mxu0 0
    %3226 = vmatpush1.bf16.msra.mxu0 0
    %3227 = vmatprep.subr.bf16.mxu0 0
    %3228 = vmatpush1.bf16.msra.mxu0 0
    %3229 = vmatprep.subr.bf16.mxu0 0
    %3230 = vmatpush1.bf16.msra.mxu0 0
    %3231 = vmatprep.subr.bf16.mxu0 0
    %3232 = vmatpush1.bf16.msra.mxu0 0
    %3233 = vmatprep.subr.bf16.mxu0 0
    %3234 = vmatpush1.bf16.msra.mxu0 %v2722
    %3235 = vmatprep.subr.bf16.mxu0 0
    %3236 = vmatpush1.bf16.msra.mxu0 %v2721
    %3237 = vmatprep.subr.bf16.mxu0 0
    %3238 = vmatpush2.bf16.msra.mxu0 0
    %3239 = vmatprep.subr.bf16.mxu0 0
    %3240 = vmatpush2.bf16.msra.mxu0 0
    %3241 = vmatprep.subr.bf16.mxu0 0
    %3242 = vmatpush2.bf16.msra.mxu0 0
    %3243 = vmatprep.subr.bf16.mxu0 0
    %3244 = vmatpush2.bf16.msra.mxu0 0
    %3245 = vmatprep.subr.bf16.mxu0 0
    %3246 = vmatpush2.bf16.msra.mxu0 0
    %3247 = vmatprep.subr.bf16.mxu0 0
    %3248 = vmatpush2.bf16.msra.mxu0 0
    %3249 = vmatprep.subr.bf16.mxu0 0
    %3250 = vmatpush2.bf16.msra.mxu0 0
    %3251 = vmatprep.subr.bf16.mxu0 0
    %3252 = vmatpush2.bf16.msra.mxu0 0
    %3253 = vmatprep.mubr.bf16.mxu0 0
    %3254 = vmatmul.mubr.bf16.gmra.mxu0 %v2895
    %v3255 = vpop.f32.mrf.mxu0
    %v3256 = vadd.f32 %v2711, %v3255
    %v3257 = vpop.f32.mrf.mxu0
    %v3258 = vpop.f32.mrf.mxu0
    %v3259 = vpop.f32.mrf.mxu0
    %3260 = vdwg.mxu0
    %v3261 = vmul.f32 %v3133, %v3256
    %v3262 = vadd.f32 %v3216, %v3261
    %v3263 = vtanh.pop %v3262
    %v3264 = vsub.f32 1.0, %v3180
    %v3265 = vmul.f32 %v3264, %v3263
    %v3266 = vmul.f32 %v3180, %v2771
    %v3267 = vadd.f32 %v3265, %v3266
    %v3268 = vmul.f32 %v3267, %v516
    %v3269 = vsel %vm2773, %v3268, 0.0
    %3270 = vadd.xlane.f32.xlu0 %v3269
    %v3271 = vpop.xlane.xlu0 %3270
    %v3272 = vmul.f32 %v3267, %v786
    %v3273 = vsel %vm2773, %v3272, 0.0
    %3274 = vadd.xlane.f32.xlu0 %v3273
    %v3275 = vpop.xlane.xlu0 %3274
    %v3276 = vmul.f32 %v3267, %v1056
    %v3277 = vsel %vm2773, %v3276, 0.0
    %3278 = vadd.xlane.f32.xlu0 %v3277
    %v3279 = vpop.xlane.xlu0 %3278
    %v3280 = vmul.f32 %v3267, %v1326
    %v3281 = vsel %vm2773, %v3280, 0.0
    %3282 = vadd.xlane.f32.xlu0 %v3281
    %v3283 = vpop.xlane.xlu0 %3282
    %v3284 = vmul.f32 %v3267, %v1596
    %v3285 = vsel %vm2773, %v3284, 0.0
    %3286 = vadd.xlane.f32.xlu0 %v3285
    %v3287 = vpop.xlane.xlu0 %3286
    %v3288 = vmul.f32 %v3267, %v1866
    %v3289 = vsel %vm2773, %v3288, 0.0
    %3290 = vadd.xlane.f32.xlu0 %v3289
    %v3291 = vpop.xlane.xlu0 %3290
    %v3292 = vmul.f32 %v3267, %v2136
    %v3293 = vsel %vm2773, %v3292, 0.0
    %3294 = vadd.xlane.f32.xlu0 %v3293
    %v3295 = vpop.xlane.xlu0 %3294
    %v3296 = vmul.f32 %v3267, %v2406
    %v3297 = vsel %vm2773, %v3296, 0.0
    %3298 = vadd.xlane.f32.xlu0 %v3297
    %v3299 = vpop.xlane.xlu0 %3298
    %v3300 = vsel %vm2805, %v3271, %v3275
    %v3301 = vsel %vm2807, %v3300, %v3279
    %v3302 = vsel %vm2809, %v3301, %v3283
    %v3303 = vsel %vm2811, %v3302, %v3287
    %v3304 = vsel %vm2813, %v3303, %v3291
    %v3305 = vsel %vm2815, %v3304, %v3295
    %v3306 = vsel %vm2817, %v3305, %v3299
    %v3307 = vadd.f32 %v3306, %v132
    %v3308 = vsel %vm2820, %v3307, -inf
    %3309 = vmax.xlane.f32.xlu0 %v3308
    %v3310 = vpop.xlane.xlu0 %3309
    %v3311 = vsub.f32 %v3307, %v3310
    %v3312 = vmul.f32 %v3311, 1.442695
    %v3313 = vpow.pop %v3312
    %v3314 = vsel %vm2820, %v3313, 0.0
    %3315 = vadd.xlane.f32.xlu0 %v3314
    %v3316 = vpop.xlane.xlu0 %3315
    %v3317 = vrcp.pop %v3316
    %v3318 = vmul.f32 %v3313, %v3317
    %3320 = vset.pattern.permute.xlu0 0
    %3321 = vperm.xlu0 %3320, %v3318
    %v3322 = vpop.permute.xlu0 %3321
    %v3324 = vmul.f32 %v3322, %v516
    %3325 = vset.pattern.permute.xlu0 1
    %3326 = vperm.xlu0 %3325, %v3318
    %v3327 = vpop.permute.xlu0 %3326
    %v3329 = vmul.f32 %v3327, %v786
    %v3330 = vadd.f32 %v3324, %v3329
    %3331 = vset.pattern.permute.xlu0 2
    %3332 = vperm.xlu0 %3331, %v3318
    %v3333 = vpop.permute.xlu0 %3332
    %v3335 = vmul.f32 %v3333, %v1056
    %v3336 = vadd.f32 %v3330, %v3335
    %3337 = vset.pattern.permute.xlu0 3
    %3338 = vperm.xlu0 %3337, %v3318
    %v3339 = vpop.permute.xlu0 %3338
    %v3341 = vmul.f32 %v3339, %v1326
    %v3342 = vadd.f32 %v3336, %v3341
    %3343 = vset.pattern.permute.xlu0 4
    %3344 = vperm.xlu0 %3343, %v3318
    %v3345 = vpop.permute.xlu0 %3344
    %v3347 = vmul.f32 %v3345, %v1596
    %v3348 = vadd.f32 %v3342, %v3347
    %3349 = vset.pattern.permute.xlu0 5
    %3350 = vperm.xlu0 %3349, %v3318
    %v3351 = vpop.permute.xlu0 %3350
    %v3353 = vmul.f32 %v3351, %v1866
    %v3354 = vadd.f32 %v3348, %v3353
    %3355 = vset.pattern.permute.xlu0 6
    %3356 = vperm.xlu0 %3355, %v3318
    %v3357 = vpop.permute.xlu0 %3356
    %v3359 = vmul.f32 %v3357, %v2136
    %v3360 = vadd.f32 %v3354, %v3359
    %3361 = vset.pattern.permute.xlu0 7
    %3362 = vperm.xlu0 %3361, %v3318
    %v3363 = vpop.permute.xlu0 %3362
    %v3365 = vmul.f32 %v3363, %v2406
    %v3366 = vadd.f32 %v3360, %v3365
    %v3367 = vpack.c.bf16 %v3366, %v3366
    %v3368 = vpack.c.bf16 %v3267, %v3267
    %v3370 = vsel %vm146, %v3368, 0
    %3372 = vmatprep.subr.bf16.mxu0 0
    %3373 = vmatpush1.bf16.msra.mxu0 0
    %3374 = vmatprep.subr.bf16.mxu0 0
    %3375 = vmatpush1.bf16.msra.mxu0 0
    %3376 = vmatprep.subr.bf16.mxu0 0
    %3377 = vmatpush1.bf16.msra.mxu0 0
    %3378 = vmatprep.subr.bf16.mxu0 0
    %3379 = vmatpush1.bf16.msra.mxu0 0
    %3380 = vmatprep.subr.bf16.mxu0 0
    %3381 = vmatpush1.bf16.msra.mxu0 0
    %3382 = vmatprep.subr.bf16.mxu0 0
    %3383 = vmatpush1.bf16.msra.mxu0 0
    %3384 = vmatprep.subr.bf16.mxu0 0
    %3385 = vmatpush1.bf16.msra.mxu0 %v2891
    %3386 = vmatprep.subr.bf16.mxu0 0
    %3387 = vmatpush1.bf16.msra.mxu0 %v2890
    %3388 = vmatprep.subr.bf16.mxu0 0
    %3389 = vmatpush2.bf16.msra.mxu0 0
    %3390 = vmatprep.subr.bf16.mxu0 0
    %3391 = vmatpush2.bf16.msra.mxu0 0
    %3392 = vmatprep.subr.bf16.mxu0 0
    %3393 = vmatpush2.bf16.msra.mxu0 0
    %3394 = vmatprep.subr.bf16.mxu0 0
    %3395 = vmatpush2.bf16.msra.mxu0 0
    %3396 = vmatprep.subr.bf16.mxu0 0
    %3397 = vmatpush2.bf16.msra.mxu0 0
    %3398 = vmatprep.subr.bf16.mxu0 0
    %3399 = vmatpush2.bf16.msra.mxu0 0
    %3400 = vmatprep.subr.bf16.mxu0 0
    %3401 = vmatpush2.bf16.msra.mxu0 0
    %3402 = vmatprep.subr.bf16.mxu0 0
    %3403 = vmatpush2.bf16.msra.mxu0 0
    %3404 = vmatprep.mubr.bf16.mxu0 0
    %3405 = vmatmul.mubr.bf16.gmra.mxu0 %v3370
    %v3406 = vpop.f32.mrf.mxu0
    %v3407 = vadd.f32 0.0, %v3406
    %v3408 = vpop.f32.mrf.mxu0
    %v3409 = vpop.f32.mrf.mxu0
    %v3410 = vpop.f32.mrf.mxu0
    %3411 = vdwg.mxu0
    %v3413 = vsel %vm146, %v3367, 0
    %3415 = vmatprep.subr.bf16.mxu0 0
    %3416 = vmatpush1.bf16.msra.mxu0 0
    %3417 = vmatprep.subr.bf16.mxu0 0
    %3418 = vmatpush1.bf16.msra.mxu0 0
    %3419 = vmatprep.subr.bf16.mxu0 0
    %3420 = vmatpush1.bf16.msra.mxu0 0
    %3421 = vmatprep.subr.bf16.mxu0 0
    %3422 = vmatpush1.bf16.msra.mxu0 0
    %3423 = vmatprep.subr.bf16.mxu0 0
    %3424 = vmatpush1.bf16.msra.mxu0 0
    %3425 = vmatprep.subr.bf16.mxu0 0
    %3426 = vmatpush1.bf16.msra.mxu0 0
    %3427 = vmatprep.subr.bf16.mxu0 0
    %3428 = vmatpush1.bf16.msra.mxu0 %v2946
    %3429 = vmatprep.subr.bf16.mxu0 0
    %3430 = vmatpush1.bf16.msra.mxu0 %v2945
    %3431 = vmatprep.subr.bf16.mxu0 0
    %3432 = vmatpush2.bf16.msra.mxu0 0
    %3433 = vmatprep.subr.bf16.mxu0 0
    %3434 = vmatpush2.bf16.msra.mxu0 0
    %3435 = vmatprep.subr.bf16.mxu0 0
    %3436 = vmatpush2.bf16.msra.mxu0 0
    %3437 = vmatprep.subr.bf16.mxu0 0
    %3438 = vmatpush2.bf16.msra.mxu0 0
    %3439 = vmatprep.subr.bf16.mxu0 0
    %3440 = vmatpush2.bf16.msra.mxu0 0
    %3441 = vmatprep.subr.bf16.mxu0 0
    %3442 = vmatpush2.bf16.msra.mxu0 0
    %3443 = vmatprep.subr.bf16.mxu0 0
    %3444 = vmatpush2.bf16.msra.mxu0 0
    %3445 = vmatprep.subr.bf16.mxu0 0
    %3446 = vmatpush2.bf16.msra.mxu0 0
    %3447 = vmatprep.mubr.bf16.mxu0 0
    %3448 = vmatmul.mubr.bf16.gmra.mxu0 %v3413
    %v3449 = vpop.f32.mrf.mxu0
    %v3450 = vadd.f32 %v3407, %v3449
    %v3451 = vpop.f32.mrf.mxu0
    %v3452 = vpop.f32.mrf.mxu0
    %v3453 = vpop.f32.mrf.mxu0
    %3454 = vdwg.mxu0
    %v3455 = vadd.f32 %v3450, %v2996
    %v3456 = vtanh.pop %v3455
    %s3457 = scalar_lea.vmem [#allocation2], 2
    %3458 = vst.msk [vmem:[%s3457] sm:$0x3] %vm2773, %v3456
    %s3459 = scalar_lea.vmem [#allocation4], 2
    %3460 = vst.msk [vmem:[%s3459] sm:$0x3] %vm2820, %v3318
    %s3461 = scalar_lea.vmem %s1, 2
    %v3462 = vld [vmem:[%s3461] sm:$0x1]
    %3463 = vmatprep.subr.bf16.mxu0 0
    %3464 = vmatpush1.bf16.msra.mxu0 0
    %3465 = vmatprep.subr.bf16.mxu0 0
    %3466 = vmatpush1.bf16.msra.mxu0 0
    %3467 = vmatprep.subr.bf16.mxu0 0
    %3468 = vmatpush1.bf16.msra.mxu0 0
    %3469 = vmatprep.subr.bf16.mxu0 0
    %3470 = vmatpush1.bf16.msra.mxu0 0
    %3471 = vmatprep.subr.bf16.mxu0 0
    %3472 = vmatpush1.bf16.msra.mxu0 0
    %3473 = vmatprep.subr.bf16.mxu0 0
    %3474 = vmatpush1.bf16.msra.mxu0 0
    %3475 = vmatprep.subr.bf16.mxu0 0
    %3476 = vmatpush1.bf16.msra.mxu0 %v2418
    %3477 = vmatprep.subr.bf16.mxu0 0
    %3478 = vmatpush1.bf16.msra.mxu0 %v2417
    %3479 = vmatprep.subr.bf16.mxu0 0
    %3480 = vmatpush2.bf16.msra.mxu0 0
    %3481 = vmatprep.subr.bf16.mxu0 0
    %3482 = vmatpush2.bf16.msra.mxu0 0
    %3483 = vmatprep.subr.bf16.mxu0 0
    %3484 = vmatpush2.bf16.msra.mxu0 0
    %3485 = vmatprep.subr.bf16.mxu0 0
    %3486 = vmatpush2.bf16.msra.mxu0 0
    %3487 = vmatprep.subr.bf16.mxu0 0
    %3488 = vmatpush2.bf16.msra.mxu0 0
    %3489 = vmatprep.subr.bf16.mxu0 0
    %3490 = vmatpush2.bf16.msra.mxu0 0
    %3491 = vmatprep.subr.bf16.mxu0 0
    %3492 = vmatpush2.bf16.msra.mxu0 0
    %3493 = vmatprep.subr.bf16.mxu0 0
    %3494 = vmatpush2.bf16.msra.mxu0 0
    %3495 = vmatprep.mubr.bf16.mxu0 0
    %3496 = vmatmul.mubr.bf16.gmra.mxu0 %v3370
    %v3497 = vpop.f32.mrf.mxu0
    %v3498 = vadd.f32 0.0, %v3497
    %v3499 = vpop.f32.mrf.mxu0
    %v3500 = vpop.f32.mrf.mxu0
    %v3501 = vpop.f32.mrf.mxu0
    %3502 = vdwg.mxu0
    %3503 = vmatprep.subr.bf16.mxu0 0
    %3504 = vmatpush1.bf16.msra.mxu0 0
    %3505 = vmatprep.subr.bf16.mxu0 0
    %3506 = vmatpush1.bf16.msra.mxu0 0
    %3507 = vmatprep.subr.bf16.mxu0 0
    %3508 = vmatpush1.bf16.msra.mxu0 0
    %3509 = vmatprep.subr.bf16.mxu0 0
    %3510 = vmatpush1.bf16.msra.mxu0 0
    %3511 = vmatprep.subr.bf16.mxu0 0
    %3512 = vmatpush1.bf16.msra.mxu0 0
    %3513 = vmatprep.subr.bf16.mxu0 0
    %3514 = vmatpush1.bf16.msra.mxu0 0
    %3515 = vmatprep.subr.bf16.mxu0 0
    %3516 = vmatpush1.bf16.msra.mxu0 %v2473
    %3517 = vmatprep.subr.bf16.mxu0 0
    %3518 = vmatpush1.bf16.msra.mxu0 %v2472
    %3519 = vmatprep.subr.bf16.mxu0 0
    %3520 = vmatpush2.bf16.msra.mxu0 0
    %3521 = vmatprep.subr.bf16.mxu0 0
    %3522 = vmatpush2.bf16.msra.mxu0 0
    %3523 = vmatprep.subr.bf16.mxu0 0
    %3524 = vmatpush2.bf16.msra.mxu0 0
    %3525 = vmatprep.subr.bf16.mxu0 0
    %3526 = vmatpush2.bf16.msra.mxu0 0
    %3527 = vmatprep.subr.bf16.mxu0 0
    %3528 = vmatpush2.bf16.msra.mxu0 0
    %3529 = vmatprep.subr.bf16.mxu0 0
    %3530 = vmatpush2.bf16.msra.mxu0 0
    %3531 = vmatprep.subr.bf16.mxu0 0
    %3532 = vmatpush2.bf16.msra.mxu0 0
    %3533 = vmatprep.subr.bf16.mxu0 0
    %3534 = vmatpush2.bf16.msra.mxu0 0
    %3535 = vmatprep.mubr.bf16.mxu0 0
    %3536 = vmatmul.mubr.bf16.gmra.mxu0 %v3370
    %v3537 = vpop.f32.mrf.mxu0
    %v3538 = vadd.f32 0.0, %v3537
    %v3539 = vpop.f32.mrf.mxu0
    %v3540 = vpop.f32.mrf.mxu0
    %v3541 = vpop.f32.mrf.mxu0
    %3542 = vdwg.mxu0
    %v3544 = vsel %vm146, %v3462, 0
    %3546 = vmatprep.subr.bf16.mxu0 0
    %3547 = vmatpush1.bf16.msra.mxu0 0
    %3548 = vmatprep.subr.bf16.mxu0 0
    %3549 = vmatpush1.bf16.msra.mxu0 0
    %3550 = vmatprep.subr.bf16.mxu0 0
    %3551 = vmatpush1.bf16.msra.mxu0 0
    %3552 = vmatprep.subr.bf16.mxu0 0
    %3553 = vmatpush1.bf16.msra.mxu0 0
    %3554 = vmatprep.subr.bf16.mxu0 0
    %3555 = vmatpush1.bf16.msra.mxu0 0
    %3556 = vmatprep.subr.bf16.mxu0 0
    %3557 = vmatpush1.bf16.msra.mxu0 0
    %3558 = vmatprep.subr.bf16.mxu0 0
    %3559 = vmatpush1.bf16.msra.mxu0 %v2525
    %3560 = vmatprep.subr.bf16.mxu0 0
    %3561 = vmatpush1.bf16.msra.mxu0 %v2524
    %3562 = vmatprep.subr.bf16.mxu0 0
    %3563 = vmatpush2.bf16.msra.mxu0 0
    %3564 = vmatprep.subr.bf16.mxu0 0
    %3565 = vmatpush2.bf16.msra.mxu0 0
    %3566 = vmatprep.subr.bf16.mxu0 0
    %3567 = vmatpush2.bf16.msra.mxu0 0
    %3568 = vmatprep.subr.bf16.mxu0 0
    %3569 = vmatpush2.bf16.msra.mxu0 0
    %3570 = vmatprep.subr.bf16.mxu0 0
    %3571 = vmatpush2.bf16.msra.mxu0 0
    %3572 = vmatprep.subr.bf16.mxu0 0
    %3573 = vmatpush2.bf16.msra.mxu0 0
    %3574 = vmatprep.subr.bf16.mxu0 0
    %3575 = vmatpush2.bf16.msra.mxu0 0
    %3576 = vmatprep.subr.bf16.mxu0 0
    %3577 = vmatpush2.bf16.msra.mxu0 0
    %3578 = vmatprep.mubr.bf16.mxu0 0
    %3579 = vmatmul.mubr.bf16.gmra.mxu0 %v3544
    %v3580 = vpop.f32.mrf.mxu0
    %v3581 = vadd.f32 %v3498, %v3580
    %v3582 = vpop.f32.mrf.mxu0
    %v3583 = vpop.f32.mrf.mxu0
    %v3584 = vpop.f32.mrf.mxu0
    %3585 = vdwg.mxu0
    %v3586 = vadd.f32 %v3581, %v2575
    %v3587 = vxor.u32 %v3586, 2147483648
    %v3588 = vmul.f32 %v3587, 1.442695
    %v3589 = vpow.pop %v3588
    %v3590 = vadd.f32 %v3589, 1.0
    %v3591 = vrcp.pop %v3590
    %v3592 = vmul.f32 1.0, %v3591
    %3593 = vmatprep.subr.bf16.mxu0 0
    %3594 = vmatpush1.bf16.msra.mxu0 0
    %3595 = vmatprep.subr.bf16.mxu0 0
    %3596 = vmatpush1.bf16.msra.mxu0 0
    %3597 = vmatprep.subr.bf16.mxu0 0
    %3598 = vmatpush1.bf16.msra.mxu0 0
    %3599 = vmatprep.subr.bf16.mxu0 0
    %3600 = vmatpush1.bf16.msra.mxu0 0
    %3601 = vmatprep.subr.bf16.mxu0 0
    %3602 = vmatpush1.bf16.msra.mxu0 0
    %3603 = vmatprep.subr.bf16.mxu0 0
    %3604 = vmatpush1.bf16.msra.mxu0 0
    %3605 = vmatprep.subr.bf16.mxu0 0
    %3606 = vmatpush1.bf16.msra.mxu0 %v2593
    %3607 = vmatprep.subr.bf16.mxu0 0
    %3608 = vmatpush1.bf16.msra.mxu0 %v2592
    %3609 = vmatprep.subr.bf16.mxu0 0
    %3610 = vmatpush2.bf16.msra.mxu0 0
    %3611 = vmatprep.subr.bf16.mxu0 0
    %3612 = vmatpush2.bf16.msra.mxu0 0
    %3613 = vmatprep.subr.bf16.mxu0 0
    %3614 = vmatpush2.bf16.msra.mxu0 0
    %3615 = vmatprep.subr.bf16.mxu0 0
    %3616 = vmatpush2.bf16.msra.mxu0 0
    %3617 = vmatprep.subr.bf16.mxu0 0
    %3618 = vmatpush2.bf16.msra.mxu0 0
    %3619 = vmatprep.subr.bf16.mxu0 0
    %3620 = vmatpush2.bf16.msra.mxu0 0
    %3621 = vmatprep.subr.bf16.mxu0 0
    %3622 = vmatpush2.bf16.msra.mxu0 0
    %3623 = vmatprep.subr.bf16.mxu0 0
    %3624 = vmatpush2.bf16.msra.mxu0 0
    %3625 = vmatprep.mubr.bf16.mxu0 0
    %3626 = vmatmul.mubr.bf16.gmra.mxu0 %v3544
    %v3627 = vpop.f32.mrf.mxu0
    %v3628 = vadd.f32 %v3538, %v3627
    %v3629 = vpop.f32.mrf.mxu0
    %v3630 = vpop.f32.mrf.mxu0
    %v3631 = vpop.f32.mrf.mxu0
    %3632 = vdwg.mxu0
    %v3633 = vadd.f32 %v3628, %v2640
    %v3634 = vxor.u32 %v3633, 2147483648
    %v3635 = vmul.f32 %v3634, 1.442695
    %v3636 = vpow.pop %v3635
    %v3637 = vadd.f32 %v3636, 1.0
    %v3638 = vrcp.pop %v3637
    %v3639 = vmul.f32 1.0, %v3638
    %3640 = vmatprep.subr.bf16.mxu0 0
    %3641 = vmatpush1.bf16.msra.mxu0 0
    %3642 = vmatprep.subr.bf16.mxu0 0
    %3643 = vmatpush1.bf16.msra.mxu0 0
    %3644 = vmatprep.subr.bf16.mxu0 0
    %3645 = vmatpush1.bf16.msra.mxu0 0
    %3646 = vmatprep.subr.bf16.mxu0 0
    %3647 = vmatpush1.bf16.msra.mxu0 0
    %3648 = vmatprep.subr.bf16.mxu0 0
    %3649 = vmatpush1.bf16.msra.mxu0 0
    %3650 = vmatprep.subr.bf16.mxu0 0
    %3651 = vmatpush1.bf16.msra.mxu0 0
    %3652 = vmatprep.subr.bf16.mxu0 0
    %3653 = vmatpush1.bf16.msra.mxu0 %v2664
    %3654 = vmatprep.subr.bf16.mxu0 0
    %3655 = vmatpush1.bf16.msra.mxu0 %v2663
    %3656 = vmatprep.subr.bf16.mxu0 0
    %3657 = vmatpush2.bf16.msra.mxu0 0
    %3658 = vmatprep.subr.bf16.mxu0 0
    %3659 = vmatpush2.bf16.msra.mxu0 0
    %3660 = vmatprep.subr.bf16.mxu0 0
    %3661 = vmatpush2.bf16.msra.mxu0 0
    %3662 = vmatprep.subr.bf16.mxu0 0
    %3663 = vmatpush2.bf16.msra.mxu0 0
    %3664 = vmatprep.subr.bf16.mxu0 0
    %3665 = vmatpush2.bf16.msra.mxu0 0
    %3666 = vmatprep.subr.bf16.mxu0 0
    %3667 = vmatpush2.bf16.msra.mxu0 0
    %3668 = vmatprep.subr.bf16.mxu0 0
    %3669 = vmatpush2.bf16.msra.mxu0 0
    %3670 = vmatprep.subr.bf16.mxu0 0
    %3671 = vmatpush2.bf16.msra.mxu0 0
    %3672 = vmatprep.mubr.bf16.mxu0 0
    %3673 = vmatmul.mubr.bf16.gmra.mxu0 %v3544
    %v3674 = vpop.f32.mrf.mxu0
    %v3675 = vadd.f32 %v2653, %v3674
    %v3676 = vpop.f32.mrf.mxu0
    %v3677 = vpop.f32.mrf.mxu0
    %v3678 = vpop.f32.mrf.mxu0
    %3679 = vdwg.mxu0
    %3680 = vmatprep.subr.bf16.mxu0 0
    %3681 = vmatpush1.bf16.msra.mxu0 0
    %3682 = vmatprep.subr.bf16.mxu0 0
    %3683 = vmatpush1.bf16.msra.mxu0 0
    %3684 = vmatprep.subr.bf16.mxu0 0
    %3685 = vmatpush1.bf16.msra.mxu0 0
    %3686 = vmatprep.subr.bf16.mxu0 0
    %3687 = vmatpush1.bf16.msra.mxu0 0
    %3688 = vmatprep.subr.bf16.mxu0 0
    %3689 = vmatpush1.bf16.msra.mxu0 0
    %3690 = vmatprep.subr.bf16.mxu0 0
    %3691 = vmatpush1.bf16.msra.mxu0 0
    %3692 = vmatprep.subr.bf16.mxu0 0
    %3693 = vmatpush1.bf16.msra.mxu0 %v2722
    %3694 = vmatprep.subr.bf16.mxu0 0
    %3695 = vmatpush1.bf16.msra.mxu0 %v2721
    %3696 = vmatprep.subr.bf16.mxu0 0
    %3697 = vmatpush2.bf16.msra.mxu0 0
    %3698 = vmatprep.subr.bf16.mxu0 0
    %3699 = vmatpush2.bf16.msra.mxu0 0
    %3700 = vmatprep.subr.bf16.mxu0 0
    %3701 = vmatpush2.bf16.msra.mxu0 0
    %3702 = vmatprep.subr.bf16.mxu0 0
    %3703 = vmatpush2.bf16.msra.mxu0 0
    %3704 = vmatprep.subr.bf16.mxu0 0
    %3705 = vmatpush2.bf16.msra.mxu0 0
    %3706 = vmatprep.subr.bf16.mxu0 0
    %3707 = vmatpush2.bf16.msra.mxu0 0
    %3708 = vmatprep.subr.bf16.mxu0 0
    %3709 = vmatpush2.bf16.msra.mxu0 0
    %3710 = vmatprep.subr.bf16.mxu0 0
    %3711 = vmatpush2.bf16.msra.mxu0 0
    %3712 = vmatprep.mubr.bf16.mxu0 0
    %3713 = vmatmul.mubr.bf16.gmra.mxu0 %v3370
    %v3714 = vpop.f32.mrf.mxu0
    %v3715 = vadd.f32 %v2711, %v3714
    %v3716 = vpop.f32.mrf.mxu0
    %v3717 = vpop.f32.mrf.mxu0
    %v3718 = vpop.f32.mrf.mxu0
    %3719 = vdwg.mxu0
    %v3720 = vmul.f32 %v3592, %v3715
    %v3721 = vadd.f32 %v3675, %v3720
    %v3722 = vtanh.pop %v3721
    %v3723 = vsub.f32 1.0, %v3639
    %v3724 = vmul.f32 %v3723, %v3722
    %v3725 = vmul.f32 %v3639, %v3267
    %v3726 = vadd.f32 %v3724, %v3725
    %v3727 = vmul.f32 %v3726, %v516
    %v3728 = vsel %vm2773, %v3727, 0.0
    %3729 = vadd.xlane.f32.xlu0 %v3728
    %v3730 = vpop.xlane.xlu0 %3729
    %v3731 = vmul.f32 %v3726, %v786
    %v3732 = vsel %vm2773, %v3731, 0.0
    %3733 = vadd.xlane.f32.xlu0 %v3732
    %v3734 = vpop.xlane.xlu0 %3733
    %v3735 = vmul.f32 %v3726, %v1056
    %v3736 = vsel %vm2773, %v3735, 0.0
    %3737 = vadd.xlane.f32.xlu0 %v3736
    %v3738 = vpop.xlane.xlu0 %3737
    %v3739 = vmul.f32 %v3726, %v1326
    %v3740 = vsel %vm2773, %v3739, 0.0
    %3741 = vadd.xlane.f32.xlu0 %v3740
    %v3742 = vpop.xlane.xlu0 %3741
    %v3743 = vmul.f32 %v3726, %v1596
    %v3744 = vsel %vm2773, %v3743, 0.0
    %3745 = vadd.xlane.f32.xlu0 %v3744
    %v3746 = vpop.xlane.xlu0 %3745
    %v3747 = vmul.f32 %v3726, %v1866
    %v3748 = vsel %vm2773, %v3747, 0.0
    %3749 = vadd.xlane.f32.xlu0 %v3748
    %v3750 = vpop.xlane.xlu0 %3749
    %v3751 = vmul.f32 %v3726, %v2136
    %v3752 = vsel %vm2773, %v3751, 0.0
    %3753 = vadd.xlane.f32.xlu0 %v3752
    %v3754 = vpop.xlane.xlu0 %3753
    %v3755 = vmul.f32 %v3726, %v2406
    %v3756 = vsel %vm2773, %v3755, 0.0
    %3757 = vadd.xlane.f32.xlu0 %v3756
    %v3758 = vpop.xlane.xlu0 %3757
    %v3759 = vsel %vm2805, %v3730, %v3734
    %v3760 = vsel %vm2807, %v3759, %v3738
    %v3761 = vsel %vm2809, %v3760, %v3742
    %v3762 = vsel %vm2811, %v3761, %v3746
    %v3763 = vsel %vm2813, %v3762, %v3750
    %v3764 = vsel %vm2815, %v3763, %v3754
    %v3765 = vsel %vm2817, %v3764, %v3758
    %v3766 = vadd.f32 %v3765, %v132
    %v3767 = vsel %vm2820, %v3766, -inf
    %3768 = vmax.xlane.f32.xlu0 %v3767
    %v3769 = vpop.xlane.xlu0 %3768
    %v3770 = vsub.f32 %v3766, %v3769
    %v3771 = vmul.f32 %v3770, 1.442695
    %v3772 = vpow.pop %v3771
    %v3773 = vsel %vm2820, %v3772, 0.0
    %3774 = vadd.xlane.f32.xlu0 %v3773
    %v3775 = vpop.xlane.xlu0 %3774
    %v3776 = vrcp.pop %v3775
    %v3777 = vmul.f32 %v3772, %v3776
    %3779 = vset.pattern.permute.xlu0 0
    %3780 = vperm.xlu0 %3779, %v3777
    %v3781 = vpop.permute.xlu0 %3780
    %v3783 = vmul.f32 %v3781, %v516
    %3784 = vset.pattern.permute.xlu0 1
    %3785 = vperm.xlu0 %3784, %v3777
    %v3786 = vpop.permute.xlu0 %3785
    %v3788 = vmul.f32 %v3786, %v786
    %v3789 = vadd.f32 %v3783, %v3788
    %3790 = vset.pattern.permute.xlu0 2
    %3791 = vperm.xlu0 %3790, %v3777
    %v3792 = vpop.permute.xlu0 %3791
    %v3794 = vmul.f32 %v3792, %v1056
    %v3795 = vadd.f32 %v3789, %v3794
    %3796 = vset.pattern.permute.xlu0 3
    %3797 = vperm.xlu0 %3796, %v3777
    %v3798 = vpop.permute.xlu0 %3797
    %v3800 = vmul.f32 %v3798, %v1326
    %v3801 = vadd.f32 %v3795, %v3800
    %3802 = vset.pattern.permute.xlu0 4
    %3803 = vperm.xlu0 %3802, %v3777
    %v3804 = vpop.permute.xlu0 %3803
    %v3806 = vmul.f32 %v3804, %v1596
    %v3807 = vadd.f32 %v3801, %v3806
    %3808 = vset.pattern.permute.xlu0 5
    %3809 = vperm.xlu0 %3808, %v3777
    %v3810 = vpop.permute.xlu0 %3809
    %v3812 = vmul.f32 %v3810, %v1866
    %v3813 = vadd.f32 %v3807, %v3812
    %3814 = vset.pattern.permute.xlu0 6
    %3815 = vperm.xlu0 %3814, %v3777
    %v3816 = vpop.permute.xlu0 %3815
    %v3818 = vmul.f32 %v3816, %v2136
    %v3819 = vadd.f32 %v3813, %v3818
    %3820 = vset.pattern.permute.xlu0 7
    %3821 = vperm.xlu0 %3820, %v3777
    %v3822 = vpop.permute.xlu0 %3821
    %v3824 = vmul.f32 %v3822, %v2406
    %v3825 = vadd.f32 %v3819, %v3824
    %v3826 = vpack.c.bf16 %v3825, %v3825
    %v3827 = vpack.c.bf16 %v3726, %v3726
    %v3829 = vsel %vm146, %v3827, 0
    %3831 = vmatprep.subr.bf16.mxu0 0
    %3832 = vmatpush1.bf16.msra.mxu0 0
    %3833 = vmatprep.subr.bf16.mxu0 0
    %3834 = vmatpush1.bf16.msra.mxu0 0
    %3835 = vmatprep.subr.bf16.mxu0 0
    %3836 = vmatpush1.bf16.msra.mxu0 0
    %3837 = vmatprep.subr.bf16.mxu0 0
    %3838 = vmatpush1.bf16.msra.mxu0 0
    %3839 = vmatprep.subr.bf16.mxu0 0
    %3840 = vmatpush1.bf16.msra.mxu0 0
    %3841 = vmatprep.subr.bf16.mxu0 0
    %3842 = vmatpush1.bf16.msra.mxu0 0
    %3843 = vmatprep.subr.bf16.mxu0 0
    %3844 = vmatpush1.bf16.msra.mxu0 %v2891
    %3845 = vmatprep.subr.bf16.mxu0 0
    %3846 = vmatpush1.bf16.msra.mxu0 %v2890
    %3847 = vmatprep.subr.bf16.mxu0 0
    %3848 = vmatpush2.bf16.msra.mxu0 0
    %3849 = vmatprep.subr.bf16.mxu0 0
    %3850 = vmatpush2.bf16.msra.mxu0 0
    %3851 = vmatprep.subr.bf16.mxu0 0
    %3852 = vmatpush2.bf16.msra.mxu0 0
    %3853 = vmatprep.subr.bf16.mxu0 0
    %3854 = vmatpush2.bf16.msra.mxu0 0
    %3855 = vmatprep.subr.bf16.mxu0 0
    %3856 = vmatpush2.bf16.msra.mxu0 0
    %3857 = vmatprep.subr.bf16.mxu0 0
    %3858 = vmatpush2.bf16.msra.mxu0 0
    %3859 = vmatprep.subr.bf16.mxu0 0
    %3860 = vmatpush2.bf16.msra.mxu0 0
    %3861 = vmatprep.subr.bf16.mxu0 0
    %3862 = vmatpush2.bf16.msra.mxu0 0
    %3863 = vmatprep.mubr.bf16.mxu0 0
    %3864 = vmatmul.mubr.bf16.gmra.mxu0 %v3829
    %v3865 = vpop.f32.mrf.mxu0
    %v3866 = vadd.f32 0.0, %v3865
    %v3867 = vpop.f32.mrf.mxu0
    %v3868 = vpop.f32.mrf.mxu0
    %v3869 = vpop.f32.mrf.mxu0
    %3870 = vdwg.mxu0
    %v3872 = vsel %vm146, %v3826, 0
    %3874 = vmatprep.subr.bf16.mxu0 0
    %3875 = vmatpush1.bf16.msra.mxu0 0
    %3876 = vmatprep.subr.bf16.mxu0 0
    %3877 = vmatpush1.bf16.msra.mxu0 0
    %3878 = vmatprep.subr.bf16.mxu0 0
    %3879 = vmatpush1.bf16.msra.mxu0 0
    %3880 = vmatprep.subr.bf16.mxu0 0
    %3881 = vmatpush1.bf16.msra.mxu0 0
    %3882 = vmatprep.subr.bf16.mxu0 0
    %3883 = vmatpush1.bf16.msra.mxu0 0
    %3884 = vmatprep.subr.bf16.mxu0 0
    %3885 = vmatpush1.bf16.msra.mxu0 0
    %3886 = vmatprep.subr.bf16.mxu0 0
    %3887 = vmatpush1.bf16.msra.mxu0 %v2946
    %3888 = vmatprep.subr.bf16.mxu0 0
    %3889 = vmatpush1.bf16.msra.mxu0 %v2945
    %3890 = vmatprep.subr.bf16.mxu0 0
    %3891 = vmatpush2.bf16.msra.mxu0 0
    %3892 = vmatprep.subr.bf16.mxu0 0
    %3893 = vmatpush2.bf16.msra.mxu0 0
    %3894 = vmatprep.subr.bf16.mxu0 0
    %3895 = vmatpush2.bf16.msra.mxu0 0
    %3896 = vmatprep.subr.bf16.mxu0 0
    %3897 = vmatpush2.bf16.msra.mxu0 0
    %3898 = vmatprep.subr.bf16.mxu0 0
    %3899 = vmatpush2.bf16.msra.mxu0 0
    %3900 = vmatprep.subr.bf16.mxu0 0
    %3901 = vmatpush2.bf16.msra.mxu0 0
    %3902 = vmatprep.subr.bf16.mxu0 0
    %3903 = vmatpush2.bf16.msra.mxu0 0
    %3904 = vmatprep.subr.bf16.mxu0 0
    %3905 = vmatpush2.bf16.msra.mxu0 0
    %3906 = vmatprep.mubr.bf16.mxu0 0
    %3907 = vmatmul.mubr.bf16.gmra.mxu0 %v3872
    %v3908 = vpop.f32.mrf.mxu0
    %v3909 = vadd.f32 %v3866, %v3908
    %v3910 = vpop.f32.mrf.mxu0
    %v3911 = vpop.f32.mrf.mxu0
    %v3912 = vpop.f32.mrf.mxu0
    %3913 = vdwg.mxu0
    %v3914 = vadd.f32 %v3909, %v2996
    %v3915 = vtanh.pop %v3914
    %s3916 = scalar_lea.vmem [#allocation2], 4
    %3917 = vst.msk [vmem:[%s3916] sm:$0x3] %vm2773, %v3915
    %s3918 = scalar_lea.vmem [#allocation4], 4
    %3919 = vst.msk [vmem:[%s3918] sm:$0x3] %vm2820, %v3777
    %s3920 = scalar_lea.vmem %s1, 3
    %v3921 = vld [vmem:[%s3920] sm:$0x1]
    %3922 = vmatprep.subr.bf16.mxu0 0
    %3923 = vmatpush1.bf16.msra.mxu0 0
    %3924 = vmatprep.subr.bf16.mxu0 0
    %3925 = vmatpush1.bf16.msra.mxu0 0
    %3926 = vmatprep.subr.bf16.mxu0 0
    %3927 = vmatpush1.bf16.msra.mxu0 0
    %3928 = vmatprep.subr.bf16.mxu0 0
    %3929 = vmatpush1.bf16.msra.mxu0 0
    %3930 = vmatprep.subr.bf16.mxu0 0
    %3931 = vmatpush1.bf16.msra.mxu0 0
    %3932 = vmatprep.subr.bf16.mxu0 0
    %3933 = vmatpush1.bf16.msra.mxu0 0
    %3934 = vmatprep.subr.bf16.mxu0 0
    %3935 = vmatpush1.bf16.msra.mxu0 %v2418
    %3936 = vmatprep.subr.bf16.mxu0 0
    %3937 = vmatpush1.bf16.msra.mxu0 %v2417
    %3938 = vmatprep.subr.bf16.mxu0 0
    %3939 = vmatpush2.bf16.msra.mxu0 0
    %3940 = vmatprep.subr.bf16.mxu0 0
    %3941 = vmatpush2.bf16.msra.mxu0 0
    %3942 = vmatprep.subr.bf16.mxu0 0
    %3943 = vmatpush2.bf16.msra.mxu0 0
    %3944 = vmatprep.subr.bf16.mxu0 0
    %3945 = vmatpush2.bf16.msra.mxu0 0
    %3946 = vmatprep.subr.bf16.mxu0 0
    %3947 = vmatpush2.bf16.msra.mxu0 0
    %3948 = vmatprep.subr.bf16.mxu0 0
    %3949 = vmatpush2.bf16.msra.mxu0 0
    %3950 = vmatprep.subr.bf16.mxu0 0
    %3951 = vmatpush2.bf16.msra.mxu0 0
    %3952 = vmatprep.subr.bf16.mxu0 0
    %3953 = vmatpush2.bf16.msra.mxu0 0
    %3954 = vmatprep.mubr.bf16.mxu0 0
    %3955 = vmatmul.mubr.bf16.gmra.mxu0 %v3829
    %v3956 = vpop.f32.mrf.mxu0
    %v3957 = vadd.f32 0.0, %v3956
    %v3958 = vpop.f32.mrf.mxu0
    %v3959 = vpop.f32.mrf.mxu0
    %v3960 = vpop.f32.mrf.mxu0
    %3961 = vdwg.mxu0
    %3962 = vmatprep.subr.bf16.mxu0 0
    %3963 = vmatpush1.bf16.msra.mxu0 0
    %3964 = vmatprep.subr.bf16.mxu0 0
    %3965 = vmatpush1.bf16.msra.mxu0 0
    %3966 = vmatprep.subr.bf16.mxu0 0
    %3967 = vmatpush1.bf16.msra.mxu0 0
    %3968 = vmatprep.subr.bf16.mxu0 0
    %3969 = vmatpush1.bf16.msra.mxu0 0
    %3970 = vmatprep.subr.bf16.mxu0 0
    %3971 = vmatpush1.bf16.msra.mxu0 0
    %3972 = vmatprep.subr.bf16.mxu0 0
    %3973 = vmatpush1.bf16.msra.mxu0 0
    %3974 = vmatprep.subr.bf16.mxu0 0
    %3975 = vmatpush1.bf16.msra.mxu0 %v2473
    %3976 = vmatprep.subr.bf16.mxu0 0
    %3977 = vmatpush1.bf16.msra.mxu0 %v2472
    %3978 = vmatprep.subr.bf16.mxu0 0
    %3979 = vmatpush2.bf16.msra.mxu0 0
    %3980 = vmatprep.subr.bf16.mxu0 0
    %3981 = vmatpush2.bf16.msra.mxu0 0
    %3982 = vmatprep.subr.bf16.mxu0 0
    %3983 = vmatpush2.bf16.msra.mxu0 0
    %3984 = vmatprep.subr.bf16.mxu0 0
    %3985 = vmatpush2.bf16.msra.mxu0 0
    %3986 = vmatprep.subr.bf16.mxu0 0
    %3987 = vmatpush2.bf16.msra.mxu0 0
    %3988 = vmatprep.subr.bf16.mxu0 0
    %3989 = vmatpush2.bf16.msra.mxu0 0
    %3990 = vmatprep.subr.bf16.mxu0 0
    %3991 = vmatpush2.bf16.msra.mxu0 0
    %3992 = vmatprep.subr.bf16.mxu0 0
    %3993 = vmatpush2.bf16.msra.mxu0 0
    %3994 = vmatprep.mubr.bf16.mxu0 0
    %3995 = vmatmul.mubr.bf16.gmra.mxu0 %v3829
    %v3996 = vpop.f32.mrf.mxu0
    %v3997 = vadd.f32 0.0, %v3996
    %v3998 = vpop.f32.mrf.mxu0
    %v3999 = vpop.f32.mrf.mxu0
    %v4000 = vpop.f32.mrf.mxu0
    %4001 = vdwg.mxu0
    %v4003 = vsel %vm146, %v3921, 0
    %4005 = vmatprep.subr.bf16.mxu0 0
    %4006 = vmatpush1.bf16.msra.mxu0 0
    %4007 = vmatprep.subr.bf16.mxu0 0
    %4008 = vmatpush1.bf16.msra.mxu0 0
    %4009 = vmatprep.subr.bf16.mxu0 0
    %4010 = vmatpush1.bf16.msra.mxu0 0
    %4011 = vmatprep.subr.bf16.mxu0 0
    %4012 = vmatpush1.bf16.msra.mxu0 0
    %4013 = vmatprep.subr.bf16.mxu0 0
    %4014 = vmatpush1.bf16.msra.mxu0 0
    %4015 = vmatprep.subr.bf16.mxu0 0
    %4016 = vmatpush1.bf16.msra.mxu0 0
    %4017 = vmatprep.subr.bf16.mxu0 0
    %4018 = vmatpush1.bf16.msra.mxu0 %v2525
    %4019 = vmatprep.subr.bf16.mxu0 0
    %4020 = vmatpush1.bf16.msra.mxu0 %v2524
    %4021 = vmatprep.subr.bf16.mxu0 0
    %4022 = vmatpush2.bf16.msra.mxu0 0
    %4023 = vmatprep.subr.bf16.mxu0 0
    %4024 = vmatpush2.bf16.msra.mxu0 0
    %4025 = vmatprep.subr.bf16.mxu0 0
    %4026 = vmatpush2.bf16.msra.mxu0 0
    %4027 = vmatprep.subr.bf16.mxu0 0
    %4028 = vmatpush2.bf16.msra.mxu0 0
    %4029 = vmatprep.subr.bf16.mxu0 0
    %4030 = vmatpush2.bf16.msra.mxu0 0
    %4031 = vmatprep.subr.bf16.mxu0 0
    %4032 = vmatpush2.bf16.msra.mxu0 0
    %4033 = vmatprep.subr.bf16.mxu0 0
    %4034 = vmatpush2.bf16.msra.mxu0 0
    %4035 = vmatprep.subr.bf16.mxu0 0
    %4036 = vmatpush2.bf16.msra.mxu0 0
    %4037 = vmatprep.mubr.bf16.mxu0 0
    %4038 = vmatmul.mubr.bf16.gmra.mxu0 %v4003
    %v4039 = vpop.f32.mrf.mxu0
    %v4040 = vadd.f32 %v3957, %v4039
    %v4041 = vpop.f32.mrf.mxu0
    %v4042 = vpop.f32.mrf.mxu0
    %v4043 = vpop.f32.mrf.mxu0
    %4044 = vdwg.mxu0
    %v4045 = vadd.f32 %v4040, %v2575
    %v4046 = vxor.u32 %v4045, 2147483648
    %v4047 = vmul.f32 %v4046, 1.442695
    %v4048 = vpow.pop %v4047
    %v4049 = vadd.f32 %v4048, 1.0
    %v4050 = vrcp.pop %v4049
    %v4051 = vmul.f32 1.0, %v4050
    %4052 = vmatprep.subr.bf16.mxu0 0
    %4053 = vmatpush1.bf16.msra.mxu0 0
    %4054 = vmatprep.subr.bf16.mxu0 0
    %4055 = vmatpush1.bf16.msra.mxu0 0
    %4056 = vmatprep.subr.bf16.mxu0 0
    %4057 = vmatpush1.bf16.msra.mxu0 0
    %4058 = vmatprep.subr.bf16.mxu0 0
    %4059 = vmatpush1.bf16.msra.mxu0 0
    %4060 = vmatprep.subr.bf16.mxu0 0
    %4061 = vmatpush1.bf16.msra.mxu0 0
    %4062 = vmatprep.subr.bf16.mxu0 0
    %4063 = vmatpush1.bf16.msra.mxu0 0
    %4064 = vmatprep.subr.bf16.mxu0 0
    %4065 = vmatpush1.bf16.msra.mxu0 %v2593
    %4066 = vmatprep.subr.bf16.mxu0 0
    %4067 = vmatpush1.bf16.msra.mxu0 %v2592
    %4068 = vmatprep.subr.bf16.mxu0 0
    %4069 = vmatpush2.bf16.msra.mxu0 0
    %4070 = vmatprep.subr.bf16.mxu0 0
    %4071 = vmatpush2.bf16.msra.mxu0 0
    %4072 = vmatprep.subr.bf16.mxu0 0
    %4073 = vmatpush2.bf16.msra.mxu0 0
    %4074 = vmatprep.subr.bf16.mxu0 0
    %4075 = vmatpush2.bf16.msra.mxu0 0
    %4076 = vmatprep.subr.bf16.mxu0 0
    %4077 = vmatpush2.bf16.msra.mxu0 0
    %4078 = vmatprep.subr.bf16.mxu0 0
    %4079 = vmatpush2.bf16.msra.mxu0 0
    %4080 = vmatprep.subr.bf16.mxu0 0
    %4081 = vmatpush2.bf16.msra.mxu0 0
    %4082 = vmatprep.subr.bf16.mxu0 0
    %4083 = vmatpush2.bf16.msra.mxu0 0
    %4084 = vmatprep.mubr.bf16.mxu0 0
    %4085 = vmatmul.mubr.bf16.gmra.mxu0 %v4003
    %v4086 = vpop.f32.mrf.mxu0
    %v4087 = vadd.f32 %v3997, %v4086
    %v4088 = vpop.f32.mrf.mxu0
    %v4089 = vpop.f32.mrf.mxu0
    %v4090 = vpop.f32.mrf.mxu0
    %4091 = vdwg.mxu0
    %v4092 = vadd.f32 %v4087, %v2640
    %v4093 = vxor.u32 %v4092, 2147483648
    %v4094 = vmul.f32 %v4093, 1.442695
    %v4095 = vpow.pop %v4094
    %v4096 = vadd.f32 %v4095, 1.0
    %v4097 = vrcp.pop %v4096
    %v4098 = vmul.f32 1.0, %v4097
    %4099 = vmatprep.subr.bf16.mxu0 0
    %4100 = vmatpush1.bf16.msra.mxu0 0
    %4101 = vmatprep.subr.bf16.mxu0 0
    %4102 = vmatpush1.bf16.msra.mxu0 0
    %4103 = vmatprep.subr.bf16.mxu0 0
    %4104 = vmatpush1.bf16.msra.mxu0 0
    %4105 = vmatprep.subr.bf16.mxu0 0
    %4106 = vmatpush1.bf16.msra.mxu0 0
    %4107 = vmatprep.subr.bf16.mxu0 0
    %4108 = vmatpush1.bf16.msra.mxu0 0
    %4109 = vmatprep.subr.bf16.mxu0 0
    %4110 = vmatpush1.bf16.msra.mxu0 0
    %4111 = vmatprep.subr.bf16.mxu0 0
    %4112 = vmatpush1.bf16.msra.mxu0 %v2664
    %4113 = vmatprep.subr.bf16.mxu0 0
    %4114 = vmatpush1.bf16.msra.mxu0 %v2663
    %4115 = vmatprep.subr.bf16.mxu0 0
    %4116 = vmatpush2.bf16.msra.mxu0 0
    %4117 = vmatprep.subr.bf16.mxu0 0
    %4118 = vmatpush2.bf16.msra.mxu0 0
    %4119 = vmatprep.subr.bf16.mxu0 0
    %4120 = vmatpush2.bf16.msra.mxu0 0
    %4121 = vmatprep.subr.bf16.mxu0 0
    %4122 = vmatpush2.bf16.msra.mxu0 0
    %4123 = vmatprep.subr.bf16.mxu0 0
    %4124 = vmatpush2.bf16.msra.mxu0 0
    %4125 = vmatprep.subr.bf16.mxu0 0
    %4126 = vmatpush2.bf16.msra.mxu0 0
    %4127 = vmatprep.subr.bf16.mxu0 0
    %4128 = vmatpush2.bf16.msra.mxu0 0
    %4129 = vmatprep.subr.bf16.mxu0 0
    %4130 = vmatpush2.bf16.msra.mxu0 0
    %4131 = vmatprep.mubr.bf16.mxu0 0
    %4132 = vmatmul.mubr.bf16.gmra.mxu0 %v4003
    %v4133 = vpop.f32.mrf.mxu0
    %v4134 = vadd.f32 %v2653, %v4133
    %v4135 = vpop.f32.mrf.mxu0
    %v4136 = vpop.f32.mrf.mxu0
    %v4137 = vpop.f32.mrf.mxu0
    %4138 = vdwg.mxu0
    %4139 = vmatprep.subr.bf16.mxu0 0
    %4140 = vmatpush1.bf16.msra.mxu0 0
    %4141 = vmatprep.subr.bf16.mxu0 0
    %4142 = vmatpush1.bf16.msra.mxu0 0
    %4143 = vmatprep.subr.bf16.mxu0 0
    %4144 = vmatpush1.bf16.msra.mxu0 0
    %4145 = vmatprep.subr.bf16.mxu0 0
    %4146 = vmatpush1.bf16.msra.mxu0 0
    %4147 = vmatprep.subr.bf16.mxu0 0
    %4148 = vmatpush1.bf16.msra.mxu0 0
    %4149 = vmatprep.subr.bf16.mxu0 0
    %4150 = vmatpush1.bf16.msra.mxu0 0
    %4151 = vmatprep.subr.bf16.mxu0 0
    %4152 = vmatpush1.bf16.msra.mxu0 %v2722
    %4153 = vmatprep.subr.bf16.mxu0 0
    %4154 = vmatpush1.bf16.msra.mxu0 %v2721
    %4155 = vmatprep.subr.bf16.mxu0 0
    %4156 = vmatpush2.bf16.msra.mxu0 0
    %4157 = vmatprep.subr.bf16.mxu0 0
    %4158 = vmatpush2.bf16.msra.mxu0 0
    %4159 = vmatprep.subr.bf16.mxu0 0
    %4160 = vmatpush2.bf16.msra.mxu0 0
    %4161 = vmatprep.subr.bf16.mxu0 0
    %4162 = vmatpush2.bf16.msra.mxu0 0
    %4163 = vmatprep.subr.bf16.mxu0 0
    %4164 = vmatpush2.bf16.msra.mxu0 0
    %4165 = vmatprep.subr.bf16.mxu0 0
    %4166 = vmatpush2.bf16.msra.mxu0 0
    %4167 = vmatprep.subr.bf16.mxu0 0
    %4168 = vmatpush2.bf16.msra.mxu0 0
    %4169 = vmatprep.subr.bf16.mxu0 0
    %4170 = vmatpush2.bf16.msra.mxu0 0
    %4171 = vmatprep.mubr.bf16.mxu0 0
    %4172 = vmatmul.mubr.bf16.gmra.mxu0 %v3829
    %v4173 = vpop.f32.mrf.mxu0
    %v4174 = vadd.f32 %v2711, %v4173
    %v4175 = vpop.f32.mrf.mxu0
    %v4176 = vpop.f32.mrf.mxu0
    %v4177 = vpop.f32.mrf.mxu0
    %4178 = vdwg.mxu0
    %v4179 = vmul.f32 %v4051, %v4174
    %v4180 = vadd.f32 %v4134, %v4179
    %v4181 = vtanh.pop %v4180
    %v4182 = vsub.f32 1.0, %v4098
    %v4183 = vmul.f32 %v4182, %v4181
    %v4184 = vmul.f32 %v4098, %v3726
    %v4185 = vadd.f32 %v4183, %v4184
    %v4186 = vmul.f32 %v4185, %v516
    %v4187 = vsel %vm2773, %v4186, 0.0
    %4188 = vadd.xlane.f32.xlu0 %v4187
    %v4189 = vpop.xlane.xlu0 %4188
    %v4190 = vmul.f32 %v4185, %v786
    %v4191 = vsel %vm2773, %v4190, 0.0
    %4192 = vadd.xlane.f32.xlu0 %v4191
    %v4193 = vpop.xlane.xlu0 %4192
    %v4194 = vmul.f32 %v4185, %v1056
    %v4195 = vsel %vm2773, %v4194, 0.0
    %4196 = vadd.xlane.f32.xlu0 %v4195
    %v4197 = vpop.xlane.xlu0 %4196
    %v4198 = vmul.f32 %v4185, %v1326
    %v4199 = vsel %vm2773, %v4198, 0.0
    %4200 = vadd.xlane.f32.xlu0 %v4199
    %v4201 = vpop.xlane.xlu0 %4200
    %v4202 = vmul.f32 %v4185, %v1596
    %v4203 = vsel %vm2773, %v4202, 0.0
    %4204 = vadd.xlane.f32.xlu0 %v4203
    %v4205 = vpop.xlane.xlu0 %4204
    %v4206 = vmul.f32 %v4185, %v1866
    %v4207 = vsel %vm2773, %v4206, 0.0
    %4208 = vadd.xlane.f32.xlu0 %v4207
    %v4209 = vpop.xlane.xlu0 %4208
    %v4210 = vmul.f32 %v4185, %v2136
    %v4211 = vsel %vm2773, %v4210, 0.0
    %4212 = vadd.xlane.f32.xlu0 %v4211
    %v4213 = vpop.xlane.xlu0 %4212
    %v4214 = vmul.f32 %v4185, %v2406
    %v4215 = vsel %vm2773, %v4214, 0.0
    %4216 = vadd.xlane.f32.xlu0 %v4215
    %v4217 = vpop.xlane.xlu0 %4216
    %v4218 = vsel %vm2805, %v4189, %v4193
    %v4219 = vsel %vm2807, %v4218, %v4197
    %v4220 = vsel %vm2809, %v4219, %v4201
    %v4221 = vsel %vm2811, %v4220, %v4205
    %v4222 = vsel %vm2813, %v4221, %v4209
    %v4223 = vsel %vm2815, %v4222, %v4213
    %v4224 = vsel %vm2817, %v4223, %v4217
    %v4225 = vadd.f32 %v4224, %v132
    %v4226 = vsel %vm2820, %v4225, -inf
    %4227 = vmax.xlane.f32.xlu0 %v4226
    %v4228 = vpop.xlane.xlu0 %4227
    %v4229 = vsub.f32 %v4225, %v4228
    %v4230 = vmul.f32 %v4229, 1.442695
    %v4231 = vpow.pop %v4230
    %v4232 = vsel %vm2820, %v4231, 0.0
    %4233 = vadd.xlane.f32.xlu0 %v4232
    %v4234 = vpop.xlane.xlu0 %4233
    %v4235 = vrcp.pop %v4234
    %v4236 = vmul.f32 %v4231, %v4235
    %4238 = vset.pattern.permute.xlu0 0
    %4239 = vperm.xlu0 %4238, %v4236
    %v4240 = vpop.permute.xlu0 %4239
    %v4242 = vmul.f32 %v4240, %v516
    %4243 = vset.pattern.permute.xlu0 1
    %4244 = vperm.xlu0 %4243, %v4236
    %v4245 = vpop.permute.xlu0 %4244
    %v4247 = vmul.f32 %v4245, %v786
    %v4248 = vadd.f32 %v4242, %v4247
    %4249 = vset.pattern.permute.xlu0 2
    %4250 = vperm.xlu0 %4249, %v4236
    %v4251 = vpop.permute.xlu0 %4250
    %v4253 = vmul.f32 %v4251, %v1056
    %v4254 = vadd.f32 %v4248, %v4253
    %4255 = vset.pattern.permute.xlu0 3
    %4256 = vperm.xlu0 %4255, %v4236
    %v4257 = vpop.permute.xlu0 %4256
    %v4259 = vmul.f32 %v4257, %v1326
    %v4260 = vadd.f32 %v4254, %v4259
    %4261 = vset.pattern.permute.xlu0 4
    %4262 = vperm.xlu0 %4261, %v4236
    %v4263 = vpop.permute.xlu0 %4262
    %v4265 = vmul.f32 %v4263, %v1596
    %v4266 = vadd.f32 %v4260, %v4265
    %4267 = vset.pattern.permute.xlu0 5
    %4268 = vperm.xlu0 %4267, %v4236
    %v4269 = vpop.permute.xlu0 %4268
    %v4271 = vmul.f32 %v4269, %v1866
    %v4272 = vadd.f32 %v4266, %v4271
    %4273 = vset.pattern.permute.xlu0 6
    %4274 = vperm.xlu0 %4273, %v4236
    %v4275 = vpop.permute.xlu0 %4274
    %v4277 = vmul.f32 %v4275, %v2136
    %v4278 = vadd.f32 %v4272, %v4277
    %4279 = vset.pattern.permute.xlu0 7
    %4280 = vperm.xlu0 %4279, %v4236
    %v4281 = vpop.permute.xlu0 %4280
    %v4283 = vmul.f32 %v4281, %v2406
    %v4284 = vadd.f32 %v4278, %v4283
    %v4285 = vpack.c.bf16 %v4284, %v4284
    %v4286 = vpack.c.bf16 %v4185, %v4185
    %v4288 = vsel %vm146, %v4286, 0
    %4290 = vmatprep.subr.bf16.mxu0 0
    %4291 = vmatpush1.bf16.msra.mxu0 0
    %4292 = vmatprep.subr.bf16.mxu0 0
    %4293 = vmatpush1.bf16.msra.mxu0 0
    %4294 = vmatprep.subr.bf16.mxu0 0
    %4295 = vmatpush1.bf16.msra.mxu0 0
    %4296 = vmatprep.subr.bf16.mxu0 0
    %4297 = vmatpush1.bf16.msra.mxu0 0
    %4298 = vmatprep.subr.bf16.mxu0 0
    %4299 = vmatpush1.bf16.msra.mxu0 0
    %4300 = vmatprep.subr.bf16.mxu0 0
    %4301 = vmatpush1.bf16.msra.mxu0 0
    %4302 = vmatprep.subr.bf16.mxu0 0
    %4303 = vmatpush1.bf16.msra.mxu0 %v2891
    %4304 = vmatprep.subr.bf16.mxu0 0
    %4305 = vmatpush1.bf16.msra.mxu0 %v2890
    %4306 = vmatprep.subr.bf16.mxu0 0
    %4307 = vmatpush2.bf16.msra.mxu0 0
    %4308 = vmatprep.subr.bf16.mxu0 0
    %4309 = vmatpush2.bf16.msra.mxu0 0
    %4310 = vmatprep.subr.bf16.mxu0 0
    %4311 = vmatpush2.bf16.msra.mxu0 0
    %4312 = vmatprep.subr.bf16.mxu0 0
    %4313 = vmatpush2.bf16.msra.mxu0 0
    %4314 = vmatprep.subr.bf16.mxu0 0
    %4315 = vmatpush2.bf16.msra.mxu0 0
    %4316 = vmatprep.subr.bf16.mxu0 0
    %4317 = vmatpush2.bf16.msra.mxu0 0
    %4318 = vmatprep.subr.bf16.mxu0 0
    %4319 = vmatpush2.bf16.msra.mxu0 0
    %4320 = vmatprep.subr.bf16.mxu0 0
    %4321 = vmatpush2.bf16.msra.mxu0 0
    %4322 = vmatprep.mubr.bf16.mxu0 0
    %4323 = vmatmul.mubr.bf16.gmra.mxu0 %v4288
    %v4324 = vpop.f32.mrf.mxu0
    %v4325 = vadd.f32 0.0, %v4324
    %v4326 = vpop.f32.mrf.mxu0
    %v4327 = vpop.f32.mrf.mxu0
    %v4328 = vpop.f32.mrf.mxu0
    %4329 = vdwg.mxu0
    %v4331 = vsel %vm146, %v4285, 0
    %4333 = vmatprep.subr.bf16.mxu0 0
    %4334 = vmatpush1.bf16.msra.mxu0 0
    %4335 = vmatprep.subr.bf16.mxu0 0
    %4336 = vmatpush1.bf16.msra.mxu0 0
    %4337 = vmatprep.subr.bf16.mxu0 0
    %4338 = vmatpush1.bf16.msra.mxu0 0
    %4339 = vmatprep.subr.bf16.mxu0 0
    %4340 = vmatpush1.bf16.msra.mxu0 0
    %4341 = vmatprep.subr.bf16.mxu0 0
    %4342 = vmatpush1.bf16.msra.mxu0 0
    %4343 = vmatprep.subr.bf16.mxu0 0
    %4344 = vmatpush1.bf16.msra.mxu0 0
    %4345 = vmatprep.subr.bf16.mxu0 0
    %4346 = vmatpush1.bf16.msra.mxu0 %v2946
    %4347 = vmatprep.subr.bf16.mxu0 0
    %4348 = vmatpush1.bf16.msra.mxu0 %v2945
    %4349 = vmatprep.subr.bf16.mxu0 0
    %4350 = vmatpush2.bf16.msra.mxu0 0
    %4351 = vmatprep.subr.bf16.mxu0 0
    %4352 = vmatpush2.bf16.msra.mxu0 0
    %4353 = vmatprep.subr.bf16.mxu0 0
    %4354 = vmatpush2.bf16.msra.mxu0 0
    %4355 = vmatprep.subr.bf16.mxu0 0
    %4356 = vmatpush2.bf16.msra.mxu0 0
    %4357 = vmatprep.subr.bf16.mxu0 0
    %4358 = vmatpush2.bf16.msra.mxu0 0
    %4359 = vmatprep.subr.bf16.mxu0 0
    %4360 = vmatpush2.bf16.msra.mxu0 0
    %4361 = vmatprep.subr.bf16.mxu0 0
    %4362 = vmatpush2.bf16.msra.mxu0 0
    %4363 = vmatprep.subr.bf16.mxu0 0
    %4364 = vmatpush2.bf16.msra.mxu0 0
    %4365 = vmatprep.mubr.bf16.mxu0 0
    %4366 = vmatmul.mubr.bf16.gmra.mxu0 %v4331
    %v4367 = vpop.f32.mrf.mxu0
    %v4368 = vadd.f32 %v4325, %v4367
    %v4369 = vpop.f32.mrf.mxu0
    %v4370 = vpop.f32.mrf.mxu0
    %v4371 = vpop.f32.mrf.mxu0
    %4372 = vdwg.mxu0
    %v4373 = vadd.f32 %v4368, %v2996
    %v4374 = vtanh.pop %v4373
    %s4375 = scalar_lea.vmem [#allocation2], 6
    %4376 = vst.msk [vmem:[%s4375] sm:$0x3] %vm2773, %v4374
    %s4377 = scalar_lea.vmem [#allocation4], 6
    %4378 = vst.msk [vmem:[%s4377] sm:$0x3] %vm2820, %v4236
    %s4379 = scalar_lea.vmem %s1, 4
    %v4380 = vld [vmem:[%s4379] sm:$0x1]
    %4381 = vmatprep.subr.bf16.mxu0 0
    %4382 = vmatpush1.bf16.msra.mxu0 0
    %4383 = vmatprep.subr.bf16.mxu0 0
    %4384 = vmatpush1.bf16.msra.mxu0 0
    %4385 = vmatprep.subr.bf16.mxu0 0
    %4386 = vmatpush1.bf16.msra.mxu0 0
    %4387 = vmatprep.subr.bf16.mxu0 0
    %4388 = vmatpush1.bf16.msra.mxu0 0
    %4389 = vmatprep.subr.bf16.mxu0 0
    %4390 = vmatpush1.bf16.msra.mxu0 0
    %4391 = vmatprep.subr.bf16.mxu0 0
    %4392 = vmatpush1.bf16.msra.mxu0 0
    %4393 = vmatprep.subr.bf16.mxu0 0
    %4394 = vmatpush1.bf16.msra.mxu0 %v2418
    %4395 = vmatprep.subr.bf16.mxu0 0
    %4396 = vmatpush1.bf16.msra.mxu0 %v2417
    %4397 = vmatprep.subr.bf16.mxu0 0
    %4398 = vmatpush2.bf16.msra.mxu0 0
    %4399 = vmatprep.subr.bf16.mxu0 0
    %4400 = vmatpush2.bf16.msra.mxu0 0
    %4401 = vmatprep.subr.bf16.mxu0 0
    %4402 = vmatpush2.bf16.msra.mxu0 0
    %4403 = vmatprep.subr.bf16.mxu0 0
    %4404 = vmatpush2.bf16.msra.mxu0 0
    %4405 = vmatprep.subr.bf16.mxu0 0
    %4406 = vmatpush2.bf16.msra.mxu0 0
    %4407 = vmatprep.subr.bf16.mxu0 0
    %4408 = vmatpush2.bf16.msra.mxu0 0
    %4409 = vmatprep.subr.bf16.mxu0 0
    %4410 = vmatpush2.bf16.msra.mxu0 0
    %4411 = vmatprep.subr.bf16.mxu0 0
    %4412 = vmatpush2.bf16.msra.mxu0 0
    %4413 = vmatprep.mubr.bf16.mxu0 0
    %4414 = vmatmul.mubr.bf16.gmra.mxu0 %v4288
    %v4415 = vpop.f32.mrf.mxu0
    %v4416 = vadd.f32 0.0, %v4415
    %v4417 = vpop.f32.mrf.mxu0
    %v4418 = vpop.f32.mrf.mxu0
    %v4419 = vpop.f32.mrf.mxu0
    %4420 = vdwg.mxu0
    %4421 = vmatprep.subr.bf16.mxu0 0
    %4422 = vmatpush1.bf16.msra.mxu0 0
    %4423 = vmatprep.subr.bf16.mxu0 0
    %4424 = vmatpush1.bf16.msra.mxu0 0
    %4425 = vmatprep.subr.bf16.mxu0 0
    %4426 = vmatpush1.bf16.msra.mxu0 0
    %4427 = vmatprep.subr.bf16.mxu0 0
    %4428 = vmatpush1.bf16.msra.mxu0 0
    %4429 = vmatprep.subr.bf16.mxu0 0
    %4430 = vmatpush1.bf16.msra.mxu0 0
    %4431 = vmatprep.subr.bf16.mxu0 0
    %4432 = vmatpush1.bf16.msra.mxu0 0
    %4433 = vmatprep.subr.bf16.mxu0 0
    %4434 = vmatpush1.bf16.msra.mxu0 %v2473
    %4435 = vmatprep.subr.bf16.mxu0 0
    %4436 = vmatpush1.bf16.msra.mxu0 %v2472
    %4437 = vmatprep.subr.bf16.mxu0 0
    %4438 = vmatpush2.bf16.msra.mxu0 0
    %4439 = vmatprep.subr.bf16.mxu0 0
    %4440 = vmatpush2.bf16.msra.mxu0 0
    %4441 = vmatprep.subr.bf16.mxu0 0
    %4442 = vmatpush2.bf16.msra.mxu0 0
    %4443 = vmatprep.subr.bf16.mxu0 0
    %4444 = vmatpush2.bf16.msra.mxu0 0
    %4445 = vmatprep.subr.bf16.mxu0 0
    %4446 = vmatpush2.bf16.msra.mxu0 0
    %4447 = vmatprep.subr.bf16.mxu0 0
    %4448 = vmatpush2.bf16.msra.mxu0 0
    %4449 = vmatprep.subr.bf16.mxu0 0
    %4450 = vmatpush2.bf16.msra.mxu0 0
    %4451 = vmatprep.subr.bf16.mxu0 0
    %4452 = vmatpush2.bf16.msra.mxu0 0
    %4453 = vmatprep.mubr.bf16.mxu0 0
    %4454 = vmatmul.mubr.bf16.gmra.mxu0 %v4288
    %v4455 = vpop.f32.mrf.mxu0
    %v4456 = vadd.f32 0.0, %v4455
    %v4457 = vpop.f32.mrf.mxu0
    %v4458 = vpop.f32.mrf.mxu0
    %v4459 = vpop.f32.mrf.mxu0
    %4460 = vdwg.mxu0
    %v4462 = vsel %vm146, %v4380, 0
    %4464 = vmatprep.subr.bf16.mxu0 0
    %4465 = vmatpush1.bf16.msra.mxu0 0
    %4466 = vmatprep.subr.bf16.mxu0 0
    %4467 = vmatpush1.bf16.msra.mxu0 0
    %4468 = vmatprep.subr.bf16.mxu0 0
    %4469 = vmatpush1.bf16.msra.mxu0 0
    %4470 = vmatprep.subr.bf16.mxu0 0
    %4471 = vmatpush1.bf16.msra.mxu0 0
    %4472 = vmatprep.subr.bf16.mxu0 0
    %4473 = vmatpush1.bf16.msra.mxu0 0
    %4474 = vmatprep.subr.bf16.mxu0 0
    %4475 = vmatpush1.bf16.msra.mxu0 0
    %4476 = vmatprep.subr.bf16.mxu0 0
    %4477 = vmatpush1.bf16.msra.mxu0 %v2525
    %4478 = vmatprep.subr.bf16.mxu0 0
    %4479 = vmatpush1.bf16.msra.mxu0 %v2524
    %4480 = vmatprep.subr.bf16.mxu0 0
    %4481 = vmatpush2.bf16.msra.mxu0 0
    %4482 = vmatprep.subr.bf16.mxu0 0
    %4483 = vmatpush2.bf16.msra.mxu0 0
    %4484 = vmatprep.subr.bf16.mxu0 0
    %4485 = vmatpush2.bf16.msra.mxu0 0
    %4486 = vmatprep.subr.bf16.mxu0 0
    %4487 = vmatpush2.bf16.msra.mxu0 0
    %4488 = vmatprep.subr.bf16.mxu0 0
    %4489 = vmatpush2.bf16.msra.mxu0 0
    %4490 = vmatprep.subr.bf16.mxu0 0
    %4491 = vmatpush2.bf16.msra.mxu0 0
    %4492 = vmatprep.subr.bf16.mxu0 0
    %4493 = vmatpush2.bf16.msra.mxu0 0
    %4494 = vmatprep.subr.bf16.mxu0 0
    %4495 = vmatpush2.bf16.msra.mxu0 0
    %4496 = vmatprep.mubr.bf16.mxu0 0
    %4497 = vmatmul.mubr.bf16.gmra.mxu0 %v4462
    %v4498 = vpop.f32.mrf.mxu0
    %v4499 = vadd.f32 %v4416, %v4498
    %v4500 = vpop.f32.mrf.mxu0
    %v4501 = vpop.f32.mrf.mxu0
    %v4502 = vpop.f32.mrf.mxu0
    %4503 = vdwg.mxu0
    %v4504 = vadd.f32 %v4499, %v2575
    %v4505 = vxor.u32 %v4504, 2147483648
    %v4506 = vmul.f32 %v4505, 1.442695
    %v4507 = vpow.pop %v4506
    %v4508 = vadd.f32 %v4507, 1.0
    %v4509 = vrcp.pop %v4508
    %v4510 = vmul.f32 1.0, %v4509
    %4511 = vmatprep.subr.bf16.mxu0 0
    %4512 = vmatpush1.bf16.msra.mxu0 0
    %4513 = vmatprep.subr.bf16.mxu0 0
    %4514 = vmatpush1.bf16.msra.mxu0 0
    %4515 = vmatprep.subr.bf16.mxu0 0
    %4516 = vmatpush1.bf16.msra.mxu0 0
    %4517 = vmatprep.subr.bf16.mxu0 0
    %4518 = vmatpush1.bf16.msra.mxu0 0
    %4519 = vmatprep.subr.bf16.mxu0 0
    %4520 = vmatpush1.bf16.msra.mxu0 0
    %4521 = vmatprep.subr.bf16.mxu0 0
    %4522 = vmatpush1.bf16.msra.mxu0 0
    %4523 = vmatprep.subr.bf16.mxu0 0
    %4524 = vmatpush1.bf16.msra.mxu0 %v2593
    %4525 = vmatprep.subr.bf16.mxu0 0
    %4526 = vmatpush1.bf16.msra.mxu0 %v2592
    %4527 = vmatprep.subr.bf16.mxu0 0
    %4528 = vmatpush2.bf16.msra.mxu0 0
    %4529 = vmatprep.subr.bf16.mxu0 0
    %4530 = vmatpush2.bf16.msra.mxu0 0
    %4531 = vmatprep.subr.bf16.mxu0 0
    %4532 = vmatpush2.bf16.msra.mxu0 0
    %4533 = vmatprep.subr.bf16.mxu0 0
    %4534 = vmatpush2.bf16.msra.mxu0 0
    %4535 = vmatprep.subr.bf16.mxu0 0
    %4536 = vmatpush2.bf16.msra.mxu0 0
    %4537 = vmatprep.subr.bf16.mxu0 0
    %4538 = vmatpush2.bf16.msra.mxu0 0
    %4539 = vmatprep.subr.bf16.mxu0 0
    %4540 = vmatpush2.bf16.msra.mxu0 0
    %4541 = vmatprep.subr.bf16.mxu0 0
    %4542 = vmatpush2.bf16.msra.mxu0 0
    %4543 = vmatprep.mubr.bf16.mxu0 0
    %4544 = vmatmul.mubr.bf16.gmra.mxu0 %v4462
    %v4545 = vpop.f32.mrf.mxu0
    %v4546 = vadd.f32 %v4456, %v4545
    %v4547 = vpop.f32.mrf.mxu0
    %v4548 = vpop.f32.mrf.mxu0
    %v4549 = vpop.f32.mrf.mxu0
    %4550 = vdwg.mxu0
    %v4551 = vadd.f32 %v4546, %v2640
    %v4552 = vxor.u32 %v4551, 2147483648
    %v4553 = vmul.f32 %v4552, 1.442695
    %v4554 = vpow.pop %v4553
    %v4555 = vadd.f32 %v4554, 1.0
    %v4556 = vrcp.pop %v4555
    %v4557 = vmul.f32 1.0, %v4556
    %4558 = vmatprep.subr.bf16.mxu0 0
    %4559 = vmatpush1.bf16.msra.mxu0 0
    %4560 = vmatprep.subr.bf16.mxu0 0
    %4561 = vmatpush1.bf16.msra.mxu0 0
    %4562 = vmatprep.subr.bf16.mxu0 0
    %4563 = vmatpush1.bf16.msra.mxu0 0
    %4564 = vmatprep.subr.bf16.mxu0 0
    %4565 = vmatpush1.bf16.msra.mxu0 0
    %4566 = vmatprep.subr.bf16.mxu0 0
    %4567 = vmatpush1.bf16.msra.mxu0 0
    %4568 = vmatprep.subr.bf16.mxu0 0
    %4569 = vmatpush1.bf16.msra.mxu0 0
    %4570 = vmatprep.subr.bf16.mxu0 0
    %4571 = vmatpush1.bf16.msra.mxu0 %v2664
    %4572 = vmatprep.subr.bf16.mxu0 0
    %4573 = vmatpush1.bf16.msra.mxu0 %v2663
    %4574 = vmatprep.subr.bf16.mxu0 0
    %4575 = vmatpush2.bf16.msra.mxu0 0
    %4576 = vmatprep.subr.bf16.mxu0 0
    %4577 = vmatpush2.bf16.msra.mxu0 0
    %4578 = vmatprep.subr.bf16.mxu0 0
    %4579 = vmatpush2.bf16.msra.mxu0 0
    %4580 = vmatprep.subr.bf16.mxu0 0
    %4581 = vmatpush2.bf16.msra.mxu0 0
    %4582 = vmatprep.subr.bf16.mxu0 0
    %4583 = vmatpush2.bf16.msra.mxu0 0
    %4584 = vmatprep.subr.bf16.mxu0 0
    %4585 = vmatpush2.bf16.msra.mxu0 0
    %4586 = vmatprep.subr.bf16.mxu0 0
    %4587 = vmatpush2.bf16.msra.mxu0 0
    %4588 = vmatprep.subr.bf16.mxu0 0
    %4589 = vmatpush2.bf16.msra.mxu0 0
    %4590 = vmatprep.mubr.bf16.mxu0 0
    %4591 = vmatmul.mubr.bf16.gmra.mxu0 %v4462
    %v4592 = vpop.f32.mrf.mxu0
    %v4593 = vadd.f32 %v2653, %v4592
    %v4594 = vpop.f32.mrf.mxu0
    %v4595 = vpop.f32.mrf.mxu0
    %v4596 = vpop.f32.mrf.mxu0
    %4597 = vdwg.mxu0
    %4598 = vmatprep.subr.bf16.mxu0 0
    %4599 = vmatpush1.bf16.msra.mxu0 0
    %4600 = vmatprep.subr.bf16.mxu0 0
    %4601 = vmatpush1.bf16.msra.mxu0 0
    %4602 = vmatprep.subr.bf16.mxu0 0
    %4603 = vmatpush1.bf16.msra.mxu0 0
    %4604 = vmatprep.subr.bf16.mxu0 0
    %4605 = vmatpush1.bf16.msra.mxu0 0
    %4606 = vmatprep.subr.bf16.mxu0 0
    %4607 = vmatpush1.bf16.msra.mxu0 0
    %4608 = vmatprep.subr.bf16.mxu0 0
    %4609 = vmatpush1.bf16.msra.mxu0 0
    %4610 = vmatprep.subr.bf16.mxu0 0
    %4611 = vmatpush1.bf16.msra.mxu0 %v2722
    %4612 = vmatprep.subr.bf16.mxu0 0
    %4613 = vmatpush1.bf16.msra.mxu0 %v2721
    %4614 = vmatprep.subr.bf16.mxu0 0
    %4615 = vmatpush2.bf16.msra.mxu0 0
    %4616 = vmatprep.subr.bf16.mxu0 0
    %4617 = vmatpush2.bf16.msra.mxu0 0
    %4618 = vmatprep.subr.bf16.mxu0 0
    %4619 = vmatpush2.bf16.msra.mxu0 0
    %4620 = vmatprep.subr.bf16.mxu0 0
    %4621 = vmatpush2.bf16.msra.mxu0 0
    %4622 = vmatprep.subr.bf16.mxu0 0
    %4623 = vmatpush2.bf16.msra.mxu0 0
    %4624 = vmatprep.subr.bf16.mxu0 0
    %4625 = vmatpush2.bf16.msra.mxu0 0
    %4626 = vmatprep.subr.bf16.mxu0 0
    %4627 = vmatpush2.bf16.msra.mxu0 0
    %4628 = vmatprep.subr.bf16.mxu0 0
    %4629 = vmatpush2.bf16.msra.mxu0 0
    %4630 = vmatprep.mubr.bf16.mxu0 0
    %4631 = vmatmul.mubr.bf16.gmra.mxu0 %v4288
    %v4632 = vpop.f32.mrf.mxu0
    %v4633 = vadd.f32 %v2711, %v4632
    %v4634 = vpop.f32.mrf.mxu0
    %v4635 = vpop.f32.mrf.mxu0
    %v4636 = vpop.f32.mrf.mxu0
    %4637 = vdwg.mxu0
    %v4638 = vmul.f32 %v4510, %v4633
    %v4639 = vadd.f32 %v4593, %v4638
    %v4640 = vtanh.pop %v4639
    %v4641 = vsub.f32 1.0, %v4557
    %v4642 = vmul.f32 %v4641, %v4640
    %v4643 = vmul.f32 %v4557, %v4185
    %v4644 = vadd.f32 %v4642, %v4643
    %v4645 = vmul.f32 %v4644, %v516
    %v4646 = vsel %vm2773, %v4645, 0.0
    %4647 = vadd.xlane.f32.xlu0 %v4646
    %v4648 = vpop.xlane.xlu0 %4647
    %v4649 = vmul.f32 %v4644, %v786
    %v4650 = vsel %vm2773, %v4649, 0.0
    %4651 = vadd.xlane.f32.xlu0 %v4650
    %v4652 = vpop.xlane.xlu0 %4651
    %v4653 = vmul.f32 %v4644, %v1056
    %v4654 = vsel %vm2773, %v4653, 0.0
    %4655 = vadd.xlane.f32.xlu0 %v4654
    %v4656 = vpop.xlane.xlu0 %4655
    %v4657 = vmul.f32 %v4644, %v1326
    %v4658 = vsel %vm2773, %v4657, 0.0
    %4659 = vadd.xlane.f32.xlu0 %v4658
    %v4660 = vpop.xlane.xlu0 %4659
    %v4661 = vmul.f32 %v4644, %v1596
    %v4662 = vsel %vm2773, %v4661, 0.0
    %4663 = vadd.xlane.f32.xlu0 %v4662
    %v4664 = vpop.xlane.xlu0 %4663
    %v4665 = vmul.f32 %v4644, %v1866
    %v4666 = vsel %vm2773, %v4665, 0.0
    %4667 = vadd.xlane.f32.xlu0 %v4666
    %v4668 = vpop.xlane.xlu0 %4667
    %v4669 = vmul.f32 %v4644, %v2136
    %v4670 = vsel %vm2773, %v4669, 0.0
    %4671 = vadd.xlane.f32.xlu0 %v4670
    %v4672 = vpop.xlane.xlu0 %4671
    %v4673 = vmul.f32 %v4644, %v2406
    %v4674 = vsel %vm2773, %v4673, 0.0
    %4675 = vadd.xlane.f32.xlu0 %v4674
    %v4676 = vpop.xlane.xlu0 %4675
    %v4677 = vsel %vm2805, %v4648, %v4652
    %v4678 = vsel %vm2807, %v4677, %v4656
    %v4679 = vsel %vm2809, %v4678, %v4660
    %v4680 = vsel %vm2811, %v4679, %v4664
    %v4681 = vsel %vm2813, %v4680, %v4668
    %v4682 = vsel %vm2815, %v4681, %v4672
    %v4683 = vsel %vm2817, %v4682, %v4676
    %v4684 = vadd.f32 %v4683, %v132
    %v4685 = vsel %vm2820, %v4684, -inf
    %4686 = vmax.xlane.f32.xlu0 %v4685
    %v4687 = vpop.xlane.xlu0 %4686
    %v4688 = vsub.f32 %v4684, %v4687
    %v4689 = vmul.f32 %v4688, 1.442695
    %v4690 = vpow.pop %v4689
    %v4691 = vsel %vm2820, %v4690, 0.0
    %4692 = vadd.xlane.f32.xlu0 %v4691
    %v4693 = vpop.xlane.xlu0 %4692
    %v4694 = vrcp.pop %v4693
    %v4695 = vmul.f32 %v4690, %v4694
    %4697 = vset.pattern.permute.xlu0 0
    %4698 = vperm.xlu0 %4697, %v4695
    %v4699 = vpop.permute.xlu0 %4698
    %v4701 = vmul.f32 %v4699, %v516
    %4702 = vset.pattern.permute.xlu0 1
    %4703 = vperm.xlu0 %4702, %v4695
    %v4704 = vpop.permute.xlu0 %4703
    %v4706 = vmul.f32 %v4704, %v786
    %v4707 = vadd.f32 %v4701, %v4706
    %4708 = vset.pattern.permute.xlu0 2
    %4709 = vperm.xlu0 %4708, %v4695
    %v4710 = vpop.permute.xlu0 %4709
    %v4712 = vmul.f32 %v4710, %v1056
    %v4713 = vadd.f32 %v4707, %v4712
    %4714 = vset.pattern.permute.xlu0 3
    %4715 = vperm.xlu0 %4714, %v4695
    %v4716 = vpop.permute.xlu0 %4715
    %v4718 = vmul.f32 %v4716, %v1326
    %v4719 = vadd.f32 %v4713, %v4718
    %4720 = vset.pattern.permute.xlu0 4
    %4721 = vperm.xlu0 %4720, %v4695
    %v4722 = vpop.permute.xlu0 %4721
    %v4724 = vmul.f32 %v4722, %v1596
    %v4725 = vadd.f32 %v4719, %v4724
    %4726 = vset.pattern.permute.xlu0 5
    %4727 = vperm.xlu0 %4726, %v4695
    %v4728 = vpop.permute.xlu0 %4727
    %v4730 = vmul.f32 %v4728, %v1866
    %v4731 = vadd.f32 %v4725, %v4730
    %4732 = vset.pattern.permute.xlu0 6
    %4733 = vperm.xlu0 %4732, %v4695
    %v4734 = vpop.permute.xlu0 %4733
    %v4736 = vmul.f32 %v4734, %v2136
    %v4737 = vadd.f32 %v4731, %v4736
    %4738 = vset.pattern.permute.xlu0 7
    %4739 = vperm.xlu0 %4738, %v4695
    %v4740 = vpop.permute.xlu0 %4739
    %v4742 = vmul.f32 %v4740, %v2406
    %v4743 = vadd.f32 %v4737, %v4742
    %v4744 = vpack.c.bf16 %v4743, %v4743
    %v4745 = vpack.c.bf16 %v4644, %v4644
    %v4747 = vsel %vm146, %v4745, 0
    %4749 = vmatprep.subr.bf16.mxu0 0
    %4750 = vmatpush1.bf16.msra.mxu0 0
    %4751 = vmatprep.subr.bf16.mxu0 0
    %4752 = vmatpush1.bf16.msra.mxu0 0
    %4753 = vmatprep.subr.bf16.mxu0 0
    %4754 = vmatpush1.bf16.msra.mxu0 0
    %4755 = vmatprep.subr.bf16.mxu0 0
    %4756 = vmatpush1.bf16.msra.mxu0 0
    %4757 = vmatprep.subr.bf16.mxu0 0
    %4758 = vmatpush1.bf16.msra.mxu0 0
    %4759 = vmatprep.subr.bf16.mxu0 0
    %4760 = vmatpush1.bf16.msra.mxu0 0
    %4761 = vmatprep.subr.bf16.mxu0 0
    %4762 = vmatpush1.bf16.msra.mxu0 %v2891
    %4763 = vmatprep.subr.bf16.mxu0 0
    %4764 = vmatpush1.bf16.msra.mxu0 %v2890
    %4765 = vmatprep.subr.bf16.mxu0 0
    %4766 = vmatpush2.bf16.msra.mxu0 0
    %4767 = vmatprep.subr.bf16.mxu0 0
    %4768 = vmatpush2.bf16.msra.mxu0 0
    %4769 = vmatprep.subr.bf16.mxu0 0
    %4770 = vmatpush2.bf16.msra.mxu0 0
    %4771 = vmatprep.subr.bf16.mxu0 0
    %4772 = vmatpush2.bf16.msra.mxu0 0
    %4773 = vmatprep.subr.bf16.mxu0 0
    %4774 = vmatpush2.bf16.msra.mxu0 0
    %4775 = vmatprep.subr.bf16.mxu0 0
    %4776 = vmatpush2.bf16.msra.mxu0 0
    %4777 = vmatprep.subr.bf16.mxu0 0
    %4778 = vmatpush2.bf16.msra.mxu0 0
    %4779 = vmatprep.subr.bf16.mxu0 0
    %4780 = vmatpush2.bf16.msra.mxu0 0
    %4781 = vmatprep.mubr.bf16.mxu0 0
    %4782 = vmatmul.mubr.bf16.gmra.mxu0 %v4747
    %v4783 = vpop.f32.mrf.mxu0
    %v4784 = vadd.f32 0.0, %v4783
    %v4785 = vpop.f32.mrf.mxu0
    %v4786 = vpop.f32.mrf.mxu0
    %v4787 = vpop.f32.mrf.mxu0
    %4788 = vdwg.mxu0
    %v4790 = vsel %vm146, %v4744, 0
    %4792 = vmatprep.subr.bf16.mxu0 0
    %4793 = vmatpush1.bf16.msra.mxu0 0
    %4794 = vmatprep.subr.bf16.mxu0 0
    %4795 = vmatpush1.bf16.msra.mxu0 0
    %4796 = vmatprep.subr.bf16.mxu0 0
    %4797 = vmatpush1.bf16.msra.mxu0 0
    %4798 = vmatprep.subr.bf16.mxu0 0
    %4799 = vmatpush1.bf16.msra.mxu0 0
    %4800 = vmatprep.subr.bf16.mxu0 0
    %4801 = vmatpush1.bf16.msra.mxu0 0
    %4802 = vmatprep.subr.bf16.mxu0 0
    %4803 = vmatpush1.bf16.msra.mxu0 0
    %4804 = vmatprep.subr.bf16.mxu0 0
    %4805 = vmatpush1.bf16.msra.mxu0 %v2946
    %4806 = vmatprep.subr.bf16.mxu0 0
    %4807 = vmatpush1.bf16.msra.mxu0 %v2945
    %4808 = vmatprep.subr.bf16.mxu0 0
    %4809 = vmatpush2.bf16.msra.mxu0 0
    %4810 = vmatprep.subr.bf16.mxu0 0
    %4811 = vmatpush2.bf16.msra.mxu0 0
    %4812 = vmatprep.subr.bf16.mxu0 0
    %4813 = vmatpush2.bf16.msra.mxu0 0
    %4814 = vmatprep.subr.bf16.mxu0 0
    %4815 = vmatpush2.bf16.msra.mxu0 0
    %4816 = vmatprep.subr.bf16.mxu0 0
    %4817 = vmatpush2.bf16.msra.mxu0 0
    %4818 = vmatprep.subr.bf16.mxu0 0
    %4819 = vmatpush2.bf16.msra.mxu0 0
    %4820 = vmatprep.subr.bf16.mxu0 0
    %4821 = vmatpush2.bf16.msra.mxu0 0
    %4822 = vmatprep.subr.bf16.mxu0 0
    %4823 = vmatpush2.bf16.msra.mxu0 0
    %4824 = vmatprep.mubr.bf16.mxu0 0
    %4825 = vmatmul.mubr.bf16.gmra.mxu0 %v4790
    %v4826 = vpop.f32.mrf.mxu0
    %v4827 = vadd.f32 %v4784, %v4826
    %v4828 = vpop.f32.mrf.mxu0
    %v4829 = vpop.f32.mrf.mxu0
    %v4830 = vpop.f32.mrf.mxu0
    %4831 = vdwg.mxu0
    %v4832 = vadd.f32 %v4827, %v2996
    %v4833 = vtanh.pop %v4832
    %s4834 = scalar_lea.vmem [#allocation2], 8
    %4835 = vst.msk [vmem:[%s4834] sm:$0x3] %vm2773, %v4833
    %s4836 = scalar_lea.vmem [#allocation4], 8
    %4837 = vst.msk [vmem:[%s4836] sm:$0x3] %vm2820, %v4695
    %s4838 = scalar_lea.vmem %s1, 5
    %v4839 = vld [vmem:[%s4838] sm:$0x1]
    %4840 = vmatprep.subr.bf16.mxu0 0
    %4841 = vmatpush1.bf16.msra.mxu0 0
    %4842 = vmatprep.subr.bf16.mxu0 0
    %4843 = vmatpush1.bf16.msra.mxu0 0
    %4844 = vmatprep.subr.bf16.mxu0 0
    %4845 = vmatpush1.bf16.msra.mxu0 0
    %4846 = vmatprep.subr.bf16.mxu0 0
    %4847 = vmatpush1.bf16.msra.mxu0 0
    %4848 = vmatprep.subr.bf16.mxu0 0
    %4849 = vmatpush1.bf16.msra.mxu0 0
    %4850 = vmatprep.subr.bf16.mxu0 0
    %4851 = vmatpush1.bf16.msra.mxu0 0
    %4852 = vmatprep.subr.bf16.mxu0 0
    %4853 = vmatpush1.bf16.msra.mxu0 %v2418
    %4854 = vmatprep.subr.bf16.mxu0 0
    %4855 = vmatpush1.bf16.msra.mxu0 %v2417
    %4856 = vmatprep.subr.bf16.mxu0 0
    %4857 = vmatpush2.bf16.msra.mxu0 0
    %4858 = vmatprep.subr.bf16.mxu0 0
    %4859 = vmatpush2.bf16.msra.mxu0 0
    %4860 = vmatprep.subr.bf16.mxu0 0
    %4861 = vmatpush2.bf16.msra.mxu0 0
    %4862 = vmatprep.subr.bf16.mxu0 0
    %4863 = vmatpush2.bf16.msra.mxu0 0
    %4864 = vmatprep.subr.bf16.mxu0 0
    %4865 = vmatpush2.bf16.msra.mxu0 0
    %4866 = vmatprep.subr.bf16.mxu0 0
    %4867 = vmatpush2.bf16.msra.mxu0 0
    %4868 = vmatprep.subr.bf16.mxu0 0
    %4869 = vmatpush2.bf16.msra.mxu0 0
    %4870 = vmatprep.subr.bf16.mxu0 0
    %4871 = vmatpush2.bf16.msra.mxu0 0
    %4872 = vmatprep.mubr.bf16.mxu0 0
    %4873 = vmatmul.mubr.bf16.gmra.mxu0 %v4747
    %v4874 = vpop.f32.mrf.mxu0
    %v4875 = vadd.f32 0.0, %v4874
    %v4876 = vpop.f32.mrf.mxu0
    %v4877 = vpop.f32.mrf.mxu0
    %v4878 = vpop.f32.mrf.mxu0
    %4879 = vdwg.mxu0
    %4880 = vmatprep.subr.bf16.mxu0 0
    %4881 = vmatpush1.bf16.msra.mxu0 0
    %4882 = vmatprep.subr.bf16.mxu0 0
    %4883 = vmatpush1.bf16.msra.mxu0 0
    %4884 = vmatprep.subr.bf16.mxu0 0
    %4885 = vmatpush1.bf16.msra.mxu0 0
    %4886 = vmatprep.subr.bf16.mxu0 0
    %4887 = vmatpush1.bf16.msra.mxu0 0
    %4888 = vmatprep.subr.bf16.mxu0 0
    %4889 = vmatpush1.bf16.msra.mxu0 0
    %4890 = vmatprep.subr.bf16.mxu0 0
    %4891 = vmatpush1.bf16.msra.mxu0 0
    %4892 = vmatprep.subr.bf16.mxu0 0
    %4893 = vmatpush1.bf16.msra.mxu0 %v2473
    %4894 = vmatprep.subr.bf16.mxu0 0
    %4895 = vmatpush1.bf16.msra.mxu0 %v2472
    %4896 = vmatprep.subr.bf16.mxu0 0
    %4897 = vmatpush2.bf16.msra.mxu0 0
    %4898 = vmatprep.subr.bf16.mxu0 0
    %4899 = vmatpush2.bf16.msra.mxu0 0
    %4900 = vmatprep.subr.bf16.mxu0 0
    %4901 = vmatpush2.bf16.msra.mxu0 0
    %4902 = vmatprep.subr.bf16.mxu0 0
    %4903 = vmatpush2.bf16.msra.mxu0 0
    %4904 = vmatprep.subr.bf16.mxu0 0
    %4905 = vmatpush2.bf16.msra.mxu0 0
    %4906 = vmatprep.subr.bf16.mxu0 0
    %4907 = vmatpush2.bf16.msra.mxu0 0
    %4908 = vmatprep.subr.bf16.mxu0 0
    %4909 = vmatpush2.bf16.msra.mxu0 0
    %4910 = vmatprep.subr.bf16.mxu0 0
    %4911 = vmatpush2.bf16.msra.mxu0 0
    %4912 = vmatprep.mubr.bf16.mxu0 0
    %4913 = vmatmul.mubr.bf16.gmra.mxu0 %v4747
    %v4914 = vpop.f32.mrf.mxu0
    %v4915 = vadd.f32 0.0, %v4914
    %v4916 = vpop.f32.mrf.mxu0
    %v4917 = vpop.f32.mrf.mxu0
    %v4918 = vpop.f32.mrf.mxu0
    %4919 = vdwg.mxu0
    %v4921 = vsel %vm146, %v4839, 0
    %4923 = vmatprep.subr.bf16.mxu0 0
    %4924 = vmatpush1.bf16.msra.mxu0 0
    %4925 = vmatprep.subr.bf16.mxu0 0
    %4926 = vmatpush1.bf16.msra.mxu0 0
    %4927 = vmatprep.subr.bf16.mxu0 0
    %4928 = vmatpush1.bf16.msra.mxu0 0
    %4929 = vmatprep.subr.bf16.mxu0 0
    %4930 = vmatpush1.bf16.msra.mxu0 0
    %4931 = vmatprep.subr.bf16.mxu0 0
    %4932 = vmatpush1.bf16.msra.mxu0 0
    %4933 = vmatprep.subr.bf16.mxu0 0
    %4934 = vmatpush1.bf16.msra.mxu0 0
    %4935 = vmatprep.subr.bf16.mxu0 0
    %4936 = vmatpush1.bf16.msra.mxu0 %v2525
    %4937 = vmatprep.subr.bf16.mxu0 0
    %4938 = vmatpush1.bf16.msra.mxu0 %v2524
    %4939 = vmatprep.subr.bf16.mxu0 0
    %4940 = vmatpush2.bf16.msra.mxu0 0
    %4941 = vmatprep.subr.bf16.mxu0 0
    %4942 = vmatpush2.bf16.msra.mxu0 0
    %4943 = vmatprep.subr.bf16.mxu0 0
    %4944 = vmatpush2.bf16.msra.mxu0 0
    %4945 = vmatprep.subr.bf16.mxu0 0
    %4946 = vmatpush2.bf16.msra.mxu0 0
    %4947 = vmatprep.subr.bf16.mxu0 0
    %4948 = vmatpush2.bf16.msra.mxu0 0
    %4949 = vmatprep.subr.bf16.mxu0 0
    %4950 = vmatpush2.bf16.msra.mxu0 0
    %4951 = vmatprep.subr.bf16.mxu0 0
    %4952 = vmatpush2.bf16.msra.mxu0 0
    %4953 = vmatprep.subr.bf16.mxu0 0
    %4954 = vmatpush2.bf16.msra.mxu0 0
    %4955 = vmatprep.mubr.bf16.mxu0 0
    %4956 = vmatmul.mubr.bf16.gmra.mxu0 %v4921
    %v4957 = vpop.f32.mrf.mxu0
    %v4958 = vadd.f32 %v4875, %v4957
    %v4959 = vpop.f32.mrf.mxu0
    %v4960 = vpop.f32.mrf.mxu0
    %v4961 = vpop.f32.mrf.mxu0
    %4962 = vdwg.mxu0
    %v4963 = vadd.f32 %v4958, %v2575
    %v4964 = vxor.u32 %v4963, 2147483648
    %v4965 = vmul.f32 %v4964, 1.442695
    %v4966 = vpow.pop %v4965
    %v4967 = vadd.f32 %v4966, 1.0
    %v4968 = vrcp.pop %v4967
    %v4969 = vmul.f32 1.0, %v4968
    %4970 = vmatprep.subr.bf16.mxu0 0
    %4971 = vmatpush1.bf16.msra.mxu0 0
    %4972 = vmatprep.subr.bf16.mxu0 0
    %4973 = vmatpush1.bf16.msra.mxu0 0
    %4974 = vmatprep.subr.bf16.mxu0 0
    %4975 = vmatpush1.bf16.msra.mxu0 0
    %4976 = vmatprep.subr.bf16.mxu0 0
    %4977 = vmatpush1.bf16.msra.mxu0 0
    %4978 = vmatprep.subr.bf16.mxu0 0
    %4979 = vmatpush1.bf16.msra.mxu0 0
    %4980 = vmatprep.subr.bf16.mxu0 0
    %4981 = vmatpush1.bf16.msra.mxu0 0
    %4982 = vmatprep.subr.bf16.mxu0 0
    %4983 = vmatpush1.bf16.msra.mxu0 %v2593
    %4984 = vmatprep.subr.bf16.mxu0 0
    %4985 = vmatpush1.bf16.msra.mxu0 %v2592
    %4986 = vmatprep.subr.bf16.mxu0 0
    %4987 = vmatpush2.bf16.msra.mxu0 0
    %4988 = vmatprep.subr.bf16.mxu0 0
    %4989 = vmatpush2.bf16.msra.mxu0 0
    %4990 = vmatprep.subr.bf16.mxu0 0
    %4991 = vmatpush2.bf16.msra.mxu0 0
    %4992 = vmatprep.subr.bf16.mxu0 0
    %4993 = vmatpush2.bf16.msra.mxu0 0
    %4994 = vmatprep.subr.bf16.mxu0 0
    %4995 = vmatpush2.bf16.msra.mxu0 0
    %4996 = vmatprep.subr.bf16.mxu0 0
    %4997 = vmatpush2.bf16.msra.mxu0 0
    %4998 = vmatprep.subr.bf16.mxu0 0
    %4999 = vmatpush2.bf16.msra.mxu0 0
    %5000 = vmatprep.subr.bf16.mxu0 0
    %5001 = vmatpush2.bf16.msra.mxu0 0
    %5002 = vmatprep.mubr.bf16.mxu0 0
    %5003 = vmatmul.mubr.bf16.gmra.mxu0 %v4921
    %v5004 = vpop.f32.mrf.mxu0
    %v5005 = vadd.f32 %v4915, %v5004
    %v5006 = vpop.f32.mrf.mxu0
    %v5007 = vpop.f32.mrf.mxu0
    %v5008 = vpop.f32.mrf.mxu0
    %5009 = vdwg.mxu0
    %v5010 = vadd.f32 %v5005, %v2640
    %v5011 = vxor.u32 %v5010, 2147483648
    %v5012 = vmul.f32 %v5011, 1.442695
    %v5013 = vpow.pop %v5012
    %v5014 = vadd.f32 %v5013, 1.0
    %v5015 = vrcp.pop %v5014
    %v5016 = vmul.f32 1.0, %v5015
    %5017 = vmatprep.subr.bf16.mxu0 0
    %5018 = vmatpush1.bf16.msra.mxu0 0
    %5019 = vmatprep.subr.bf16.mxu0 0
    %5020 = vmatpush1.bf16.msra.mxu0 0
    %5021 = vmatprep.subr.bf16.mxu0 0
    %5022 = vmatpush1.bf16.msra.mxu0 0
    %5023 = vmatprep.subr.bf16.mxu0 0
    %5024 = vmatpush1.bf16.msra.mxu0 0
    %5025 = vmatprep.subr.bf16.mxu0 0
    %5026 = vmatpush1.bf16.msra.mxu0 0
    %5027 = vmatprep.subr.bf16.mxu0 0
    %5028 = vmatpush1.bf16.msra.mxu0 0
    %5029 = vmatprep.subr.bf16.mxu0 0
    %5030 = vmatpush1.bf16.msra.mxu0 %v2664
    %5031 = vmatprep.subr.bf16.mxu0 0
    %5032 = vmatpush1.bf16.msra.mxu0 %v2663
    %5033 = vmatprep.subr.bf16.mxu0 0
    %5034 = vmatpush2.bf16.msra.mxu0 0
    %5035 = vmatprep.subr.bf16.mxu0 0
    %5036 = vmatpush2.bf16.msra.mxu0 0
    %5037 = vmatprep.subr.bf16.mxu0 0
    %5038 = vmatpush2.bf16.msra.mxu0 0
    %5039 = vmatprep.subr.bf16.mxu0 0
    %5040 = vmatpush2.bf16.msra.mxu0 0
    %5041 = vmatprep.subr.bf16.mxu0 0
    %5042 = vmatpush2.bf16.msra.mxu0 0
    %5043 = vmatprep.subr.bf16.mxu0 0
    %5044 = vmatpush2.bf16.msra.mxu0 0
    %5045 = vmatprep.subr.bf16.mxu0 0
    %5046 = vmatpush2.bf16.msra.mxu0 0
    %5047 = vmatprep.subr.bf16.mxu0 0
    %5048 = vmatpush2.bf16.msra.mxu0 0
    %5049 = vmatprep.mubr.bf16.mxu0 0
    %5050 = vmatmul.mubr.bf16.gmra.mxu0 %v4921
    %v5051 = vpop.f32.mrf.mxu0
    %v5052 = vadd.f32 %v2653, %v5051
    %v5053 = vpop.f32.mrf.mxu0
    %v5054 = vpop.f32.mrf.mxu0
    %v5055 = vpop.f32.mrf.mxu0
    %5056 = vdwg.mxu0
    %5057 = vmatprep.subr.bf16.mxu0 0
    %5058 = vmatpush1.bf16.msra.mxu0 0
    %5059 = vmatprep.subr.bf16.mxu0 0
    %5060 = vmatpush1.bf16.msra.mxu0 0
    %5061 = vmatprep.subr.bf16.mxu0 0
    %5062 = vmatpush1.bf16.msra.mxu0 0
    %5063 = vmatprep.subr.bf16.mxu0 0
    %5064 = vmatpush1.bf16.msra.mxu0 0
    %5065 = vmatprep.subr.bf16.mxu0 0
    %5066 = vmatpush1.bf16.msra.mxu0 0
    %5067 = vmatprep.subr.bf16.mxu0 0
    %5068 = vmatpush1.bf16.msra.mxu0 0
    %5069 = vmatprep.subr.bf16.mxu0 0
    %5070 = vmatpush1.bf16.msra.mxu0 %v2722
    %5071 = vmatprep.subr.bf16.mxu0 0
    %5072 = vmatpush1.bf16.msra.mxu0 %v2721
    %5073 = vmatprep.subr.bf16.mxu0 0
    %5074 = vmatpush2.bf16.msra.mxu0 0
    %5075 = vmatprep.subr.bf16.mxu0 0
    %5076 = vmatpush2.bf16.msra.mxu0 0
    %5077 = vmatprep.subr.bf16.mxu0 0
    %5078 = vmatpush2.bf16.msra.mxu0 0
    %5079 = vmatprep.subr.bf16.mxu0 0
    %5080 = vmatpush2.bf16.msra.mxu0 0
    %5081 = vmatprep.subr.bf16.mxu0 0
    %5082 = vmatpush2.bf16.msra.mxu0 0
    %5083 = vmatprep.subr.bf16.mxu0 0
    %5084 = vmatpush2.bf16.msra.mxu0 0
    %5085 = vmatprep.subr.bf16.mxu0 0
    %5086 = vmatpush2.bf16.msra.mxu0 0
    %5087 = vmatprep.subr.bf16.mxu0 0
    %5088 = vmatpush2.bf16.msra.mxu0 0
    %5089 = vmatprep.mubr.bf16.mxu0 0
    %5090 = vmatmul.mubr.bf16.gmra.mxu0 %v4747
    %v5091 = vpop.f32.mrf.mxu0
    %v5092 = vadd.f32 %v2711, %v5091
    %v5093 = vpop.f32.mrf.mxu0
    %v5094 = vpop.f32.mrf.mxu0
    %v5095 = vpop.f32.mrf.mxu0
    %5096 = vdwg.mxu0
    %v5097 = vmul.f32 %v4969, %v5092
    %v5098 = vadd.f32 %v5052, %v5097
    %v5099 = vtanh.pop %v5098
    %v5100 = vsub.f32 1.0, %v5016
    %v5101 = vmul.f32 %v5100, %v5099
    %v5102 = vmul.f32 %v5016, %v4644
    %v5103 = vadd.f32 %v5101, %v5102
    %v5104 = vmul.f32 %v5103, %v516
    %v5105 = vsel %vm2773, %v5104, 0.0
    %5106 = vadd.xlane.f32.xlu0 %v5105
    %v5107 = vpop.xlane.xlu0 %5106
    %v5108 = vmul.f32 %v5103, %v786
    %v5109 = vsel %vm2773, %v5108, 0.0
    %5110 = vadd.xlane.f32.xlu0 %v5109
    %v5111 = vpop.xlane.xlu0 %5110
    %v5112 = vmul.f32 %v5103, %v1056
    %v5113 = vsel %vm2773, %v5112, 0.0
    %5114 = vadd.xlane.f32.xlu0 %v5113
    %v5115 = vpop.xlane.xlu0 %5114
    %v5116 = vmul.f32 %v5103, %v1326
    %v5117 = vsel %vm2773, %v5116, 0.0
    %5118 = vadd.xlane.f32.xlu0 %v5117
    %v5119 = vpop.xlane.xlu0 %5118
    %v5120 = vmul.f32 %v5103, %v1596
    %v5121 = vsel %vm2773, %v5120, 0.0
    %5122 = vadd.xlane.f32.xlu0 %v5121
    %v5123 = vpop.xlane.xlu0 %5122
    %v5124 = vmul.f32 %v5103, %v1866
    %v5125 = vsel %vm2773, %v5124, 0.0
    %5126 = vadd.xlane.f32.xlu0 %v5125
    %v5127 = vpop.xlane.xlu0 %5126
    %v5128 = vmul.f32 %v5103, %v2136
    %v5129 = vsel %vm2773, %v5128, 0.0
    %5130 = vadd.xlane.f32.xlu0 %v5129
    %v5131 = vpop.xlane.xlu0 %5130
    %v5132 = vmul.f32 %v5103, %v2406
    %v5133 = vsel %vm2773, %v5132, 0.0
    %5134 = vadd.xlane.f32.xlu0 %v5133
    %v5135 = vpop.xlane.xlu0 %5134
    %v5136 = vsel %vm2805, %v5107, %v5111
    %v5137 = vsel %vm2807, %v5136, %v5115
    %v5138 = vsel %vm2809, %v5137, %v5119
    %v5139 = vsel %vm2811, %v5138, %v5123
    %v5140 = vsel %vm2813, %v5139, %v5127
    %v5141 = vsel %vm2815, %v5140, %v5131
    %v5142 = vsel %vm2817, %v5141, %v5135
    %v5143 = vadd.f32 %v5142, %v132
    %v5144 = vsel %vm2820, %v5143, -inf
    %5145 = vmax.xlane.f32.xlu0 %v5144
    %v5146 = vpop.xlane.xlu0 %5145
    %v5147 = vsub.f32 %v5143, %v5146
    %v5148 = vmul.f32 %v5147, 1.442695
    %v5149 = vpow.pop %v5148
    %v5150 = vsel %vm2820, %v5149, 0.0
    %5151 = vadd.xlane.f32.xlu0 %v5150
    %v5152 = vpop.xlane.xlu0 %5151
    %v5153 = vrcp.pop %v5152
    %v5154 = vmul.f32 %v5149, %v5153
    %5156 = vset.pattern.permute.xlu0 0
    %5157 = vperm.xlu0 %5156, %v5154
    %v5158 = vpop.permute.xlu0 %5157
    %v5160 = vmul.f32 %v5158, %v516
    %5161 = vset.pattern.permute.xlu0 1
    %5162 = vperm.xlu0 %5161, %v5154
    %v5163 = vpop.permute.xlu0 %5162
    %v5165 = vmul.f32 %v5163, %v786
    %v5166 = vadd.f32 %v5160, %v5165
    %5167 = vset.pattern.permute.xlu0 2
    %5168 = vperm.xlu0 %5167, %v5154
    %v5169 = vpop.permute.xlu0 %5168
    %v5171 = vmul.f32 %v5169, %v1056
    %v5172 = vadd.f32 %v5166, %v5171
    %5173 = vset.pattern.permute.xlu0 3
    %5174 = vperm.xlu0 %5173, %v5154
    %v5175 = vpop.permute.xlu0 %5174
    %v5177 = vmul.f32 %v5175, %v1326
    %v5178 = vadd.f32 %v5172, %v5177
    %5179 = vset.pattern.permute.xlu0 4
    %5180 = vperm.xlu0 %5179, %v5154
    %v5181 = vpop.permute.xlu0 %5180
    %v5183 = vmul.f32 %v5181, %v1596
    %v5184 = vadd.f32 %v5178, %v5183
    %5185 = vset.pattern.permute.xlu0 5
    %5186 = vperm.xlu0 %5185, %v5154
    %v5187 = vpop.permute.xlu0 %5186
    %v5189 = vmul.f32 %v5187, %v1866
    %v5190 = vadd.f32 %v5184, %v5189
    %5191 = vset.pattern.permute.xlu0 6
    %5192 = vperm.xlu0 %5191, %v5154
    %v5193 = vpop.permute.xlu0 %5192
    %v5195 = vmul.f32 %v5193, %v2136
    %v5196 = vadd.f32 %v5190, %v5195
    %5197 = vset.pattern.permute.xlu0 7
    %5198 = vperm.xlu0 %5197, %v5154
    %v5199 = vpop.permute.xlu0 %5198
    %v5201 = vmul.f32 %v5199, %v2406
    %v5202 = vadd.f32 %v5196, %v5201
    %v5203 = vpack.c.bf16 %v5202, %v5202
    %v5204 = vpack.c.bf16 %v5103, %v5103
    %v5206 = vsel %vm146, %v5204, 0
    %5208 = vmatprep.subr.bf16.mxu0 0
    %5209 = vmatpush1.bf16.msra.mxu0 0
    %5210 = vmatprep.subr.bf16.mxu0 0
    %5211 = vmatpush1.bf16.msra.mxu0 0
    %5212 = vmatprep.subr.bf16.mxu0 0
    %5213 = vmatpush1.bf16.msra.mxu0 0
    %5214 = vmatprep.subr.bf16.mxu0 0
    %5215 = vmatpush1.bf16.msra.mxu0 0
    %5216 = vmatprep.subr.bf16.mxu0 0
    %5217 = vmatpush1.bf16.msra.mxu0 0
    %5218 = vmatprep.subr.bf16.mxu0 0
    %5219 = vmatpush1.bf16.msra.mxu0 0
    %5220 = vmatprep.subr.bf16.mxu0 0
    %5221 = vmatpush1.bf16.msra.mxu0 %v2891
    %5222 = vmatprep.subr.bf16.mxu0 0
    %5223 = vmatpush1.bf16.msra.mxu0 %v2890
    %5224 = vmatprep.subr.bf16.mxu0 0
    %5225 = vmatpush2.bf16.msra.mxu0 0
    %5226 = vmatprep.subr.bf16.mxu0 0
    %5227 = vmatpush2.bf16.msra.mxu0 0
    %5228 = vmatprep.subr.bf16.mxu0 0
    %5229 = vmatpush2.bf16.msra.mxu0 0
    %5230 = vmatprep.subr.bf16.mxu0 0
    %5231 = vmatpush2.bf16.msra.mxu0 0
    %5232 = vmatprep.subr.bf16.mxu0 0
    %5233 = vmatpush2.bf16.msra.mxu0 0
    %5234 = vmatprep.subr.bf16.mxu0 0
    %5235 = vmatpush2.bf16.msra.mxu0 0
    %5236 = vmatprep.subr.bf16.mxu0 0
    %5237 = vmatpush2.bf16.msra.mxu0 0
    %5238 = vmatprep.subr.bf16.mxu0 0
    %5239 = vmatpush2.bf16.msra.mxu0 0
    %5240 = vmatprep.mubr.bf16.mxu0 0
    %5241 = vmatmul.mubr.bf16.gmra.mxu0 %v5206
    %v5242 = vpop.f32.mrf.mxu0
    %v5243 = vadd.f32 0.0, %v5242
    %v5244 = vpop.f32.mrf.mxu0
    %v5245 = vpop.f32.mrf.mxu0
    %v5246 = vpop.f32.mrf.mxu0
    %5247 = vdwg.mxu0
    %v5249 = vsel %vm146, %v5203, 0
    %5251 = vmatprep.subr.bf16.mxu0 0
    %5252 = vmatpush1.bf16.msra.mxu0 0
    %5253 = vmatprep.subr.bf16.mxu0 0
    %5254 = vmatpush1.bf16.msra.mxu0 0
    %5255 = vmatprep.subr.bf16.mxu0 0
    %5256 = vmatpush1.bf16.msra.mxu0 0
    %5257 = vmatprep.subr.bf16.mxu0 0
    %5258 = vmatpush1.bf16.msra.mxu0 0
    %5259 = vmatprep.subr.bf16.mxu0 0
    %5260 = vmatpush1.bf16.msra.mxu0 0
    %5261 = vmatprep.subr.bf16.mxu0 0
    %5262 = vmatpush1.bf16.msra.mxu0 0
    %5263 = vmatprep.subr.bf16.mxu0 0
    %5264 = vmatpush1.bf16.msra.mxu0 %v2946
    %5265 = vmatprep.subr.bf16.mxu0 0
    %5266 = vmatpush1.bf16.msra.mxu0 %v2945
    %5267 = vmatprep.subr.bf16.mxu0 0
    %5268 = vmatpush2.bf16.msra.mxu0 0
    %5269 = vmatprep.subr.bf16.mxu0 0
    %5270 = vmatpush2.bf16.msra.mxu0 0
    %5271 = vmatprep.subr.bf16.mxu0 0
    %5272 = vmatpush2.bf16.msra.mxu0 0
    %5273 = vmatprep.subr.bf16.mxu0 0
    %5274 = vmatpush2.bf16.msra.mxu0 0
    %5275 = vmatprep.subr.bf16.mxu0 0
    %5276 = vmatpush2.bf16.msra.mxu0 0
    %5277 = vmatprep.subr.bf16.mxu0 0
    %5278 = vmatpush2.bf16.msra.mxu0 0
    %5279 = vmatprep.subr.bf16.mxu0 0
    %5280 = vmatpush2.bf16.msra.mxu0 0
    %5281 = vmatprep.subr.bf16.mxu0 0
    %5282 = vmatpush2.bf16.msra.mxu0 0
    %5283 = vmatprep.mubr.bf16.mxu0 0
    %5284 = vmatmul.mubr.bf16.gmra.mxu0 %v5249
    %v5285 = vpop.f32.mrf.mxu0
    %v5286 = vadd.f32 %v5243, %v5285
    %v5287 = vpop.f32.mrf.mxu0
    %v5288 = vpop.f32.mrf.mxu0
    %v5289 = vpop.f32.mrf.mxu0
    %5290 = vdwg.mxu0
    %v5291 = vadd.f32 %v5286, %v2996
    %v5292 = vtanh.pop %v5291
    %s5293 = scalar_lea.vmem [#allocation2], 10
    %5294 = vst.msk [vmem:[%s5293] sm:$0x3] %vm2773, %v5292
    %s5295 = scalar_lea.vmem [#allocation4], 10
    %5296 = vst.msk [vmem:[%s5295] sm:$0x3] %vm2820, %v5154
    %s5297 = scalar_lea.vmem %s1, 6
    %v5298 = vld [vmem:[%s5297] sm:$0x1]
    %5299 = vmatprep.subr.bf16.mxu0 0
    %5300 = vmatpush1.bf16.msra.mxu0 0
    %5301 = vmatprep.subr.bf16.mxu0 0
    %5302 = vmatpush1.bf16.msra.mxu0 0
    %5303 = vmatprep.subr.bf16.mxu0 0
    %5304 = vmatpush1.bf16.msra.mxu0 0
    %5305 = vmatprep.subr.bf16.mxu0 0
    %5306 = vmatpush1.bf16.msra.mxu0 0
    %5307 = vmatprep.subr.bf16.mxu0 0
    %5308 = vmatpush1.bf16.msra.mxu0 0
    %5309 = vmatprep.subr.bf16.mxu0 0
    %5310 = vmatpush1.bf16.msra.mxu0 0
    %5311 = vmatprep.subr.bf16.mxu0 0
    %5312 = vmatpush1.bf16.msra.mxu0 %v2418
    %5313 = vmatprep.subr.bf16.mxu0 0
    %5314 = vmatpush1.bf16.msra.mxu0 %v2417
    %5315 = vmatprep.subr.bf16.mxu0 0
    %5316 = vmatpush2.bf16.msra.mxu0 0
    %5317 = vmatprep.subr.bf16.mxu0 0
    %5318 = vmatpush2.bf16.msra.mxu0 0
    %5319 = vmatprep.subr.bf16.mxu0 0
    %5320 = vmatpush2.bf16.msra.mxu0 0
    %5321 = vmatprep.subr.bf16.mxu0 0
    %5322 = vmatpush2.bf16.msra.mxu0 0
    %5323 = vmatprep.subr.bf16.mxu0 0
    %5324 = vmatpush2.bf16.msra.mxu0 0
    %5325 = vmatprep.subr.bf16.mxu0 0
    %5326 = vmatpush2.bf16.msra.mxu0 0
    %5327 = vmatprep.subr.bf16.mxu0 0
    %5328 = vmatpush2.bf16.msra.mxu0 0
    %5329 = vmatprep.subr.bf16.mxu0 0
    %5330 = vmatpush2.bf16.msra.mxu0 0
    %5331 = vmatprep.mubr.bf16.mxu0 0
    %5332 = vmatmul.mubr.bf16.gmra.mxu0 %v5206
    %v5333 = vpop.f32.mrf.mxu0
    %v5334 = vadd.f32 0.0, %v5333
    %v5335 = vpop.f32.mrf.mxu0
    %v5336 = vpop.f32.mrf.mxu0
    %v5337 = vpop.f32.mrf.mxu0
    %5338 = vdwg.mxu0
    %5339 = vmatprep.subr.bf16.mxu0 0
    %5340 = vmatpush1.bf16.msra.mxu0 0
    %5341 = vmatprep.subr.bf16.mxu0 0
    %5342 = vmatpush1.bf16.msra.mxu0 0
    %5343 = vmatprep.subr.bf16.mxu0 0
    %5344 = vmatpush1.bf16.msra.mxu0 0
    %5345 = vmatprep.subr.bf16.mxu0 0
    %5346 = vmatpush1.bf16.msra.mxu0 0
    %5347 = vmatprep.subr.bf16.mxu0 0
    %5348 = vmatpush1.bf16.msra.mxu0 0
    %5349 = vmatprep.subr.bf16.mxu0 0
    %5350 = vmatpush1.bf16.msra.mxu0 0
    %5351 = vmatprep.subr.bf16.mxu0 0
    %5352 = vmatpush1.bf16.msra.mxu0 %v2473
    %5353 = vmatprep.subr.bf16.mxu0 0
    %5354 = vmatpush1.bf16.msra.mxu0 %v2472
    %5355 = vmatprep.subr.bf16.mxu0 0
    %5356 = vmatpush2.bf16.msra.mxu0 0
    %5357 = vmatprep.subr.bf16.mxu0 0
    %5358 = vmatpush2.bf16.msra.mxu0 0
    %5359 = vmatprep.subr.bf16.mxu0 0
    %5360 = vmatpush2.bf16.msra.mxu0 0
    %5361 = vmatprep.subr.bf16.mxu0 0
    %5362 = vmatpush2.bf16.msra.mxu0 0
    %5363 = vmatprep.subr.bf16.mxu0 0
    %5364 = vmatpush2.bf16.msra.mxu0 0
    %5365 = vmatprep.subr.bf16.mxu0 0
    %5366 = vmatpush2.bf16.msra.mxu0 0
    %5367 = vmatprep.subr.bf16.mxu0 0
    %5368 = vmatpush2.bf16.msra.mxu0 0
    %5369 = vmatprep.subr.bf16.mxu0 0
    %5370 = vmatpush2.bf16.msra.mxu0 0
    %5371 = vmatprep.mubr.bf16.mxu0 0
    %5372 = vmatmul.mubr.bf16.gmra.mxu0 %v5206
    %v5373 = vpop.f32.mrf.mxu0
    %v5374 = vadd.f32 0.0, %v5373
    %v5375 = vpop.f32.mrf.mxu0
    %v5376 = vpop.f32.mrf.mxu0
    %v5377 = vpop.f32.mrf.mxu0
    %5378 = vdwg.mxu0
    %v5380 = vsel %vm146, %v5298, 0
    %5382 = vmatprep.subr.bf16.mxu0 0
    %5383 = vmatpush1.bf16.msra.mxu0 0
    %5384 = vmatprep.subr.bf16.mxu0 0
    %5385 = vmatpush1.bf16.msra.mxu0 0
    %5386 = vmatprep.subr.bf16.mxu0 0
    %5387 = vmatpush1.bf16.msra.mxu0 0
    %5388 = vmatprep.subr.bf16.mxu0 0
    %5389 = vmatpush1.bf16.msra.mxu0 0
    %5390 = vmatprep.subr.bf16.mxu0 0
    %5391 = vmatpush1.bf16.msra.mxu0 0
    %5392 = vmatprep.subr.bf16.mxu0 0
    %5393 = vmatpush1.bf16.msra.mxu0 0
    %5394 = vmatprep.subr.bf16.mxu0 0
    %5395 = vmatpush1.bf16.msra.mxu0 %v2525
    %5396 = vmatprep.subr.bf16.mxu0 0
    %5397 = vmatpush1.bf16.msra.mxu0 %v2524
    %5398 = vmatprep.subr.bf16.mxu0 0
    %5399 = vmatpush2.bf16.msra.mxu0 0
    %5400 = vmatprep.subr.bf16.mxu0 0
    %5401 = vmatpush2.bf16.msra.mxu0 0
    %5402 = vmatprep.subr.bf16.mxu0 0
    %5403 = vmatpush2.bf16.msra.mxu0 0
    %5404 = vmatprep.subr.bf16.mxu0 0
    %5405 = vmatpush2.bf16.msra.mxu0 0
    %5406 = vmatprep.subr.bf16.mxu0 0
    %5407 = vmatpush2.bf16.msra.mxu0 0
    %5408 = vmatprep.subr.bf16.mxu0 0
    %5409 = vmatpush2.bf16.msra.mxu0 0
    %5410 = vmatprep.subr.bf16.mxu0 0
    %5411 = vmatpush2.bf16.msra.mxu0 0
    %5412 = vmatprep.subr.bf16.mxu0 0
    %5413 = vmatpush2.bf16.msra.mxu0 0
    %5414 = vmatprep.mubr.bf16.mxu0 0
    %5415 = vmatmul.mubr.bf16.gmra.mxu0 %v5380
    %v5416 = vpop.f32.mrf.mxu0
    %v5417 = vadd.f32 %v5334, %v5416
    %v5418 = vpop.f32.mrf.mxu0
    %v5419 = vpop.f32.mrf.mxu0
    %v5420 = vpop.f32.mrf.mxu0
    %5421 = vdwg.mxu0
    %v5422 = vadd.f32 %v5417, %v2575
    %v5423 = vxor.u32 %v5422, 2147483648
    %v5424 = vmul.f32 %v5423, 1.442695
    %v5425 = vpow.pop %v5424
    %v5426 = vadd.f32 %v5425, 1.0
    %v5427 = vrcp.pop %v5426
    %v5428 = vmul.f32 1.0, %v5427
    %5429 = vmatprep.subr.bf16.mxu0 0
    %5430 = vmatpush1.bf16.msra.mxu0 0
    %5431 = vmatprep.subr.bf16.mxu0 0
    %5432 = vmatpush1.bf16.msra.mxu0 0
    %5433 = vmatprep.subr.bf16.mxu0 0
    %5434 = vmatpush1.bf16.msra.mxu0 0
    %5435 = vmatprep.subr.bf16.mxu0 0
    %5436 = vmatpush1.bf16.msra.mxu0 0
    %5437 = vmatprep.subr.bf16.mxu0 0
    %5438 = vmatpush1.bf16.msra.mxu0 0
    %5439 = vmatprep.subr.bf16.mxu0 0
    %5440 = vmatpush1.bf16.msra.mxu0 0
    %5441 = vmatprep.subr.bf16.mxu0 0
    %5442 = vmatpush1.bf16.msra.mxu0 %v2593
    %5443 = vmatprep.subr.bf16.mxu0 0
    %5444 = vmatpush1.bf16.msra.mxu0 %v2592
    %5445 = vmatprep.subr.bf16.mxu0 0
    %5446 = vmatpush2.bf16.msra.mxu0 0
    %5447 = vmatprep.subr.bf16.mxu0 0
    %5448 = vmatpush2.bf16.msra.mxu0 0
    %5449 = vmatprep.subr.bf16.mxu0 0
    %5450 = vmatpush2.bf16.msra.mxu0 0
    %5451 = vmatprep.subr.bf16.mxu0 0
    %5452 = vmatpush2.bf16.msra.mxu0 0
    %5453 = vmatprep.subr.bf16.mxu0 0
    %5454 = vmatpush2.bf16.msra.mxu0 0
    %5455 = vmatprep.subr.bf16.mxu0 0
    %5456 = vmatpush2.bf16.msra.mxu0 0
    %5457 = vmatprep.subr.bf16.mxu0 0
    %5458 = vmatpush2.bf16.msra.mxu0 0
    %5459 = vmatprep.subr.bf16.mxu0 0
    %5460 = vmatpush2.bf16.msra.mxu0 0
    %5461 = vmatprep.mubr.bf16.mxu0 0
    %5462 = vmatmul.mubr.bf16.gmra.mxu0 %v5380
    %v5463 = vpop.f32.mrf.mxu0
    %v5464 = vadd.f32 %v5374, %v5463
    %v5465 = vpop.f32.mrf.mxu0
    %v5466 = vpop.f32.mrf.mxu0
    %v5467 = vpop.f32.mrf.mxu0
    %5468 = vdwg.mxu0
    %v5469 = vadd.f32 %v5464, %v2640
    %v5470 = vxor.u32 %v5469, 2147483648
    %v5471 = vmul.f32 %v5470, 1.442695
    %v5472 = vpow.pop %v5471
    %v5473 = vadd.f32 %v5472, 1.0
    %v5474 = vrcp.pop %v5473
    %v5475 = vmul.f32 1.0, %v5474
    %5476 = vmatprep.subr.bf16.mxu0 0
    %5477 = vmatpush1.bf16.msra.mxu0 0
    %5478 = vmatprep.subr.bf16.mxu0 0
    %5479 = vmatpush1.bf16.msra.mxu0 0
    %5480 = vmatprep.subr.bf16.mxu0 0
    %5481 = vmatpush1.bf16.msra.mxu0 0
    %5482 = vmatprep.subr.bf16.mxu0 0
    %5483 = vmatpush1.bf16.msra.mxu0 0
    %5484 = vmatprep.subr.bf16.mxu0 0
    %5485 = vmatpush1.bf16.msra.mxu0 0
    %5486 = vmatprep.subr.bf16.mxu0 0
    %5487 = vmatpush1.bf16.msra.mxu0 0
    %5488 = vmatprep.subr.bf16.mxu0 0
    %5489 = vmatpush1.bf16.msra.mxu0 %v2664
    %5490 = vmatprep.subr.bf16.mxu0 0
    %5491 = vmatpush1.bf16.msra.mxu0 %v2663
    %5492 = vmatprep.subr.bf16.mxu0 0
    %5493 = vmatpush2.bf16.msra.mxu0 0
    %5494 = vmatprep.subr.bf16.mxu0 0
    %5495 = vmatpush2.bf16.msra.mxu0 0
    %5496 = vmatprep.subr.bf16.mxu0 0
    %5497 = vmatpush2.bf16.msra.mxu0 0
    %5498 = vmatprep.subr.bf16.mxu0 0
    %5499 = vmatpush2.bf16.msra.mxu0 0
    %5500 = vmatprep.subr.bf16.mxu0 0
    %5501 = vmatpush2.bf16.msra.mxu0 0
    %5502 = vmatprep.subr.bf16.mxu0 0
    %5503 = vmatpush2.bf16.msra.mxu0 0
    %5504 = vmatprep.subr.bf16.mxu0 0
    %5505 = vmatpush2.bf16.msra.mxu0 0
    %5506 = vmatprep.subr.bf16.mxu0 0
    %5507 = vmatpush2.bf16.msra.mxu0 0
    %5508 = vmatprep.mubr.bf16.mxu0 0
    %5509 = vmatmul.mubr.bf16.gmra.mxu0 %v5380
    %v5510 = vpop.f32.mrf.mxu0
    %v5511 = vadd.f32 %v2653, %v5510
    %v5512 = vpop.f32.mrf.mxu0
    %v5513 = vpop.f32.mrf.mxu0
    %v5514 = vpop.f32.mrf.mxu0
    %5515 = vdwg.mxu0
    %5516 = vmatprep.subr.bf16.mxu0 0
    %5517 = vmatpush1.bf16.msra.mxu0 0
    %5518 = vmatprep.subr.bf16.mxu0 0
    %5519 = vmatpush1.bf16.msra.mxu0 0
    %5520 = vmatprep.subr.bf16.mxu0 0
    %5521 = vmatpush1.bf16.msra.mxu0 0
    %5522 = vmatprep.subr.bf16.mxu0 0
    %5523 = vmatpush1.bf16.msra.mxu0 0
    %5524 = vmatprep.subr.bf16.mxu0 0
    %5525 = vmatpush1.bf16.msra.mxu0 0
    %5526 = vmatprep.subr.bf16.mxu0 0
    %5527 = vmatpush1.bf16.msra.mxu0 0
    %5528 = vmatprep.subr.bf16.mxu0 0
    %5529 = vmatpush1.bf16.msra.mxu0 %v2722
    %5530 = vmatprep.subr.bf16.mxu0 0
    %5531 = vmatpush1.bf16.msra.mxu0 %v2721
    %5532 = vmatprep.subr.bf16.mxu0 0
    %5533 = vmatpush2.bf16.msra.mxu0 0
    %5534 = vmatprep.subr.bf16.mxu0 0
    %5535 = vmatpush2.bf16.msra.mxu0 0
    %5536 = vmatprep.subr.bf16.mxu0 0
    %5537 = vmatpush2.bf16.msra.mxu0 0
    %5538 = vmatprep.subr.bf16.mxu0 0
    %5539 = vmatpush2.bf16.msra.mxu0 0
    %5540 = vmatprep.subr.bf16.mxu0 0
    %5541 = vmatpush2.bf16.msra.mxu0 0
    %5542 = vmatprep.subr.bf16.mxu0 0
    %5543 = vmatpush2.bf16.msra.mxu0 0
    %5544 = vmatprep.subr.bf16.mxu0 0
    %5545 = vmatpush2.bf16.msra.mxu0 0
    %5546 = vmatprep.subr.bf16.mxu0 0
    %5547 = vmatpush2.bf16.msra.mxu0 0
    %5548 = vmatprep.mubr.bf16.mxu0 0
    %5549 = vmatmul.mubr.bf16.gmra.mxu0 %v5206
    %v5550 = vpop.f32.mrf.mxu0
    %v5551 = vadd.f32 %v2711, %v5550
    %v5552 = vpop.f32.mrf.mxu0
    %v5553 = vpop.f32.mrf.mxu0
    %v5554 = vpop.f32.mrf.mxu0
    %5555 = vdwg.mxu0
    %v5556 = vmul.f32 %v5428, %v5551
    %v5557 = vadd.f32 %v5511, %v5556
    %v5558 = vtanh.pop %v5557
    %v5559 = vsub.f32 1.0, %v5475
    %v5560 = vmul.f32 %v5559, %v5558
    %v5561 = vmul.f32 %v5475, %v5103
    %v5562 = vadd.f32 %v5560, %v5561
    %v5563 = vmul.f32 %v5562, %v516
    %v5564 = vsel %vm2773, %v5563, 0.0
    %5565 = vadd.xlane.f32.xlu0 %v5564
    %v5566 = vpop.xlane.xlu0 %5565
    %v5567 = vmul.f32 %v5562, %v786
    %v5568 = vsel %vm2773, %v5567, 0.0
    %5569 = vadd.xlane.f32.xlu0 %v5568
    %v5570 = vpop.xlane.xlu0 %5569
    %v5571 = vmul.f32 %v5562, %v1056
    %v5572 = vsel %vm2773, %v5571, 0.0
    %5573 = vadd.xlane.f32.xlu0 %v5572
    %v5574 = vpop.xlane.xlu0 %5573
    %v5575 = vmul.f32 %v5562, %v1326
    %v5576 = vsel %vm2773, %v5575, 0.0
    %5577 = vadd.xlane.f32.xlu0 %v5576
    %v5578 = vpop.xlane.xlu0 %5577
    %v5579 = vmul.f32 %v5562, %v1596
    %v5580 = vsel %vm2773, %v5579, 0.0
    %5581 = vadd.xlane.f32.xlu0 %v5580
    %v5582 = vpop.xlane.xlu0 %5581
    %v5583 = vmul.f32 %v5562, %v1866
    %v5584 = vsel %vm2773, %v5583, 0.0
    %5585 = vadd.xlane.f32.xlu0 %v5584
    %v5586 = vpop.xlane.xlu0 %5585
    %v5587 = vmul.f32 %v5562, %v2136
    %v5588 = vsel %vm2773, %v5587, 0.0
    %5589 = vadd.xlane.f32.xlu0 %v5588
    %v5590 = vpop.xlane.xlu0 %5589
    %v5591 = vmul.f32 %v5562, %v2406
    %v5592 = vsel %vm2773, %v5591, 0.0
    %5593 = vadd.xlane.f32.xlu0 %v5592
    %v5594 = vpop.xlane.xlu0 %5593
    %v5595 = vsel %vm2805, %v5566, %v5570
    %v5596 = vsel %vm2807, %v5595, %v5574
    %v5597 = vsel %vm2809, %v5596, %v5578
    %v5598 = vsel %vm2811, %v5597, %v5582
    %v5599 = vsel %vm2813, %v5598, %v5586
    %v5600 = vsel %vm2815, %v5599, %v5590
    %v5601 = vsel %vm2817, %v5600, %v5594
    %v5602 = vadd.f32 %v5601, %v132
    %v5603 = vsel %vm2820, %v5602, -inf
    %5604 = vmax.xlane.f32.xlu0 %v5603
    %v5605 = vpop.xlane.xlu0 %5604
    %v5606 = vsub.f32 %v5602, %v5605
    %v5607 = vmul.f32 %v5606, 1.442695
    %v5608 = vpow.pop %v5607
    %v5609 = vsel %vm2820, %v5608, 0.0
    %5610 = vadd.xlane.f32.xlu0 %v5609
    %v5611 = vpop.xlane.xlu0 %5610
    %v5612 = vrcp.pop %v5611
    %v5613 = vmul.f32 %v5608, %v5612
    %5615 = vset.pattern.permute.xlu0 0
    %5616 = vperm.xlu0 %5615, %v5613
    %v5617 = vpop.permute.xlu0 %5616
    %v5619 = vmul.f32 %v5617, %v516
    %5620 = vset.pattern.permute.xlu0 1
    %5621 = vperm.xlu0 %5620, %v5613
    %v5622 = vpop.permute.xlu0 %5621
    %v5624 = vmul.f32 %v5622, %v786
    %v5625 = vadd.f32 %v5619, %v5624
    %5626 = vset.pattern.permute.xlu0 2
    %5627 = vperm.xlu0 %5626, %v5613
    %v5628 = vpop.permute.xlu0 %5627
    %v5630 = vmul.f32 %v5628, %v1056
    %v5631 = vadd.f32 %v5625, %v5630
    %5632 = vset.pattern.permute.xlu0 3
    %5633 = vperm.xlu0 %5632, %v5613
    %v5634 = vpop.permute.xlu0 %5633
    %v5636 = vmul.f32 %v5634, %v1326
    %v5637 = vadd.f32 %v5631, %v5636
    %5638 = vset.pattern.permute.xlu0 4
    %5639 = vperm.xlu0 %5638, %v5613
    %v5640 = vpop.permute.xlu0 %5639
    %v5642 = vmul.f32 %v5640, %v1596
    %v5643 = vadd.f32 %v5637, %v5642
    %5644 = vset.pattern.permute.xlu0 5
    %5645 = vperm.xlu0 %5644, %v5613
    %v5646 = vpop.permute.xlu0 %5645
    %v5648 = vmul.f32 %v5646, %v1866
    %v5649 = vadd.f32 %v5643, %v5648
    %5650 = vset.pattern.permute.xlu0 6
    %5651 = vperm.xlu0 %5650, %v5613
    %v5652 = vpop.permute.xlu0 %5651
    %v5654 = vmul.f32 %v5652, %v2136
    %v5655 = vadd.f32 %v5649, %v5654
    %5656 = vset.pattern.permute.xlu0 7
    %5657 = vperm.xlu0 %5656, %v5613
    %v5658 = vpop.permute.xlu0 %5657
    %v5660 = vmul.f32 %v5658, %v2406
    %v5661 = vadd.f32 %v5655, %v5660
    %v5662 = vpack.c.bf16 %v5661, %v5661
    %v5663 = vpack.c.bf16 %v5562, %v5562
    %v5665 = vsel %vm146, %v5663, 0
    %5667 = vmatprep.subr.bf16.mxu0 0
    %5668 = vmatpush1.bf16.msra.mxu0 0
    %5669 = vmatprep.subr.bf16.mxu0 0
    %5670 = vmatpush1.bf16.msra.mxu0 0
    %5671 = vmatprep.subr.bf16.mxu0 0
    %5672 = vmatpush1.bf16.msra.mxu0 0
    %5673 = vmatprep.subr.bf16.mxu0 0
    %5674 = vmatpush1.bf16.msra.mxu0 0
    %5675 = vmatprep.subr.bf16.mxu0 0
    %5676 = vmatpush1.bf16.msra.mxu0 0
    %5677 = vmatprep.subr.bf16.mxu0 0
    %5678 = vmatpush1.bf16.msra.mxu0 0
    %5679 = vmatprep.subr.bf16.mxu0 0
    %5680 = vmatpush1.bf16.msra.mxu0 %v2891
    %5681 = vmatprep.subr.bf16.mxu0 0
    %5682 = vmatpush1.bf16.msra.mxu0 %v2890
    %5683 = vmatprep.subr.bf16.mxu0 0
    %5684 = vmatpush2.bf16.msra.mxu0 0
    %5685 = vmatprep.subr.bf16.mxu0 0
    %5686 = vmatpush2.bf16.msra.mxu0 0
    %5687 = vmatprep.subr.bf16.mxu0 0
    %5688 = vmatpush2.bf16.msra.mxu0 0
    %5689 = vmatprep.subr.bf16.mxu0 0
    %5690 = vmatpush2.bf16.msra.mxu0 0
    %5691 = vmatprep.subr.bf16.mxu0 0
    %5692 = vmatpush2.bf16.msra.mxu0 0
    %5693 = vmatprep.subr.bf16.mxu0 0
    %5694 = vmatpush2.bf16.msra.mxu0 0
    %5695 = vmatprep.subr.bf16.mxu0 0
    %5696 = vmatpush2.bf16.msra.mxu0 0
    %5697 = vmatprep.subr.bf16.mxu0 0
    %5698 = vmatpush2.bf16.msra.mxu0 0
    %5699 = vmatprep.mubr.bf16.mxu0 0
    %5700 = vmatmul.mubr.bf16.gmra.mxu0 %v5665
    %v5701 = vpop.f32.mrf.mxu0
    %v5702 = vadd.f32 0.0, %v5701
    %v5703 = vpop.f32.mrf.mxu0
    %v5704 = vpop.f32.mrf.mxu0
    %v5705 = vpop.f32.mrf.mxu0
    %5706 = vdwg.mxu0
    %v5708 = vsel %vm146, %v5662, 0
    %5710 = vmatprep.subr.bf16.mxu0 0
    %5711 = vmatpush1.bf16.msra.mxu0 0
    %5712 = vmatprep.subr.bf16.mxu0 0
    %5713 = vmatpush1.bf16.msra.mxu0 0
    %5714 = vmatprep.subr.bf16.mxu0 0
    %5715 = vmatpush1.bf16.msra.mxu0 0
    %5716 = vmatprep.subr.bf16.mxu0 0
    %5717 = vmatpush1.bf16.msra.mxu0 0
    %5718 = vmatprep.subr.bf16.mxu0 0
    %5719 = vmatpush1.bf16.msra.mxu0 0
    %5720 = vmatprep.subr.bf16.mxu0 0
    %5721 = vmatpush1.bf16.msra.mxu0 0
    %5722 = vmatprep.subr.bf16.mxu0 0
    %5723 = vmatpush1.bf16.msra.mxu0 %v2946
    %5724 = vmatprep.subr.bf16.mxu0 0
    %5725 = vmatpush1.bf16.msra.mxu0 %v2945
    %5726 = vmatprep.subr.bf16.mxu0 0
    %5727 = vmatpush2.bf16.msra.mxu0 0
    %5728 = vmatprep.subr.bf16.mxu0 0
    %5729 = vmatpush2.bf16.msra.mxu0 0
    %5730 = vmatprep.subr.bf16.mxu0 0
    %5731 = vmatpush2.bf16.msra.mxu0 0
    %5732 = vmatprep.subr.bf16.mxu0 0
    %5733 = vmatpush2.bf16.msra.mxu0 0
    %5734 = vmatprep.subr.bf16.mxu0 0
    %5735 = vmatpush2.bf16.msra.mxu0 0
    %5736 = vmatprep.subr.bf16.mxu0 0
    %5737 = vmatpush2.bf16.msra.mxu0 0
    %5738 = vmatprep.subr.bf16.mxu0 0
    %5739 = vmatpush2.bf16.msra.mxu0 0
    %5740 = vmatprep.subr.bf16.mxu0 0
    %5741 = vmatpush2.bf16.msra.mxu0 0
    %5742 = vmatprep.mubr.bf16.mxu0 0
    %5743 = vmatmul.mubr.bf16.gmra.mxu0 %v5708
    %v5744 = vpop.f32.mrf.mxu0
    %v5745 = vadd.f32 %v5702, %v5744
    %v5746 = vpop.f32.mrf.mxu0
    %v5747 = vpop.f32.mrf.mxu0
    %v5748 = vpop.f32.mrf.mxu0
    %5749 = vdwg.mxu0
    %v5750 = vadd.f32 %v5745, %v2996
    %v5751 = vtanh.pop %v5750
    %s5752 = scalar_lea.vmem [#allocation2], 12
    %5753 = vst.msk [vmem:[%s5752] sm:$0x3] %vm2773, %v5751
    %s5754 = scalar_lea.vmem [#allocation4], 12
    %5755 = vst.msk [vmem:[%s5754] sm:$0x3] %vm2820, %v5613
    %s5756 = scalar_lea.vmem %s1, 7
    %v5757 = vld [vmem:[%s5756] sm:$0x1]
    %5758 = vmatprep.subr.bf16.mxu0 0
    %5759 = vmatpush1.bf16.msra.mxu0 0
    %5760 = vmatprep.subr.bf16.mxu0 0
    %5761 = vmatpush1.bf16.msra.mxu0 0
    %5762 = vmatprep.subr.bf16.mxu0 0
    %5763 = vmatpush1.bf16.msra.mxu0 0
    %5764 = vmatprep.subr.bf16.mxu0 0
    %5765 = vmatpush1.bf16.msra.mxu0 0
    %5766 = vmatprep.subr.bf16.mxu0 0
    %5767 = vmatpush1.bf16.msra.mxu0 0
    %5768 = vmatprep.subr.bf16.mxu0 0
    %5769 = vmatpush1.bf16.msra.mxu0 0
    %5770 = vmatprep.subr.bf16.mxu0 0
    %5771 = vmatpush1.bf16.msra.mxu0 %v2418
    %5772 = vmatprep.subr.bf16.mxu0 0
    %5773 = vmatpush1.bf16.msra.mxu0 %v2417
    %5774 = vmatprep.subr.bf16.mxu0 0
    %5775 = vmatpush2.bf16.msra.mxu0 0
    %5776 = vmatprep.subr.bf16.mxu0 0
    %5777 = vmatpush2.bf16.msra.mxu0 0
    %5778 = vmatprep.subr.bf16.mxu0 0
    %5779 = vmatpush2.bf16.msra.mxu0 0
    %5780 = vmatprep.subr.bf16.mxu0 0
    %5781 = vmatpush2.bf16.msra.mxu0 0
    %5782 = vmatprep.subr.bf16.mxu0 0
    %5783 = vmatpush2.bf16.msra.mxu0 0
    %5784 = vmatprep.subr.bf16.mxu0 0
    %5785 = vmatpush2.bf16.msra.mxu0 0
    %5786 = vmatprep.subr.bf16.mxu0 0
    %5787 = vmatpush2.bf16.msra.mxu0 0
    %5788 = vmatprep.subr.bf16.mxu0 0
    %5789 = vmatpush2.bf16.msra.mxu0 0
    %5790 = vmatprep.mubr.bf16.mxu0 0
    %5791 = vmatmul.mubr.bf16.gmra.mxu0 %v5665
    %v5792 = vpop.f32.mrf.mxu0
    %v5793 = vadd.f32 0.0, %v5792
    %v5794 = vpop.f32.mrf.mxu0
    %v5795 = vpop.f32.mrf.mxu0
    %v5796 = vpop.f32.mrf.mxu0
    %5797 = vdwg.mxu0
    %5798 = vmatprep.subr.bf16.mxu0 0
    %5799 = vmatpush1.bf16.msra.mxu0 0
    %5800 = vmatprep.subr.bf16.mxu0 0
    %5801 = vmatpush1.bf16.msra.mxu0 0
    %5802 = vmatprep.subr.bf16.mxu0 0
    %5803 = vmatpush1.bf16.msra.mxu0 0
    %5804 = vmatprep.subr.bf16.mxu0 0
    %5805 = vmatpush1.bf16.msra.mxu0 0
    %5806 = vmatprep.subr.bf16.mxu0 0
    %5807 = vmatpush1.bf16.msra.mxu0 0
    %5808 = vmatprep.subr.bf16.mxu0 0
    %5809 = vmatpush1.bf16.msra.mxu0 0
    %5810 = vmatprep.subr.bf16.mxu0 0
    %5811 = vmatpush1.bf16.msra.mxu0 %v2473
    %5812 = vmatprep.subr.bf16.mxu0 0
    %5813 = vmatpush1.bf16.msra.mxu0 %v2472
    %5814 = vmatprep.subr.bf16.mxu0 0
    %5815 = vmatpush2.bf16.msra.mxu0 0
    %5816 = vmatprep.subr.bf16.mxu0 0
    %5817 = vmatpush2.bf16.msra.mxu0 0
    %5818 = vmatprep.subr.bf16.mxu0 0
    %5819 = vmatpush2.bf16.msra.mxu0 0
    %5820 = vmatprep.subr.bf16.mxu0 0
    %5821 = vmatpush2.bf16.msra.mxu0 0
    %5822 = vmatprep.subr.bf16.mxu0 0
    %5823 = vmatpush2.bf16.msra.mxu0 0
    %5824 = vmatprep.subr.bf16.mxu0 0
    %5825 = vmatpush2.bf16.msra.mxu0 0
    %5826 = vmatprep.subr.bf16.mxu0 0
    %5827 = vmatpush2.bf16.msra.mxu0 0
    %5828 = vmatprep.subr.bf16.mxu0 0
    %5829 = vmatpush2.bf16.msra.mxu0 0
    %5830 = vmatprep.mubr.bf16.mxu0 0
    %5831 = vmatmul.mubr.bf16.gmra.mxu0 %v5665
    %v5832 = vpop.f32.mrf.mxu0
    %v5833 = vadd.f32 0.0, %v5832
    %v5834 = vpop.f32.mrf.mxu0
    %v5835 = vpop.f32.mrf.mxu0
    %v5836 = vpop.f32.mrf.mxu0
    %5837 = vdwg.mxu0
    %v5839 = vsel %vm146, %v5757, 0
    %5841 = vmatprep.subr.bf16.mxu0 0
    %5842 = vmatpush1.bf16.msra.mxu0 0
    %5843 = vmatprep.subr.bf16.mxu0 0
    %5844 = vmatpush1.bf16.msra.mxu0 0
    %5845 = vmatprep.subr.bf16.mxu0 0
    %5846 = vmatpush1.bf16.msra.mxu0 0
    %5847 = vmatprep.subr.bf16.mxu0 0
    %5848 = vmatpush1.bf16.msra.mxu0 0
    %5849 = vmatprep.subr.bf16.mxu0 0
    %5850 = vmatpush1.bf16.msra.mxu0 0
    %5851 = vmatprep.subr.bf16.mxu0 0
    %5852 = vmatpush1.bf16.msra.mxu0 0
    %5853 = vmatprep.subr.bf16.mxu0 0
    %5854 = vmatpush1.bf16.msra.mxu0 %v2525
    %5855 = vmatprep.subr.bf16.mxu0 0
    %5856 = vmatpush1.bf16.msra.mxu0 %v2524
    %5857 = vmatprep.subr.bf16.mxu0 0
    %5858 = vmatpush2.bf16.msra.mxu0 0
    %5859 = vmatprep.subr.bf16.mxu0 0
    %5860 = vmatpush2.bf16.msra.mxu0 0
    %5861 = vmatprep.subr.bf16.mxu0 0
    %5862 = vmatpush2.bf16.msra.mxu0 0
    %5863 = vmatprep.subr.bf16.mxu0 0
    %5864 = vmatpush2.bf16.msra.mxu0 0
    %5865 = vmatprep.subr.bf16.mxu0 0
    %5866 = vmatpush2.bf16.msra.mxu0 0
    %5867 = vmatprep.subr.bf16.mxu0 0
    %5868 = vmatpush2.bf16.msra.mxu0 0
    %5869 = vmatprep.subr.bf16.mxu0 0
    %5870 = vmatpush2.bf16.msra.mxu0 0
    %5871 = vmatprep.subr.bf16.mxu0 0
    %5872 = vmatpush2.bf16.msra.mxu0 0
    %5873 = vmatprep.mubr.bf16.mxu0 0
    %5874 = vmatmul.mubr.bf16.gmra.mxu0 %v5839
    %v5875 = vpop.f32.mrf.mxu0
    %v5876 = vadd.f32 %v5793, %v5875
    %v5877 = vpop.f32.mrf.mxu0
    %v5878 = vpop.f32.mrf.mxu0
    %v5879 = vpop.f32.mrf.mxu0
    %5880 = vdwg.mxu0
    %v5881 = vadd.f32 %v5876, %v2575
    %v5882 = vxor.u32 %v5881, 2147483648
    %v5883 = vmul.f32 %v5882, 1.442695
    %v5884 = vpow.pop %v5883
    %v5885 = vadd.f32 %v5884, 1.0
    %v5886 = vrcp.pop %v5885
    %v5887 = vmul.f32 1.0, %v5886
    %5888 = vmatprep.subr.bf16.mxu0 0
    %5889 = vmatpush1.bf16.msra.mxu0 0
    %5890 = vmatprep.subr.bf16.mxu0 0
    %5891 = vmatpush1.bf16.msra.mxu0 0
    %5892 = vmatprep.subr.bf16.mxu0 0
    %5893 = vmatpush1.bf16.msra.mxu0 0
    %5894 = vmatprep.subr.bf16.mxu0 0
    %5895 = vmatpush1.bf16.msra.mxu0 0
    %5896 = vmatprep.subr.bf16.mxu0 0
    %5897 = vmatpush1.bf16.msra.mxu0 0
    %5898 = vmatprep.subr.bf16.mxu0 0
    %5899 = vmatpush1.bf16.msra.mxu0 0
    %5900 = vmatprep.subr.bf16.mxu0 0
    %5901 = vmatpush1.bf16.msra.mxu0 %v2593
    %5902 = vmatprep.subr.bf16.mxu0 0
    %5903 = vmatpush1.bf16.msra.mxu0 %v2592
    %5904 = vmatprep.subr.bf16.mxu0 0
    %5905 = vmatpush2.bf16.msra.mxu0 0
    %5906 = vmatprep.subr.bf16.mxu0 0
    %5907 = vmatpush2.bf16.msra.mxu0 0
    %5908 = vmatprep.subr.bf16.mxu0 0
    %5909 = vmatpush2.bf16.msra.mxu0 0
    %5910 = vmatprep.subr.bf16.mxu0 0
    %5911 = vmatpush2.bf16.msra.mxu0 0
    %5912 = vmatprep.subr.bf16.mxu0 0
    %5913 = vmatpush2.bf16.msra.mxu0 0
    %5914 = vmatprep.subr.bf16.mxu0 0
    %5915 = vmatpush2.bf16.msra.mxu0 0
    %5916 = vmatprep.subr.bf16.mxu0 0
    %5917 = vmatpush2.bf16.msra.mxu0 0
    %5918 = vmatprep.subr.bf16.mxu0 0
    %5919 = vmatpush2.bf16.msra.mxu0 0
    %5920 = vmatprep.mubr.bf16.mxu0 0
    %5921 = vmatmul.mubr.bf16.gmra.mxu0 %v5839
    %v5922 = vpop.f32.mrf.mxu0
    %v5923 = vadd.f32 %v5833, %v5922
    %v5924 = vpop.f32.mrf.mxu0
    %v5925 = vpop.f32.mrf.mxu0
    %v5926 = vpop.f32.mrf.mxu0
    %5927 = vdwg.mxu0
    %v5928 = vadd.f32 %v5923, %v2640
    %v5929 = vxor.u32 %v5928, 2147483648
    %v5930 = vmul.f32 %v5929, 1.442695
    %v5931 = vpow.pop %v5930
    %v5932 = vadd.f32 %v5931, 1.0
    %v5933 = vrcp.pop %v5932
    %v5934 = vmul.f32 1.0, %v5933
    %5935 = vmatprep.subr.bf16.mxu0 0
    %5936 = vmatpush1.bf16.msra.mxu0 0
    %5937 = vmatprep.subr.bf16.mxu0 0
    %5938 = vmatpush1.bf16.msra.mxu0 0
    %5939 = vmatprep.subr.bf16.mxu0 0
    %5940 = vmatpush1.bf16.msra.mxu0 0
    %5941 = vmatprep.subr.bf16.mxu0 0
    %5942 = vmatpush1.bf16.msra.mxu0 0
    %5943 = vmatprep.subr.bf16.mxu0 0
    %5944 = vmatpush1.bf16.msra.mxu0 0
    %5945 = vmatprep.subr.bf16.mxu0 0
    %5946 = vmatpush1.bf16.msra.mxu0 0
    %5947 = vmatprep.subr.bf16.mxu0 0
    %5948 = vmatpush1.bf16.msra.mxu0 %v2664
    %5949 = vmatprep.subr.bf16.mxu0 0
    %5950 = vmatpush1.bf16.msra.mxu0 %v2663
    %5951 = vmatprep.subr.bf16.mxu0 0
    %5952 = vmatpush2.bf16.msra.mxu0 0
    %5953 = vmatprep.subr.bf16.mxu0 0
    %5954 = vmatpush2.bf16.msra.mxu0 0
    %5955 = vmatprep.subr.bf16.mxu0 0
    %5956 = vmatpush2.bf16.msra.mxu0 0
    %5957 = vmatprep.subr.bf16.mxu0 0
    %5958 = vmatpush2.bf16.msra.mxu0 0
    %5959 = vmatprep.subr.bf16.mxu0 0
    %5960 = vmatpush2.bf16.msra.mxu0 0
    %5961 = vmatprep.subr.bf16.mxu0 0
    %5962 = vmatpush2.bf16.msra.mxu0 0
    %5963 = vmatprep.subr.bf16.mxu0 0
    %5964 = vmatpush2.bf16.msra.mxu0 0
    %5965 = vmatprep.subr.bf16.mxu0 0
    %5966 = vmatpush2.bf16.msra.mxu0 0
    %5967 = vmatprep.mubr.bf16.mxu0 0
    %5968 = vmatmul.mubr.bf16.gmra.mxu0 %v5839
    %v5969 = vpop.f32.mrf.mxu0
    %v5970 = vadd.f32 %v2653, %v5969
    %v5971 = vpop.f32.mrf.mxu0
    %v5972 = vpop.f32.mrf.mxu0
    %v5973 = vpop.f32.mrf.mxu0
    %5974 = vdwg.mxu0
    %5975 = vmatprep.subr.bf16.mxu0 0
    %5976 = vmatpush1.bf16.msra.mxu0 0
    %5977 = vmatprep.subr.bf16.mxu0 0
    %5978 = vmatpush1.bf16.msra.mxu0 0
    %5979 = vmatprep.subr.bf16.mxu0 0
    %5980 = vmatpush1.bf16.msra.mxu0 0
    %5981 = vmatprep.subr.bf16.mxu0 0
    %5982 = vmatpush1.bf16.msra.mxu0 0
    %5983 = vmatprep.subr.bf16.mxu0 0
    %5984 = vmatpush1.bf16.msra.mxu0 0
    %5985 = vmatprep.subr.bf16.mxu0 0
    %5986 = vmatpush1.bf16.msra.mxu0 0
    %5987 = vmatprep.subr.bf16.mxu0 0
    %5988 = vmatpush1.bf16.msra.mxu0 %v2722
    %5989 = vmatprep.subr.bf16.mxu0 0
    %5990 = vmatpush1.bf16.msra.mxu0 %v2721
    %5991 = vmatprep.subr.bf16.mxu0 0
    %5992 = vmatpush2.bf16.msra.mxu0 0
    %5993 = vmatprep.subr.bf16.mxu0 0
    %5994 = vmatpush2.bf16.msra.mxu0 0
    %5995 = vmatprep.subr.bf16.mxu0 0
    %5996 = vmatpush2.bf16.msra.mxu0 0
    %5997 = vmatprep.subr.bf16.mxu0 0
    %5998 = vmatpush2.bf16.msra.mxu0 0
    %5999 = vmatprep.subr.bf16.mxu0 0
    %6000 = vmatpush2.bf16.msra.mxu0 0
    %6001 = vmatprep.subr.bf16.mxu0 0
    %6002 = vmatpush2.bf16.msra.mxu0 0
    %6003 = vmatprep.subr.bf16.mxu0 0
    %6004 = vmatpush2.bf16.msra.mxu0 0
    %6005 = vmatprep.subr.bf16.mxu0 0
    %6006 = vmatpush2.bf16.msra.mxu0 0
    %6007 = vmatprep.mubr.bf16.mxu0 0
    %6008 = vmatmul.mubr.bf16.gmra.mxu0 %v5665
    %v6009 = vpop.f32.mrf.mxu0
    %v6010 = vadd.f32 %v2711, %v6009
    %v6011 = vpop.f32.mrf.mxu0
    %v6012 = vpop.f32.mrf.mxu0
    %v6013 = vpop.f32.mrf.mxu0
    %6014 = vdwg.mxu0
    %v6015 = vmul.f32 %v5887, %v6010
    %v6016 = vadd.f32 %v5970, %v6015
    %v6017 = vtanh.pop %v6016
    %v6018 = vsub.f32 1.0, %v5934
    %v6019 = vmul.f32 %v6018, %v6017
    %v6020 = vmul.f32 %v5934, %v5562
    %v6021 = vadd.f32 %v6019, %v6020
    %v6022 = vmul.f32 %v6021, %v516
    %v6023 = vsel %vm2773, %v6022, 0.0
    %6024 = vadd.xlane.f32.xlu0 %v6023
    %v6025 = vpop.xlane.xlu0 %6024
    %v6026 = vmul.f32 %v6021, %v786
    %v6027 = vsel %vm2773, %v6026, 0.0
    %6028 = vadd.xlane.f32.xlu0 %v6027
    %v6029 = vpop.xlane.xlu0 %6028
    %v6030 = vmul.f32 %v6021, %v1056
    %v6031 = vsel %vm2773, %v6030, 0.0
    %6032 = vadd.xlane.f32.xlu0 %v6031
    %v6033 = vpop.xlane.xlu0 %6032
    %v6034 = vmul.f32 %v6021, %v1326
    %v6035 = vsel %vm2773, %v6034, 0.0
    %6036 = vadd.xlane.f32.xlu0 %v6035
    %v6037 = vpop.xlane.xlu0 %6036
    %v6038 = vmul.f32 %v6021, %v1596
    %v6039 = vsel %vm2773, %v6038, 0.0
    %6040 = vadd.xlane.f32.xlu0 %v6039
    %v6041 = vpop.xlane.xlu0 %6040
    %v6042 = vmul.f32 %v6021, %v1866
    %v6043 = vsel %vm2773, %v6042, 0.0
    %6044 = vadd.xlane.f32.xlu0 %v6043
    %v6045 = vpop.xlane.xlu0 %6044
    %v6046 = vmul.f32 %v6021, %v2136
    %v6047 = vsel %vm2773, %v6046, 0.0
    %6048 = vadd.xlane.f32.xlu0 %v6047
    %v6049 = vpop.xlane.xlu0 %6048
    %v6050 = vmul.f32 %v6021, %v2406
    %v6051 = vsel %vm2773, %v6050, 0.0
    %6052 = vadd.xlane.f32.xlu0 %v6051
    %v6053 = vpop.xlane.xlu0 %6052
    %v6054 = vsel %vm2805, %v6025, %v6029
    %v6055 = vsel %vm2807, %v6054, %v6033
    %v6056 = vsel %vm2809, %v6055, %v6037
    %v6057 = vsel %vm2811, %v6056, %v6041
    %v6058 = vsel %vm2813, %v6057, %v6045
    %v6059 = vsel %vm2815, %v6058, %v6049
    %v6060 = vsel %vm2817, %v6059, %v6053
    %v6061 = vadd.f32 %v6060, %v132
    %v6062 = vsel %vm2820, %v6061, -inf
    %6063 = vmax.xlane.f32.xlu0 %v6062
    %v6064 = vpop.xlane.xlu0 %6063
    %v6065 = vsub.f32 %v6061, %v6064
    %v6066 = vmul.f32 %v6065, 1.442695
    %v6067 = vpow.pop %v6066
    %v6068 = vsel %vm2820, %v6067, 0.0
    %6069 = vadd.xlane.f32.xlu0 %v6068
    %v6070 = vpop.xlane.xlu0 %6069
    %v6071 = vrcp.pop %v6070
    %v6072 = vmul.f32 %v6067, %v6071
    %6074 = vset.pattern.permute.xlu0 0
    %6075 = vperm.xlu0 %6074, %v6072
    %v6076 = vpop.permute.xlu0 %6075
    %v6078 = vmul.f32 %v6076, %v516
    %6079 = vset.pattern.permute.xlu0 1
    %6080 = vperm.xlu0 %6079, %v6072
    %v6081 = vpop.permute.xlu0 %6080
    %v6083 = vmul.f32 %v6081, %v786
    %v6084 = vadd.f32 %v6078, %v6083
    %6085 = vset.pattern.permute.xlu0 2
    %6086 = vperm.xlu0 %6085, %v6072
    %v6087 = vpop.permute.xlu0 %6086
    %v6089 = vmul.f32 %v6087, %v1056
    %v6090 = vadd.f32 %v6084, %v6089
    %6091 = vset.pattern.permute.xlu0 3
    %6092 = vperm.xlu0 %6091, %v6072
    %v6093 = vpop.permute.xlu0 %6092
    %v6095 = vmul.f32 %v6093, %v1326
    %v6096 = vadd.f32 %v6090, %v6095
    %6097 = vset.pattern.permute.xlu0 4
    %6098 = vperm.xlu0 %6097, %v6072
    %v6099 = vpop.permute.xlu0 %6098
    %v6101 = vmul.f32 %v6099, %v1596
    %v6102 = vadd.f32 %v6096, %v6101
    %6103 = vset.pattern.permute.xlu0 5
    %6104 = vperm.xlu0 %6103, %v6072
    %v6105 = vpop.permute.xlu0 %6104
    %v6107 = vmul.f32 %v6105, %v1866
    %v6108 = vadd.f32 %v6102, %v6107
    %6109 = vset.pattern.permute.xlu0 6
    %6110 = vperm.xlu0 %6109, %v6072
    %v6111 = vpop.permute.xlu0 %6110
    %v6113 = vmul.f32 %v6111, %v2136
    %v6114 = vadd.f32 %v6108, %v6113
    %6115 = vset.pattern.permute.xlu0 7
    %6116 = vperm.xlu0 %6115, %v6072
    %v6117 = vpop.permute.xlu0 %6116
    %v6119 = vmul.f32 %v6117, %v2406
    %v6120 = vadd.f32 %v6114, %v6119
    %v6121 = vpack.c.bf16 %v6120, %v6120
    %v6122 = vpack.c.bf16 %v6021, %v6021
    %v6124 = vsel %vm146, %v6122, 0
    %6126 = vmatprep.subr.bf16.mxu0 0
    %6127 = vmatpush1.bf16.msra.mxu0 0
    %6128 = vmatprep.subr.bf16.mxu0 0
    %6129 = vmatpush1.bf16.msra.mxu0 0
    %6130 = vmatprep.subr.bf16.mxu0 0
    %6131 = vmatpush1.bf16.msra.mxu0 0
    %6132 = vmatprep.subr.bf16.mxu0 0
    %6133 = vmatpush1.bf16.msra.mxu0 0
    %6134 = vmatprep.subr.bf16.mxu0 0
    %6135 = vmatpush1.bf16.msra.mxu0 0
    %6136 = vmatprep.subr.bf16.mxu0 0
    %6137 = vmatpush1.bf16.msra.mxu0 0
    %6138 = vmatprep.subr.bf16.mxu0 0
    %6139 = vmatpush1.bf16.msra.mxu0 %v2891
    %6140 = vmatprep.subr.bf16.mxu0 0
    %6141 = vmatpush1.bf16.msra.mxu0 %v2890
    %6142 = vmatprep.subr.bf16.mxu0 0
    %6143 = vmatpush2.bf16.msra.mxu0 0
    %6144 = vmatprep.subr.bf16.mxu0 0
    %6145 = vmatpush2.bf16.msra.mxu0 0
    %6146 = vmatprep.subr.bf16.mxu0 0
    %6147 = vmatpush2.bf16.msra.mxu0 0
    %6148 = vmatprep.subr.bf16.mxu0 0
    %6149 = vmatpush2.bf16.msra.mxu0 0
    %6150 = vmatprep.subr.bf16.mxu0 0
    %6151 = vmatpush2.bf16.msra.mxu0 0
    %6152 = vmatprep.subr.bf16.mxu0 0
    %6153 = vmatpush2.bf16.msra.mxu0 0
    %6154 = vmatprep.subr.bf16.mxu0 0
    %6155 = vmatpush2.bf16.msra.mxu0 0
    %6156 = vmatprep.subr.bf16.mxu0 0
    %6157 = vmatpush2.bf16.msra.mxu0 0
    %6158 = vmatprep.mubr.bf16.mxu0 0
    %6159 = vmatmul.mubr.bf16.gmra.mxu0 %v6124
    %v6160 = vpop.f32.mrf.mxu0
    %v6161 = vadd.f32 0.0, %v6160
    %v6162 = vpop.f32.mrf.mxu0
    %v6163 = vpop.f32.mrf.mxu0
    %v6164 = vpop.f32.mrf.mxu0
    %6165 = vdwg.mxu0
    %v6167 = vsel %vm146, %v6121, 0
    %6169 = vmatprep.subr.bf16.mxu0 0
    %6170 = vmatpush1.bf16.msra.mxu0 0
    %6171 = vmatprep.subr.bf16.mxu0 0
    %6172 = vmatpush1.bf16.msra.mxu0 0
    %6173 = vmatprep.subr.bf16.mxu0 0
    %6174 = vmatpush1.bf16.msra.mxu0 0
    %6175 = vmatprep.subr.bf16.mxu0 0
    %6176 = vmatpush1.bf16.msra.mxu0 0
    %6177 = vmatprep.subr.bf16.mxu0 0
    %6178 = vmatpush1.bf16.msra.mxu0 0
    %6179 = vmatprep.subr.bf16.mxu0 0
    %6180 = vmatpush1.bf16.msra.mxu0 0
    %6181 = vmatprep.subr.bf16.mxu0 0
    %6182 = vmatpush1.bf16.msra.mxu0 %v2946
    %6183 = vmatprep.subr.bf16.mxu0 0
    %6184 = vmatpush1.bf16.msra.mxu0 %v2945
    %6185 = vmatprep.subr.bf16.mxu0 0
    %6186 = vmatpush2.bf16.msra.mxu0 0
    %6187 = vmatprep.subr.bf16.mxu0 0
    %6188 = vmatpush2.bf16.msra.mxu0 0
    %6189 = vmatprep.subr.bf16.mxu0 0
    %6190 = vmatpush2.bf16.msra.mxu0 0
    %6191 = vmatprep.subr.bf16.mxu0 0
    %6192 = vmatpush2.bf16.msra.mxu0 0
    %6193 = vmatprep.subr.bf16.mxu0 0
    %6194 = vmatpush2.bf16.msra.mxu0 0
    %6195 = vmatprep.subr.bf16.mxu0 0
    %6196 = vmatpush2.bf16.msra.mxu0 0
    %6197 = vmatprep.subr.bf16.mxu0 0
    %6198 = vmatpush2.bf16.msra.mxu0 0
    %6199 = vmatprep.subr.bf16.mxu0 0
    %6200 = vmatpush2.bf16.msra.mxu0 0
    %6201 = vmatprep.mubr.bf16.mxu0 0
    %6202 = vmatmul.mubr.bf16.gmra.mxu0 %v6167
    %v6203 = vpop.f32.mrf.mxu0
    %v6204 = vadd.f32 %v6161, %v6203
    %v6205 = vpop.f32.mrf.mxu0
    %v6206 = vpop.f32.mrf.mxu0
    %v6207 = vpop.f32.mrf.mxu0
    %6208 = vdwg.mxu0
    %v6209 = vadd.f32 %v6204, %v2996
    %v6210 = vtanh.pop %v6209
    %s6211 = scalar_lea.vmem [#allocation2], 14
    %6212 = vst.msk [vmem:[%s6211] sm:$0x3] %vm2773, %v6210
    %s6213 = scalar_lea.vmem [#allocation4], 14
    %6214 = vst.msk [vmem:[%s6213] sm:$0x3] %vm2820, %v6072
    %6215 = vst.msk [vmem:[#allocation6] sm:$0x3] %vm2773, %v6021
    // Predicated region
    $region50: #{combine_wals_source_words_forward.1} parent=1 // pred_check
      _
    $region51: #{combine_wals_source_words_forward.1} parent=1 // pred_check_branch
      %6217 = sbr.rel (0) target = $region53
    $region52: #{combine_wals_source_words_forward.1} parent=1 // pred_region
      %s6219 = ssub.s32 256, 256
      %6220 = vsyncadd [#allocation3], %s6219
      %s6221 = sshll.u32 [#allocation2], 4
      %s6222 = int_to_ptr.vmem [resolvable:$true] %s6221
      %6227 = dma.vmem_to_hbm [thread:$0]  %s6222, 256, %s12, [#allocation3], 32, 32, 2
    $region53: #{combine_wals_source_words_forward.1} parent=1 // pred_fallthru
      _
    // Predicated region
    $region54: #{combine_wals_source_words_forward.1} parent=1 // pred_check
      _
    $region55: #{combine_wals_source_words_forward.1} parent=1 // pred_check_branch
      %6229 = sbr.rel (0) target = $region57
    $region56: #{combine_wals_source_words_forward.1} parent=1 // pred_region
      %s6231 = ssub.s32 256, 256
      %6232 = vsyncadd [#allocation5], %s6231
      %s6233 = sshll.u32 [#allocation4], 4
      %s6234 = int_to_ptr.vmem [resolvable:$true] %s6233
      %6239 = dma.vmem_to_hbm [thread:$0]  %s6234, 256, %s13, [#allocation5], 32, 32, 2
    $region57: #{combine_wals_source_words_forward.1} parent=1 // pred_fallthru
      _
    // Predicated region
    $region58: #{combine_wals_source_words_forward.1} parent=1 // pred_check
      _
    $region59: #{combine_wals_source_words_forward.1} parent=1 // pred_check_branch
      %6241 = sbr.rel (0) target = $region61
    $region60: #{combine_wals_source_words_forward.1} parent=1 // pred_region
      %s6243 = ssub.s32 32, 32
      %6244 = vsyncadd [#allocation5], %s6243
      %s6246 = sshll.u32 [#allocation6], 4
      %s6247 = int_to_ptr.vmem [resolvable:$true] %s6246
      %6249 = dma.vmem_to_hbm [thread:$0]  %s6247, 32, %s14, [#allocation5]
    $region61: #{combine_wals_source_words_forward.1} parent=1 // pred_fallthru
      _
    // Predicated region
    $region62: #{combine_wals_source_words_forward.1} parent=1 // pred_check
      _
    $region63: #{combine_wals_source_words_forward.1} parent=1 // pred_check_branch
      %6251 = sbr.rel (0) target = $region65
    $region64: #{combine_wals_source_words_forward.1} parent=1 // pred_region
      %6252 = dma.done [#allocation3], 256
    $region65: #{combine_wals_source_words_forward.1} parent=1 // pred_fallthru
      _
    // Predicated region
    $region66: #{combine_wals_source_words_forward.1} parent=1 // pred_check
      _
    $region67: #{combine_wals_source_words_forward.1} parent=1 // pred_check_branch
      %6254 = sbr.rel (0) target = $region69
    $region68: #{combine_wals_source_words_forward.1} parent=1 // pred_region
      %6255 = dma.done [#allocation5], 256
    $region69: #{combine_wals_source_words_forward.1} parent=1 // pred_fallthru
      _
    // Predicated region
    $region70: #{combine_wals_source_words_forward.1} parent=1 // pred_check
      _
    $region71: #{combine_wals_source_words_forward.1} parent=1 // pred_check_branch
      %6257 = sbr.rel (0) target = $region73
    $region72: #{combine_wals_source_words_forward.1} parent=1 // pred_region
      %6258 = dma.done [#allocation5], 32
    $region73: #{combine_wals_source_words_forward.1} parent=1 // pred_fallthru
      _
    %6259 = vsyncpa [#allocation3], 1
    %6260 = vsyncpa [#allocation5], 1

</llo_original>
